<compile_context>
chip_gen: v6e
topology: v6e:2x2x1
jax: 0.10.0
libtpu: 0.0.40
codegen_flags: <defaults>
</compile_context>

<pallas_src>
import functools

import jax
import jax.numpy as jnp
from jax.experimental import pallas as pl
from jax.experimental.pallas import tpu as pltpu

_LPAD = 8  # left halo pad in the depthwise scratch -> sublane-tile-aligned interior store


# ---------------------------- Pallas kernels ----------------------------

def _lightconv_level_kernel(*args, has_pre):
    """Fused: [optional conv1 = 1x1+bias+ReLU] -> 1x1 linear -> depthwise 3x3
    (pad=1, halo handled in VMEM scratch) -> folded-BN bias -> ReLU.
    One batch element per grid step."""
    if has_pre:
        x_ref, wp_ref, bp_ref, w1_ref, wdw_ref, bias_ref, o_ref, pad_ref = args
    else:
        x_ref, w1_ref, wdw_ref, bias_ref, o_ref, pad_ref = args
    _, H, W, Cout = o_ref.shape
    Cin = x_ref.shape[-1]

    xm = x_ref[0].reshape(H * W, Cin)                  # (H*W, Cin); W is 8-aligned
    if has_pre:                                        # conv1: 1x1 + folded BN + ReLU
        xm = jnp.maximum(
            jnp.dot(xm, wp_ref[...], preferred_element_type=jnp.float32) + bp_ref[...],
            0.0)
    # LightConv 1x1 (linear, no bias) on the MXU.
    z = jnp.dot(xm, w1_ref[...], preferred_element_type=jnp.float32)   # (H*W, Cout)

    # Depthwise 3x3 with a 1-pixel zero halo, entirely in VMEM:
    # data lives at rows [1:H+1], cols [_LPAD:_LPAD+W]; the rest of the scratch is 0.
    pad_ref[...] = jnp.zeros_like(pad_ref)
    pad_ref[1:H + 1, _LPAD:_LPAD + W, :] = z.reshape(H, W, Cout)
    xp = pad_ref[...]
    wdw = wdw_ref[...]                                  # (3, 3, Cout), BN scale folded in
    acc = xp[0:H, _LPAD - 1:_LPAD - 1 + W, :] * wdw[0, 0]
    for ky in range(3):
        for kx in range(3):
            if ky == 0 and kx == 0:
                continue
            acc = acc + xp[ky:ky + H, _LPAD - 1 + kx:_LPAD - 1 + kx + W, :] * wdw[ky, kx]
    o_ref[0] = jnp.maximum(acc + bias_ref[...], 0.0)


def _tail_kernel(*args, mid, has_down):
    """ChannelGate (x4, shared weights) -> gated sum -> conv3 (1x1 + folded BN)
    -> (+ optional 1x1 downsample of identity) -> residual add -> ReLU."""
    if has_down:
        (x_ref, a_ref, b_ref, c_ref, d_ref,
         gw1_ref, gb1_ref, gw2_ref, gb2_ref,
         w3_ref, b3_ref, wd_ref, bd_ref, o_ref) = args
    else:
        (x_ref, a_ref, b_ref, c_ref, d_ref,
         gw1_ref, gb1_ref, gw2_ref, gb2_ref,
         w3_ref, b3_ref, o_ref) = args
    _, H, W, Cout = o_ref.shape
    Cin = x_ref.shape[-1]
    gw1 = gw1_ref[...]
    gb1 = gb1_ref[...]
    gw2 = gw2_ref[...]
    gb2 = gb2_ref[...]
    inv_hw = 1.0 / float(H * W)

    def gated(ref):
        # Each branch's final output lives in the first `mid` channels of its level tensor.
        v = ref[0][:, :, :mid]                                            # (H, W, mid)
        # two-step H,W mean (lane-axis-last friendly)
        pooled = jnp.sum(jnp.sum(v, axis=0), axis=0, keepdims=True) * inv_hw  # (1, mid)
        h = jnp.maximum(
            jnp.dot(pooled, gw1, preferred_element_type=jnp.float32) + gb1, 0.0)
        g = jax.nn.sigmoid(
            jnp.dot(h, gw2, preferred_element_type=jnp.float32) + gb2)    # (1, mid)
        return v * g                                                      # broadcast H, W

    x2 = gated(a_ref) + gated(b_ref) + gated(c_ref) + gated(d_ref)        # (H, W, mid)
    y = jnp.dot(x2.reshape(H * W, mid), w3_ref[...],
                preferred_element_type=jnp.float32) + b3_ref[...]         # (H*W, Cout)
    xm = x_ref[0].reshape(H * W, Cin)
    if has_down:
        idn = jnp.dot(xm, wd_ref[...], preferred_element_type=jnp.float32) + bd_ref[...]
    else:
        idn = xm                                                           # Cin == Cout
    o_ref[0] = jnp.maximum(y + idn, 0.0).reshape(H, W, Cout)
    # TODO(synk): optional InstanceNorm2d branch (IN=True) not implemented
    # (default OSBlock uses IN=False).


# ---------------------------- pallas_call wrappers ----------------------------

def _batch_spec(shape):
    # Per-batch-element block; grid axis n indexes the batch dimension.
    return pl.BlockSpec((1,) + tuple(shape[1:]), lambda n: (n, 0, 0, 0))


def _resident_spec(shape):
    # Full-array block with a constant index map -> stays resident in VMEM.
    nd = len(shape)
    return pl.BlockSpec(tuple(shape), lambda n, _nd=nd: (0,) * _nd)


def lightconv_level(x, w1, wdw, bias, w_pre=None, b_pre=None):
    N, H, W, _ = x.shape
    Cout = w1.shape[1]
    has_pre = w_pre is not None
    ins = [x] + ([w_pre, b_pre] if has_pre else []) + [w1, wdw, bias]
    in_specs = [_batch_spec(x.shape)] + [_resident_spec(a.shape) for a in ins[1:]]
    return pl.pallas_call(
        functools.partial(_lightconv_level_kernel, has_pre=has_pre),
        grid=(N,),
        in_specs=in_specs,
        out_specs=_batch_spec((N, H, W, Cout)),
        out_shape=jax.ShapeDtypeStruct((N, H, W, Cout), jnp.float32),
        scratch_shapes=[pltpu.VMEM((H + 2, W + _LPAD + 1, Cout), jnp.float32)],
        compiler_params=pltpu.CompilerParams(dimension_semantics=("parallel",)),
    )(*ins)


def gated_residual_tail(x, a, b, c, d, pp):
    N, H, W, _ = x.shape
    mid = pp['w_conv3'].shape[0]
    Cout = pp['w_conv3'].shape[1]
    has_down = 'w_down' in pp
    ins = [x, a, b, c, d,
           pp['gate_w1'], pp['gate_b1'], pp['gate_w2'], pp['gate_b2'],
           pp['w_conv3'], pp['b_conv3']]
    if has_down:
        ins += [pp['w_down'], pp['b_down']]
    in_specs = ([_batch_spec(t.shape) for t in (x, a, b, c, d)]
                + [_resident_spec(t.shape) for t in ins[5:]])
    return pl.pallas_call(
        functools.partial(_tail_kernel, mid=mid, has_down=has_down),
        grid=(N,),
        in_specs=in_specs,
        out_specs=_batch_spec((N, H, W, Cout)),
        out_shape=jax.ShapeDtypeStruct((N, H, W, Cout), jnp.float32),
        compiler_params=pltpu.CompilerParams(dimension_semantics=("parallel",)),
    )(*ins)


# ---------------------------- parameters ----------------------------

def _fold_bn(key, c):
    kg, kb, km, kv = jax.random.split(key, 4)
    gamma = 1.0 + 0.1 * jax.random.normal(kg, (c,), jnp.float32)
    beta = 0.05 * jax.random.normal(kb, (c,), jnp.float32)
    mean = 0.1 * jax.random.normal(km, (c,), jnp.float32)
    var = 0.9 + 0.2 * jax.random.uniform(kv, (c,), jnp.float32)
    scale = gamma / jnp.sqrt(var + 1e-5)
    bias = beta - mean * scale
    return scale.reshape(1, c), bias.reshape(1, c)


def _conv_w(key, cin, cout):
    return 0.2 * jax.random.normal(key, (cin, cout), jnp.float32)


def _dw_w(key, c):
    return 0.2 * jax.random.normal(key, (3, 3, c), jnp.float32)


def init_osblock_params(key, cin, cout, reduction=16, bottleneck_reduction=4):
    mid = cout // bottleneck_reduction
    cr = mid // reduction
    keys = iter(jax.random.split(key, 64))
    p = {}
    p['conv1_w'] = _conv_w(next(keys), cin, mid)
    p['conv1_scale'], p['conv1_bias'] = _fold_bn(next(keys), mid)

    def light(n):
        return [dict(w1=_conv_w(next(keys), mid, mid),
                     wdw=_dw_w(next(keys), mid),
                     bn=_fold_bn(next(keys), mid)) for _ in range(n)]

    p['conv2a'] = light(1)
    p['conv2b'] = light(2)
    p['conv2c'] = light(3)
    p['conv2d'] = light(4)
    p['gate_w1'] = _conv_w(next(keys), mid, cr)
    p['gate_b1'] = 0.05 * jax.random.normal(next(keys), (1, cr), jnp.float32)
    p['gate_w2'] = _conv_w(next(keys), cr, mid)
    p['gate_b2'] = 0.05 * jax.random.normal(next(keys), (1, mid), jnp.float32)
    p['conv3_w'] = _conv_w(next(keys), mid, cout)
    p['conv3_scale'], p['conv3_bias'] = _fold_bn(next(keys), cout)
    if cin != cout:
        p['down_w'] = _conv_w(next(keys), cin, cout)
        p['down_scale'], p['down_bias'] = _fold_bn(next(keys), cout)
    return p


def prepare_pallas_params(p):
    """Fold BN scales into the weights and build the batched per-level weights."""
    mid = p['conv1_w'].shape[1]
    pp = {'w_conv1': p['conv1_w'] * p['conv1_scale'], 'b_conv1': p['conv1_bias']}

    branches = [p['conv2a'], p['conv2b'], p['conv2c'], p['conv2d']]
    levels = []
    for lvl in range(4):
        parts = [br[lvl] for br in branches if len(br) > lvl]
        k = len(parts)
        if lvl == 0:
            # All four branches read the shared x1: concatenate 1x1 weights along Cout.
            w = jnp.concatenate([q['w1'] for q in parts], axis=1)
        else:
            # Block-diagonal weight; rows of the branch that finished at the previous
            # level (channels [0:mid]) are zero, so no channel slicing is needed upstream.
            w = jnp.zeros(((k + 1) * mid, k * mid), jnp.float32)
            for j, q in enumerate(parts):
                w = w.at[(j + 1) * mid:(j + 2) * mid, j * mid:(j + 1) * mid].set(q['w1'])
        wdw = jnp.concatenate([q['wdw'] * q['bn'][0] for q in parts], axis=-1)
        bias = jnp.concatenate([q['bn'][1] for q in parts], axis=1)
        levels.append({'w': w, 'wdw': wdw, 'bias': bias})
    pp['levels'] = levels

    # Gate FCs: zero-pad the hidden dim to >= 8 so the in-kernel MXU dots have a
    # non-degenerate contraction dim (mathematically exact: padded cols/rows are zero).
    cr = p['gate_w1'].shape[1]
    cr_p = max(8, ((cr + 7) // 8) * 8)
    pp['gate_w1'] = jnp.zeros((mid, cr_p), jnp.float32).at[:, :cr].set(p['gate_w1'])
    pp['gate_b1'] = jnp.zeros((1, cr_p), jnp.float32).at[:, :cr].set(p['gate_b1'])
    pp['gate_w2'] = jnp.zeros((cr_p, mid), jnp.float32).at[:cr, :].set(p['gate_w2'])
    pp['gate_b2'] = p['gate_b2']

    pp['w_conv3'] = p['conv3_w'] * p['conv3_scale']
    pp['b_conv3'] = p['conv3_bias']
    if 'down_w' in p:
        pp['w_down'] = p['down_w'] * p['down_scale']
        pp['b_down'] = p['down_bias']
    return pp


# ---------------------------- OSBlock forward (Pallas) ----------------------------

def osblock_forward_nhwc(x, pp):
    """OSBlock forward on an NHWC tensor: 5 fused, batch-gridded pallas_calls."""
    lvls = pp['levels']
    out1 = lightconv_level(x, lvls[0]['w'], lvls[0]['wdw'], lvls[0]['bias'],
                           w_pre=pp['w_conv1'], b_pre=pp['b_conv1'])
    out2 = lightconv_level(out1, lvls[1]['w'], lvls[1]['wdw'], lvls[1]['bias'])
    out3 = lightconv_level(out2, lvls[2]['w'], lvls[2]['wdw'], lvls[2]['bias'])
    out4 = lightconv_level(out3, lvls[3]['w'], lvls[3]['wdw'], lvls[3]['bias'])
    return gated_residual_tail(x, out1, out2, out3, out4, pp)


def osblock_forward(x_nchw, pp):
    # NCHW <-> NHWC glue for PyTorch-style callers; callers that already hold NHWC
    # should call osblock_forward_nhwc directly and skip both full-tensor transposes.
    x = jnp.transpose(x_nchw, (0, 2, 3, 1)).astype(jnp.float32)
    out = osblock_forward_nhwc(x, pp)
    return jnp.transpose(out, (0, 3, 1, 2))


# ---------------------------- pure-JAX reference ----------------------------

def osblock_reference(x_nchw, p):
    """Non-Pallas reference: per-branch, per-layer, no weight concatenation/fusion.
    Inference-mode BN is applied by folding its per-channel scale into the weights
    (mathematically identical to conv -> affine)."""
    x = jnp.transpose(x_nchw, (0, 2, 3, 1)).astype(jnp.float32)

    def conv1x1_bn(v, w, scale, bias, relu):
        y = jnp.einsum('nhwc,cd->nhwd', v, w * scale[0]) + bias.reshape(1, 1, 1, -1)
        return jnp.maximum(y, 0.0) if relu else y

    def dw3x3_bn_relu(v, wdw, scale, bias):
        wf = wdw * scale                       # (3,3,C) * (1,C)
        N, H, W, C = v.shape
        vp = jnp.pad(v, ((0, 0), (1, 1), (1, 1), (0, 0)))
        acc = jnp.zeros_like(v)
        for ky in range(3):
            for kx in range(3):
                acc = acc + vp[:, ky:ky + H, kx:kx + W, :] * wf[ky, kx]
        return jnp.maximum(acc + bias.reshape(1, 1, 1, -1), 0.0)

    def light_seq(v, layers):
        for lp in layers:
            v = jnp.einsum('nhwc,cd->nhwd', v, lp['w1'])      # 1x1 linear (no bias)
            v = dw3x3_bn_relu(v, lp['wdw'], lp['bn'][0], lp['bn'][1])
        return v

    def gate(v):
        pooled = jnp.mean(v, axis=(1, 2))
        h = jnp.maximum(pooled @ p['gate_w1'] + p['gate_b1'], 0.0)
        g = jax.nn.sigmoid(h @ p['gate_w2'] + p['gate_b2'])
        return v * g[:, None, None, :]

    x1 = conv1x1_bn(x, p['conv1_w'], p['conv1_scale'], p['conv1_bias'], relu=True)
    x2 = (gate(light_seq(x1, p['conv2a'])) + gate(light_seq(x1, p['conv2b'])) +
          gate(light_seq(x1, p['conv2c'])) + gate(light_seq(x1, p['conv2d'])))
    x3 = conv1x1_bn(x2, p['conv3_w'], p['conv3_scale'], p['conv3_bias'], relu=False)
    identity = (conv1x1_bn(x, p['down_w'], p['down_scale'], p['down_bias'], relu=False)
                if 'down_w' in p else x)
    return jnp.transpose(jnp.maximum(x3 + identity, 0.0), (0, 3, 1, 2))


# ---------------------------- main ----------------------------

if __name__ == "__main__":
    key = jax.random.PRNGKey(0)
    kx, kp = jax.random.split(key)
    N, Cin, H, W = 2, 32, 8, 8
    Cout = 128                          # mid = 32 -> 4*mid = 128 (lane-dense stem output)
    x = jax.random.normal(kx, (N, Cin, H, W), jnp.float32)   # PyTorch-style NCHW input
    params = init_osblock_params(kp, Cin, Cout)
    pallas_params = prepare_pallas_params(params)

    fwd = jax.jit(osblock_forward)
    out = jax.block_until_ready(fwd(x, pallas_params))
    ref = jax.block_until_ready(osblock_reference(x, params))

    assert out.shape == (N, Cout, H, W), out.shape
    max_err = float(jnp.max(jnp.abs(out - ref)))
    ref_scale = float(jnp.maximum(1.0, jnp.max(jnp.abs(ref))))
    assert max_err <= 1e-3 * ref_scale, (
        f"mismatch vs reference: max abs err {max_err} (ref scale {ref_scale})")
    print("KERNEL_OK")
</pallas_src>

<mosaic_0001>
module attributes {stable_mosaic.version = 11 : i64} {
  func.func @_lightconv_level_kernel(%arg0: i32, %arg1: memref<1x8x8x32xf32, #tpu.memory_space<vmem>>, %arg2: memref<32x32xf32, #tpu.memory_space<vmem>>, %arg3: memref<1x32xf32, #tpu.memory_space<vmem>>, %arg4: memref<32x128xf32, #tpu.memory_space<vmem>>, %arg5: memref<3x3x128xf32, #tpu.memory_space<vmem>>, %arg6: memref<1x128xf32, #tpu.memory_space<vmem>>, %arg7: memref<1x8x8x128xf32, #tpu.memory_space<vmem>>, %arg8: memref<10x17x128xf32, #tpu.memory_space<vmem>>) attributes {dimension_semantics = [#tpu.dimension_semantics<parallel>], iteration_bounds = array<i64: 2>, scalar_prefetch = 0 : i64, scratch_operands = 1 : i64, tpu.core_type = #tpu.core_type<tc>, window_params = [{transform_indices = @transform_0, window_bounds = array<i64: 1, 8, 8, 32>}, {pipeline_mode = #tpu.pipeline_mode<synchronous>, transform_indices = @transform_1, window_bounds = array<i64: 32, 32>}, {pipeline_mode = #tpu.pipeline_mode<synchronous>, transform_indices = @transform_2, window_bounds = array<i64: 1, 32>}, {pipeline_mode = #tpu.pipeline_mode<synchronous>, transform_indices = @transform_3, window_bounds = array<i64: 32, 128>}, {pipeline_mode = #tpu.pipeline_mode<synchronous>, transform_indices = @transform_4, window_bounds = array<i64: 3, 3, 128>}, {pipeline_mode = #tpu.pipeline_mode<synchronous>, transform_indices = @transform_5, window_bounds = array<i64: 1, 128>}, {transform_indices = @transform_6, window_bounds = array<i64: 1, 8, 8, 128>}]} {
    %c0 = arith.constant 0 : index
    %c0_0 = arith.constant 0 : index
    %c0_1 = arith.constant 0 : index
    %c0_2 = arith.constant 0 : index
    %0 = vector.load %arg1[%c0, %c0_0, %c0_1, %c0_2] : memref<1x8x8x32xf32, #tpu.memory_space<vmem>>, vector<1x8x8x32xf32>
    %1 = vector.shape_cast %0 : vector<1x8x8x32xf32> to vector<8x8x32xf32>
    %2 = vector.shape_cast %1 : vector<8x8x32xf32> to vector<64x32xf32>
    %c0_3 = arith.constant 0 : index
    %c0_4 = arith.constant 0 : index
    %3 = vector.load %arg2[%c0_3, %c0_4] : memref<32x32xf32, #tpu.memory_space<vmem>>, vector<32x32xf32>
    %cst = arith.constant dense<0.000000e+00> : vector<64x32xf32>
    %4 = tpu.matmul %2, %3, %cst {dimension_numbers = #tpu.dot_dimension_numbers<[1], [0], [0], [1], [0, 0, 1, 1], [], []>} : vector<64x32xf32>, vector<32x32xf32>, vector<64x32xf32> -> vector<64x32xf32>
    %c0_5 = arith.constant 0 : index
    %c0_6 = arith.constant 0 : index
    %5 = vector.load %arg3[%c0_5, %c0_6] : memref<1x32xf32, #tpu.memory_space<vmem>>, vector<1x32xf32>
    %6 = vector.broadcast %5 : vector<1x32xf32> to vector<64x32xf32>
    %7 = arith.addf %4, %6 : vector<64x32xf32>
    %cst_7 = arith.constant 0.000000e+00 : f32
    %8 = vector.broadcast %cst_7 : f32 to vector<64x32xf32>
    %9 = arith.maximumf %7, %8 : vector<64x32xf32>
    %c0_8 = arith.constant 0 : index
    %c0_9 = arith.constant 0 : index
    %10 = vector.load %arg4[%c0_8, %c0_9] : memref<32x128xf32, #tpu.memory_space<vmem>>, vector<32x128xf32>
    %cst_10 = arith.constant dense<0.000000e+00> : vector<64x128xf32>
    %11 = tpu.matmul %9, %10, %cst_10 {dimension_numbers = #tpu.dot_dimension_numbers<[1], [0], [0], [1], [0, 0, 1, 1], [], []>} : vector<64x32xf32>, vector<32x128xf32>, vector<64x128xf32> -> vector<64x128xf32>
    %cst_11 = arith.constant 0.000000e+00 : f32
    %12 = vector.broadcast %cst_11 : f32 to vector<10x17x128xf32>
    %c0_12 = arith.constant 0 : index
    %c0_13 = arith.constant 0 : index
    %c0_14 = arith.constant 0 : index
    %13 = vector.load %arg8[%c0_12, %c0_13, %c0_14] : memref<10x17x128xf32, #tpu.memory_space<vmem>>, vector<10x17x128xf32>
    tpu.vector_store %arg8[%c0_12, %c0_13, %c0_14], %12 {strides = array<i32>} : memref<10x17x128xf32, #tpu.memory_space<vmem>>, vector<10x17x128xf32>,
    %14 = vector.shape_cast %11 : vector<64x128xf32> to vector<8x8x128xf32>
    %c1 = arith.constant 1 : index
    %c8 = arith.constant 8 : index
    %c0_15 = arith.constant 0 : index
    %15 = vector.load %arg8[%c1, %c8, %c0_15] : memref<10x17x128xf32, #tpu.memory_space<vmem>>, vector<8x8x128xf32>
    tpu.vector_store %arg8[%c1, %c8, %c0_15], %14 {strides = array<i32>} : memref<10x17x128xf32, #tpu.memory_space<vmem>>, vector<8x8x128xf32>,
    %c0_16 = arith.constant 0 : index
    %c0_17 = arith.constant 0 : index
    %c0_18 = arith.constant 0 : index
    %16 = vector.load %arg8[%c0_16, %c0_17, %c0_18] : memref<10x17x128xf32, #tpu.memory_space<vmem>>, vector<10x17x128xf32>
    %c0_19 = arith.constant 0 : index
    %c0_20 = arith.constant 0 : index
    %c0_21 = arith.constant 0 : index
    %17 = vector.load %arg5[%c0_19, %c0_20, %c0_21] : memref<3x3x128xf32, #tpu.memory_space<vmem>>, vector<3x3x128xf32>
    %18 = vector.extract_strided_slice %16 {offsets = [0, 7, 0], sizes = [8, 8, 128], strides = [1, 1, 1]} : vector<10x17x128xf32> to vector<8x8x128xf32>
    %19 = vector.extract_strided_slice %17 {offsets = [0, 0, 0], sizes = [1, 1, 128], strides = [1, 1, 1]} : vector<3x3x128xf32> to vector<1x1x128xf32>
    %20 = vector.shape_cast %19 : vector<1x1x128xf32> to vector<128xf32>
    %21 = vector.shape_cast %20 : vector<128xf32> to vector<1x1x128xf32>
    %22 = vector.broadcast %21 : vector<1x1x128xf32> to vector<8x8x128xf32>
    %23 = arith.mulf %18, %22 : vector<8x8x128xf32>
    %24 = vector.extract_strided_slice %16 {offsets = [0, 8, 0], sizes = [8, 8, 128], strides = [1, 1, 1]} : vector<10x17x128xf32> to vector<8x8x128xf32>
    %25 = vector.extract_strided_slice %17 {offsets = [0, 1, 0], sizes = [1, 1, 128], strides = [1, 1, 1]} : vector<3x3x128xf32> to vector<1x1x128xf32>
    %26 = vector.shape_cast %25 : vector<1x1x128xf32> to vector<128xf32>
    %27 = vector.shape_cast %26 : vector<128xf32> to vector<1x1x128xf32>
    %28 = vector.broadcast %27 : vector<1x1x128xf32> to vector<8x8x128xf32>
    %29 = arith.mulf %24, %28 : vector<8x8x128xf32>
    %30 = arith.addf %23, %29 : vector<8x8x128xf32>
    %31 = vector.extract_strided_slice %16 {offsets = [0, 9, 0], sizes = [8, 8, 128], strides = [1, 1, 1]} : vector<10x17x128xf32> to vector<8x8x128xf32>
    %32 = vector.extract_strided_slice %17 {offsets = [0, 2, 0], sizes = [1, 1, 128], strides = [1, 1, 1]} : vector<3x3x128xf32> to vector<1x1x128xf32>
    %33 = vector.shape_cast %32 : vector<1x1x128xf32> to vector<128xf32>
    %34 = vector.shape_cast %33 : vector<128xf32> to vector<1x1x128xf32>
    %35 = vector.broadcast %34 : vector<1x1x128xf32> to vector<8x8x128xf32>
    %36 = arith.mulf %31, %35 : vector<8x8x128xf32>
    %37 = arith.addf %30, %36 : vector<8x8x128xf32>
    %38 = vector.extract_strided_slice %16 {offsets = [1, 7, 0], sizes = [8, 8, 128], strides = [1, 1, 1]} : vector<10x17x128xf32> to vector<8x8x128xf32>
    %39 = vector.extract_strided_slice %17 {offsets = [1, 0, 0], sizes = [1, 1, 128], strides = [1, 1, 1]} : vector<3x3x128xf32> to vector<1x1x128xf32>
    %40 = vector.shape_cast %39 : vector<1x1x128xf32> to vector<128xf32>
    %41 = vector.shape_cast %40 : vector<128xf32> to vector<1x1x128xf32>
    %42 = vector.broadcast %41 : vector<1x1x128xf32> to vector<8x8x128xf32>
    %43 = arith.mulf %38, %42 : vector<8x8x128xf32>
    %44 = arith.addf %37, %43 : vector<8x8x128xf32>
    %45 = vector.extract_strided_slice %16 {offsets = [1, 8, 0], sizes = [8, 8, 128], strides = [1, 1, 1]} : vector<10x17x128xf32> to vector<8x8x128xf32>
    %46 = vector.extract_strided_slice %17 {offsets = [1, 1, 0], sizes = [1, 1, 128], strides = [1, 1, 1]} : vector<3x3x128xf32> to vector<1x1x128xf32>
    %47 = vector.shape_cast %46 : vector<1x1x128xf32> to vector<128xf32>
    %48 = vector.shape_cast %47 : vector<128xf32> to vector<1x1x128xf32>
    %49 = vector.broadcast %48 : vector<1x1x128xf32> to vector<8x8x128xf32>
    %50 = arith.mulf %45, %49 : vector<8x8x128xf32>
    %51 = arith.addf %44, %50 : vector<8x8x128xf32>
    %52 = vector.extract_strided_slice %16 {offsets = [1, 9, 0], sizes = [8, 8, 128], strides = [1, 1, 1]} : vector<10x17x128xf32> to vector<8x8x128xf32>
    %53 = vector.extract_strided_slice %17 {offsets = [1, 2, 0], sizes = [1, 1, 128], strides = [1, 1, 1]} : vector<3x3x128xf32> to vector<1x1x128xf32>
    %54 = vector.shape_cast %53 : vector<1x1x128xf32> to vector<128xf32>
    %55 = vector.shape_cast %54 : vector<128xf32> to vector<1x1x128xf32>
    %56 = vector.broadcast %55 : vector<1x1x128xf32> to vector<8x8x128xf32>
    %57 = arith.mulf %52, %56 : vector<8x8x128xf32>
    %58 = arith.addf %51, %57 : vector<8x8x128xf32>
    %59 = vector.extract_strided_slice %16 {offsets = [2, 7, 0], sizes = [8, 8, 128], strides = [1, 1, 1]} : vector<10x17x128xf32> to vector<8x8x128xf32>
    %60 = vector.extract_strided_slice %17 {offsets = [2, 0, 0], sizes = [1, 1, 128], strides = [1, 1, 1]} : vector<3x3x128xf32> to vector<1x1x128xf32>
    %61 = vector.shape_cast %60 : vector<1x1x128xf32> to vector<128xf32>
    %62 = vector.shape_cast %61 : vector<128xf32> to vector<1x1x128xf32>
    %63 = vector.broadcast %62 : vector<1x1x128xf32> to vector<8x8x128xf32>
    %64 = arith.mulf %59, %63 : vector<8x8x128xf32>
    %65 = arith.addf %58, %64 : vector<8x8x128xf32>
    %66 = vector.extract_strided_slice %16 {offsets = [2, 8, 0], sizes = [8, 8, 128], strides = [1, 1, 1]} : vector<10x17x128xf32> to vector<8x8x128xf32>
    %67 = vector.extract_strided_slice %17 {offsets = [2, 1, 0], sizes = [1, 1, 128], strides = [1, 1, 1]} : vector<3x3x128xf32> to vector<1x1x128xf32>
    %68 = vector.shape_cast %67 : vector<1x1x128xf32> to vector<128xf32>
    %69 = vector.shape_cast %68 : vector<128xf32> to vector<1x1x128xf32>
    %70 = vector.broadcast %69 : vector<1x1x128xf32> to vector<8x8x128xf32>
    %71 = arith.mulf %66, %70 : vector<8x8x128xf32>
    %72 = arith.addf %65, %71 : vector<8x8x128xf32>
    %73 = vector.extract_strided_slice %16 {offsets = [2, 9, 0], sizes = [8, 8, 128], strides = [1, 1, 1]} : vector<10x17x128xf32> to vector<8x8x128xf32>
    %74 = vector.extract_strided_slice %17 {offsets = [2, 2, 0], sizes = [1, 1, 128], strides = [1, 1, 1]} : vector<3x3x128xf32> to vector<1x1x128xf32>
    %75 = vector.shape_cast %74 : vector<1x1x128xf32> to vector<128xf32>
    %76 = vector.shape_cast %75 : vector<128xf32> to vector<1x1x128xf32>
    %77 = vector.broadcast %76 : vector<1x1x128xf32> to vector<8x8x128xf32>
    %78 = arith.mulf %73, %77 : vector<8x8x128xf32>
    %79 = arith.addf %72, %78 : vector<8x8x128xf32>
    %c0_22 = arith.constant 0 : index
    %c0_23 = arith.constant 0 : index
    %80 = vector.load %arg6[%c0_22, %c0_23] : memref<1x128xf32, #tpu.memory_space<vmem>>, vector<1x128xf32>
    %81 = vector.shape_cast %80 : vector<1x128xf32> to vector<1x1x128xf32>
    %82 = vector.broadcast %81 : vector<1x1x128xf32> to vector<8x8x128xf32>
    %83 = arith.addf %79, %82 : vector<8x8x128xf32>
    %cst_24 = arith.constant 0.000000e+00 : f32
    %84 = vector.broadcast %cst_24 : f32 to vector<8x8x128xf32>
    %85 = arith.maximumf %83, %84 : vector<8x8x128xf32>
    %c0_25 = arith.constant 0 : index
    %c0_26 = arith.constant 0 : index
    %c0_27 = arith.constant 0 : index
    %c0_28 = arith.constant 0 : index
    %86 = vector.load %arg7[%c0_25, %c0_26, %c0_27, %c0_28] : memref<1x8x8x128xf32, #tpu.memory_space<vmem>>, vector<1x8x8x128xf32>
    %87 = vector.shape_cast %86 : vector<1x8x8x128xf32> to vector<8x8x128xf32>
    %88 = vector.shape_cast %85 : vector<8x8x128xf32> to vector<1x8x8x128xf32>
    tpu.vector_store %arg7[%c0_25, %c0_26, %c0_27, %c0_28], %88 {strides = array<i32>} : memref<1x8x8x128xf32, #tpu.memory_space<vmem>>, vector<1x8x8x128xf32>,
    return
  }
  func.func @transform_0(%arg0: i32) -> (i32, i32, i32, i32) {
    %c0_i32 = arith.constant 0 : i32
    %c0_i32_0 = arith.constant 0 : i32
    %c0_i32_1 = arith.constant 0 : i32
    %c0_i32_2 = arith.constant 0 : i32
    return %arg0, %c0_i32, %c0_i32_0, %c0_i32_1 : i32, i32, i32, i32
  }
  func.func @transform_1(%arg0: i32) -> (i32, i32) {
    %c0_i32 = arith.constant 0 : i32
    %c0_i32_0 = arith.constant 0 : i32
    %c0_i32_1 = arith.constant 0 : i32
    return %c0_i32, %c0_i32_0 : i32, i32
  }
  func.func @transform_2(%arg0: i32) -> (i32, i32) {
    %c0_i32 = arith.constant 0 : i32
    %c0_i32_0 = arith.constant 0 : i32
    %c0_i32_1 = arith.constant 0 : i32
    return %c0_i32, %c0_i32_0 : i32, i32
  }
  func.func @transform_3(%arg0: i32) -> (i32, i32) {
    %c0_i32 = arith.constant 0 : i32
    %c0_i32_0 = arith.constant 0 : i32
    %c0_i32_1 = arith.constant 0 : i32
    return %c0_i32, %c0_i32_0 : i32, i32
  }
  func.func @transform_4(%arg0: i32) -> (i32, i32, i32) {
    %c0_i32 = arith.constant 0 : i32
    %c0_i32_0 = arith.constant 0 : i32
    %c0_i32_1 = arith.constant 0 : i32
    %c0_i32_2 = arith.constant 0 : i32
    return %c0_i32, %c0_i32_0, %c0_i32_1 : i32, i32, i32
  }
  func.func @transform_5(%arg0: i32) -> (i32, i32) {
    %c0_i32 = arith.constant 0 : i32
    %c0_i32_0 = arith.constant 0 : i32
    %c0_i32_1 = arith.constant 0 : i32
    return %c0_i32, %c0_i32_0 : i32, i32
  }
  func.func @transform_6(%arg0: i32) -> (i32, i32, i32, i32) {
    %c0_i32 = arith.constant 0 : i32
    %c0_i32_0 = arith.constant 0 : i32
    %c0_i32_1 = arith.constant 0 : i32
    %c0_i32_2 = arith.constant 0 : i32
    return %arg0, %c0_i32, %c0_i32_0, %c0_i32_1 : i32, i32, i32, i32
  }
}

module attributes {stable_mosaic.version = 11 : i64} {
  func.func @_lightconv_level_kernel(%arg0: i32, %arg1: memref<1x8x8x96xf32, #tpu.memory_space<vmem>>, %arg2: memref<96x64xf32, #tpu.memory_space<vmem>>, %arg3: memref<3x3x64xf32, #tpu.memory_space<vmem>>, %arg4: memref<1x64xf32, #tpu.memory_space<vmem>>, %arg5: memref<1x8x8x64xf32, #tpu.memory_space<vmem>>, %arg6: memref<10x17x64xf32, #tpu.memory_space<vmem>>) attributes {dimension_semantics = [#tpu.dimension_semantics<parallel>], iteration_bounds = array<i64: 2>, scalar_prefetch = 0 : i64, scratch_operands = 1 : i64, tpu.core_type = #tpu.core_type<tc>, window_params = [{transform_indices = @transform_0, window_bounds = array<i64: 1, 8, 8, 96>}, {pipeline_mode = #tpu.pipeline_mode<synchronous>, transform_indices = @transform_1, window_bounds = array<i64: 96, 64>}, {pipeline_mode = #tpu.pipeline_mode<synchronous>, transform_indices = @transform_2, window_bounds = array<i64: 3, 3, 64>}, {pipeline_mode = #tpu.pipeline_mode<synchronous>, transform_indices = @transform_3, window_bounds = array<i64: 1, 64>}, {transform_indices = @transform_4, window_bounds = array<i64: 1, 8, 8, 64>}]} {
    %c0 = arith.constant 0 : index
    %c0_0 = arith.constant 0 : index
    %c0_1 = arith.constant 0 : index
    %c0_2 = arith.constant 0 : index
    %0 = vector.load %arg1[%c0, %c0_0, %c0_1, %c0_2] : memref<1x8x8x96xf32, #tpu.memory_space<vmem>>, vector<1x8x8x96xf32>
    %1 = vector.shape_cast %0 : vector<1x8x8x96xf32> to vector<8x8x96xf32>
    %2 = vector.shape_cast %1 : vector<8x8x96xf32> to vector<64x96xf32>
    %c0_3 = arith.constant 0 : index
    %c0_4 = arith.constant 0 : index
    %3 = vector.load %arg2[%c0_3, %c0_4] : memref<96x64xf32, #tpu.memory_space<vmem>>, vector<96x64xf32>
    %cst = arith.constant dense<0.000000e+00> : vector<64x64xf32>
    %4 = tpu.matmul %2, %3, %cst {dimension_numbers = #tpu.dot_dimension_numbers<[1], [0], [0], [1], [0, 0, 1, 1], [], []>} : vector<64x96xf32>, vector<96x64xf32>, vector<64x64xf32> -> vector<64x64xf32>
    %cst_5 = arith.constant 0.000000e+00 : f32
    %5 = vector.broadcast %cst_5 : f32 to vector<10x17x64xf32>
    %c0_6 = arith.constant 0 : index
    %c0_7 = arith.constant 0 : index
    %c0_8 = arith.constant 0 : index
    %6 = vector.load %arg6[%c0_6, %c0_7, %c0_8] : memref<10x17x64xf32, #tpu.memory_space<vmem>>, vector<10x17x64xf32>
    tpu.vector_store %arg6[%c0_6, %c0_7, %c0_8], %5 {strides = array<i32>} : memref<10x17x64xf32, #tpu.memory_space<vmem>>, vector<10x17x64xf32>,
    %7 = vector.shape_cast %4 : vector<64x64xf32> to vector<8x8x64xf32>
    %c1 = arith.constant 1 : index
    %c8 = arith.constant 8 : index
    %c0_9 = arith.constant 0 : index
    %8 = vector.load %arg6[%c1, %c8, %c0_9] : memref<10x17x64xf32, #tpu.memory_space<vmem>>, vector<8x8x64xf32>
    tpu.vector_store %arg6[%c1, %c8, %c0_9], %7 {strides = array<i32>} : memref<10x17x64xf32, #tpu.memory_space<vmem>>, vector<8x8x64xf32>,
    %c0_10 = arith.constant 0 : index
    %c0_11 = arith.constant 0 : index
    %c0_12 = arith.constant 0 : index
    %9 = vector.load %arg6[%c0_10, %c0_11, %c0_12] : memref<10x17x64xf32, #tpu.memory_space<vmem>>, vector<10x17x64xf32>
    %c0_13 = arith.constant 0 : index
    %c0_14 = arith.constant 0 : index
    %c0_15 = arith.constant 0 : index
    %10 = vector.load %arg3[%c0_13, %c0_14, %c0_15] : memref<3x3x64xf32, #tpu.memory_space<vmem>>, vector<3x3x64xf32>
    %11 = vector.extract_strided_slice %9 {offsets = [0, 7, 0], sizes = [8, 8, 64], strides = [1, 1, 1]} : vector<10x17x64xf32> to vector<8x8x64xf32>
    %12 = vector.extract_strided_slice %10 {offsets = [0, 0, 0], sizes = [1, 1, 64], strides = [1, 1, 1]} : vector<3x3x64xf32> to vector<1x1x64xf32>
    %13 = vector.shape_cast %12 : vector<1x1x64xf32> to vector<64xf32>
    %14 = vector.shape_cast %13 : vector<64xf32> to vector<1x1x64xf32>
    %15 = vector.broadcast %14 : vector<1x1x64xf32> to vector<8x8x64xf32>
    %16 = arith.mulf %11, %15 : vector<8x8x64xf32>
    %17 = vector.extract_strided_slice %9 {offsets = [0, 8, 0], sizes = [8, 8, 64], strides = [1, 1, 1]} : vector<10x17x64xf32> to vector<8x8x64xf32>
    %18 = vector.extract_strided_slice %10 {offsets = [0, 1, 0], sizes = [1, 1, 64], strides = [1, 1, 1]} : vector<3x3x64xf32> to vector<1x1x64xf32>
    %19 = vector.shape_cast %18 : vector<1x1x64xf32> to vector<64xf32>
    %20 = vector.shape_cast %19 : vector<64xf32> to vector<1x1x64xf32>
    %21 = vector.broadcast %20 : vector<1x1x64xf32> to vector<8x8x64xf32>
    %22 = arith.mulf %17, %21 : vector<8x8x64xf32>
    %23 = arith.addf %16, %22 : vector<8x8x64xf32>
    %24 = vector.extract_strided_slice %9 {offsets = [0, 9, 0], sizes = [8, 8, 64], strides = [1, 1, 1]} : vector<10x17x64xf32> to vector<8x8x64xf32>
    %25 = vector.extract_strided_slice %10 {offsets = [0, 2, 0], sizes = [1, 1, 64], strides = [1, 1, 1]} : vector<3x3x64xf32> to vector<1x1x64xf32>
    %26 = vector.shape_cast %25 : vector<1x1x64xf32> to vector<64xf32>
    %27 = vector.shape_cast %26 : vector<64xf32> to vector<1x1x64xf32>
    %28 = vector.broadcast %27 : vector<1x1x64xf32> to vector<8x8x64xf32>
    %29 = arith.mulf %24, %28 : vector<8x8x64xf32>
    %30 = arith.addf %23, %29 : vector<8x8x64xf32>
    %31 = vector.extract_strided_slice %9 {offsets = [1, 7, 0], sizes = [8, 8, 64], strides = [1, 1, 1]} : vector<10x17x64xf32> to vector<8x8x64xf32>
    %32 = vector.extract_strided_slice %10 {offsets = [1, 0, 0], sizes = [1, 1, 64], strides = [1, 1, 1]} : vector<3x3x64xf32> to vector<1x1x64xf32>
    %33 = vector.shape_cast %32 : vector<1x1x64xf32> to vector<64xf32>
    %34 = vector.shape_cast %33 : vector<64xf32> to vector<1x1x64xf32>
    %35 = vector.broadcast %34 : vector<1x1x64xf32> to vector<8x8x64xf32>
    %36 = arith.mulf %31, %35 : vector<8x8x64xf32>
    %37 = arith.addf %30, %36 : vector<8x8x64xf32>
    %38 = vector.extract_strided_slice %9 {offsets = [1, 8, 0], sizes = [8, 8, 64], strides = [1, 1, 1]} : vector<10x17x64xf32> to vector<8x8x64xf32>
    %39 = vector.extract_strided_slice %10 {offsets = [1, 1, 0], sizes = [1, 1, 64], strides = [1, 1, 1]} : vector<3x3x64xf32> to vector<1x1x64xf32>
    %40 = vector.shape_cast %39 : vector<1x1x64xf32> to vector<64xf32>
    %41 = vector.shape_cast %40 : vector<64xf32> to vector<1x1x64xf32>
    %42 = vector.broadcast %41 : vector<1x1x64xf32> to vector<8x8x64xf32>
    %43 = arith.mulf %38, %42 : vector<8x8x64xf32>
    %44 = arith.addf %37, %43 : vector<8x8x64xf32>
    %45 = vector.extract_strided_slice %9 {offsets = [1, 9, 0], sizes = [8, 8, 64], strides = [1, 1, 1]} : vector<10x17x64xf32> to vector<8x8x64xf32>
    %46 = vector.extract_strided_slice %10 {offsets = [1, 2, 0], sizes = [1, 1, 64], strides = [1, 1, 1]} : vector<3x3x64xf32> to vector<1x1x64xf32>
    %47 = vector.shape_cast %46 : vector<1x1x64xf32> to vector<64xf32>
    %48 = vector.shape_cast %47 : vector<64xf32> to vector<1x1x64xf32>
    %49 = vector.broadcast %48 : vector<1x1x64xf32> to vector<8x8x64xf32>
    %50 = arith.mulf %45, %49 : vector<8x8x64xf32>
    %51 = arith.addf %44, %50 : vector<8x8x64xf32>
    %52 = vector.extract_strided_slice %9 {offsets = [2, 7, 0], sizes = [8, 8, 64], strides = [1, 1, 1]} : vector<10x17x64xf32> to vector<8x8x64xf32>
    %53 = vector.extract_strided_slice %10 {offsets = [2, 0, 0], sizes = [1, 1, 64], strides = [1, 1, 1]} : vector<3x3x64xf32> to vector<1x1x64xf32>
    %54 = vector.shape_cast %53 : vector<1x1x64xf32> to vector<64xf32>
    %55 = vector.shape_cast %54 : vector<64xf32> to vector<1x1x64xf32>
    %56 = vector.broadcast %55 : vector<1x1x64xf32> to vector<8x8x64xf32>
    %57 = arith.mulf %52, %56 : vector<8x8x64xf32>
    %58 = arith.addf %51, %57 : vector<8x8x64xf32>
    %59 = vector.extract_strided_slice %9 {offsets = [2, 8, 0], sizes = [8, 8, 64], strides = [1, 1, 1]} : vector<10x17x64xf32> to vector<8x8x64xf32>
    %60 = vector.extract_strided_slice %10 {offsets = [2, 1, 0], sizes = [1, 1, 64], strides = [1, 1, 1]} : vector<3x3x64xf32> to vector<1x1x64xf32>
    %61 = vector.shape_cast %60 : vector<1x1x64xf32> to vector<64xf32>
    %62 = vector.shape_cast %61 : vector<64xf32> to vector<1x1x64xf32>
    %63 = vector.broadcast %62 : vector<1x1x64xf32> to vector<8x8x64xf32>
    %64 = arith.mulf %59, %63 : vector<8x8x64xf32>
    %65 = arith.addf %58, %64 : vector<8x8x64xf32>
    %66 = vector.extract_strided_slice %9 {offsets = [2, 9, 0], sizes = [8, 8, 64], strides = [1, 1, 1]} : vector<10x17x64xf32> to vector<8x8x64xf32>
    %67 = vector.extract_strided_slice %10 {offsets = [2, 2, 0], sizes = [1, 1, 64], strides = [1, 1, 1]} : vector<3x3x64xf32> to vector<1x1x64xf32>
    %68 = vector.shape_cast %67 : vector<1x1x64xf32> to vector<64xf32>
    %69 = vector.shape_cast %68 : vector<64xf32> to vector<1x1x64xf32>
    %70 = vector.broadcast %69 : vector<1x1x64xf32> to vector<8x8x64xf32>
    %71 = arith.mulf %66, %70 : vector<8x8x64xf32>
    %72 = arith.addf %65, %71 : vector<8x8x64xf32>
    %c0_16 = arith.constant 0 : index
    %c0_17 = arith.constant 0 : index
    %73 = vector.load %arg4[%c0_16, %c0_17] : memref<1x64xf32, #tpu.memory_space<vmem>>, vector<1x64xf32>
    %74 = vector.shape_cast %73 : vector<1x64xf32> to vector<1x1x64xf32>
    %75 = vector.broadcast %74 : vector<1x1x64xf32> to vector<8x8x64xf32>
    %76 = arith.addf %72, %75 : vector<8x8x64xf32>
    %cst_18 = arith.constant 0.000000e+00 : f32
    %77 = vector.broadcast %cst_18 : f32 to vector<8x8x64xf32>
    %78 = arith.maximumf %76, %77 : vector<8x8x64xf32>
    %c0_19 = arith.constant 0 : index
    %c0_20 = arith.constant 0 : index
    %c0_21 = arith.constant 0 : index
    %c0_22 = arith.constant 0 : index
    %79 = vector.load %arg5[%c0_19, %c0_20, %c0_21, %c0_22] : memref<1x8x8x64xf32, #tpu.memory_space<vmem>>, vector<1x8x8x64xf32>
    %80 = vector.shape_cast %79 : vector<1x8x8x64xf32> to vector<8x8x64xf32>
    %81 = vector.shape_cast %78 : vector<8x8x64xf32> to vector<1x8x8x64xf32>
    tpu.vector_store %arg5[%c0_19, %c0_20, %c0_21, %c0_22], %81 {strides = array<i32>} : memref<1x8x8x64xf32, #tpu.memory_space<vmem>>, vector<1x8x8x64xf32>,
    return
  }
  func.func @transform_0(%arg0: i32) -> (i32, i32, i32, i32) {
    %c0_i32 = arith.constant 0 : i32
    %c0_i32_0 = arith.constant 0 : i32
    %c0_i32_1 = arith.constant 0 : i32
    %c0_i32_2 = arith.constant 0 : i32
    return %arg0, %c0_i32, %c0_i32_0, %c0_i32_1 : i32, i32, i32, i32
  }
  func.func @transform_1(%arg0: i32) -> (i32, i32) {
    %c0_i32 = arith.constant 0 : i32
    %c0_i32_0 = arith.constant 0 : i32
    %c0_i32_1 = arith.constant 0 : i32
    return %c0_i32, %c0_i32_0 : i32, i32
  }
  func.func @transform_2(%arg0: i32) -> (i32, i32, i32) {
    %c0_i32 = arith.constant 0 : i32
    %c0_i32_0 = arith.constant 0 : i32
    %c0_i32_1 = arith.constant 0 : i32
    %c0_i32_2 = arith.constant 0 : i32
    return %c0_i32, %c0_i32_0, %c0_i32_1 : i32, i32, i32
  }
  func.func @transform_3(%arg0: i32) -> (i32, i32) {
    %c0_i32 = arith.constant 0 : i32
    %c0_i32_0 = arith.constant 0 : i32
    %c0_i32_1 = arith.constant 0 : i32
    return %c0_i32, %c0_i32_0 : i32, i32
  }
  func.func @transform_4(%arg0: i32) -> (i32, i32, i32, i32) {
    %c0_i32 = arith.constant 0 : i32
    %c0_i32_0 = arith.constant 0 : i32
    %c0_i32_1 = arith.constant 0 : i32
    %c0_i32_2 = arith.constant 0 : i32
    return %arg0, %c0_i32, %c0_i32_0, %c0_i32_1 : i32, i32, i32, i32
  }
}

module attributes {stable_mosaic.version = 11 : i64} {
  func.func @_lightconv_level_kernel(%arg0: i32, %arg1: memref<1x8x8x128xf32, #tpu.memory_space<vmem>>, %arg2: memref<128x96xf32, #tpu.memory_space<vmem>>, %arg3: memref<3x3x96xf32, #tpu.memory_space<vmem>>, %arg4: memref<1x96xf32, #tpu.memory_space<vmem>>, %arg5: memref<1x8x8x96xf32, #tpu.memory_space<vmem>>, %arg6: memref<10x17x96xf32, #tpu.memory_space<vmem>>) attributes {dimension_semantics = [#tpu.dimension_semantics<parallel>], iteration_bounds = array<i64: 2>, scalar_prefetch = 0 : i64, scratch_operands = 1 : i64, tpu.core_type = #tpu.core_type<tc>, window_params = [{transform_indices = @transform_0, window_bounds = array<i64: 1, 8, 8, 128>}, {pipeline_mode = #tpu.pipeline_mode<synchronous>, transform_indices = @transform_1, window_bounds = array<i64: 128, 96>}, {pipeline_mode = #tpu.pipeline_mode<synchronous>, transform_indices = @transform_2, window_bounds = array<i64: 3, 3, 96>}, {pipeline_mode = #tpu.pipeline_mode<synchronous>, transform_indices = @transform_3, window_bounds = array<i64: 1, 96>}, {transform_indices = @transform_4, window_bounds = array<i64: 1, 8, 8, 96>}]} {
    %c0 = arith.constant 0 : index
    %c0_0 = arith.constant 0 : index
    %c0_1 = arith.constant 0 : index
    %c0_2 = arith.constant 0 : index
    %0 = vector.load %arg1[%c0, %c0_0, %c0_1, %c0_2] : memref<1x8x8x128xf32, #tpu.memory_space<vmem>>, vector<1x8x8x128xf32>
    %1 = vector.shape_cast %0 : vector<1x8x8x128xf32> to vector<8x8x128xf32>
    %2 = vector.shape_cast %1 : vector<8x8x128xf32> to vector<64x128xf32>
    %c0_3 = arith.constant 0 : index
    %c0_4 = arith.constant 0 : index
    %3 = vector.load %arg2[%c0_3, %c0_4] : memref<128x96xf32, #tpu.memory_space<vmem>>, vector<128x96xf32>
    %cst = arith.constant dense<0.000000e+00> : vector<64x96xf32>
    %4 = tpu.matmul %2, %3, %cst {dimension_numbers = #tpu.dot_dimension_numbers<[1], [0], [0], [1], [0, 0, 1, 1], [], []>} : vector<64x128xf32>, vector<128x96xf32>, vector<64x96xf32> -> vector<64x96xf32>
    %cst_5 = arith.constant 0.000000e+00 : f32
    %5 = vector.broadcast %cst_5 : f32 to vector<10x17x96xf32>
    %c0_6 = arith.constant 0 : index
    %c0_7 = arith.constant 0 : index
    %c0_8 = arith.constant 0 : index
    %6 = vector.load %arg6[%c0_6, %c0_7, %c0_8] : memref<10x17x96xf32, #tpu.memory_space<vmem>>, vector<10x17x96xf32>
    tpu.vector_store %arg6[%c0_6, %c0_7, %c0_8], %5 {strides = array<i32>} : memref<10x17x96xf32, #tpu.memory_space<vmem>>, vector<10x17x96xf32>,
    %7 = vector.shape_cast %4 : vector<64x96xf32> to vector<8x8x96xf32>
    %c1 = arith.constant 1 : index
    %c8 = arith.constant 8 : index
    %c0_9 = arith.constant 0 : index
    %8 = vector.load %arg6[%c1, %c8, %c0_9] : memref<10x17x96xf32, #tpu.memory_space<vmem>>, vector<8x8x96xf32>
    tpu.vector_store %arg6[%c1, %c8, %c0_9], %7 {strides = array<i32>} : memref<10x17x96xf32, #tpu.memory_space<vmem>>, vector<8x8x96xf32>,
    %c0_10 = arith.constant 0 : index
    %c0_11 = arith.constant 0 : index
    %c0_12 = arith.constant 0 : index
    %9 = vector.load %arg6[%c0_10, %c0_11, %c0_12] : memref<10x17x96xf32, #tpu.memory_space<vmem>>, vector<10x17x96xf32>
    %c0_13 = arith.constant 0 : index
    %c0_14 = arith.constant 0 : index
    %c0_15 = arith.constant 0 : index
    %10 = vector.load %arg3[%c0_13, %c0_14, %c0_15] : memref<3x3x96xf32, #tpu.memory_space<vmem>>, vector<3x3x96xf32>
    %11 = vector.extract_strided_slice %9 {offsets = [0, 7, 0], sizes = [8, 8, 96], strides = [1, 1, 1]} : vector<10x17x96xf32> to vector<8x8x96xf32>
    %12 = vector.extract_strided_slice %10 {offsets = [0, 0, 0], sizes = [1, 1, 96], strides = [1, 1, 1]} : vector<3x3x96xf32> to vector<1x1x96xf32>
    %13 = vector.shape_cast %12 : vector<1x1x96xf32> to vector<96xf32>
    %14 = vector.shape_cast %13 : vector<96xf32> to vector<1x1x96xf32>
    %15 = vector.broadcast %14 : vector<1x1x96xf32> to vector<8x8x96xf32>
    %16 = arith.mulf %11, %15 : vector<8x8x96xf32>
    %17 = vector.extract_strided_slice %9 {offsets = [0, 8, 0], sizes = [8, 8, 96], strides = [1, 1, 1]} : vector<10x17x96xf32> to vector<8x8x96xf32>
    %18 = vector.extract_strided_slice %10 {offsets = [0, 1, 0], sizes = [1, 1, 96], strides = [1, 1, 1]} : vector<3x3x96xf32> to vector<1x1x96xf32>
    %19 = vector.shape_cast %18 : vector<1x1x96xf32> to vector<96xf32>
    %20 = vector.shape_cast %19 : vector<96xf32> to vector<1x1x96xf32>
    %21 = vector.broadcast %20 : vector<1x1x96xf32> to vector<8x8x96xf32>
    %22 = arith.mulf %17, %21 : vector<8x8x96xf32>
    %23 = arith.addf %16, %22 : vector<8x8x96xf32>
    %24 = vector.extract_strided_slice %9 {offsets = [0, 9, 0], sizes = [8, 8, 96], strides = [1, 1, 1]} : vector<10x17x96xf32> to vector<8x8x96xf32>
    %25 = vector.extract_strided_slice %10 {offsets = [0, 2, 0], sizes = [1, 1, 96], strides = [1, 1, 1]} : vector<3x3x96xf32> to vector<1x1x96xf32>
    %26 = vector.shape_cast %25 : vector<1x1x96xf32> to vector<96xf32>
    %27 = vector.shape_cast %26 : vector<96xf32> to vector<1x1x96xf32>
    %28 = vector.broadcast %27 : vector<1x1x96xf32> to vector<8x8x96xf32>
    %29 = arith.mulf %24, %28 : vector<8x8x96xf32>
    %30 = arith.addf %23, %29 : vector<8x8x96xf32>
    %31 = vector.extract_strided_slice %9 {offsets = [1, 7, 0], sizes = [8, 8, 96], strides = [1, 1, 1]} : vector<10x17x96xf32> to vector<8x8x96xf32>
    %32 = vector.extract_strided_slice %10 {offsets = [1, 0, 0], sizes = [1, 1, 96], strides = [1, 1, 1]} : vector<3x3x96xf32> to vector<1x1x96xf32>
    %33 = vector.shape_cast %32 : vector<1x1x96xf32> to vector<96xf32>
    %34 = vector.shape_cast %33 : vector<96xf32> to vector<1x1x96xf32>
    %35 = vector.broadcast %34 : vector<1x1x96xf32> to vector<8x8x96xf32>
    %36 = arith.mulf %31, %35 : vector<8x8x96xf32>
    %37 = arith.addf %30, %36 : vector<8x8x96xf32>
    %38 = vector.extract_strided_slice %9 {offsets = [1, 8, 0], sizes = [8, 8, 96], strides = [1, 1, 1]} : vector<10x17x96xf32> to vector<8x8x96xf32>
    %39 = vector.extract_strided_slice %10 {offsets = [1, 1, 0], sizes = [1, 1, 96], strides = [1, 1, 1]} : vector<3x3x96xf32> to vector<1x1x96xf32>
    %40 = vector.shape_cast %39 : vector<1x1x96xf32> to vector<96xf32>
    %41 = vector.shape_cast %40 : vector<96xf32> to vector<1x1x96xf32>
    %42 = vector.broadcast %41 : vector<1x1x96xf32> to vector<8x8x96xf32>
    %43 = arith.mulf %38, %42 : vector<8x8x96xf32>
    %44 = arith.addf %37, %43 : vector<8x8x96xf32>
    %45 = vector.extract_strided_slice %9 {offsets = [1, 9, 0], sizes = [8, 8, 96], strides = [1, 1, 1]} : vector<10x17x96xf32> to vector<8x8x96xf32>
    %46 = vector.extract_strided_slice %10 {offsets = [1, 2, 0], sizes = [1, 1, 96], strides = [1, 1, 1]} : vector<3x3x96xf32> to vector<1x1x96xf32>
    %47 = vector.shape_cast %46 : vector<1x1x96xf32> to vector<96xf32>
    %48 = vector.shape_cast %47 : vector<96xf32> to vector<1x1x96xf32>
    %49 = vector.broadcast %48 : vector<1x1x96xf32> to vector<8x8x96xf32>
    %50 = arith.mulf %45, %49 : vector<8x8x96xf32>
    %51 = arith.addf %44, %50 : vector<8x8x96xf32>
    %52 = vector.extract_strided_slice %9 {offsets = [2, 7, 0], sizes = [8, 8, 96], strides = [1, 1, 1]} : vector<10x17x96xf32> to vector<8x8x96xf32>
    %53 = vector.extract_strided_slice %10 {offsets = [2, 0, 0], sizes = [1, 1, 96], strides = [1, 1, 1]} : vector<3x3x96xf32> to vector<1x1x96xf32>
    %54 = vector.shape_cast %53 : vector<1x1x96xf32> to vector<96xf32>
    %55 = vector.shape_cast %54 : vector<96xf32> to vector<1x1x96xf32>
    %56 = vector.broadcast %55 : vector<1x1x96xf32> to vector<8x8x96xf32>
    %57 = arith.mulf %52, %56 : vector<8x8x96xf32>
    %58 = arith.addf %51, %57 : vector<8x8x96xf32>
    %59 = vector.extract_strided_slice %9 {offsets = [2, 8, 0], sizes = [8, 8, 96], strides = [1, 1, 1]} : vector<10x17x96xf32> to vector<8x8x96xf32>
    %60 = vector.extract_strided_slice %10 {offsets = [2, 1, 0], sizes = [1, 1, 96], strides = [1, 1, 1]} : vector<3x3x96xf32> to vector<1x1x96xf32>
    %61 = vector.shape_cast %60 : vector<1x1x96xf32> to vector<96xf32>
    %62 = vector.shape_cast %61 : vector<96xf32> to vector<1x1x96xf32>
    %63 = vector.broadcast %62 : vector<1x1x96xf32> to vector<8x8x96xf32>
    %64 = arith.mulf %59, %63 : vector<8x8x96xf32>
    %65 = arith.addf %58, %64 : vector<8x8x96xf32>
    %66 = vector.extract_strided_slice %9 {offsets = [2, 9, 0], sizes = [8, 8, 96], strides = [1, 1, 1]} : vector<10x17x96xf32> to vector<8x8x96xf32>
    %67 = vector.extract_strided_slice %10 {offsets = [2, 2, 0], sizes = [1, 1, 96], strides = [1, 1, 1]} : vector<3x3x96xf32> to vector<1x1x96xf32>
    %68 = vector.shape_cast %67 : vector<1x1x96xf32> to vector<96xf32>
    %69 = vector.shape_cast %68 : vector<96xf32> to vector<1x1x96xf32>
    %70 = vector.broadcast %69 : vector<1x1x96xf32> to vector<8x8x96xf32>
    %71 = arith.mulf %66, %70 : vector<8x8x96xf32>
    %72 = arith.addf %65, %71 : vector<8x8x96xf32>
    %c0_16 = arith.constant 0 : index
    %c0_17 = arith.constant 0 : index
    %73 = vector.load %arg4[%c0_16, %c0_17] : memref<1x96xf32, #tpu.memory_space<vmem>>, vector<1x96xf32>
    %74 = vector.shape_cast %73 : vector<1x96xf32> to vector<1x1x96xf32>
    %75 = vector.broadcast %74 : vector<1x1x96xf32> to vector<8x8x96xf32>
    %76 = arith.addf %72, %75 : vector<8x8x96xf32>
    %cst_18 = arith.constant 0.000000e+00 : f32
    %77 = vector.broadcast %cst_18 : f32 to vector<8x8x96xf32>
    %78 = arith.maximumf %76, %77 : vector<8x8x96xf32>
    %c0_19 = arith.constant 0 : index
    %c0_20 = arith.constant 0 : index
    %c0_21 = arith.constant 0 : index
    %c0_22 = arith.constant 0 : index
    %79 = vector.load %arg5[%c0_19, %c0_20, %c0_21, %c0_22] : memref<1x8x8x96xf32, #tpu.memory_space<vmem>>, vector<1x8x8x96xf32>
    %80 = vector.shape_cast %79 : vector<1x8x8x96xf32> to vector<8x8x96xf32>
    %81 = vector.shape_cast %78 : vector<8x8x96xf32> to vector<1x8x8x96xf32>
    tpu.vector_store %arg5[%c0_19, %c0_20, %c0_21, %c0_22], %81 {strides = array<i32>} : memref<1x8x8x96xf32, #tpu.memory_space<vmem>>, vector<1x8x8x96xf32>,
    return
  }
  func.func @transform_0(%arg0: i32) -> (i32, i32, i32, i32) {
    %c0_i32 = arith.constant 0 : i32
    %c0_i32_0 = arith.constant 0 : i32
    %c0_i32_1 = arith.constant 0 : i32
    %c0_i32_2 = arith.constant 0 : i32
    return %arg0, %c0_i32, %c0_i32_0, %c0_i32_1 : i32, i32, i32, i32
  }
  func.func @transform_1(%arg0: i32) -> (i32, i32) {
    %c0_i32 = arith.constant 0 : i32
    %c0_i32_0 = arith.constant 0 : i32
    %c0_i32_1 = arith.constant 0 : i32
    return %c0_i32, %c0_i32_0 : i32, i32
  }
  func.func @transform_2(%arg0: i32) -> (i32, i32, i32) {
    %c0_i32 = arith.constant 0 : i32
    %c0_i32_0 = arith.constant 0 : i32
    %c0_i32_1 = arith.constant 0 : i32
    %c0_i32_2 = arith.constant 0 : i32
    return %c0_i32, %c0_i32_0, %c0_i32_1 : i32, i32, i32
  }
  func.func @transform_3(%arg0: i32) -> (i32, i32) {
    %c0_i32 = arith.constant 0 : i32
    %c0_i32_0 = arith.constant 0 : i32
    %c0_i32_1 = arith.constant 0 : i32
    return %c0_i32, %c0_i32_0 : i32, i32
  }
  func.func @transform_4(%arg0: i32) -> (i32, i32, i32, i32) {
    %c0_i32 = arith.constant 0 : i32
    %c0_i32_0 = arith.constant 0 : i32
    %c0_i32_1 = arith.constant 0 : i32
    %c0_i32_2 = arith.constant 0 : i32
    return %arg0, %c0_i32, %c0_i32_0, %c0_i32_1 : i32, i32, i32, i32
  }
}

module attributes {stable_mosaic.version = 11 : i64} {
  func.func @_lightconv_level_kernel(%arg0: i32, %arg1: memref<1x8x8x64xf32, #tpu.memory_space<vmem>>, %arg2: memref<64x32xf32, #tpu.memory_space<vmem>>, %arg3: memref<3x3x32xf32, #tpu.memory_space<vmem>>, %arg4: memref<1x32xf32, #tpu.memory_space<vmem>>, %arg5: memref<1x8x8x32xf32, #tpu.memory_space<vmem>>, %arg6: memref<10x17x32xf32, #tpu.memory_space<vmem>>) attributes {dimension_semantics = [#tpu.dimension_semantics<parallel>], iteration_bounds = array<i64: 2>, scalar_prefetch = 0 : i64, scratch_operands = 1 : i64, tpu.core_type = #tpu.core_type<tc>, window_params = [{transform_indices = @transform_0, window_bounds = array<i64: 1, 8, 8, 64>}, {pipeline_mode = #tpu.pipeline_mode<synchronous>, transform_indices = @transform_1, window_bounds = array<i64: 64, 32>}, {pipeline_mode = #tpu.pipeline_mode<synchronous>, transform_indices = @transform_2, window_bounds = array<i64: 3, 3, 32>}, {pipeline_mode = #tpu.pipeline_mode<synchronous>, transform_indices = @transform_3, window_bounds = array<i64: 1, 32>}, {transform_indices = @transform_4, window_bounds = array<i64: 1, 8, 8, 32>}]} {
    %c0 = arith.constant 0 : index
    %c0_0 = arith.constant 0 : index
    %c0_1 = arith.constant 0 : index
    %c0_2 = arith.constant 0 : index
    %0 = vector.load %arg1[%c0, %c0_0, %c0_1, %c0_2] : memref<1x8x8x64xf32, #tpu.memory_space<vmem>>, vector<1x8x8x64xf32>
    %1 = vector.shape_cast %0 : vector<1x8x8x64xf32> to vector<8x8x64xf32>
    %2 = vector.shape_cast %1 : vector<8x8x64xf32> to vector<64x64xf32>
    %c0_3 = arith.constant 0 : index
    %c0_4 = arith.constant 0 : index
    %3 = vector.load %arg2[%c0_3, %c0_4] : memref<64x32xf32, #tpu.memory_space<vmem>>, vector<64x32xf32>
    %cst = arith.constant dense<0.000000e+00> : vector<64x32xf32>
    %4 = tpu.matmul %2, %3, %cst {dimension_numbers = #tpu.dot_dimension_numbers<[1], [0], [0], [1], [0, 0, 1, 1], [], []>} : vector<64x64xf32>, vector<64x32xf32>, vector<64x32xf32> -> vector<64x32xf32>
    %cst_5 = arith.constant 0.000000e+00 : f32
    %5 = vector.broadcast %cst_5 : f32 to vector<10x17x32xf32>
    %c0_6 = arith.constant 0 : index
    %c0_7 = arith.constant 0 : index
    %c0_8 = arith.constant 0 : index
    %6 = vector.load %arg6[%c0_6, %c0_7, %c0_8] : memref<10x17x32xf32, #tpu.memory_space<vmem>>, vector<10x17x32xf32>
    tpu.vector_store %arg6[%c0_6, %c0_7, %c0_8], %5 {strides = array<i32>} : memref<10x17x32xf32, #tpu.memory_space<vmem>>, vector<10x17x32xf32>,
    %7 = vector.shape_cast %4 : vector<64x32xf32> to vector<8x8x32xf32>
    %c1 = arith.constant 1 : index
    %c8 = arith.constant 8 : index
    %c0_9 = arith.constant 0 : index
    %8 = vector.load %arg6[%c1, %c8, %c0_9] : memref<10x17x32xf32, #tpu.memory_space<vmem>>, vector<8x8x32xf32>
    tpu.vector_store %arg6[%c1, %c8, %c0_9], %7 {strides = array<i32>} : memref<10x17x32xf32, #tpu.memory_space<vmem>>, vector<8x8x32xf32>,
    %c0_10 = arith.constant 0 : index
    %c0_11 = arith.constant 0 : index
    %c0_12 = arith.constant 0 : index
    %9 = vector.load %arg6[%c0_10, %c0_11, %c0_12] : memref<10x17x32xf32, #tpu.memory_space<vmem>>, vector<10x17x32xf32>
    %c0_13 = arith.constant 0 : index
    %c0_14 = arith.constant 0 : index
    %c0_15 = arith.constant 0 : index
    %10 = vector.load %arg3[%c0_13, %c0_14, %c0_15] : memref<3x3x32xf32, #tpu.memory_space<vmem>>, vector<3x3x32xf32>
    %11 = vector.extract_strided_slice %9 {offsets = [0, 7, 0], sizes = [8, 8, 32], strides = [1, 1, 1]} : vector<10x17x32xf32> to vector<8x8x32xf32>
    %12 = vector.extract_strided_slice %10 {offsets = [0, 0, 0], sizes = [1, 1, 32], strides = [1, 1, 1]} : vector<3x3x32xf32> to vector<1x1x32xf32>
    %13 = vector.shape_cast %12 : vector<1x1x32xf32> to vector<32xf32>
    %14 = vector.shape_cast %13 : vector<32xf32> to vector<1x1x32xf32>
    %15 = vector.broadcast %14 : vector<1x1x32xf32> to vector<8x8x32xf32>
    %16 = arith.mulf %11, %15 : vector<8x8x32xf32>
    %17 = vector.extract_strided_slice %9 {offsets = [0, 8, 0], sizes = [8, 8, 32], strides = [1, 1, 1]} : vector<10x17x32xf32> to vector<8x8x32xf32>
    %18 = vector.extract_strided_slice %10 {offsets = [0, 1, 0], sizes = [1, 1, 32], strides = [1, 1, 1]} : vector<3x3x32xf32> to vector<1x1x32xf32>
    %19 = vector.shape_cast %18 : vector<1x1x32xf32> to vector<32xf32>
    %20 = vector.shape_cast %19 : vector<32xf32> to vector<1x1x32xf32>
    %21 = vector.broadcast %20 : vector<1x1x32xf32> to vector<8x8x32xf32>
    %22 = arith.mulf %17, %21 : vector<8x8x32xf32>
    %23 = arith.addf %16, %22 : vector<8x8x32xf32>
    %24 = vector.extract_strided_slice %9 {offsets = [0, 9, 0], sizes = [8, 8, 32], strides = [1, 1, 1]} : vector<10x17x32xf32> to vector<8x8x32xf32>
    %25 = vector.extract_strided_slice %10 {offsets = [0, 2, 0], sizes = [1, 1, 32], strides = [1, 1, 1]} : vector<3x3x32xf32> to vector<1x1x32xf32>
    %26 = vector.shape_cast %25 : vector<1x1x32xf32> to vector<32xf32>
    %27 = vector.shape_cast %26 : vector<32xf32> to vector<1x1x32xf32>
    %28 = vector.broadcast %27 : vector<1x1x32xf32> to vector<8x8x32xf32>
    %29 = arith.mulf %24, %28 : vector<8x8x32xf32>
    %30 = arith.addf %23, %29 : vector<8x8x32xf32>
    %31 = vector.extract_strided_slice %9 {offsets = [1, 7, 0], sizes = [8, 8, 32], strides = [1, 1, 1]} : vector<10x17x32xf32> to vector<8x8x32xf32>
    %32 = vector.extract_strided_slice %10 {offsets = [1, 0, 0], sizes = [1, 1, 32], strides = [1, 1, 1]} : vector<3x3x32xf32> to vector<1x1x32xf32>
    %33 = vector.shape_cast %32 : vector<1x1x32xf32> to vector<32xf32>
    %34 = vector.shape_cast %33 : vector<32xf32> to vector<1x1x32xf32>
    %35 = vector.broadcast %34 : vector<1x1x32xf32> to vector<8x8x32xf32>
    %36 = arith.mulf %31, %35 : vector<8x8x32xf32>
    %37 = arith.addf %30, %36 : vector<8x8x32xf32>
    %38 = vector.extract_strided_slice %9 {offsets = [1, 8, 0], sizes = [8, 8, 32], strides = [1, 1, 1]} : vector<10x17x32xf32> to vector<8x8x32xf32>
    %39 = vector.extract_strided_slice %10 {offsets = [1, 1, 0], sizes = [1, 1, 32], strides = [1, 1, 1]} : vector<3x3x32xf32> to vector<1x1x32xf32>
    %40 = vector.shape_cast %39 : vector<1x1x32xf32> to vector<32xf32>
    %41 = vector.shape_cast %40 : vector<32xf32> to vector<1x1x32xf32>
    %42 = vector.broadcast %41 : vector<1x1x32xf32> to vector<8x8x32xf32>
    %43 = arith.mulf %38, %42 : vector<8x8x32xf32>
    %44 = arith.addf %37, %43 : vector<8x8x32xf32>
    %45 = vector.extract_strided_slice %9 {offsets = [1, 9, 0], sizes = [8, 8, 32], strides = [1, 1, 1]} : vector<10x17x32xf32> to vector<8x8x32xf32>
    %46 = vector.extract_strided_slice %10 {offsets = [1, 2, 0], sizes = [1, 1, 32], strides = [1, 1, 1]} : vector<3x3x32xf32> to vector<1x1x32xf32>
    %47 = vector.shape_cast %46 : vector<1x1x32xf32> to vector<32xf32>
    %48 = vector.shape_cast %47 : vector<32xf32> to vector<1x1x32xf32>
    %49 = vector.broadcast %48 : vector<1x1x32xf32> to vector<8x8x32xf32>
    %50 = arith.mulf %45, %49 : vector<8x8x32xf32>
    %51 = arith.addf %44, %50 : vector<8x8x32xf32>
    %52 = vector.extract_strided_slice %9 {offsets = [2, 7, 0], sizes = [8, 8, 32], strides = [1, 1, 1]} : vector<10x17x32xf32> to vector<8x8x32xf32>
    %53 = vector.extract_strided_slice %10 {offsets = [2, 0, 0], sizes = [1, 1, 32], strides = [1, 1, 1]} : vector<3x3x32xf32> to vector<1x1x32xf32>
    %54 = vector.shape_cast %53 : vector<1x1x32xf32> to vector<32xf32>
    %55 = vector.shape_cast %54 : vector<32xf32> to vector<1x1x32xf32>
    %56 = vector.broadcast %55 : vector<1x1x32xf32> to vector<8x8x32xf32>
    %57 = arith.mulf %52, %56 : vector<8x8x32xf32>
    %58 = arith.addf %51, %57 : vector<8x8x32xf32>
    %59 = vector.extract_strided_slice %9 {offsets = [2, 8, 0], sizes = [8, 8, 32], strides = [1, 1, 1]} : vector<10x17x32xf32> to vector<8x8x32xf32>
    %60 = vector.extract_strided_slice %10 {offsets = [2, 1, 0], sizes = [1, 1, 32], strides = [1, 1, 1]} : vector<3x3x32xf32> to vector<1x1x32xf32>
    %61 = vector.shape_cast %60 : vector<1x1x32xf32> to vector<32xf32>
    %62 = vector.shape_cast %61 : vector<32xf32> to vector<1x1x32xf32>
    %63 = vector.broadcast %62 : vector<1x1x32xf32> to vector<8x8x32xf32>
    %64 = arith.mulf %59, %63 : vector<8x8x32xf32>
    %65 = arith.addf %58, %64 : vector<8x8x32xf32>
    %66 = vector.extract_strided_slice %9 {offsets = [2, 9, 0], sizes = [8, 8, 32], strides = [1, 1, 1]} : vector<10x17x32xf32> to vector<8x8x32xf32>
    %67 = vector.extract_strided_slice %10 {offsets = [2, 2, 0], sizes = [1, 1, 32], strides = [1, 1, 1]} : vector<3x3x32xf32> to vector<1x1x32xf32>
    %68 = vector.shape_cast %67 : vector<1x1x32xf32> to vector<32xf32>
    %69 = vector.shape_cast %68 : vector<32xf32> to vector<1x1x32xf32>
    %70 = vector.broadcast %69 : vector<1x1x32xf32> to vector<8x8x32xf32>
    %71 = arith.mulf %66, %70 : vector<8x8x32xf32>
    %72 = arith.addf %65, %71 : vector<8x8x32xf32>
    %c0_16 = arith.constant 0 : index
    %c0_17 = arith.constant 0 : index
    %73 = vector.load %arg4[%c0_16, %c0_17] : memref<1x32xf32, #tpu.memory_space<vmem>>, vector<1x32xf32>
    %74 = vector.shape_cast %73 : vector<1x32xf32> to vector<1x1x32xf32>
    %75 = vector.broadcast %74 : vector<1x1x32xf32> to vector<8x8x32xf32>
    %76 = arith.addf %72, %75 : vector<8x8x32xf32>
    %cst_18 = arith.constant 0.000000e+00 : f32
    %77 = vector.broadcast %cst_18 : f32 to vector<8x8x32xf32>
    %78 = arith.maximumf %76, %77 : vector<8x8x32xf32>
    %c0_19 = arith.constant 0 : index
    %c0_20 = arith.constant 0 : index
    %c0_21 = arith.constant 0 : index
    %c0_22 = arith.constant 0 : index
    %79 = vector.load %arg5[%c0_19, %c0_20, %c0_21, %c0_22] : memref<1x8x8x32xf32, #tpu.memory_space<vmem>>, vector<1x8x8x32xf32>
    %80 = vector.shape_cast %79 : vector<1x8x8x32xf32> to vector<8x8x32xf32>
    %81 = vector.shape_cast %78 : vector<8x8x32xf32> to vector<1x8x8x32xf32>
    tpu.vector_store %arg5[%c0_19, %c0_20, %c0_21, %c0_22], %81 {strides = array<i32>} : memref<1x8x8x32xf32, #tpu.memory_space<vmem>>, vector<1x8x8x32xf32>,
    return
  }
  func.func @transform_0(%arg0: i32) -> (i32, i32, i32, i32) {
    %c0_i32 = arith.constant 0 : i32
    %c0_i32_0 = arith.constant 0 : i32
    %c0_i32_1 = arith.constant 0 : i32
    %c0_i32_2 = arith.constant 0 : i32
    return %arg0, %c0_i32, %c0_i32_0, %c0_i32_1 : i32, i32, i32, i32
  }
  func.func @transform_1(%arg0: i32) -> (i32, i32) {
    %c0_i32 = arith.constant 0 : i32
    %c0_i32_0 = arith.constant 0 : i32
    %c0_i32_1 = arith.constant 0 : i32
    return %c0_i32, %c0_i32_0 : i32, i32
  }
  func.func @transform_2(%arg0: i32) -> (i32, i32, i32) {
    %c0_i32 = arith.constant 0 : i32
    %c0_i32_0 = arith.constant 0 : i32
    %c0_i32_1 = arith.constant 0 : i32
    %c0_i32_2 = arith.constant 0 : i32
    return %c0_i32, %c0_i32_0, %c0_i32_1 : i32, i32, i32
  }
  func.func @transform_3(%arg0: i32) -> (i32, i32) {
    %c0_i32 = arith.constant 0 : i32
    %c0_i32_0 = arith.constant 0 : i32
    %c0_i32_1 = arith.constant 0 : i32
    return %c0_i32, %c0_i32_0 : i32, i32
  }
  func.func @transform_4(%arg0: i32) -> (i32, i32, i32, i32) {
    %c0_i32 = arith.constant 0 : i32
    %c0_i32_0 = arith.constant 0 : i32
    %c0_i32_1 = arith.constant 0 : i32
    %c0_i32_2 = arith.constant 0 : i32
    return %arg0, %c0_i32, %c0_i32_0, %c0_i32_1 : i32, i32, i32, i32
  }
}

module attributes {stable_mosaic.version = 11 : i64} {
  func.func @_tail_kernel(%arg0: i32, %arg1: memref<1x8x8x32xf32, #tpu.memory_space<vmem>>, %arg2: memref<1x8x8x128xf32, #tpu.memory_space<vmem>>, %arg3: memref<1x8x8x96xf32, #tpu.memory_space<vmem>>, %arg4: memref<1x8x8x64xf32, #tpu.memory_space<vmem>>, %arg5: memref<1x8x8x32xf32, #tpu.memory_space<vmem>>, %arg6: memref<32x8xf32, #tpu.memory_space<vmem>>, %arg7: memref<1x8xf32, #tpu.memory_space<vmem>>, %arg8: memref<8x32xf32, #tpu.memory_space<vmem>>, %arg9: memref<1x32xf32, #tpu.memory_space<vmem>>, %arg10: memref<32x128xf32, #tpu.memory_space<vmem>>, %arg11: memref<1x128xf32, #tpu.memory_space<vmem>>, %arg12: memref<32x128xf32, #tpu.memory_space<vmem>>, %arg13: memref<1x128xf32, #tpu.memory_space<vmem>>, %arg14: memref<1x8x8x128xf32, #tpu.memory_space<vmem>>) attributes {dimension_semantics = [#tpu.dimension_semantics<parallel>], iteration_bounds = array<i64: 2>, scalar_prefetch = 0 : i64, scratch_operands = 0 : i64, tpu.core_type = #tpu.core_type<tc>, window_params = [{transform_indices = @transform_0, window_bounds = array<i64: 1, 8, 8, 32>}, {transform_indices = @transform_1, window_bounds = array<i64: 1, 8, 8, 128>}, {transform_indices = @transform_2, window_bounds = array<i64: 1, 8, 8, 96>}, {transform_indices = @transform_3, window_bounds = array<i64: 1, 8, 8, 64>}, {transform_indices = @transform_4, window_bounds = array<i64: 1, 8, 8, 32>}, {pipeline_mode = #tpu.pipeline_mode<synchronous>, transform_indices = @transform_5, window_bounds = array<i64: 32, 8>}, {pipeline_mode = #tpu.pipeline_mode<synchronous>, transform_indices = @transform_6, window_bounds = array<i64: 1, 8>}, {pipeline_mode = #tpu.pipeline_mode<synchronous>, transform_indices = @transform_7, window_bounds = array<i64: 8, 32>}, {pipeline_mode = #tpu.pipeline_mode<synchronous>, transform_indices = @transform_8, window_bounds = array<i64: 1, 32>}, {pipeline_mode = #tpu.pipeline_mode<synchronous>, transform_indices = @transform_9, window_bounds = array<i64: 32, 128>}, {pipeline_mode = #tpu.pipeline_mode<synchronous>, transform_indices = @transform_10, window_bounds = array<i64: 1, 128>}, {pipeline_mode = #tpu.pipeline_mode<synchronous>, transform_indices = @transform_11, window_bounds = array<i64: 32, 128>}, {pipeline_mode = #tpu.pipeline_mode<synchronous>, transform_indices = @transform_12, window_bounds = array<i64: 1, 128>}, {transform_indices = @transform_13, window_bounds = array<i64: 1, 8, 8, 128>}]} {
    %c0 = arith.constant 0 : index
    %c0_0 = arith.constant 0 : index
    %0 = vector.load %arg6[%c0, %c0_0] : memref<32x8xf32, #tpu.memory_space<vmem>>, vector<32x8xf32>
    %c0_1 = arith.constant 0 : index
    %c0_2 = arith.constant 0 : index
    %1 = vector.load %arg7[%c0_1, %c0_2] : memref<1x8xf32, #tpu.memory_space<vmem>>, vector<1x8xf32>
    %c0_3 = arith.constant 0 : index
    %c0_4 = arith.constant 0 : index
    %2 = vector.load %arg8[%c0_3, %c0_4] : memref<8x32xf32, #tpu.memory_space<vmem>>, vector<8x32xf32>
    %c0_5 = arith.constant 0 : index
    %c0_6 = arith.constant 0 : index
    %3 = vector.load %arg9[%c0_5, %c0_6] : memref<1x32xf32, #tpu.memory_space<vmem>>, vector<1x32xf32>
    %c0_7 = arith.constant 0 : index
    %c0_8 = arith.constant 0 : index
    %c0_9 = arith.constant 0 : index
    %c0_10 = arith.constant 0 : index
    %4 = vector.load %arg2[%c0_7, %c0_8, %c0_9, %c0_10] : memref<1x8x8x128xf32, #tpu.memory_space<vmem>>, vector<1x8x8x128xf32>
    %5 = vector.shape_cast %4 : vector<1x8x8x128xf32> to vector<8x8x128xf32>
    %6 = vector.extract_strided_slice %5 {offsets = [0, 0, 0], sizes = [8, 8, 32], strides = [1, 1, 1]} : vector<8x8x128xf32> to vector<8x8x32xf32>
    %cst = arith.constant dense<0.000000e+00> : vector<8x32xf32>
    %7 = vector.multi_reduction <add>, %6, %cst [0] : vector<8x8x32xf32> to vector<8x32xf32>
    %cst_11 = arith.constant dense<0.000000e+00> : vector<32xf32>
    %8 = vector.multi_reduction <add>, %7, %cst_11 [0] : vector<8x32xf32> to vector<32xf32>
    %9 = vector.shape_cast %8 : vector<32xf32> to vector<1x32xf32>
    %cst_12 = arith.constant 1.562500e-02 : f32
    %10 = vector.broadcast %cst_12 : f32 to vector<1x32xf32>
    %11 = arith.mulf %9, %10 : vector<1x32xf32>
    %cst_13 = arith.constant dense<0.000000e+00> : vector<1x8xf32>
    %12 = tpu.matmul %11, %0, %cst_13 {dimension_numbers = #tpu.dot_dimension_numbers<[1], [0], [0], [1], [0, 0, 1, 1], [], []>} : vector<1x32xf32>, vector<32x8xf32>, vector<1x8xf32> -> vector<1x8xf32>
    %13 = arith.addf %12, %1 : vector<1x8xf32>
    %cst_14 = arith.constant 0.000000e+00 : f32
    %14 = vector.broadcast %cst_14 : f32 to vector<1x8xf32>
    %15 = arith.maximumf %13, %14 : vector<1x8xf32>
    %cst_15 = arith.constant dense<0.000000e+00> : vector<1x32xf32>
    %16 = tpu.matmul %15, %2, %cst_15 {dimension_numbers = #tpu.dot_dimension_numbers<[1], [0], [0], [1], [0, 0, 1, 1], [], []>} : vector<1x8xf32>, vector<8x32xf32>, vector<1x32xf32> -> vector<1x32xf32>
    %17 = arith.addf %16, %3 : vector<1x32xf32>
    %18 = arith.negf %17 : vector<1x32xf32>
    %19 = math.exp %18 : vector<1x32xf32>
    %cst_16 = arith.constant 1.000000e+00 : f32
    %20 = vector.broadcast %cst_16 : f32 to vector<1x32xf32>
    %21 = arith.addf %20, %19 : vector<1x32xf32>
    %22 = arith.divf %20, %21 : vector<1x32xf32>
    %23 = vector.shape_cast %22 : vector<1x32xf32> to vector<1x1x32xf32>
    %24 = vector.broadcast %23 : vector<1x1x32xf32> to vector<8x8x32xf32>
    %25 = arith.mulf %6, %24 : vector<8x8x32xf32>
    %c0_17 = arith.constant 0 : index
    %c0_18 = arith.constant 0 : index
    %c0_19 = arith.constant 0 : index
    %c0_20 = arith.constant 0 : index
    %26 = vector.load %arg3[%c0_17, %c0_18, %c0_19, %c0_20] : memref<1x8x8x96xf32, #tpu.memory_space<vmem>>, vector<1x8x8x96xf32>
    %27 = vector.shape_cast %26 : vector<1x8x8x96xf32> to vector<8x8x96xf32>
    %28 = vector.extract_strided_slice %27 {offsets = [0, 0, 0], sizes = [8, 8, 32], strides = [1, 1, 1]} : vector<8x8x96xf32> to vector<8x8x32xf32>
    %cst_21 = arith.constant dense<0.000000e+00> : vector<8x32xf32>
    %29 = vector.multi_reduction <add>, %28, %cst_21 [0] : vector<8x8x32xf32> to vector<8x32xf32>
    %cst_22 = arith.constant dense<0.000000e+00> : vector<32xf32>
    %30 = vector.multi_reduction <add>, %29, %cst_22 [0] : vector<8x32xf32> to vector<32xf32>
    %31 = vector.shape_cast %30 : vector<32xf32> to vector<1x32xf32>
    %cst_23 = arith.constant 1.562500e-02 : f32
    %32 = vector.broadcast %cst_23 : f32 to vector<1x32xf32>
    %33 = arith.mulf %31, %32 : vector<1x32xf32>
    %cst_24 = arith.constant dense<0.000000e+00> : vector<1x8xf32>
    %34 = tpu.matmul %33, %0, %cst_24 {dimension_numbers = #tpu.dot_dimension_numbers<[1], [0], [0], [1], [0, 0, 1, 1], [], []>} : vector<1x32xf32>, vector<32x8xf32>, vector<1x8xf32> -> vector<1x8xf32>
    %35 = arith.addf %34, %1 : vector<1x8xf32>
    %cst_25 = arith.constant 0.000000e+00 : f32
    %36 = vector.broadcast %cst_25 : f32 to vector<1x8xf32>
    %37 = arith.maximumf %35, %36 : vector<1x8xf32>
    %cst_26 = arith.constant dense<0.000000e+00> : vector<1x32xf32>
    %38 = tpu.matmul %37, %2, %cst_26 {dimension_numbers = #tpu.dot_dimension_numbers<[1], [0], [0], [1], [0, 0, 1, 1], [], []>} : vector<1x8xf32>, vector<8x32xf32>, vector<1x32xf32> -> vector<1x32xf32>
    %39 = arith.addf %38, %3 : vector<1x32xf32>
    %40 = arith.negf %39 : vector<1x32xf32>
    %41 = math.exp %40 : vector<1x32xf32>
    %cst_27 = arith.constant 1.000000e+00 : f32
    %42 = vector.broadcast %cst_27 : f32 to vector<1x32xf32>
    %43 = arith.addf %42, %41 : vector<1x32xf32>
    %44 = arith.divf %42, %43 : vector<1x32xf32>
    %45 = vector.shape_cast %44 : vector<1x32xf32> to vector<1x1x32xf32>
    %46 = vector.broadcast %45 : vector<1x1x32xf32> to vector<8x8x32xf32>
    %47 = arith.mulf %28, %46 : vector<8x8x32xf32>
    %48 = arith.addf %25, %47 : vector<8x8x32xf32>
    %c0_28 = arith.constant 0 : index
    %c0_29 = arith.constant 0 : index
    %c0_30 = arith.constant 0 : index
    %c0_31 = arith.constant 0 : index
    %49 = vector.load %arg4[%c0_28, %c0_29, %c0_30, %c0_31] : memref<1x8x8x64xf32, #tpu.memory_space<vmem>>, vector<1x8x8x64xf32>
    %50 = vector.shape_cast %49 : vector<1x8x8x64xf32> to vector<8x8x64xf32>
    %51 = vector.extract_strided_slice %50 {offsets = [0, 0, 0], sizes = [8, 8, 32], strides = [1, 1, 1]} : vector<8x8x64xf32> to vector<8x8x32xf32>
    %cst_32 = arith.constant dense<0.000000e+00> : vector<8x32xf32>
    %52 = vector.multi_reduction <add>, %51, %cst_32 [0] : vector<8x8x32xf32> to vector<8x32xf32>
    %cst_33 = arith.constant dense<0.000000e+00> : vector<32xf32>
    %53 = vector.multi_reduction <add>, %52, %cst_33 [0] : vector<8x32xf32> to vector<32xf32>
    %54 = vector.shape_cast %53 : vector<32xf32> to vector<1x32xf32>
    %cst_34 = arith.constant 1.562500e-02 : f32
    %55 = vector.broadcast %cst_34 : f32 to vector<1x32xf32>
    %56 = arith.mulf %54, %55 : vector<1x32xf32>
    %cst_35 = arith.constant dense<0.000000e+00> : vector<1x8xf32>
    %57 = tpu.matmul %56, %0, %cst_35 {dimension_numbers = #tpu.dot_dimension_numbers<[1], [0], [0], [1], [0, 0, 1, 1], [], []>} : vector<1x32xf32>, vector<32x8xf32>, vector<1x8xf32> -> vector<1x8xf32>
    %58 = arith.addf %57, %1 : vector<1x8xf32>
    %cst_36 = arith.constant 0.000000e+00 : f32
    %59 = vector.broadcast %cst_36 : f32 to vector<1x8xf32>
    %60 = arith.maximumf %58, %59 : vector<1x8xf32>
    %cst_37 = arith.constant dense<0.000000e+00> : vector<1x32xf32>
    %61 = tpu.matmul %60, %2, %cst_37 {dimension_numbers = #tpu.dot_dimension_numbers<[1], [0], [0], [1], [0, 0, 1, 1], [], []>} : vector<1x8xf32>, vector<8x32xf32>, vector<1x32xf32> -> vector<1x32xf32>
    %62 = arith.addf %61, %3 : vector<1x32xf32>
    %63 = arith.negf %62 : vector<1x32xf32>
    %64 = math.exp %63 : vector<1x32xf32>
    %cst_38 = arith.constant 1.000000e+00 : f32
    %65 = vector.broadcast %cst_38 : f32 to vector<1x32xf32>
    %66 = arith.addf %65, %64 : vector<1x32xf32>
    %67 = arith.divf %65, %66 : vector<1x32xf32>
    %68 = vector.shape_cast %67 : vector<1x32xf32> to vector<1x1x32xf32>
    %69 = vector.broadcast %68 : vector<1x1x32xf32> to vector<8x8x32xf32>
    %70 = arith.mulf %51, %69 : vector<8x8x32xf32>
    %71 = arith.addf %48, %70 : vector<8x8x32xf32>
    %c0_39 = arith.constant 0 : index
    %c0_40 = arith.constant 0 : index
    %c0_41 = arith.constant 0 : index
    %c0_42 = arith.constant 0 : index
    %72 = vector.load %arg5[%c0_39, %c0_40, %c0_41, %c0_42] : memref<1x8x8x32xf32, #tpu.memory_space<vmem>>, vector<1x8x8x32xf32>
    %73 = vector.shape_cast %72 : vector<1x8x8x32xf32> to vector<8x8x32xf32>
    %cst_43 = arith.constant dense<0.000000e+00> : vector<8x32xf32>
    %74 = vector.multi_reduction <add>, %73, %cst_43 [0] : vector<8x8x32xf32> to vector<8x32xf32>
    %cst_44 = arith.constant dense<0.000000e+00> : vector<32xf32>
    %75 = vector.multi_reduction <add>, %74, %cst_44 [0] : vector<8x32xf32> to vector<32xf32>
    %76 = vector.shape_cast %75 : vector<32xf32> to vector<1x32xf32>
    %cst_45 = arith.constant 1.562500e-02 : f32
    %77 = vector.broadcast %cst_45 : f32 to vector<1x32xf32>
    %78 = arith.mulf %76, %77 : vector<1x32xf32>
    %cst_46 = arith.constant dense<0.000000e+00> : vector<1x8xf32>
    %79 = tpu.matmul %78, %0, %cst_46 {dimension_numbers = #tpu.dot_dimension_numbers<[1], [0], [0], [1], [0, 0, 1, 1], [], []>} : vector<1x32xf32>, vector<32x8xf32>, vector<1x8xf32> -> vector<1x8xf32>
    %80 = arith.addf %79, %1 : vector<1x8xf32>
    %cst_47 = arith.constant 0.000000e+00 : f32
    %81 = vector.broadcast %cst_47 : f32 to vector<1x8xf32>
    %82 = arith.maximumf %80, %81 : vector<1x8xf32>
    %cst_48 = arith.constant dense<0.000000e+00> : vector<1x32xf32>
    %83 = tpu.matmul %82, %2, %cst_48 {dimension_numbers = #tpu.dot_dimension_numbers<[1], [0], [0], [1], [0, 0, 1, 1], [], []>} : vector<1x8xf32>, vector<8x32xf32>, vector<1x32xf32> -> vector<1x32xf32>
    %84 = arith.addf %83, %3 : vector<1x32xf32>
    %85 = arith.negf %84 : vector<1x32xf32>
    %86 = math.exp %85 : vector<1x32xf32>
    %cst_49 = arith.constant 1.000000e+00 : f32
    %87 = vector.broadcast %cst_49 : f32 to vector<1x32xf32>
    %88 = arith.addf %87, %86 : vector<1x32xf32>
    %89 = arith.divf %87, %88 : vector<1x32xf32>
    %90 = vector.shape_cast %89 : vector<1x32xf32> to vector<1x1x32xf32>
    %91 = vector.broadcast %90 : vector<1x1x32xf32> to vector<8x8x32xf32>
    %92 = arith.mulf %73, %91 : vector<8x8x32xf32>
    %93 = arith.addf %71, %92 : vector<8x8x32xf32>
    %94 = vector.shape_cast %93 : vector<8x8x32xf32> to vector<64x32xf32>
    %c0_50 = arith.constant 0 : index
    %c0_51 = arith.constant 0 : index
    %95 = vector.load %arg10[%c0_50, %c0_51] : memref<32x128xf32, #tpu.memory_space<vmem>>, vector<32x128xf32>
    %cst_52 = arith.constant dense<0.000000e+00> : vector<64x128xf32>
    %96 = tpu.matmul %94, %95, %cst_52 {dimension_numbers = #tpu.dot_dimension_numbers<[1], [0], [0], [1], [0, 0, 1, 1], [], []>} : vector<64x32xf32>, vector<32x128xf32>, vector<64x128xf32> -> vector<64x128xf32>
    %c0_53 = arith.constant 0 : index
    %c0_54 = arith.constant 0 : index
    %97 = vector.load %arg11[%c0_53, %c0_54] : memref<1x128xf32, #tpu.memory_space<vmem>>, vector<1x128xf32>
    %98 = vector.broadcast %97 : vector<1x128xf32> to vector<64x128xf32>
    %99 = arith.addf %96, %98 : vector<64x128xf32>
    %c0_55 = arith.constant 0 : index
    %c0_56 = arith.constant 0 : index
    %c0_57 = arith.constant 0 : index
    %c0_58 = arith.constant 0 : index
    %100 = vector.load %arg1[%c0_55, %c0_56, %c0_57, %c0_58] : memref<1x8x8x32xf32, #tpu.memory_space<vmem>>, vector<1x8x8x32xf32>
    %101 = vector.shape_cast %100 : vector<1x8x8x32xf32> to vector<8x8x32xf32>
    %102 = vector.shape_cast %101 : vector<8x8x32xf32> to vector<64x32xf32>
    %c0_59 = arith.constant 0 : index
    %c0_60 = arith.constant 0 : index
    %103 = vector.load %arg12[%c0_59, %c0_60] : memref<32x128xf32, #tpu.memory_space<vmem>>, vector<32x128xf32>
    %cst_61 = arith.constant dense<0.000000e+00> : vector<64x128xf32>
    %104 = tpu.matmul %102, %103, %cst_61 {dimension_numbers = #tpu.dot_dimension_numbers<[1], [0], [0], [1], [0, 0, 1, 1], [], []>} : vector<64x32xf32>, vector<32x128xf32>, vector<64x128xf32> -> vector<64x128xf32>
    %c0_62 = arith.constant 0 : index
    %c0_63 = arith.constant 0 : index
    %105 = vector.load %arg13[%c0_62, %c0_63] : memref<1x128xf32, #tpu.memory_space<vmem>>, vector<1x128xf32>
    %106 = vector.broadcast %105 : vector<1x128xf32> to vector<64x128xf32>
    %107 = arith.addf %104, %106 : vector<64x128xf32>
    %108 = arith.addf %99, %107 : vector<64x128xf32>
    %cst_64 = arith.constant 0.000000e+00 : f32
    %109 = vector.broadcast %cst_64 : f32 to vector<64x128xf32>
    %110 = arith.maximumf %108, %109 : vector<64x128xf32>
    %111 = vector.shape_cast %110 : vector<64x128xf32> to vector<8x8x128xf32>
    %c0_65 = arith.constant 0 : index
    %c0_66 = arith.constant 0 : index
    %c0_67 = arith.constant 0 : index
    %c0_68 = arith.constant 0 : index
    %112 = vector.load %arg14[%c0_65, %c0_66, %c0_67, %c0_68] : memref<1x8x8x128xf32, #tpu.memory_space<vmem>>, vector<1x8x8x128xf32>
    %113 = vector.shape_cast %112 : vector<1x8x8x128xf32> to vector<8x8x128xf32>
    %114 = vector.shape_cast %111 : vector<8x8x128xf32> to vector<1x8x8x128xf32>
    tpu.vector_store %arg14[%c0_65, %c0_66, %c0_67, %c0_68], %114 {strides = array<i32>} : memref<1x8x8x128xf32, #tpu.memory_space<vmem>>, vector<1x8x8x128xf32>,
    return
  }
  func.func @transform_0(%arg0: i32) -> (i32, i32, i32, i32) {
    %c0_i32 = arith.constant 0 : i32
    %c0_i32_0 = arith.constant 0 : i32
    %c0_i32_1 = arith.constant 0 : i32
    %c0_i32_2 = arith.constant 0 : i32
    return %arg0, %c0_i32, %c0_i32_0, %c0_i32_1 : i32, i32, i32, i32
  }
  func.func @transform_1(%arg0: i32) -> (i32, i32, i32, i32) {
    %c0_i32 = arith.constant 0 : i32
    %c0_i32_0 = arith.constant 0 : i32
    %c0_i32_1 = arith.constant 0 : i32
    %c0_i32_2 = arith.constant 0 : i32
    return %arg0, %c0_i32, %c0_i32_0, %c0_i32_1 : i32, i32, i32, i32
  }
  func.func @transform_2(%arg0: i32) -> (i32, i32, i32, i32) {
    %c0_i32 = arith.constant 0 : i32
    %c0_i32_0 = arith.constant 0 : i32
    %c0_i32_1 = arith.constant 0 : i32
    %c0_i32_2 = arith.constant 0 : i32
    return %arg0, %c0_i32, %c0_i32_0, %c0_i32_1 : i32, i32, i32, i32
  }
  func.func @transform_3(%arg0: i32) -> (i32, i32, i32, i32) {
    %c0_i32 = arith.constant 0 : i32
    %c0_i32_0 = arith.constant 0 : i32
    %c0_i32_1 = arith.constant 0 : i32
    %c0_i32_2 = arith.constant 0 : i32
    return %arg0, %c0_i32, %c0_i32_0, %c0_i32_1 : i32, i32, i32, i32
  }
  func.func @transform_4(%arg0: i32) -> (i32, i32, i32, i32) {
    %c0_i32 = arith.constant 0 : i32
    %c0_i32_0 = arith.constant 0 : i32
    %c0_i32_1 = arith.constant 0 : i32
    %c0_i32_2 = arith.constant 0 : i32
    return %arg0, %c0_i32, %c0_i32_0, %c0_i32_1 : i32, i32, i32, i32
  }
  func.func @transform_5(%arg0: i32) -> (i32, i32) {
    %c0_i32 = arith.constant 0 : i32
    %c0_i32_0 = arith.constant 0 : i32
    %c0_i32_1 = arith.constant 0 : i32
    return %c0_i32, %c0_i32_0 : i32, i32
  }
  func.func @transform_6(%arg0: i32) -> (i32, i32) {
    %c0_i32 = arith.constant 0 : i32
    %c0_i32_0 = arith.constant 0 : i32
    %c0_i32_1 = arith.constant 0 : i32
    return %c0_i32, %c0_i32_0 : i32, i32
  }
  func.func @transform_7(%arg0: i32) -> (i32, i32) {
    %c0_i32 = arith.constant 0 : i32
    %c0_i32_0 = arith.constant 0 : i32
    %c0_i32_1 = arith.constant 0 : i32
    return %c0_i32, %c0_i32_0 : i32, i32
  }
  func.func @transform_8(%arg0: i32) -> (i32, i32) {
    %c0_i32 = arith.constant 0 : i32
    %c0_i32_0 = arith.constant 0 : i32
    %c0_i32_1 = arith.constant 0 : i32
    return %c0_i32, %c0_i32_0 : i32, i32
  }
  func.func @transform_9(%arg0: i32) -> (i32, i32) {
    %c0_i32 = arith.constant 0 : i32
    %c0_i32_0 = arith.constant 0 : i32
    %c0_i32_1 = arith.constant 0 : i32
    return %c0_i32, %c0_i32_0 : i32, i32
  }
  func.func @transform_10(%arg0: i32) -> (i32, i32) {
    %c0_i32 = arith.constant 0 : i32
    %c0_i32_0 = arith.constant 0 : i32
    %c0_i32_1 = arith.constant 0 : i32
    return %c0_i32, %c0_i32_0 : i32, i32
  }
  func.func @transform_11(%arg0: i32) -> (i32, i32) {
    %c0_i32 = arith.constant 0 : i32
    %c0_i32_0 = arith.constant 0 : i32
    %c0_i32_1 = arith.constant 0 : i32
    return %c0_i32, %c0_i32_0 : i32, i32
  }
  func.func @transform_12(%arg0: i32) -> (i32, i32) {
    %c0_i32 = arith.constant 0 : i32
    %c0_i32_0 = arith.constant 0 : i32
    %c0_i32_1 = arith.constant 0 : i32
    return %c0_i32, %c0_i32_0 : i32, i32
  }
  func.func @transform_13(%arg0: i32) -> (i32, i32, i32, i32) {
    %c0_i32 = arith.constant 0 : i32
    %c0_i32_0 = arith.constant 0 : i32
    %c0_i32_1 = arith.constant 0 : i32
    %c0_i32_2 = arith.constant 0 : i32
    return %arg0, %c0_i32, %c0_i32_0, %c0_i32_1 : i32, i32, i32, i32
  }
}

</mosaic_0001>

<llo_original>
// kernel: osblock_forward.7
$region0: #{osblock_forward.7}
  #allocation0 [shape = 'u32[]', space=smem, size = 0x4, offset = 0x4, fixed_abs, tag = 'smem constant byte address 0x4 - core index']
  #allocation1 [shape = 'u32[144,128]{1,0:T(1,128)}', space=vmem, size = 0x12000, scoped, tag = 'internal scratch']
  #allocation2 [shape = 'f32[10,17,64]{2,1,0:T(8,128)}', space=vmem, size = 0x1e000, scoped, tag = 'scratch operand']
  %s0 = inlined_call_operand.vmem [shape: f32[2,8,8,96], index: 0, kind: input, shape index: {}]
  %s1 = inlined_call_operand.vmem [shape: f32[96,64], index: 1, kind: input, shape index: {}]
  %s2 = inlined_call_operand.vmem [shape: f32[3,3,64], index: 2, kind: input, shape index: {}]
  %s3 = inlined_call_operand.vmem [shape: f32[1,64], index: 3, kind: input, shape index: {}]
  %s4 = inlined_call_operand.vmem [shape: f32[2,8,8,64], index: 4, kind: output, shape index: {}]
  %s5 = sld [smem:[#allocation0]]
  $region49: #{osblock_forward.7} parent=0
    _
  %s7 = ssub.s32 1, %s5
  %s8 = scalar_select 0, %s7, %s5
  loop: start=0, step=1, limit=4
  $region2: #{osblock_forward.7} parent=0 // loop_pre_header
    _
  $region3: #{osblock_forward.7} parent=0 // loop_header
    %s10 = sphi 0, %s14
    %p11 = scmp.ge.s32.totalorder %s10, 4
    %s20 = sphi 0, %s22
    %s23 = sphi 0, %s20
    %s24 = sphi 0, %s23
    %s40 = sphi 0, %s24
    %s44 = sphi 0, %s44
    %s46 = sphi 0, %s44
    %s47 = sphi 0, %s46
    %s61 = sphi 0, %s47
    %s65 = sphi 0, %s65
    %s67 = sphi 0, %s65
    %s68 = sphi 0, %s67
    %s82 = sphi 0, %s68
    %s86 = sphi 0, %s86
    %s88 = sphi 0, %s86
    %s89 = sphi 0, %s88
    %s103 = sphi 0, %s89
    %s109 = sphi 0, %s111
    %s112 = sphi 0, %s109
    %s113 = sphi 0, %s112
    %s129 = sphi 0, %s113
  $region4: #{osblock_forward.7} parent=0 // loop_header_branch
    %13 = sbr.rel (%p11) target = $region8
  $region5: #{osblock_forward.7} parent=0 // loop_body
    %s15 = ssub.s32 %s10, 1
    %s16 = ssub.s32 %s10, 2
    %s17 = sadd.s32 %s10, 1
    %s18 = ssub.s32 %s10, %s17
    %p19 = scmp.eq.s32.totalorder %s18, 0
    %s21 = sadd.s32 %s20, 1
    %s22 = scalar_select %p19, %s20, %s21
    %p25 = pneg %p19
    %p26 = scmp.eq.s32.totalorder %s10, 1
    %p27 = por %p25, %p26
    %p28 = scmp.ne.s32.totalorder %s20, %s23
    %p29 = scmp.eq.s32.totalorder %s10, 0
    %p30 = por %p28, %p29
    %p31 = scmp.ne.s32.totalorder %s20, %s23
    %p32 = scmp.eq.s32.totalorder %s15, 1
    %p33 = por %p31, %p32
    %p34 = scmp.ne.s32.totalorder %s23, %s24
    %p35 = scmp.eq.s32.totalorder %s15, 0
    %p36 = por %p34, %p35
    %p37 = scmp.ne.s32.totalorder %s23, %s24
    %p38 = scmp.eq.s32.totalorder %s16, 1
    %p39 = por %p37, %p38
    %p41 = scmp.ne.s32.totalorder %s24, %s40
    %p42 = scmp.eq.s32.totalorder %s16, 0
    %p43 = por %p41, %p42
    %s45 = sadd.s32 %s44, 1
    %p48 = scmp.eq.s32.totalorder %s10, 1
    %p49 = scmp.ne.s32.totalorder %s44, %s46
    %p50 = scmp.eq.s32.totalorder %s10, 0
    %p51 = por %p49, %p50
    %p52 = scmp.ne.s32.totalorder %s44, %s46
    %p53 = scmp.eq.s32.totalorder %s15, 1
    %p54 = por %p52, %p53
    %p55 = scmp.ne.s32.totalorder %s46, %s47
    %p56 = scmp.eq.s32.totalorder %s15, 0
    %p57 = por %p55, %p56
    %p58 = scmp.ne.s32.totalorder %s46, %s47
    %p59 = scmp.eq.s32.totalorder %s16, 1
    %p60 = por %p58, %p59
    %p62 = scmp.ne.s32.totalorder %s47, %s61
    %p63 = scmp.eq.s32.totalorder %s16, 0
    %p64 = por %p62, %p63
    %s66 = sadd.s32 %s65, 1
    %p69 = scmp.eq.s32.totalorder %s10, 1
    %p70 = scmp.ne.s32.totalorder %s65, %s67
    %p71 = scmp.eq.s32.totalorder %s10, 0
    %p72 = por %p70, %p71
    %p73 = scmp.ne.s32.totalorder %s65, %s67
    %p74 = scmp.eq.s32.totalorder %s15, 1
    %p75 = por %p73, %p74
    %p76 = scmp.ne.s32.totalorder %s67, %s68
    %p77 = scmp.eq.s32.totalorder %s15, 0
    %p78 = por %p76, %p77
    %p79 = scmp.ne.s32.totalorder %s67, %s68
    %p80 = scmp.eq.s32.totalorder %s16, 1
    %p81 = por %p79, %p80
    %p83 = scmp.ne.s32.totalorder %s68, %s82
    %p84 = scmp.eq.s32.totalorder %s16, 0
    %p85 = por %p83, %p84
    %s87 = sadd.s32 %s86, 1
    %p90 = scmp.eq.s32.totalorder %s10, 1
    %p91 = scmp.ne.s32.totalorder %s86, %s88
    %p92 = scmp.eq.s32.totalorder %s10, 0
    %p93 = por %p91, %p92
    %p94 = scmp.ne.s32.totalorder %s86, %s88
    %p95 = scmp.eq.s32.totalorder %s15, 1
    %p96 = por %p94, %p95
    %p97 = scmp.ne.s32.totalorder %s88, %s89
    %p98 = scmp.eq.s32.totalorder %s15, 0
    %p99 = por %p97, %p98
    %p100 = scmp.ne.s32.totalorder %s88, %s89
    %p101 = scmp.eq.s32.totalorder %s16, 1
    %p102 = por %p100, %p101
    %p104 = scmp.ne.s32.totalorder %s89, %s103
    %p105 = scmp.eq.s32.totalorder %s16, 0
    %p106 = por %p104, %p105
    %s107 = ssub.s32 %s10, %s17
    %p108 = scmp.eq.s32.totalorder %s107, 0
    %s110 = sadd.s32 %s109, 1
    %s111 = scalar_select %p108, %s109, %s110
    %p114 = pneg %p108
    %p115 = scmp.eq.s32.totalorder %s10, 1
    %p116 = por %p114, %p115
    %p117 = scmp.ne.s32.totalorder %s109, %s112
    %p118 = scmp.eq.s32.totalorder %s10, 0
    %p119 = por %p117, %p118
    %p120 = scmp.ne.s32.totalorder %s109, %s112
    %p121 = scmp.eq.s32.totalorder %s15, 1
    %p122 = por %p120, %p121
    %p123 = scmp.ne.s32.totalorder %s112, %s113
    %p124 = scmp.eq.s32.totalorder %s15, 0
    %p125 = por %p123, %p124
    %p126 = scmp.ne.s32.totalorder %s112, %s113
    %p127 = scmp.eq.s32.totalorder %s16, 1
    %p128 = por %p126, %p127
    %p130 = scmp.ne.s32.totalorder %s113, %s129
    %p131 = scmp.eq.s32.totalorder %s16, 0
    %p132 = por %p130, %p131
    %p133 = scmp.le.s32.totalorder 1, %s10
    %p134 = scmp.lt.s32.totalorder %s10, 3
    %p135 = pnand %p133, %p134
    %p136 = pneg %p135
    // Predicated region
    $region9: #{osblock_forward.7} parent=5 // pred_check
      _
    $region10: #{osblock_forward.7} parent=5 // pred_check_branch
      %138 = sbr.rel (%p135) target = $region12
    $region11: #{osblock_forward.7} parent=5 // pred_region
      %s139 = ssub.s32 %s10, 1
      // Predicated region
      $region13: #{osblock_forward.7} parent=11 // pred_check
        %p140 = pneg %p57
      $region14: #{osblock_forward.7} parent=11 // pred_check_branch
        %142 = sbr.rel (%p140) target = $region16
      $region15: #{osblock_forward.7} parent=11 // pred_region
        _
      $region16: #{osblock_forward.7} parent=11 // pred_fallthru
        _
      // Predicated region
      $region17: #{osblock_forward.7} parent=11 // pred_check
        %p143 = pneg %p78
      $region18: #{osblock_forward.7} parent=11 // pred_check_branch
        %145 = sbr.rel (%p143) target = $region20
      $region19: #{osblock_forward.7} parent=11 // pred_region
        _
      $region20: #{osblock_forward.7} parent=11 // pred_fallthru
        _
      // Predicated region
      $region21: #{osblock_forward.7} parent=11 // pred_check
        %p146 = pneg %p99
      $region22: #{osblock_forward.7} parent=11 // pred_check_branch
        %148 = sbr.rel (%p146) target = $region24
      $region23: #{osblock_forward.7} parent=11 // pred_region
        _
      $region24: #{osblock_forward.7} parent=11 // pred_fallthru
        _
    $region12: #{osblock_forward.7} parent=5 // pred_fallthru
      _
    %p149 = scmp.lt.s32.totalorder %s10, 2
    // Predicated region
    $region25: #{osblock_forward.7} parent=5 // pred_check
      %p150 = pneg %p149
    $region26: #{osblock_forward.7} parent=5 // pred_check_branch
      %152 = sbr.rel (%p150) target = $region28
    $region27: #{osblock_forward.7} parent=5 // pred_region
      // Predicated region
      $region29: #{osblock_forward.7} parent=27 // pred_check
        %p153 = pneg %p30
      $region30: #{osblock_forward.7} parent=27 // pred_check_branch
        %155 = sbr.rel (%p153) target = $region32
      $region31: #{osblock_forward.7} parent=27 // pred_region
        %p156 = scmp.lt.s32.totalorder %s10, 1
        %s157 = scalar_select %p156, %s10, 1
        %s158 = smul.addr %s157, 8
        %s159 = smul.addr %s158, 8
        %s160 = scalar_lea.vmem %s0, %s159
      $region32: #{osblock_forward.7} parent=27 // pred_fallthru
        _
    $region28: #{osblock_forward.7} parent=5 // pred_fallthru
      _
    %p161 = scmp.le.s32.totalorder 1, %s10
    %p162 = scmp.lt.s32.totalorder %s10, 3
    %p163 = pnand %p161, %p162
    %p164 = pneg %p163
    // Predicated region
    $region33: #{osblock_forward.7} parent=5 // pred_check
      _
    $region34: #{osblock_forward.7} parent=5 // pred_check_branch
      %166 = sbr.rel (%p163) target = $region36
    $region35: #{osblock_forward.7} parent=5 // pred_region
      %s167 = ssub.s32 %s10, 1
      %p168 = scmp.lt.s32.totalorder %s15, 1
      %s169 = scalar_select %p168, %s15, 1
      %s170 = smul.addr %s169, 8
      %s171 = smul.addr %s170, 8
      %s172 = scalar_lea.vmem %s0, %s171
      %p173 = pneg %p36
      %p174 = pneg %p33
      %p175 = pneg %p57
      %p176 = pneg %p54
      %p177 = pneg %p78
      %p178 = pneg %p75
      %p179 = pneg %p99
      %p180 = pneg %p96
      %p181 = pneg %p125
      %p182 = pneg %p122
      %p183 = scmp.lt.s32.totalorder %s15, 1
      %s184 = scalar_select %p183, %s15, 1
      %s185 = smul.addr %s184, 8
      %s186 = smul.addr %s185, 8
      %s187 = scalar_lea.vmem %s4, %s186
      %p188 = scmp.lt.s32.totalorder %s15, 1
      %s189 = scalar_select %p188, %s15, 1
      %s190 = smul.addr %s189, 8
      %s191 = smul.addr %s190, 8
      %s192 = scalar_lea.vmem %s0, %s191
      %p193 = scmp.lt.s32.totalorder %s15, 1
      %s194 = scalar_select %p193, %s15, 1
      %s195 = smul.addr %s194, 8
      %s196 = smul.addr %s195, 8
      %s197 = scalar_lea.vmem %s4, %s196
      %v198 = vld [vmem:[%s192] sm:$0xff]
      %v199 = vld [vmem:[%s192 + $0x8] sm:$0xff]
      %v200 = vld [vmem:[%s192 + $0x10] sm:$0xff]
      %v201 = vld [vmem:[%s192 + $0x18] sm:$0xff]
      %v202 = vld [vmem:[%s192 + $0x20] sm:$0xff]
      %v203 = vld [vmem:[%s192 + $0x28] sm:$0xff]
      %v204 = vld [vmem:[%s192 + $0x30] sm:$0xff]
      %v205 = vld [vmem:[%s192 + $0x38] sm:$0xff]
      %v206 = vld [vmem:[%s1] sm:$0xff]
      %v207 = vld [vmem:[%s1 + $0x8] sm:$0xff]
      %v208 = vld [vmem:[%s1 + $0x10] sm:$0xff]
      %v209 = vld [vmem:[%s1 + $0x18] sm:$0xff]
      %v210 = vld [vmem:[%s1 + $0x20] sm:$0xff]
      %v211 = vld [vmem:[%s1 + $0x28] sm:$0xff]
      %v212 = vld [vmem:[%s1 + $0x30] sm:$0xff]
      %v213 = vld [vmem:[%s1 + $0x38] sm:$0xff]
      %v214 = vld [vmem:[%s1 + $0x40] sm:$0xff]
      %v215 = vld [vmem:[%s1 + $0x48] sm:$0xff]
      %v216 = vld [vmem:[%s1 + $0x50] sm:$0xff]
      %v217 = vld [vmem:[%s1 + $0x58] sm:$0xff]
      %vm218 = vcmask 785408
      %v220 = vsel %vm218, %v198, 0
      %v223 = vsel %vm218, %v199, 0
      %v226 = vsel %vm218, %v200, 0
      %v229 = vsel %vm218, %v201, 0
      %v232 = vsel %vm218, %v202, 0
      %v235 = vsel %vm218, %v203, 0
      %v238 = vsel %vm218, %v204, 0
      %v241 = vsel %vm218, %v205, 0
      %243 = vmatprep.subr.mxu0 0.0
      %244 = vmatpush1.msra.mxu0 0.0
      %245 = vmatprep.subr.mxu0 0.0
      %246 = vmatpush1.msra.mxu0 0.0
      %247 = vmatprep.subr.mxu0 0.0
      %248 = vmatpush1.msra.mxu0 0.0
      %249 = vmatprep.subr.mxu0 0.0
      %250 = vmatpush1.msra.mxu0 0.0
      %251 = vmatprep.subr.mxu0 0.0
      %252 = vmatpush1.msra.mxu0 %v217
      %253 = vmatprep.subr.mxu0 0.0
      %254 = vmatpush1.msra.mxu0 %v216
      %255 = vmatprep.subr.mxu0 0.0
      %256 = vmatpush1.msra.mxu0 %v215
      %257 = vmatprep.subr.mxu0 0.0
      %258 = vmatpush1.msra.mxu0 %v214
      %259 = vmatprep.subr.mxu0 0.0
      %260 = vmatpush1.msra.mxu0 %v213
      %261 = vmatprep.subr.mxu0 0.0
      %262 = vmatpush1.msra.mxu0 %v212
      %263 = vmatprep.subr.mxu0 0.0
      %264 = vmatpush1.msra.mxu0 %v211
      %265 = vmatprep.subr.mxu0 0.0
      %266 = vmatpush1.msra.mxu0 %v210
      %267 = vmatprep.subr.mxu0 0.0
      %268 = vmatpush1.msra.mxu0 %v209
      %269 = vmatprep.subr.mxu0 0.0
      %270 = vmatpush1.msra.mxu0 %v208
      %271 = vmatprep.subr.mxu0 0.0
      %272 = vmatpush1.msra.mxu0 %v207
      %273 = vmatprep.subr.mxu0 0.0
      %274 = vmatpush1.msra.mxu0 %v206
      %275 = vmatprep.subr.mxu0 0.0
      %276 = vmatpush2.msra.mxu0 0.0
      %277 = vmatprep.subr.mxu0 0.0
      %278 = vmatpush2.msra.mxu0 0.0
      %279 = vmatprep.subr.mxu0 0.0
      %280 = vmatpush2.msra.mxu0 0.0
      %281 = vmatprep.subr.mxu0 0.0
      %282 = vmatpush2.msra.mxu0 0.0
      %283 = vmatprep.subr.mxu0 0.0
      %284 = vmatpush2.msra.mxu0 0.0
      %285 = vmatprep.subr.mxu0 0.0
      %286 = vmatpush2.msra.mxu0 0.0
      %287 = vmatprep.subr.mxu0 0.0
      %288 = vmatpush2.msra.mxu0 0.0
      %289 = vmatprep.subr.mxu0 0.0
      %290 = vmatpush2.msra.mxu0 0.0
      %291 = vmatprep.subr.mxu0 0.0
      %292 = vmatpush2.msra.mxu0 0.0
      %293 = vmatprep.subr.mxu0 0.0
      %294 = vmatpush2.msra.mxu0 0.0
      %295 = vmatprep.subr.mxu0 0.0
      %296 = vmatpush2.msra.mxu0 0.0
      %297 = vmatprep.subr.mxu0 0.0
      %298 = vmatpush2.msra.mxu0 0.0
      %299 = vmatprep.subr.mxu0 0.0
      %300 = vmatpush2.msra.mxu0 0.0
      %301 = vmatprep.subr.mxu0 0.0
      %302 = vmatpush2.msra.mxu0 0.0
      %303 = vmatprep.subr.mxu0 0.0
      %304 = vmatpush2.msra.mxu0 0.0
      %305 = vmatprep.subr.mxu0 0.0
      %306 = vmatpush2.msra.mxu0 0.0
      %307 = vmatprep.mubr.f32.mxu0 0.0
      %308 = vmatmul.mubr.f32.gmra.mxu0 %v220
      %v309 = vpop.f32.mrf.mxu0
      %v310 = vadd.f32 0.0, %v309
      %v311 = vpop.f32.mrf.mxu0
      %312 = vmatprep.mubr.f32.mxu0 0.0
      %313 = vmatmul.mubr.f32.gmra.mxu0 %v223
      %v314 = vpop.f32.mrf.mxu0
      %v315 = vadd.f32 0.0, %v314
      %v316 = vpop.f32.mrf.mxu0
      %317 = vmatprep.mubr.f32.mxu0 0.0
      %318 = vmatmul.mubr.f32.gmra.mxu0 %v226
      %v319 = vpop.f32.mrf.mxu0
      %v320 = vadd.f32 0.0, %v319
      %v321 = vpop.f32.mrf.mxu0
      %322 = vmatprep.mubr.f32.mxu0 0.0
      %323 = vmatmul.mubr.f32.gmra.mxu0 %v229
      %v324 = vpop.f32.mrf.mxu0
      %v325 = vadd.f32 0.0, %v324
      %v326 = vpop.f32.mrf.mxu0
      %327 = vmatprep.mubr.f32.mxu0 0.0
      %328 = vmatmul.mubr.f32.gmra.mxu0 %v232
      %v329 = vpop.f32.mrf.mxu0
      %v330 = vadd.f32 0.0, %v329
      %v331 = vpop.f32.mrf.mxu0
      %332 = vmatprep.mubr.f32.mxu0 0.0
      %333 = vmatmul.mubr.f32.gmra.mxu0 %v235
      %v334 = vpop.f32.mrf.mxu0
      %v335 = vadd.f32 0.0, %v334
      %v336 = vpop.f32.mrf.mxu0
      %337 = vmatprep.mubr.f32.mxu0 0.0
      %338 = vmatmul.mubr.f32.gmra.mxu0 %v238
      %v339 = vpop.f32.mrf.mxu0
      %v340 = vadd.f32 0.0, %v339
      %v341 = vpop.f32.mrf.mxu0
      %342 = vmatprep.mubr.f32.mxu0 0.0
      %343 = vmatmul.mubr.f32.gmra.mxu0 %v241
      %v344 = vpop.f32.mrf.mxu0
      %v345 = vadd.f32 0.0, %v344
      %v346 = vpop.f32.mrf.mxu0
      %347 = vdwg.mxu0
      %vm348 = vcmask 523264
      %349 = vst.msk [vmem:[#allocation2] sm:$0xff] %vm348, 0.0
      %350 = vst.msk [vmem:[#allocation2 + $0x8] sm:$0xff] %vm348, 0.0
      %vm351 = vcmask 516096
      %352 = vst.msk [vmem:[#allocation2 + $0x10] sm:$0x1] %vm351, 0.0
      %353 = vst.msk [vmem:[#allocation2 + $0x18] sm:$0xff] %vm348, 0.0
      %354 = vst.msk [vmem:[#allocation2 + $0x20] sm:$0xff] %vm348, 0.0
      %355 = vst.msk [vmem:[#allocation2 + $0x28] sm:$0x1] %vm351, 0.0
      %356 = vst.msk [vmem:[#allocation2 + $0x30] sm:$0xff] %vm348, 0.0
      %357 = vst.msk [vmem:[#allocation2 + $0x38] sm:$0xff] %vm348, 0.0
      %358 = vst.msk [vmem:[#allocation2 + $0x40] sm:$0x1] %vm351, 0.0
      %359 = vst.msk [vmem:[#allocation2 + $0x48] sm:$0xff] %vm348, 0.0
      %360 = vst.msk [vmem:[#allocation2 + $0x50] sm:$0xff] %vm348, 0.0
      %361 = vst.msk [vmem:[#allocation2 + $0x58] sm:$0x1] %vm351, 0.0
      %362 = vst.msk [vmem:[#allocation2 + $0x60] sm:$0xff] %vm348, 0.0
      %363 = vst.msk [vmem:[#allocation2 + $0x68] sm:$0xff] %vm348, 0.0
      %364 = vst.msk [vmem:[#allocation2 + $0x70] sm:$0x1] %vm351, 0.0
      %365 = vst.msk [vmem:[#allocation2 + $0x78] sm:$0xff] %vm348, 0.0
      %366 = vst.msk [vmem:[#allocation2 + $0x80] sm:$0xff] %vm348, 0.0
      %367 = vst.msk [vmem:[#allocation2 + $0x88] sm:$0x1] %vm351, 0.0
      %368 = vst.msk [vmem:[#allocation2 + $0x90] sm:$0xff] %vm348, 0.0
      %369 = vst.msk [vmem:[#allocation2 + $0x98] sm:$0xff] %vm348, 0.0
      %370 = vst.msk [vmem:[#allocation2 + $0xa0] sm:$0x1] %vm351, 0.0
      %371 = vst.msk [vmem:[#allocation2 + $0xa8] sm:$0xff] %vm348, 0.0
      %372 = vst.msk [vmem:[#allocation2 + $0xb0] sm:$0xff] %vm348, 0.0
      %373 = vst.msk [vmem:[#allocation2 + $0xb8] sm:$0x1] %vm351, 0.0
      %374 = vst.msk [vmem:[#allocation2 + $0xc0] sm:$0xff] %vm348, 0.0
      %375 = vst.msk [vmem:[#allocation2 + $0xc8] sm:$0xff] %vm348, 0.0
      %376 = vst.msk [vmem:[#allocation2 + $0xd0] sm:$0x1] %vm351, 0.0
      %377 = vst.msk [vmem:[#allocation2 + $0xd8] sm:$0xff] %vm348, 0.0
      %378 = vst.msk [vmem:[#allocation2 + $0xe0] sm:$0xff] %vm348, 0.0
      %379 = vst.msk [vmem:[#allocation2 + $0xe8] sm:$0x1] %vm351, 0.0
      %s380 = scalar_lea.vmem [#allocation2], 24
      %381 = vst.msk [vmem:[%s380 + $0x8] sm:$0xff] %vm348, %v310
      %382 = vst.msk [vmem:[%s380 + $0x20] sm:$0xff] %vm348, %v315
      %383 = vst.msk [vmem:[%s380 + $0x38] sm:$0xff] %vm348, %v320
      %384 = vst.msk [vmem:[%s380 + $0x50] sm:$0xff] %vm348, %v325
      %385 = vst.msk [vmem:[%s380 + $0x68] sm:$0xff] %vm348, %v330
      %386 = vst.msk [vmem:[%s380 + $0x80] sm:$0xff] %vm348, %v335
      %387 = vst.msk [vmem:[%s380 + $0x98] sm:$0xff] %vm348, %v340
      %388 = vst.msk [vmem:[%s380 + $0xb0] sm:$0xff] %vm348, %v345
      %v389 = vld [vmem:[#allocation2] sm:$0xff]
      %v390 = vld [vmem:[#allocation2 + $0x8] sm:$0xff]
      %v391 = vld [vmem:[#allocation2 + $0x10] sm:$0x1]
      %v392 = vld [vmem:[#allocation2 + $0x18] sm:$0xff]
      %v393 = vld [vmem:[#allocation2 + $0x20] sm:$0xff]
      %v394 = vld [vmem:[#allocation2 + $0x28] sm:$0x1]
      %v395 = vld [vmem:[#allocation2 + $0x30] sm:$0xff]
      %v396 = vld [vmem:[#allocation2 + $0x38] sm:$0xff]
      %v397 = vld [vmem:[#allocation2 + $0x40] sm:$0x1]
      %v398 = vld [vmem:[#allocation2 + $0x48] sm:$0xff]
      %v399 = vld [vmem:[#allocation2 + $0x50] sm:$0xff]
      %v400 = vld [vmem:[#allocation2 + $0x58] sm:$0x1]
      %v401 = vld [vmem:[#allocation2 + $0x60] sm:$0xff]
      %v402 = vld [vmem:[#allocation2 + $0x68] sm:$0xff]
      %v403 = vld [vmem:[#allocation2 + $0x70] sm:$0x1]
      %v404 = vld [vmem:[#allocation2 + $0x78] sm:$0xff]
      %v405 = vld [vmem:[#allocation2 + $0x80] sm:$0xff]
      %v406 = vld [vmem:[#allocation2 + $0x88] sm:$0x1]
      %v407 = vld [vmem:[#allocation2 + $0x90] sm:$0xff]
      %v408 = vld [vmem:[#allocation2 + $0x98] sm:$0xff]
      %v409 = vld [vmem:[#allocation2 + $0xa0] sm:$0x1]
      %v410 = vld [vmem:[#allocation2 + $0xa8] sm:$0xff]
      %v411 = vld [vmem:[#allocation2 + $0xb0] sm:$0xff]
      %v412 = vld [vmem:[#allocation2 + $0xb8] sm:$0x1]
      %v413 = vld [vmem:[#allocation2 + $0xc0] sm:$0xff]
      %v414 = vld [vmem:[#allocation2 + $0xc8] sm:$0xff]
      %v415 = vld [vmem:[#allocation2 + $0xd0] sm:$0x1]
      %v416 = vld [vmem:[#allocation2 + $0xd8] sm:$0xff]
      %v417 = vld [vmem:[#allocation2 + $0xe0] sm:$0xff]
      %v418 = vld [vmem:[#allocation2 + $0xe8] sm:$0x1]
      %v419 = vld [vmem:[%s2] sm:$0x7]
      %v420 = vld [vmem:[%s2 + $0x4] sm:$0x7]
      %v421 = vld [vmem:[%s2 + $0x8] sm:$0x7]
      %v422 = vlaneseq
      %v423 = vshrl.u32 %v422, 7
      %v424 = vsub.s32 0, %v423
      %v425 = vrot.slane %v419, %v424
      %v426 = vmul.f32 %v389, %v425
      %v427 = vmul.f32 %v390, %v425
      %v428 = vmul.f32 %v392, %v425
      %v429 = vmul.f32 %v393, %v425
      %v430 = vmul.f32 %v395, %v425
      %v431 = vmul.f32 %v396, %v425
      %v432 = vmul.f32 %v398, %v425
      %v433 = vmul.f32 %v399, %v425
      %v434 = vmul.f32 %v401, %v425
      %v435 = vmul.f32 %v402, %v425
      %v436 = vmul.f32 %v404, %v425
      %v437 = vmul.f32 %v405, %v425
      %v438 = vmul.f32 %v407, %v425
      %v439 = vmul.f32 %v408, %v425
      %v440 = vmul.f32 %v410, %v425
      %v441 = vmul.f32 %v411, %v425
      %v442 = vlaneseq
      %v443 = vshrl.u32 %v442, 7
      %v444 = vsub.s32 1, %v443
      %v445 = vrot.slane %v419, %v444
      %v446 = vmul.f32 %v390, %v445
      %v447 = vmul.f32 %v393, %v445
      %v448 = vmul.f32 %v396, %v445
      %v449 = vmul.f32 %v399, %v445
      %v450 = vmul.f32 %v402, %v445
      %v451 = vmul.f32 %v405, %v445
      %v452 = vmul.f32 %v408, %v445
      %v453 = vmul.f32 %v411, %v445
      %v462 = vrot.slane %v446, 1
      %v463 = vrot.slane %v447, 1
      %v464 = vrot.slane %v448, 1
      %v465 = vrot.slane %v449, 1
      %v466 = vrot.slane %v450, 1
      %v467 = vrot.slane %v451, 1
      %v468 = vrot.slane %v452, 1
      %v469 = vrot.slane %v453, 1
      %v478 = vadd.f32 %v426, %v462
      %v479 = vadd.f32 %v427, %v462
      %v480 = vadd.f32 %v428, %v463
      %v481 = vadd.f32 %v429, %v463
      %v482 = vadd.f32 %v430, %v464
      %v483 = vadd.f32 %v431, %v464
      %v484 = vadd.f32 %v432, %v465
      %v485 = vadd.f32 %v433, %v465
      %v486 = vadd.f32 %v434, %v466
      %v487 = vadd.f32 %v435, %v466
      %v488 = vadd.f32 %v436, %v467
      %v489 = vadd.f32 %v437, %v467
      %v490 = vadd.f32 %v438, %v468
      %v491 = vadd.f32 %v439, %v468
      %v492 = vadd.f32 %v440, %v469
      %v493 = vadd.f32 %v441, %v469
      %v494 = vlaneseq
      %v495 = vshrl.u32 %v494, 7
      %v496 = vsub.s32 2, %v495
      %v497 = vrot.slane %v419, %v496
      %v498 = vmul.f32 %v390, %v497
      %v499 = vmul.f32 %v391, %v497
      %v500 = vmul.f32 %v393, %v497
      %v501 = vmul.f32 %v394, %v497
      %v502 = vmul.f32 %v396, %v497
      %v503 = vmul.f32 %v397, %v497
      %v504 = vmul.f32 %v399, %v497
      %v505 = vmul.f32 %v400, %v497
      %v506 = vmul.f32 %v402, %v497
      %v507 = vmul.f32 %v403, %v497
      %v508 = vmul.f32 %v405, %v497
      %v509 = vmul.f32 %v406, %v497
      %v510 = vmul.f32 %v408, %v497
      %v511 = vmul.f32 %v409, %v497
      %v512 = vmul.f32 %v411, %v497
      %v513 = vmul.f32 %v412, %v497
      %vm530 = vcmask 1045504
      %v531 = vrot.slane %v498, 2
      %v532 = vrot.slane %v499, 2
      %v533 = vsel %vm530, %v531, %v532
      %v534 = vrot.slane %v500, 2
      %v535 = vrot.slane %v501, 2
      %v536 = vsel %vm530, %v534, %v535
      %v537 = vrot.slane %v502, 2
      %v538 = vrot.slane %v503, 2
      %v539 = vsel %vm530, %v537, %v538
      %v540 = vrot.slane %v504, 2
      %v541 = vrot.slane %v505, 2
      %v542 = vsel %vm530, %v540, %v541
      %v543 = vrot.slane %v506, 2
      %v544 = vrot.slane %v507, 2
      %v545 = vsel %vm530, %v543, %v544
      %v546 = vrot.slane %v508, 2
      %v547 = vrot.slane %v509, 2
      %v548 = vsel %vm530, %v546, %v547
      %v549 = vrot.slane %v510, 2
      %v550 = vrot.slane %v511, 2
      %v551 = vsel %vm530, %v549, %v550
      %v552 = vrot.slane %v512, 2
      %v553 = vrot.slane %v513, 2
      %v554 = vsel %vm530, %v552, %v553
      %v571 = vadd.f32 %v478, %v531
      %v572 = vadd.f32 %v479, %v533
      %v573 = vadd.f32 %v480, %v534
      %v574 = vadd.f32 %v481, %v536
      %v575 = vadd.f32 %v482, %v537
      %v576 = vadd.f32 %v483, %v539
      %v577 = vadd.f32 %v484, %v540
      %v578 = vadd.f32 %v485, %v542
      %v579 = vadd.f32 %v486, %v543
      %v580 = vadd.f32 %v487, %v545
      %v581 = vadd.f32 %v488, %v546
      %v582 = vadd.f32 %v489, %v548
      %v583 = vadd.f32 %v490, %v549
      %v584 = vadd.f32 %v491, %v551
      %v585 = vadd.f32 %v492, %v552
      %v586 = vadd.f32 %v493, %v554
      %v587 = vlaneseq
      %v588 = vshrl.u32 %v587, 7
      %v589 = vsub.s32 0, %v588
      %v590 = vrot.slane %v420, %v589
      %v591 = vmul.f32 %v392, %v590
      %v592 = vmul.f32 %v393, %v590
      %v593 = vmul.f32 %v395, %v590
      %v594 = vmul.f32 %v396, %v590
      %v595 = vmul.f32 %v398, %v590
      %v596 = vmul.f32 %v399, %v590
      %v597 = vmul.f32 %v401, %v590
      %v598 = vmul.f32 %v402, %v590
      %v599 = vmul.f32 %v404, %v590
      %v600 = vmul.f32 %v405, %v590
      %v601 = vmul.f32 %v407, %v590
      %v602 = vmul.f32 %v408, %v590
      %v603 = vmul.f32 %v410, %v590
      %v604 = vmul.f32 %v411, %v590
      %v605 = vmul.f32 %v413, %v590
      %v606 = vmul.f32 %v414, %v590
      %v607 = vadd.f32 %v571, %v591
      %v608 = vadd.f32 %v572, %v592
      %v609 = vadd.f32 %v573, %v593
      %v610 = vadd.f32 %v574, %v594
      %v611 = vadd.f32 %v575, %v595
      %v612 = vadd.f32 %v576, %v596
      %v613 = vadd.f32 %v577, %v597
      %v614 = vadd.f32 %v578, %v598
      %v615 = vadd.f32 %v579, %v599
      %v616 = vadd.f32 %v580, %v600
      %v617 = vadd.f32 %v581, %v601
      %v618 = vadd.f32 %v582, %v602
      %v619 = vadd.f32 %v583, %v603
      %v620 = vadd.f32 %v584, %v604
      %v621 = vadd.f32 %v585, %v605
      %v622 = vadd.f32 %v586, %v606
      %v623 = vlaneseq
      %v624 = vshrl.u32 %v623, 7
      %v625 = vsub.s32 1, %v624
      %v626 = vrot.slane %v420, %v625
      %v627 = vmul.f32 %v393, %v626
      %v628 = vmul.f32 %v396, %v626
      %v629 = vmul.f32 %v399, %v626
      %v630 = vmul.f32 %v402, %v626
      %v631 = vmul.f32 %v405, %v626
      %v632 = vmul.f32 %v408, %v626
      %v633 = vmul.f32 %v411, %v626
      %v634 = vmul.f32 %v414, %v626
      %v643 = vrot.slane %v627, 1
      %v644 = vrot.slane %v628, 1
      %v645 = vrot.slane %v629, 1
      %v646 = vrot.slane %v630, 1
      %v647 = vrot.slane %v631, 1
      %v648 = vrot.slane %v632, 1
      %v649 = vrot.slane %v633, 1
      %v650 = vrot.slane %v634, 1
      %v659 = vadd.f32 %v607, %v643
      %v660 = vadd.f32 %v608, %v643
      %v661 = vadd.f32 %v609, %v644
      %v662 = vadd.f32 %v610, %v644
      %v663 = vadd.f32 %v611, %v645
      %v664 = vadd.f32 %v612, %v645
      %v665 = vadd.f32 %v613, %v646
      %v666 = vadd.f32 %v614, %v646
      %v667 = vadd.f32 %v615, %v647
      %v668 = vadd.f32 %v616, %v647
      %v669 = vadd.f32 %v617, %v648
      %v670 = vadd.f32 %v618, %v648
      %v671 = vadd.f32 %v619, %v649
      %v672 = vadd.f32 %v620, %v649
      %v673 = vadd.f32 %v621, %v650
      %v674 = vadd.f32 %v622, %v650
      %v675 = vlaneseq
      %v676 = vshrl.u32 %v675, 7
      %v677 = vsub.s32 2, %v676
      %v678 = vrot.slane %v420, %v677
      %v679 = vmul.f32 %v393, %v678
      %v680 = vmul.f32 %v394, %v678
      %v681 = vmul.f32 %v396, %v678
      %v682 = vmul.f32 %v397, %v678
      %v683 = vmul.f32 %v399, %v678
      %v684 = vmul.f32 %v400, %v678
      %v685 = vmul.f32 %v402, %v678
      %v686 = vmul.f32 %v403, %v678
      %v687 = vmul.f32 %v405, %v678
      %v688 = vmul.f32 %v406, %v678
      %v689 = vmul.f32 %v408, %v678
      %v690 = vmul.f32 %v409, %v678
      %v691 = vmul.f32 %v411, %v678
      %v692 = vmul.f32 %v412, %v678
      %v693 = vmul.f32 %v414, %v678
      %v694 = vmul.f32 %v415, %v678
      %v711 = vrot.slane %v679, 2
      %v712 = vrot.slane %v680, 2
      %v713 = vsel %vm530, %v711, %v712
      %v714 = vrot.slane %v681, 2
      %v715 = vrot.slane %v682, 2
      %v716 = vsel %vm530, %v714, %v715
      %v717 = vrot.slane %v683, 2
      %v718 = vrot.slane %v684, 2
      %v719 = vsel %vm530, %v717, %v718
      %v720 = vrot.slane %v685, 2
      %v721 = vrot.slane %v686, 2
      %v722 = vsel %vm530, %v720, %v721
      %v723 = vrot.slane %v687, 2
      %v724 = vrot.slane %v688, 2
      %v725 = vsel %vm530, %v723, %v724
      %v726 = vrot.slane %v689, 2
      %v727 = vrot.slane %v690, 2
      %v728 = vsel %vm530, %v726, %v727
      %v729 = vrot.slane %v691, 2
      %v730 = vrot.slane %v692, 2
      %v731 = vsel %vm530, %v729, %v730
      %v732 = vrot.slane %v693, 2
      %v733 = vrot.slane %v694, 2
      %v734 = vsel %vm530, %v732, %v733
      %v751 = vadd.f32 %v659, %v711
      %v752 = vadd.f32 %v660, %v713
      %v753 = vadd.f32 %v661, %v714
      %v754 = vadd.f32 %v662, %v716
      %v755 = vadd.f32 %v663, %v717
      %v756 = vadd.f32 %v664, %v719
      %v757 = vadd.f32 %v665, %v720
      %v758 = vadd.f32 %v666, %v722
      %v759 = vadd.f32 %v667, %v723
      %v760 = vadd.f32 %v668, %v725
      %v761 = vadd.f32 %v669, %v726
      %v762 = vadd.f32 %v670, %v728
      %v763 = vadd.f32 %v671, %v729
      %v764 = vadd.f32 %v672, %v731
      %v765 = vadd.f32 %v673, %v732
      %v766 = vadd.f32 %v674, %v734
      %v767 = vlaneseq
      %v768 = vshrl.u32 %v767, 7
      %v769 = vsub.s32 0, %v768
      %v770 = vrot.slane %v421, %v769
      %v771 = vmul.f32 %v395, %v770
      %v772 = vmul.f32 %v396, %v770
      %v773 = vmul.f32 %v398, %v770
      %v774 = vmul.f32 %v399, %v770
      %v775 = vmul.f32 %v401, %v770
      %v776 = vmul.f32 %v402, %v770
      %v777 = vmul.f32 %v404, %v770
      %v778 = vmul.f32 %v405, %v770
      %v779 = vmul.f32 %v407, %v770
      %v780 = vmul.f32 %v408, %v770
      %v781 = vmul.f32 %v410, %v770
      %v782 = vmul.f32 %v411, %v770
      %v783 = vmul.f32 %v413, %v770
      %v784 = vmul.f32 %v414, %v770
      %v785 = vmul.f32 %v416, %v770
      %v786 = vmul.f32 %v417, %v770
      %v787 = vadd.f32 %v751, %v771
      %v788 = vadd.f32 %v752, %v772
      %v789 = vadd.f32 %v753, %v773
      %v790 = vadd.f32 %v754, %v774
      %v791 = vadd.f32 %v755, %v775
      %v792 = vadd.f32 %v756, %v776
      %v793 = vadd.f32 %v757, %v777
      %v794 = vadd.f32 %v758, %v778
      %v795 = vadd.f32 %v759, %v779
      %v796 = vadd.f32 %v760, %v780
      %v797 = vadd.f32 %v761, %v781
      %v798 = vadd.f32 %v762, %v782
      %v799 = vadd.f32 %v763, %v783
      %v800 = vadd.f32 %v764, %v784
      %v801 = vadd.f32 %v765, %v785
      %v802 = vadd.f32 %v766, %v786
      %v803 = vlaneseq
      %v804 = vshrl.u32 %v803, 7
      %v805 = vsub.s32 1, %v804
      %v806 = vrot.slane %v421, %v805
      %v807 = vmul.f32 %v396, %v806
      %v808 = vmul.f32 %v399, %v806
      %v809 = vmul.f32 %v402, %v806
      %v810 = vmul.f32 %v405, %v806
      %v811 = vmul.f32 %v408, %v806
      %v812 = vmul.f32 %v411, %v806
      %v813 = vmul.f32 %v414, %v806
      %v814 = vmul.f32 %v417, %v806
      %v823 = vrot.slane %v807, 1
      %v824 = vrot.slane %v808, 1
      %v825 = vrot.slane %v809, 1
      %v826 = vrot.slane %v810, 1
      %v827 = vrot.slane %v811, 1
      %v828 = vrot.slane %v812, 1
      %v829 = vrot.slane %v813, 1
      %v830 = vrot.slane %v814, 1
      %v839 = vadd.f32 %v787, %v823
      %v840 = vadd.f32 %v788, %v823
      %v841 = vadd.f32 %v789, %v824
      %v842 = vadd.f32 %v790, %v824
      %v843 = vadd.f32 %v791, %v825
      %v844 = vadd.f32 %v792, %v825
      %v845 = vadd.f32 %v793, %v826
      %v846 = vadd.f32 %v794, %v826
      %v847 = vadd.f32 %v795, %v827
      %v848 = vadd.f32 %v796, %v827
      %v849 = vadd.f32 %v797, %v828
      %v850 = vadd.f32 %v798, %v828
      %v851 = vadd.f32 %v799, %v829
      %v852 = vadd.f32 %v800, %v829
      %v853 = vadd.f32 %v801, %v830
      %v854 = vadd.f32 %v802, %v830
      %v855 = vlaneseq
      %v856 = vshrl.u32 %v855, 7
      %v857 = vsub.s32 2, %v856
      %v858 = vrot.slane %v421, %v857
      %v859 = vmul.f32 %v396, %v858
      %v860 = vmul.f32 %v397, %v858
      %v861 = vmul.f32 %v399, %v858
      %v862 = vmul.f32 %v400, %v858
      %v863 = vmul.f32 %v402, %v858
      %v864 = vmul.f32 %v403, %v858
      %v865 = vmul.f32 %v405, %v858
      %v866 = vmul.f32 %v406, %v858
      %v867 = vmul.f32 %v408, %v858
      %v868 = vmul.f32 %v409, %v858
      %v869 = vmul.f32 %v411, %v858
      %v870 = vmul.f32 %v412, %v858
      %v871 = vmul.f32 %v414, %v858
      %v872 = vmul.f32 %v415, %v858
      %v873 = vmul.f32 %v417, %v858
      %v874 = vmul.f32 %v418, %v858
      %v891 = vrot.slane %v859, 2
      %v892 = vrot.slane %v860, 2
      %v893 = vsel %vm530, %v891, %v892
      %v894 = vrot.slane %v861, 2
      %v895 = vrot.slane %v862, 2
      %v896 = vsel %vm530, %v894, %v895
      %v897 = vrot.slane %v863, 2
      %v898 = vrot.slane %v864, 2
      %v899 = vsel %vm530, %v897, %v898
      %v900 = vrot.slane %v865, 2
      %v901 = vrot.slane %v866, 2
      %v902 = vsel %vm530, %v900, %v901
      %v903 = vrot.slane %v867, 2
      %v904 = vrot.slane %v868, 2
      %v905 = vsel %vm530, %v903, %v904
      %v906 = vrot.slane %v869, 2
      %v907 = vrot.slane %v870, 2
      %v908 = vsel %vm530, %v906, %v907
      %v909 = vrot.slane %v871, 2
      %v910 = vrot.slane %v872, 2
      %v911 = vsel %vm530, %v909, %v910
      %v912 = vrot.slane %v873, 2
      %v913 = vrot.slane %v874, 2
      %v914 = vsel %vm530, %v912, %v913
      %v931 = vadd.f32 %v839, %v891
      %v932 = vadd.f32 %v840, %v893
      %v933 = vadd.f32 %v841, %v894
      %v934 = vadd.f32 %v842, %v896
      %v935 = vadd.f32 %v843, %v897
      %v936 = vadd.f32 %v844, %v899
      %v937 = vadd.f32 %v845, %v900
      %v938 = vadd.f32 %v846, %v902
      %v939 = vadd.f32 %v847, %v903
      %v940 = vadd.f32 %v848, %v905
      %v941 = vadd.f32 %v849, %v906
      %v942 = vadd.f32 %v850, %v908
      %v943 = vadd.f32 %v851, %v909
      %v944 = vadd.f32 %v852, %v911
      %v945 = vadd.f32 %v853, %v912
      %v946 = vadd.f32 %v854, %v914
      %v947 = vld [vmem:[%s3] sm:$0x1]
      %v949 = vlaneseq
      %v950 = vshrl.u32 %v949, 7
      %v951 = vsub.s32 0, %v950
      %v952 = vrot.slane %v947, %v951
      %v954 = vadd.f32 %v931, %v952
      %v955 = vadd.f32 %v932, %v952
      %v956 = vadd.f32 %v933, %v952
      %v957 = vadd.f32 %v934, %v952
      %v958 = vadd.f32 %v935, %v952
      %v959 = vadd.f32 %v936, %v952
      %v960 = vadd.f32 %v937, %v952
      %v961 = vadd.f32 %v938, %v952
      %v962 = vadd.f32 %v939, %v952
      %v963 = vadd.f32 %v940, %v952
      %v964 = vadd.f32 %v941, %v952
      %v965 = vadd.f32 %v942, %v952
      %v966 = vadd.f32 %v943, %v952
      %v967 = vadd.f32 %v944, %v952
      %v968 = vadd.f32 %v945, %v952
      %v969 = vadd.f32 %v946, %v952
      %v970 = vmax.f32 %v954, 0.0
      %v971 = vmax.f32 %v955, 0.0
      %v972 = vmax.f32 %v956, 0.0
      %v973 = vmax.f32 %v957, 0.0
      %v974 = vmax.f32 %v958, 0.0
      %v975 = vmax.f32 %v959, 0.0
      %v976 = vmax.f32 %v960, 0.0
      %v977 = vmax.f32 %v961, 0.0
      %v978 = vmax.f32 %v962, 0.0
      %v979 = vmax.f32 %v963, 0.0
      %v980 = vmax.f32 %v964, 0.0
      %v981 = vmax.f32 %v965, 0.0
      %v982 = vmax.f32 %v966, 0.0
      %v983 = vmax.f32 %v967, 0.0
      %v984 = vmax.f32 %v968, 0.0
      %v985 = vmax.f32 %v969, 0.0
      %vm986 = vcmask 523271
      %987 = vst.msk [vmem:[%s197 - $0x7] sm:$0x80] %vm986, %v970
      %vm988 = vcmask 522240
      %989 = vst.msk [vmem:[%s197 + $0x1] sm:$0x7f] %vm988, %v971
      %990 = vst.msk [vmem:[%s197 + $0x1] sm:$0x80] %vm986, %v972
      %991 = vst.msk [vmem:[%s197 + $0x9] sm:$0x7f] %vm988, %v973
      %992 = vst.msk [vmem:[%s197 + $0x9] sm:$0x80] %vm986, %v974
      %993 = vst.msk [vmem:[%s197 + $0x11] sm:$0x7f] %vm988, %v975
      %994 = vst.msk [vmem:[%s197 + $0x11] sm:$0x80] %vm986, %v976
      %995 = vst.msk [vmem:[%s197 + $0x19] sm:$0x7f] %vm988, %v977
      %996 = vst.msk [vmem:[%s197 + $0x19] sm:$0x80] %vm986, %v978
      %997 = vst.msk [vmem:[%s197 + $0x21] sm:$0x7f] %vm988, %v979
      %998 = vst.msk [vmem:[%s197 + $0x21] sm:$0x80] %vm986, %v980
      %999 = vst.msk [vmem:[%s197 + $0x29] sm:$0x7f] %vm988, %v981
      %1000 = vst.msk [vmem:[%s197 + $0x29] sm:$0x80] %vm986, %v982
      %1001 = vst.msk [vmem:[%s197 + $0x31] sm:$0x7f] %vm988, %v983
      %1002 = vst.msk [vmem:[%s197 + $0x31] sm:$0x80] %vm986, %v984
      %1003 = vst.msk [vmem:[%s197 + $0x39] sm:$0x7f] %vm988, %v985
      %p1004 = scmp.lt.s32.totalorder %s15, 1
      %s1005 = scalar_select %p1004, %s15, 1
      %s1006 = smul.addr %s1005, 8
      %s1007 = smul.addr %s1006, 8
      %s1008 = scalar_lea.vmem %s4, %s1007
      // Predicated region
      $region37: #{osblock_forward.7} parent=35 // pred_check
        %p1009 = pneg %p122
      $region38: #{osblock_forward.7} parent=35 // pred_check_branch
        %1011 = sbr.rel (%p1009) target = $region40
      $region39: #{osblock_forward.7} parent=35 // pred_region
        _
      $region40: #{osblock_forward.7} parent=35 // pred_fallthru
        _
    $region36: #{osblock_forward.7} parent=5 // pred_fallthru
      _
    %p1012 = scmp.le.s32.totalorder 2, %s10
    // Predicated region
    $region41: #{osblock_forward.7} parent=5 // pred_check
      %p1013 = pneg %p1012
    $region42: #{osblock_forward.7} parent=5 // pred_check_branch
      %1015 = sbr.rel (%p1013) target = $region44
    $region43: #{osblock_forward.7} parent=5 // pred_region
      %s1016 = ssub.s32 %s10, 2
      // Predicated region
      $region45: #{osblock_forward.7} parent=43 // pred_check
        %p1017 = pneg %p128
      $region46: #{osblock_forward.7} parent=43 // pred_check_branch
        %1019 = sbr.rel (%p1017) target = $region48
      $region47: #{osblock_forward.7} parent=43 // pred_region
        %p1020 = scmp.lt.s32.totalorder %s16, 1
        %s1021 = scalar_select %p1020, %s16, 1
        %s1022 = smul.addr %s1021, 8
        %s1023 = smul.addr %s1022, 8
        %s1024 = scalar_lea.vmem %s4, %s1023
      $region48: #{osblock_forward.7} parent=43 // pred_fallthru
        _
    $region44: #{osblock_forward.7} parent=5 // pred_fallthru
      _
  $region6: #{osblock_forward.7} parent=0 // loop_footer
    %s14 = sadd.s32 1, %s10
  $region7: #{osblock_forward.7} parent=0 // loop_footer_branch
    %9 = sbr.rel target = $region3
  $region8: #{osblock_forward.7} parent=0 // loop_exit
    _

// kernel: osblock_forward.5
$region0: #{osblock_forward.5}
  #allocation0 [shape = 'u32[]', space=smem, size = 0x4, offset = 0x4, fixed_abs, tag = 'smem constant byte address 0x4 - core index']
  #allocation1 [shape = 'u32[144,128]{1,0:T(1,128)}', space=vmem, size = 0x12000, scoped, tag = 'internal scratch']
  #allocation2 [shape = 'f32[10,17,128]{2,1,0:T(8,128)}', space=vmem, size = 0x1e000, scoped, tag = 'scratch operand']
  %s0 = inlined_call_operand.vmem [shape: f32[2,8,8,32], index: 0, kind: input, shape index: {}]
  %s1 = inlined_call_operand.vmem [shape: f32[32,32], index: 1, kind: input, shape index: {}]
  %s2 = inlined_call_operand.vmem [shape: f32[1,32], index: 2, kind: input, shape index: {}]
  %s3 = inlined_call_operand.vmem [shape: f32[32,128], index: 3, kind: input, shape index: {}]
  %s4 = inlined_call_operand.vmem [shape: f32[3,3,128], index: 4, kind: input, shape index: {}]
  %s5 = inlined_call_operand.vmem [shape: f32[1,128], index: 5, kind: input, shape index: {}]
  %s6 = inlined_call_operand.vmem [shape: f32[2,8,8,128], index: 6, kind: output, shape index: {}]
  %s7 = sld [smem:[#allocation0]]
  $region57: #{osblock_forward.5} parent=0
    _
  %s9 = ssub.s32 1, %s7
  %s10 = scalar_select 0, %s9, %s7
  loop: start=0, step=1, limit=4
  $region2: #{osblock_forward.5} parent=0 // loop_pre_header
    _
  $region3: #{osblock_forward.5} parent=0 // loop_header
    %s12 = sphi 0, %s16
    %p13 = scmp.ge.s32.totalorder %s12, 4
    %s22 = sphi 0, %s24
    %s25 = sphi 0, %s22
    %s26 = sphi 0, %s25
    %s42 = sphi 0, %s26
    %s46 = sphi 0, %s46
    %s48 = sphi 0, %s46
    %s49 = sphi 0, %s48
    %s63 = sphi 0, %s49
    %s67 = sphi 0, %s67
    %s69 = sphi 0, %s67
    %s70 = sphi 0, %s69
    %s84 = sphi 0, %s70
    %s88 = sphi 0, %s88
    %s90 = sphi 0, %s88
    %s91 = sphi 0, %s90
    %s105 = sphi 0, %s91
    %s109 = sphi 0, %s109
    %s111 = sphi 0, %s109
    %s112 = sphi 0, %s111
    %s126 = sphi 0, %s112
    %s130 = sphi 0, %s130
    %s132 = sphi 0, %s130
    %s133 = sphi 0, %s132
    %s147 = sphi 0, %s133
    %s153 = sphi 0, %s155
    %s156 = sphi 0, %s153
    %s157 = sphi 0, %s156
    %s173 = sphi 0, %s157
  $region4: #{osblock_forward.5} parent=0 // loop_header_branch
    %15 = sbr.rel (%p13) target = $region8
  $region5: #{osblock_forward.5} parent=0 // loop_body
    %s17 = ssub.s32 %s12, 1
    %s18 = ssub.s32 %s12, 2
    %s19 = sadd.s32 %s12, 1
    %s20 = ssub.s32 %s12, %s19
    %p21 = scmp.eq.s32.totalorder %s20, 0
    %s23 = sadd.s32 %s22, 1
    %s24 = scalar_select %p21, %s22, %s23
    %p27 = pneg %p21
    %p28 = scmp.eq.s32.totalorder %s12, 1
    %p29 = por %p27, %p28
    %p30 = scmp.ne.s32.totalorder %s22, %s25
    %p31 = scmp.eq.s32.totalorder %s12, 0
    %p32 = por %p30, %p31
    %p33 = scmp.ne.s32.totalorder %s22, %s25
    %p34 = scmp.eq.s32.totalorder %s17, 1
    %p35 = por %p33, %p34
    %p36 = scmp.ne.s32.totalorder %s25, %s26
    %p37 = scmp.eq.s32.totalorder %s17, 0
    %p38 = por %p36, %p37
    %p39 = scmp.ne.s32.totalorder %s25, %s26
    %p40 = scmp.eq.s32.totalorder %s18, 1
    %p41 = por %p39, %p40
    %p43 = scmp.ne.s32.totalorder %s26, %s42
    %p44 = scmp.eq.s32.totalorder %s18, 0
    %p45 = por %p43, %p44
    %s47 = sadd.s32 %s46, 1
    %p50 = scmp.eq.s32.totalorder %s12, 1
    %p51 = scmp.ne.s32.totalorder %s46, %s48
    %p52 = scmp.eq.s32.totalorder %s12, 0
    %p53 = por %p51, %p52
    %p54 = scmp.ne.s32.totalorder %s46, %s48
    %p55 = scmp.eq.s32.totalorder %s17, 1
    %p56 = por %p54, %p55
    %p57 = scmp.ne.s32.totalorder %s48, %s49
    %p58 = scmp.eq.s32.totalorder %s17, 0
    %p59 = por %p57, %p58
    %p60 = scmp.ne.s32.totalorder %s48, %s49
    %p61 = scmp.eq.s32.totalorder %s18, 1
    %p62 = por %p60, %p61
    %p64 = scmp.ne.s32.totalorder %s49, %s63
    %p65 = scmp.eq.s32.totalorder %s18, 0
    %p66 = por %p64, %p65
    %s68 = sadd.s32 %s67, 1
    %p71 = scmp.eq.s32.totalorder %s12, 1
    %p72 = scmp.ne.s32.totalorder %s67, %s69
    %p73 = scmp.eq.s32.totalorder %s12, 0
    %p74 = por %p72, %p73
    %p75 = scmp.ne.s32.totalorder %s67, %s69
    %p76 = scmp.eq.s32.totalorder %s17, 1
    %p77 = por %p75, %p76
    %p78 = scmp.ne.s32.totalorder %s69, %s70
    %p79 = scmp.eq.s32.totalorder %s17, 0
    %p80 = por %p78, %p79
    %p81 = scmp.ne.s32.totalorder %s69, %s70
    %p82 = scmp.eq.s32.totalorder %s18, 1
    %p83 = por %p81, %p82
    %p85 = scmp.ne.s32.totalorder %s70, %s84
    %p86 = scmp.eq.s32.totalorder %s18, 0
    %p87 = por %p85, %p86
    %s89 = sadd.s32 %s88, 1
    %p92 = scmp.eq.s32.totalorder %s12, 1
    %p93 = scmp.ne.s32.totalorder %s88, %s90
    %p94 = scmp.eq.s32.totalorder %s12, 0
    %p95 = por %p93, %p94
    %p96 = scmp.ne.s32.totalorder %s88, %s90
    %p97 = scmp.eq.s32.totalorder %s17, 1
    %p98 = por %p96, %p97
    %p99 = scmp.ne.s32.totalorder %s90, %s91
    %p100 = scmp.eq.s32.totalorder %s17, 0
    %p101 = por %p99, %p100
    %p102 = scmp.ne.s32.totalorder %s90, %s91
    %p103 = scmp.eq.s32.totalorder %s18, 1
    %p104 = por %p102, %p103
    %p106 = scmp.ne.s32.totalorder %s91, %s105
    %p107 = scmp.eq.s32.totalorder %s18, 0
    %p108 = por %p106, %p107
    %s110 = sadd.s32 %s109, 1
    %p113 = scmp.eq.s32.totalorder %s12, 1
    %p114 = scmp.ne.s32.totalorder %s109, %s111
    %p115 = scmp.eq.s32.totalorder %s12, 0
    %p116 = por %p114, %p115
    %p117 = scmp.ne.s32.totalorder %s109, %s111
    %p118 = scmp.eq.s32.totalorder %s17, 1
    %p119 = por %p117, %p118
    %p120 = scmp.ne.s32.totalorder %s111, %s112
    %p121 = scmp.eq.s32.totalorder %s17, 0
    %p122 = por %p120, %p121
    %p123 = scmp.ne.s32.totalorder %s111, %s112
    %p124 = scmp.eq.s32.totalorder %s18, 1
    %p125 = por %p123, %p124
    %p127 = scmp.ne.s32.totalorder %s112, %s126
    %p128 = scmp.eq.s32.totalorder %s18, 0
    %p129 = por %p127, %p128
    %s131 = sadd.s32 %s130, 1
    %p134 = scmp.eq.s32.totalorder %s12, 1
    %p135 = scmp.ne.s32.totalorder %s130, %s132
    %p136 = scmp.eq.s32.totalorder %s12, 0
    %p137 = por %p135, %p136
    %p138 = scmp.ne.s32.totalorder %s130, %s132
    %p139 = scmp.eq.s32.totalorder %s17, 1
    %p140 = por %p138, %p139
    %p141 = scmp.ne.s32.totalorder %s132, %s133
    %p142 = scmp.eq.s32.totalorder %s17, 0
    %p143 = por %p141, %p142
    %p144 = scmp.ne.s32.totalorder %s132, %s133
    %p145 = scmp.eq.s32.totalorder %s18, 1
    %p146 = por %p144, %p145
    %p148 = scmp.ne.s32.totalorder %s133, %s147
    %p149 = scmp.eq.s32.totalorder %s18, 0
    %p150 = por %p148, %p149
    %s151 = ssub.s32 %s12, %s19
    %p152 = scmp.eq.s32.totalorder %s151, 0
    %s154 = sadd.s32 %s153, 1
    %s155 = scalar_select %p152, %s153, %s154
    %p158 = pneg %p152
    %p159 = scmp.eq.s32.totalorder %s12, 1
    %p160 = por %p158, %p159
    %p161 = scmp.ne.s32.totalorder %s153, %s156
    %p162 = scmp.eq.s32.totalorder %s12, 0
    %p163 = por %p161, %p162
    %p164 = scmp.ne.s32.totalorder %s153, %s156
    %p165 = scmp.eq.s32.totalorder %s17, 1
    %p166 = por %p164, %p165
    %p167 = scmp.ne.s32.totalorder %s156, %s157
    %p168 = scmp.eq.s32.totalorder %s17, 0
    %p169 = por %p167, %p168
    %p170 = scmp.ne.s32.totalorder %s156, %s157
    %p171 = scmp.eq.s32.totalorder %s18, 1
    %p172 = por %p170, %p171
    %p174 = scmp.ne.s32.totalorder %s157, %s173
    %p175 = scmp.eq.s32.totalorder %s18, 0
    %p176 = por %p174, %p175
    %p177 = scmp.le.s32.totalorder 1, %s12
    %p178 = scmp.lt.s32.totalorder %s12, 3
    %p179 = pnand %p177, %p178
    %p180 = pneg %p179
    // Predicated region
    $region9: #{osblock_forward.5} parent=5 // pred_check
      _
    $region10: #{osblock_forward.5} parent=5 // pred_check_branch
      %182 = sbr.rel (%p179) target = $region12
    $region11: #{osblock_forward.5} parent=5 // pred_region
      %s183 = ssub.s32 %s12, 1
      // Predicated region
      $region13: #{osblock_forward.5} parent=11 // pred_check
        %p184 = pneg %p59
      $region14: #{osblock_forward.5} parent=11 // pred_check_branch
        %186 = sbr.rel (%p184) target = $region16
      $region15: #{osblock_forward.5} parent=11 // pred_region
        _
      $region16: #{osblock_forward.5} parent=11 // pred_fallthru
        _
      // Predicated region
      $region17: #{osblock_forward.5} parent=11 // pred_check
        %p187 = pneg %p80
      $region18: #{osblock_forward.5} parent=11 // pred_check_branch
        %189 = sbr.rel (%p187) target = $region20
      $region19: #{osblock_forward.5} parent=11 // pred_region
        _
      $region20: #{osblock_forward.5} parent=11 // pred_fallthru
        _
      // Predicated region
      $region21: #{osblock_forward.5} parent=11 // pred_check
        %p190 = pneg %p101
      $region22: #{osblock_forward.5} parent=11 // pred_check_branch
        %192 = sbr.rel (%p190) target = $region24
      $region23: #{osblock_forward.5} parent=11 // pred_region
        _
      $region24: #{osblock_forward.5} parent=11 // pred_fallthru
        _
      // Predicated region
      $region25: #{osblock_forward.5} parent=11 // pred_check
        %p193 = pneg %p122
      $region26: #{osblock_forward.5} parent=11 // pred_check_branch
        %195 = sbr.rel (%p193) target = $region28
      $region27: #{osblock_forward.5} parent=11 // pred_region
        _
      $region28: #{osblock_forward.5} parent=11 // pred_fallthru
        _
      // Predicated region
      $region29: #{osblock_forward.5} parent=11 // pred_check
        %p196 = pneg %p143
      $region30: #{osblock_forward.5} parent=11 // pred_check_branch
        %198 = sbr.rel (%p196) target = $region32
      $region31: #{osblock_forward.5} parent=11 // pred_region
        _
      $region32: #{osblock_forward.5} parent=11 // pred_fallthru
        _
    $region12: #{osblock_forward.5} parent=5 // pred_fallthru
      _
    %p199 = scmp.lt.s32.totalorder %s12, 2
    // Predicated region
    $region33: #{osblock_forward.5} parent=5 // pred_check
      %p200 = pneg %p199
    $region34: #{osblock_forward.5} parent=5 // pred_check_branch
      %202 = sbr.rel (%p200) target = $region36
    $region35: #{osblock_forward.5} parent=5 // pred_region
      // Predicated region
      $region37: #{osblock_forward.5} parent=35 // pred_check
        %p203 = pneg %p32
      $region38: #{osblock_forward.5} parent=35 // pred_check_branch
        %205 = sbr.rel (%p203) target = $region40
      $region39: #{osblock_forward.5} parent=35 // pred_region
        %p206 = scmp.lt.s32.totalorder %s12, 1
        %s207 = scalar_select %p206, %s12, 1
        %s208 = smul.addr %s207, 8
        %s209 = smul.addr %s208, 8
        %s210 = scalar_lea.vmem %s0, %s209
      $region40: #{osblock_forward.5} parent=35 // pred_fallthru
        _
    $region36: #{osblock_forward.5} parent=5 // pred_fallthru
      _
    %p211 = scmp.le.s32.totalorder 1, %s12
    %p212 = scmp.lt.s32.totalorder %s12, 3
    %p213 = pnand %p211, %p212
    %p214 = pneg %p213
    // Predicated region
    $region41: #{osblock_forward.5} parent=5 // pred_check
      _
    $region42: #{osblock_forward.5} parent=5 // pred_check_branch
      %216 = sbr.rel (%p213) target = $region44
    $region43: #{osblock_forward.5} parent=5 // pred_region
      %s217 = ssub.s32 %s12, 1
      %p218 = scmp.lt.s32.totalorder %s17, 1
      %s219 = scalar_select %p218, %s17, 1
      %s220 = smul.addr %s219, 8
      %s221 = smul.addr %s220, 8
      %s222 = scalar_lea.vmem %s0, %s221
      %p223 = pneg %p38
      %p224 = pneg %p35
      %p225 = pneg %p59
      %p226 = pneg %p56
      %p227 = pneg %p80
      %p228 = pneg %p77
      %p229 = pneg %p101
      %p230 = pneg %p98
      %p231 = pneg %p122
      %p232 = pneg %p119
      %p233 = pneg %p143
      %p234 = pneg %p140
      %p235 = pneg %p169
      %p236 = pneg %p166
      %p237 = scmp.lt.s32.totalorder %s17, 1
      %s238 = scalar_select %p237, %s17, 1
      %s239 = smul.addr %s238, 8
      %s240 = smul.addr %s239, 8
      %s241 = scalar_lea.vmem %s6, %s240
      %p242 = scmp.lt.s32.totalorder %s17, 1
      %s243 = scalar_select %p242, %s17, 1
      %s244 = smul.addr %s243, 8
      %s245 = smul.addr %s244, 8
      %s246 = scalar_lea.vmem %s0, %s245
      %p247 = scmp.lt.s32.totalorder %s17, 1
      %s248 = scalar_select %p247, %s17, 1
      %s249 = smul.addr %s248, 8
      %s250 = smul.addr %s249, 8
      %s251 = scalar_lea.vmem %s6, %s250
      %v252 = vld [vmem:[%s246] sm:$0xff]
      %v253 = vld [vmem:[%s246 + $0x8] sm:$0xff]
      %v254 = vld [vmem:[%s246 + $0x10] sm:$0xff]
      %v255 = vld [vmem:[%s246 + $0x18] sm:$0xff]
      %v256 = vld [vmem:[%s246 + $0x20] sm:$0xff]
      %v257 = vld [vmem:[%s246 + $0x28] sm:$0xff]
      %v258 = vld [vmem:[%s246 + $0x30] sm:$0xff]
      %v259 = vld [vmem:[%s246 + $0x38] sm:$0xff]
      %v260 = vld [vmem:[%s1] sm:$0xff]
      %v261 = vld [vmem:[%s1 + $0x8] sm:$0xff]
      %v262 = vld [vmem:[%s1 + $0x10] sm:$0xff]
      %v263 = vld [vmem:[%s1 + $0x18] sm:$0xff]
      %v264 = vld [vmem:[%s2] sm:$0x1]
      %v266 = vlaneseq
      %v267 = vshrl.u32 %v266, 7
      %v268 = vsub.s32 0, %v267
      %v269 = vrot.slane %v264, %v268
      %vm271 = vcmask 261120
      %v273 = vsel %vm271, %v252, 0
      %v276 = vsel %vm271, %v253, 0
      %v279 = vsel %vm271, %v254, 0
      %v282 = vsel %vm271, %v255, 0
      %v285 = vsel %vm271, %v256, 0
      %v288 = vsel %vm271, %v257, 0
      %v291 = vsel %vm271, %v258, 0
      %v294 = vsel %vm271, %v259, 0
      %296 = vmatprep.subr.mxu0 0.0
      %297 = vmatpush1.msra.mxu0 0.0
      %298 = vmatprep.subr.mxu0 0.0
      %299 = vmatpush1.msra.mxu0 0.0
      %300 = vmatprep.subr.mxu0 0.0
      %301 = vmatpush1.msra.mxu0 0.0
      %302 = vmatprep.subr.mxu0 0.0
      %303 = vmatpush1.msra.mxu0 0.0
      %304 = vmatprep.subr.mxu0 0.0
      %305 = vmatpush1.msra.mxu0 0.0
      %306 = vmatprep.subr.mxu0 0.0
      %307 = vmatpush1.msra.mxu0 0.0
      %308 = vmatprep.subr.mxu0 0.0
      %309 = vmatpush1.msra.mxu0 0.0
      %310 = vmatprep.subr.mxu0 0.0
      %311 = vmatpush1.msra.mxu0 0.0
      %312 = vmatprep.subr.mxu0 0.0
      %313 = vmatpush1.msra.mxu0 0.0
      %314 = vmatprep.subr.mxu0 0.0
      %315 = vmatpush1.msra.mxu0 0.0
      %316 = vmatprep.subr.mxu0 0.0
      %317 = vmatpush1.msra.mxu0 0.0
      %318 = vmatprep.subr.mxu0 0.0
      %319 = vmatpush1.msra.mxu0 0.0
      %320 = vmatprep.subr.mxu0 0.0
      %321 = vmatpush1.msra.mxu0 %v263
      %322 = vmatprep.subr.mxu0 0.0
      %323 = vmatpush1.msra.mxu0 %v262
      %324 = vmatprep.subr.mxu0 0.0
      %325 = vmatpush1.msra.mxu0 %v261
      %326 = vmatprep.subr.mxu0 0.0
      %327 = vmatpush1.msra.mxu0 %v260
      %328 = vmatprep.subr.mxu0 0.0
      %329 = vmatpush2.msra.mxu0 0.0
      %330 = vmatprep.subr.mxu0 0.0
      %331 = vmatpush2.msra.mxu0 0.0
      %332 = vmatprep.subr.mxu0 0.0
      %333 = vmatpush2.msra.mxu0 0.0
      %334 = vmatprep.subr.mxu0 0.0
      %335 = vmatpush2.msra.mxu0 0.0
      %336 = vmatprep.subr.mxu0 0.0
      %337 = vmatpush2.msra.mxu0 0.0
      %338 = vmatprep.subr.mxu0 0.0
      %339 = vmatpush2.msra.mxu0 0.0
      %340 = vmatprep.subr.mxu0 0.0
      %341 = vmatpush2.msra.mxu0 0.0
      %342 = vmatprep.subr.mxu0 0.0
      %343 = vmatpush2.msra.mxu0 0.0
      %344 = vmatprep.subr.mxu0 0.0
      %345 = vmatpush2.msra.mxu0 0.0
      %346 = vmatprep.subr.mxu0 0.0
      %347 = vmatpush2.msra.mxu0 0.0
      %348 = vmatprep.subr.mxu0 0.0
      %349 = vmatpush2.msra.mxu0 0.0
      %350 = vmatprep.subr.mxu0 0.0
      %351 = vmatpush2.msra.mxu0 0.0
      %352 = vmatprep.subr.mxu0 0.0
      %353 = vmatpush2.msra.mxu0 0.0
      %354 = vmatprep.subr.mxu0 0.0
      %355 = vmatpush2.msra.mxu0 0.0
      %356 = vmatprep.subr.mxu0 0.0
      %357 = vmatpush2.msra.mxu0 0.0
      %358 = vmatprep.subr.mxu0 0.0
      %359 = vmatpush2.msra.mxu0 0.0
      %360 = vmatprep.mubr.f32.mxu0 0.0
      %361 = vmatmul.mubr.f32.gmra.mxu0 %v273
      %v362 = vpop.f32.mrf.mxu0
      %v363 = vadd.f32 %v269, %v362
      %v364 = vpop.f32.mrf.mxu0
      %365 = vmatprep.mubr.f32.mxu0 0.0
      %366 = vmatmul.mubr.f32.gmra.mxu0 %v276
      %v367 = vpop.f32.mrf.mxu0
      %v368 = vadd.f32 %v269, %v367
      %v369 = vpop.f32.mrf.mxu0
      %370 = vmatprep.mubr.f32.mxu0 0.0
      %371 = vmatmul.mubr.f32.gmra.mxu0 %v279
      %v372 = vpop.f32.mrf.mxu0
      %v373 = vadd.f32 %v269, %v372
      %v374 = vpop.f32.mrf.mxu0
      %375 = vmatprep.mubr.f32.mxu0 0.0
      %376 = vmatmul.mubr.f32.gmra.mxu0 %v282
      %v377 = vpop.f32.mrf.mxu0
      %v378 = vadd.f32 %v269, %v377
      %v379 = vpop.f32.mrf.mxu0
      %380 = vmatprep.mubr.f32.mxu0 0.0
      %381 = vmatmul.mubr.f32.gmra.mxu0 %v285
      %v382 = vpop.f32.mrf.mxu0
      %v383 = vadd.f32 %v269, %v382
      %v384 = vpop.f32.mrf.mxu0
      %385 = vmatprep.mubr.f32.mxu0 0.0
      %386 = vmatmul.mubr.f32.gmra.mxu0 %v288
      %v387 = vpop.f32.mrf.mxu0
      %v388 = vadd.f32 %v269, %v387
      %v389 = vpop.f32.mrf.mxu0
      %390 = vmatprep.mubr.f32.mxu0 0.0
      %391 = vmatmul.mubr.f32.gmra.mxu0 %v291
      %v392 = vpop.f32.mrf.mxu0
      %v393 = vadd.f32 %v269, %v392
      %v394 = vpop.f32.mrf.mxu0
      %395 = vmatprep.mubr.f32.mxu0 0.0
      %396 = vmatmul.mubr.f32.gmra.mxu0 %v294
      %v397 = vpop.f32.mrf.mxu0
      %v398 = vadd.f32 %v269, %v397
      %v399 = vpop.f32.mrf.mxu0
      %400 = vdwg.mxu0
      %v401 = vmax.f32 %v363, 0.0
      %v402 = vmax.f32 %v368, 0.0
      %v403 = vmax.f32 %v373, 0.0
      %v404 = vmax.f32 %v378, 0.0
      %v405 = vmax.f32 %v383, 0.0
      %v406 = vmax.f32 %v388, 0.0
      %v407 = vmax.f32 %v393, 0.0
      %v408 = vmax.f32 %v398, 0.0
      %v409 = vld [vmem:[%s3] sm:$0xff]
      %v410 = vld [vmem:[%s3 + $0x8] sm:$0xff]
      %v411 = vld [vmem:[%s3 + $0x10] sm:$0xff]
      %v412 = vld [vmem:[%s3 + $0x18] sm:$0xff]
      %v414 = vsel %vm271, %v401, 0
      %v417 = vsel %vm271, %v402, 0
      %v420 = vsel %vm271, %v403, 0
      %v423 = vsel %vm271, %v404, 0
      %v426 = vsel %vm271, %v405, 0
      %v429 = vsel %vm271, %v406, 0
      %v432 = vsel %vm271, %v407, 0
      %v435 = vsel %vm271, %v408, 0
      %437 = vmatprep.subr.mxu0 0.0
      %438 = vmatpush1.msra.mxu0 0.0
      %439 = vmatprep.subr.mxu0 0.0
      %440 = vmatpush1.msra.mxu0 0.0
      %441 = vmatprep.subr.mxu0 0.0
      %442 = vmatpush1.msra.mxu0 0.0
      %443 = vmatprep.subr.mxu0 0.0
      %444 = vmatpush1.msra.mxu0 0.0
      %445 = vmatprep.subr.mxu0 0.0
      %446 = vmatpush1.msra.mxu0 0.0
      %447 = vmatprep.subr.mxu0 0.0
      %448 = vmatpush1.msra.mxu0 0.0
      %449 = vmatprep.subr.mxu0 0.0
      %450 = vmatpush1.msra.mxu0 0.0
      %451 = vmatprep.subr.mxu0 0.0
      %452 = vmatpush1.msra.mxu0 0.0
      %453 = vmatprep.subr.mxu0 0.0
      %454 = vmatpush1.msra.mxu0 0.0
      %455 = vmatprep.subr.mxu0 0.0
      %456 = vmatpush1.msra.mxu0 0.0
      %457 = vmatprep.subr.mxu0 0.0
      %458 = vmatpush1.msra.mxu0 0.0
      %459 = vmatprep.subr.mxu0 0.0
      %460 = vmatpush1.msra.mxu0 0.0
      %461 = vmatprep.subr.mxu0 0.0
      %462 = vmatpush1.msra.mxu0 %v412
      %463 = vmatprep.subr.mxu0 0.0
      %464 = vmatpush1.msra.mxu0 %v411
      %465 = vmatprep.subr.mxu0 0.0
      %466 = vmatpush1.msra.mxu0 %v410
      %467 = vmatprep.subr.mxu0 0.0
      %468 = vmatpush1.msra.mxu0 %v409
      %469 = vmatprep.subr.mxu0 0.0
      %470 = vmatpush2.msra.mxu0 0.0
      %471 = vmatprep.subr.mxu0 0.0
      %472 = vmatpush2.msra.mxu0 0.0
      %473 = vmatprep.subr.mxu0 0.0
      %474 = vmatpush2.msra.mxu0 0.0
      %475 = vmatprep.subr.mxu0 0.0
      %476 = vmatpush2.msra.mxu0 0.0
      %477 = vmatprep.subr.mxu0 0.0
      %478 = vmatpush2.msra.mxu0 0.0
      %479 = vmatprep.subr.mxu0 0.0
      %480 = vmatpush2.msra.mxu0 0.0
      %481 = vmatprep.subr.mxu0 0.0
      %482 = vmatpush2.msra.mxu0 0.0
      %483 = vmatprep.subr.mxu0 0.0
      %484 = vmatpush2.msra.mxu0 0.0
      %485 = vmatprep.subr.mxu0 0.0
      %486 = vmatpush2.msra.mxu0 0.0
      %487 = vmatprep.subr.mxu0 0.0
      %488 = vmatpush2.msra.mxu0 0.0
      %489 = vmatprep.subr.mxu0 0.0
      %490 = vmatpush2.msra.mxu0 0.0
      %491 = vmatprep.subr.mxu0 0.0
      %492 = vmatpush2.msra.mxu0 0.0
      %493 = vmatprep.subr.mxu0 0.0
      %494 = vmatpush2.msra.mxu0 0.0
      %495 = vmatprep.subr.mxu0 0.0
      %496 = vmatpush2.msra.mxu0 0.0
      %497 = vmatprep.subr.mxu0 0.0
      %498 = vmatpush2.msra.mxu0 0.0
      %499 = vmatprep.subr.mxu0 0.0
      %500 = vmatpush2.msra.mxu0 0.0
      %501 = vmatprep.mubr.f32.mxu0 0.0
      %502 = vmatmul.mubr.f32.gmra.mxu0 %v414
      %v503 = vpop.f32.mrf.mxu0
      %v504 = vadd.f32 0.0, %v503
      %v505 = vpop.f32.mrf.mxu0
      %506 = vmatprep.mubr.f32.mxu0 0.0
      %507 = vmatmul.mubr.f32.gmra.mxu0 %v417
      %v508 = vpop.f32.mrf.mxu0
      %v509 = vadd.f32 0.0, %v508
      %v510 = vpop.f32.mrf.mxu0
      %511 = vmatprep.mubr.f32.mxu0 0.0
      %512 = vmatmul.mubr.f32.gmra.mxu0 %v420
      %v513 = vpop.f32.mrf.mxu0
      %v514 = vadd.f32 0.0, %v513
      %v515 = vpop.f32.mrf.mxu0
      %516 = vmatprep.mubr.f32.mxu0 0.0
      %517 = vmatmul.mubr.f32.gmra.mxu0 %v423
      %v518 = vpop.f32.mrf.mxu0
      %v519 = vadd.f32 0.0, %v518
      %v520 = vpop.f32.mrf.mxu0
      %521 = vmatprep.mubr.f32.mxu0 0.0
      %522 = vmatmul.mubr.f32.gmra.mxu0 %v426
      %v523 = vpop.f32.mrf.mxu0
      %v524 = vadd.f32 0.0, %v523
      %v525 = vpop.f32.mrf.mxu0
      %526 = vmatprep.mubr.f32.mxu0 0.0
      %527 = vmatmul.mubr.f32.gmra.mxu0 %v429
      %v528 = vpop.f32.mrf.mxu0
      %v529 = vadd.f32 0.0, %v528
      %v530 = vpop.f32.mrf.mxu0
      %531 = vmatprep.mubr.f32.mxu0 0.0
      %532 = vmatmul.mubr.f32.gmra.mxu0 %v432
      %v533 = vpop.f32.mrf.mxu0
      %v534 = vadd.f32 0.0, %v533
      %v535 = vpop.f32.mrf.mxu0
      %536 = vmatprep.mubr.f32.mxu0 0.0
      %537 = vmatmul.mubr.f32.gmra.mxu0 %v435
      %v538 = vpop.f32.mrf.mxu0
      %v539 = vadd.f32 0.0, %v538
      %v540 = vpop.f32.mrf.mxu0
      %541 = vdwg.mxu0
      %542 = vst [vmem:[#allocation2] sm:$0xff] 0.0
      %543 = vst [vmem:[#allocation2 + $0x8] sm:$0xff] 0.0
      %544 = vst [vmem:[#allocation2 + $0x10] sm:$0x1] 0.0
      %545 = vst [vmem:[#allocation2 + $0x18] sm:$0xff] 0.0
      %546 = vst [vmem:[#allocation2 + $0x20] sm:$0xff] 0.0
      %547 = vst [vmem:[#allocation2 + $0x28] sm:$0x1] 0.0
      %548 = vst [vmem:[#allocation2 + $0x30] sm:$0xff] 0.0
      %549 = vst [vmem:[#allocation2 + $0x38] sm:$0xff] 0.0
      %550 = vst [vmem:[#allocation2 + $0x40] sm:$0x1] 0.0
      %551 = vst [vmem:[#allocation2 + $0x48] sm:$0xff] 0.0
      %552 = vst [vmem:[#allocation2 + $0x50] sm:$0xff] 0.0
      %553 = vst [vmem:[#allocation2 + $0x58] sm:$0x1] 0.0
      %554 = vst [vmem:[#allocation2 + $0x60] sm:$0xff] 0.0
      %555 = vst [vmem:[#allocation2 + $0x68] sm:$0xff] 0.0
      %556 = vst [vmem:[#allocation2 + $0x70] sm:$0x1] 0.0
      %557 = vst [vmem:[#allocation2 + $0x78] sm:$0xff] 0.0
      %558 = vst [vmem:[#allocation2 + $0x80] sm:$0xff] 0.0
      %559 = vst [vmem:[#allocation2 + $0x88] sm:$0x1] 0.0
      %560 = vst [vmem:[#allocation2 + $0x90] sm:$0xff] 0.0
      %561 = vst [vmem:[#allocation2 + $0x98] sm:$0xff] 0.0
      %562 = vst [vmem:[#allocation2 + $0xa0] sm:$0x1] 0.0
      %563 = vst [vmem:[#allocation2 + $0xa8] sm:$0xff] 0.0
      %564 = vst [vmem:[#allocation2 + $0xb0] sm:$0xff] 0.0
      %565 = vst [vmem:[#allocation2 + $0xb8] sm:$0x1] 0.0
      %566 = vst [vmem:[#allocation2 + $0xc0] sm:$0xff] 0.0
      %567 = vst [vmem:[#allocation2 + $0xc8] sm:$0xff] 0.0
      %568 = vst [vmem:[#allocation2 + $0xd0] sm:$0x1] 0.0
      %569 = vst [vmem:[#allocation2 + $0xd8] sm:$0xff] 0.0
      %570 = vst [vmem:[#allocation2 + $0xe0] sm:$0xff] 0.0
      %571 = vst [vmem:[#allocation2 + $0xe8] sm:$0x1] 0.0
      %s572 = scalar_lea.vmem [#allocation2], 24
      %573 = vst [vmem:[%s572 + $0x8] sm:$0xff] %v504
      %574 = vst [vmem:[%s572 + $0x20] sm:$0xff] %v509
      %575 = vst [vmem:[%s572 + $0x38] sm:$0xff] %v514
      %576 = vst [vmem:[%s572 + $0x50] sm:$0xff] %v519
      %577 = vst [vmem:[%s572 + $0x68] sm:$0xff] %v524
      %578 = vst [vmem:[%s572 + $0x80] sm:$0xff] %v529
      %579 = vst [vmem:[%s572 + $0x98] sm:$0xff] %v534
      %580 = vst [vmem:[%s572 + $0xb0] sm:$0xff] %v539
      %v581 = vld [vmem:[#allocation2] sm:$0xff]
      %v582 = vld [vmem:[#allocation2 + $0x8] sm:$0xff]
      %v583 = vld [vmem:[#allocation2 + $0x10] sm:$0x1]
      %v584 = vld [vmem:[#allocation2 + $0x18] sm:$0xff]
      %v585 = vld [vmem:[#allocation2 + $0x20] sm:$0xff]
      %v586 = vld [vmem:[#allocation2 + $0x28] sm:$0x1]
      %v587 = vld [vmem:[#allocation2 + $0x30] sm:$0xff]
      %v588 = vld [vmem:[#allocation2 + $0x38] sm:$0xff]
      %v589 = vld [vmem:[#allocation2 + $0x40] sm:$0x1]
      %v590 = vld [vmem:[#allocation2 + $0x48] sm:$0xff]
      %v591 = vld [vmem:[#allocation2 + $0x50] sm:$0xff]
      %v592 = vld [vmem:[#allocation2 + $0x58] sm:$0x1]
      %v593 = vld [vmem:[#allocation2 + $0x60] sm:$0xff]
      %v594 = vld [vmem:[#allocation2 + $0x68] sm:$0xff]
      %v595 = vld [vmem:[#allocation2 + $0x70] sm:$0x1]
      %v596 = vld [vmem:[#allocation2 + $0x78] sm:$0xff]
      %v597 = vld [vmem:[#allocation2 + $0x80] sm:$0xff]
      %v598 = vld [vmem:[#allocation2 + $0x88] sm:$0x1]
      %v599 = vld [vmem:[#allocation2 + $0x90] sm:$0xff]
      %v600 = vld [vmem:[#allocation2 + $0x98] sm:$0xff]
      %v601 = vld [vmem:[#allocation2 + $0xa0] sm:$0x1]
      %v602 = vld [vmem:[#allocation2 + $0xa8] sm:$0xff]
      %v603 = vld [vmem:[#allocation2 + $0xb0] sm:$0xff]
      %v604 = vld [vmem:[#allocation2 + $0xb8] sm:$0x1]
      %v605 = vld [vmem:[#allocation2 + $0xc0] sm:$0xff]
      %v606 = vld [vmem:[#allocation2 + $0xc8] sm:$0xff]
      %v607 = vld [vmem:[#allocation2 + $0xd0] sm:$0x1]
      %v608 = vld [vmem:[#allocation2 + $0xd8] sm:$0xff]
      %v609 = vld [vmem:[#allocation2 + $0xe0] sm:$0xff]
      %v610 = vld [vmem:[#allocation2 + $0xe8] sm:$0x1]
      %v611 = vld [vmem:[%s4] sm:$0x7]
      %v612 = vld [vmem:[%s4 + $0x4] sm:$0x7]
      %v613 = vld [vmem:[%s4 + $0x8] sm:$0x7]
      %v614 = vlaneseq
      %v615 = vshrl.u32 %v614, 7
      %v616 = vsub.s32 0, %v615
      %v617 = vrot.slane %v611, %v616
      %v618 = vmul.f32 %v581, %v617
      %v619 = vmul.f32 %v582, %v617
      %v620 = vmul.f32 %v584, %v617
      %v621 = vmul.f32 %v585, %v617
      %v622 = vmul.f32 %v587, %v617
      %v623 = vmul.f32 %v588, %v617
      %v624 = vmul.f32 %v590, %v617
      %v625 = vmul.f32 %v591, %v617
      %v626 = vmul.f32 %v593, %v617
      %v627 = vmul.f32 %v594, %v617
      %v628 = vmul.f32 %v596, %v617
      %v629 = vmul.f32 %v597, %v617
      %v630 = vmul.f32 %v599, %v617
      %v631 = vmul.f32 %v600, %v617
      %v632 = vmul.f32 %v602, %v617
      %v633 = vmul.f32 %v603, %v617
      %v634 = vlaneseq
      %v635 = vshrl.u32 %v634, 7
      %v636 = vsub.s32 1, %v635
      %v637 = vrot.slane %v611, %v636
      %v638 = vmul.f32 %v582, %v637
      %v639 = vmul.f32 %v585, %v637
      %v640 = vmul.f32 %v588, %v637
      %v641 = vmul.f32 %v591, %v637
      %v642 = vmul.f32 %v594, %v637
      %v643 = vmul.f32 %v597, %v637
      %v644 = vmul.f32 %v600, %v637
      %v645 = vmul.f32 %v603, %v637
      %v654 = vrot.slane %v638, 1
      %v655 = vrot.slane %v639, 1
      %v656 = vrot.slane %v640, 1
      %v657 = vrot.slane %v641, 1
      %v658 = vrot.slane %v642, 1
      %v659 = vrot.slane %v643, 1
      %v660 = vrot.slane %v644, 1
      %v661 = vrot.slane %v645, 1
      %v670 = vadd.f32 %v618, %v654
      %v671 = vadd.f32 %v619, %v654
      %v672 = vadd.f32 %v620, %v655
      %v673 = vadd.f32 %v621, %v655
      %v674 = vadd.f32 %v622, %v656
      %v675 = vadd.f32 %v623, %v656
      %v676 = vadd.f32 %v624, %v657
      %v677 = vadd.f32 %v625, %v657
      %v678 = vadd.f32 %v626, %v658
      %v679 = vadd.f32 %v627, %v658
      %v680 = vadd.f32 %v628, %v659
      %v681 = vadd.f32 %v629, %v659
      %v682 = vadd.f32 %v630, %v660
      %v683 = vadd.f32 %v631, %v660
      %v684 = vadd.f32 %v632, %v661
      %v685 = vadd.f32 %v633, %v661
      %v686 = vlaneseq
      %v687 = vshrl.u32 %v686, 7
      %v688 = vsub.s32 2, %v687
      %v689 = vrot.slane %v611, %v688
      %v690 = vmul.f32 %v582, %v689
      %v691 = vmul.f32 %v583, %v689
      %v692 = vmul.f32 %v585, %v689
      %v693 = vmul.f32 %v586, %v689
      %v694 = vmul.f32 %v588, %v689
      %v695 = vmul.f32 %v589, %v689
      %v696 = vmul.f32 %v591, %v689
      %v697 = vmul.f32 %v592, %v689
      %v698 = vmul.f32 %v594, %v689
      %v699 = vmul.f32 %v595, %v689
      %v700 = vmul.f32 %v597, %v689
      %v701 = vmul.f32 %v598, %v689
      %v702 = vmul.f32 %v600, %v689
      %v703 = vmul.f32 %v601, %v689
      %v704 = vmul.f32 %v603, %v689
      %v705 = vmul.f32 %v604, %v689
      %vm722 = vcmask 1045504
      %v723 = vrot.slane %v690, 2
      %v724 = vrot.slane %v691, 2
      %v725 = vsel %vm722, %v723, %v724
      %v726 = vrot.slane %v692, 2
      %v727 = vrot.slane %v693, 2
      %v728 = vsel %vm722, %v726, %v727
      %v729 = vrot.slane %v694, 2
      %v730 = vrot.slane %v695, 2
      %v731 = vsel %vm722, %v729, %v730
      %v732 = vrot.slane %v696, 2
      %v733 = vrot.slane %v697, 2
      %v734 = vsel %vm722, %v732, %v733
      %v735 = vrot.slane %v698, 2
      %v736 = vrot.slane %v699, 2
      %v737 = vsel %vm722, %v735, %v736
      %v738 = vrot.slane %v700, 2
      %v739 = vrot.slane %v701, 2
      %v740 = vsel %vm722, %v738, %v739
      %v741 = vrot.slane %v702, 2
      %v742 = vrot.slane %v703, 2
      %v743 = vsel %vm722, %v741, %v742
      %v744 = vrot.slane %v704, 2
      %v745 = vrot.slane %v705, 2
      %v746 = vsel %vm722, %v744, %v745
      %v763 = vadd.f32 %v670, %v723
      %v764 = vadd.f32 %v671, %v725
      %v765 = vadd.f32 %v672, %v726
      %v766 = vadd.f32 %v673, %v728
      %v767 = vadd.f32 %v674, %v729
      %v768 = vadd.f32 %v675, %v731
      %v769 = vadd.f32 %v676, %v732
      %v770 = vadd.f32 %v677, %v734
      %v771 = vadd.f32 %v678, %v735
      %v772 = vadd.f32 %v679, %v737
      %v773 = vadd.f32 %v680, %v738
      %v774 = vadd.f32 %v681, %v740
      %v775 = vadd.f32 %v682, %v741
      %v776 = vadd.f32 %v683, %v743
      %v777 = vadd.f32 %v684, %v744
      %v778 = vadd.f32 %v685, %v746
      %v779 = vlaneseq
      %v780 = vshrl.u32 %v779, 7
      %v781 = vsub.s32 0, %v780
      %v782 = vrot.slane %v612, %v781
      %v783 = vmul.f32 %v584, %v782
      %v784 = vmul.f32 %v585, %v782
      %v785 = vmul.f32 %v587, %v782
      %v786 = vmul.f32 %v588, %v782
      %v787 = vmul.f32 %v590, %v782
      %v788 = vmul.f32 %v591, %v782
      %v789 = vmul.f32 %v593, %v782
      %v790 = vmul.f32 %v594, %v782
      %v791 = vmul.f32 %v596, %v782
      %v792 = vmul.f32 %v597, %v782
      %v793 = vmul.f32 %v599, %v782
      %v794 = vmul.f32 %v600, %v782
      %v795 = vmul.f32 %v602, %v782
      %v796 = vmul.f32 %v603, %v782
      %v797 = vmul.f32 %v605, %v782
      %v798 = vmul.f32 %v606, %v782
      %v799 = vadd.f32 %v763, %v783
      %v800 = vadd.f32 %v764, %v784
      %v801 = vadd.f32 %v765, %v785
      %v802 = vadd.f32 %v766, %v786
      %v803 = vadd.f32 %v767, %v787
      %v804 = vadd.f32 %v768, %v788
      %v805 = vadd.f32 %v769, %v789
      %v806 = vadd.f32 %v770, %v790
      %v807 = vadd.f32 %v771, %v791
      %v808 = vadd.f32 %v772, %v792
      %v809 = vadd.f32 %v773, %v793
      %v810 = vadd.f32 %v774, %v794
      %v811 = vadd.f32 %v775, %v795
      %v812 = vadd.f32 %v776, %v796
      %v813 = vadd.f32 %v777, %v797
      %v814 = vadd.f32 %v778, %v798
      %v815 = vlaneseq
      %v816 = vshrl.u32 %v815, 7
      %v817 = vsub.s32 1, %v816
      %v818 = vrot.slane %v612, %v817
      %v819 = vmul.f32 %v585, %v818
      %v820 = vmul.f32 %v588, %v818
      %v821 = vmul.f32 %v591, %v818
      %v822 = vmul.f32 %v594, %v818
      %v823 = vmul.f32 %v597, %v818
      %v824 = vmul.f32 %v600, %v818
      %v825 = vmul.f32 %v603, %v818
      %v826 = vmul.f32 %v606, %v818
      %v835 = vrot.slane %v819, 1
      %v836 = vrot.slane %v820, 1
      %v837 = vrot.slane %v821, 1
      %v838 = vrot.slane %v822, 1
      %v839 = vrot.slane %v823, 1
      %v840 = vrot.slane %v824, 1
      %v841 = vrot.slane %v825, 1
      %v842 = vrot.slane %v826, 1
      %v851 = vadd.f32 %v799, %v835
      %v852 = vadd.f32 %v800, %v835
      %v853 = vadd.f32 %v801, %v836
      %v854 = vadd.f32 %v802, %v836
      %v855 = vadd.f32 %v803, %v837
      %v856 = vadd.f32 %v804, %v837
      %v857 = vadd.f32 %v805, %v838
      %v858 = vadd.f32 %v806, %v838
      %v859 = vadd.f32 %v807, %v839
      %v860 = vadd.f32 %v808, %v839
      %v861 = vadd.f32 %v809, %v840
      %v862 = vadd.f32 %v810, %v840
      %v863 = vadd.f32 %v811, %v841
      %v864 = vadd.f32 %v812, %v841
      %v865 = vadd.f32 %v813, %v842
      %v866 = vadd.f32 %v814, %v842
      %v867 = vlaneseq
      %v868 = vshrl.u32 %v867, 7
      %v869 = vsub.s32 2, %v868
      %v870 = vrot.slane %v612, %v869
      %v871 = vmul.f32 %v585, %v870
      %v872 = vmul.f32 %v586, %v870
      %v873 = vmul.f32 %v588, %v870
      %v874 = vmul.f32 %v589, %v870
      %v875 = vmul.f32 %v591, %v870
      %v876 = vmul.f32 %v592, %v870
      %v877 = vmul.f32 %v594, %v870
      %v878 = vmul.f32 %v595, %v870
      %v879 = vmul.f32 %v597, %v870
      %v880 = vmul.f32 %v598, %v870
      %v881 = vmul.f32 %v600, %v870
      %v882 = vmul.f32 %v601, %v870
      %v883 = vmul.f32 %v603, %v870
      %v884 = vmul.f32 %v604, %v870
      %v885 = vmul.f32 %v606, %v870
      %v886 = vmul.f32 %v607, %v870
      %v903 = vrot.slane %v871, 2
      %v904 = vrot.slane %v872, 2
      %v905 = vsel %vm722, %v903, %v904
      %v906 = vrot.slane %v873, 2
      %v907 = vrot.slane %v874, 2
      %v908 = vsel %vm722, %v906, %v907
      %v909 = vrot.slane %v875, 2
      %v910 = vrot.slane %v876, 2
      %v911 = vsel %vm722, %v909, %v910
      %v912 = vrot.slane %v877, 2
      %v913 = vrot.slane %v878, 2
      %v914 = vsel %vm722, %v912, %v913
      %v915 = vrot.slane %v879, 2
      %v916 = vrot.slane %v880, 2
      %v917 = vsel %vm722, %v915, %v916
      %v918 = vrot.slane %v881, 2
      %v919 = vrot.slane %v882, 2
      %v920 = vsel %vm722, %v918, %v919
      %v921 = vrot.slane %v883, 2
      %v922 = vrot.slane %v884, 2
      %v923 = vsel %vm722, %v921, %v922
      %v924 = vrot.slane %v885, 2
      %v925 = vrot.slane %v886, 2
      %v926 = vsel %vm722, %v924, %v925
      %v943 = vadd.f32 %v851, %v903
      %v944 = vadd.f32 %v852, %v905
      %v945 = vadd.f32 %v853, %v906
      %v946 = vadd.f32 %v854, %v908
      %v947 = vadd.f32 %v855, %v909
      %v948 = vadd.f32 %v856, %v911
      %v949 = vadd.f32 %v857, %v912
      %v950 = vadd.f32 %v858, %v914
      %v951 = vadd.f32 %v859, %v915
      %v952 = vadd.f32 %v860, %v917
      %v953 = vadd.f32 %v861, %v918
      %v954 = vadd.f32 %v862, %v920
      %v955 = vadd.f32 %v863, %v921
      %v956 = vadd.f32 %v864, %v923
      %v957 = vadd.f32 %v865, %v924
      %v958 = vadd.f32 %v866, %v926
      %v959 = vlaneseq
      %v960 = vshrl.u32 %v959, 7
      %v961 = vsub.s32 0, %v960
      %v962 = vrot.slane %v613, %v961
      %v963 = vmul.f32 %v587, %v962
      %v964 = vmul.f32 %v588, %v962
      %v965 = vmul.f32 %v590, %v962
      %v966 = vmul.f32 %v591, %v962
      %v967 = vmul.f32 %v593, %v962
      %v968 = vmul.f32 %v594, %v962
      %v969 = vmul.f32 %v596, %v962
      %v970 = vmul.f32 %v597, %v962
      %v971 = vmul.f32 %v599, %v962
      %v972 = vmul.f32 %v600, %v962
      %v973 = vmul.f32 %v602, %v962
      %v974 = vmul.f32 %v603, %v962
      %v975 = vmul.f32 %v605, %v962
      %v976 = vmul.f32 %v606, %v962
      %v977 = vmul.f32 %v608, %v962
      %v978 = vmul.f32 %v609, %v962
      %v979 = vadd.f32 %v943, %v963
      %v980 = vadd.f32 %v944, %v964
      %v981 = vadd.f32 %v945, %v965
      %v982 = vadd.f32 %v946, %v966
      %v983 = vadd.f32 %v947, %v967
      %v984 = vadd.f32 %v948, %v968
      %v985 = vadd.f32 %v949, %v969
      %v986 = vadd.f32 %v950, %v970
      %v987 = vadd.f32 %v951, %v971
      %v988 = vadd.f32 %v952, %v972
      %v989 = vadd.f32 %v953, %v973
      %v990 = vadd.f32 %v954, %v974
      %v991 = vadd.f32 %v955, %v975
      %v992 = vadd.f32 %v956, %v976
      %v993 = vadd.f32 %v957, %v977
      %v994 = vadd.f32 %v958, %v978
      %v995 = vlaneseq
      %v996 = vshrl.u32 %v995, 7
      %v997 = vsub.s32 1, %v996
      %v998 = vrot.slane %v613, %v997
      %v999 = vmul.f32 %v588, %v998
      %v1000 = vmul.f32 %v591, %v998
      %v1001 = vmul.f32 %v594, %v998
      %v1002 = vmul.f32 %v597, %v998
      %v1003 = vmul.f32 %v600, %v998
      %v1004 = vmul.f32 %v603, %v998
      %v1005 = vmul.f32 %v606, %v998
      %v1006 = vmul.f32 %v609, %v998
      %v1015 = vrot.slane %v999, 1
      %v1016 = vrot.slane %v1000, 1
      %v1017 = vrot.slane %v1001, 1
      %v1018 = vrot.slane %v1002, 1
      %v1019 = vrot.slane %v1003, 1
      %v1020 = vrot.slane %v1004, 1
      %v1021 = vrot.slane %v1005, 1
      %v1022 = vrot.slane %v1006, 1
      %v1031 = vadd.f32 %v979, %v1015
      %v1032 = vadd.f32 %v980, %v1015
      %v1033 = vadd.f32 %v981, %v1016
      %v1034 = vadd.f32 %v982, %v1016
      %v1035 = vadd.f32 %v983, %v1017
      %v1036 = vadd.f32 %v984, %v1017
      %v1037 = vadd.f32 %v985, %v1018
      %v1038 = vadd.f32 %v986, %v1018
      %v1039 = vadd.f32 %v987, %v1019
      %v1040 = vadd.f32 %v988, %v1019
      %v1041 = vadd.f32 %v989, %v1020
      %v1042 = vadd.f32 %v990, %v1020
      %v1043 = vadd.f32 %v991, %v1021
      %v1044 = vadd.f32 %v992, %v1021
      %v1045 = vadd.f32 %v993, %v1022
      %v1046 = vadd.f32 %v994, %v1022
      %v1047 = vlaneseq
      %v1048 = vshrl.u32 %v1047, 7
      %v1049 = vsub.s32 2, %v1048
      %v1050 = vrot.slane %v613, %v1049
      %v1051 = vmul.f32 %v588, %v1050
      %v1052 = vmul.f32 %v589, %v1050
      %v1053 = vmul.f32 %v591, %v1050
      %v1054 = vmul.f32 %v592, %v1050
      %v1055 = vmul.f32 %v594, %v1050
      %v1056 = vmul.f32 %v595, %v1050
      %v1057 = vmul.f32 %v597, %v1050
      %v1058 = vmul.f32 %v598, %v1050
      %v1059 = vmul.f32 %v600, %v1050
      %v1060 = vmul.f32 %v601, %v1050
      %v1061 = vmul.f32 %v603, %v1050
      %v1062 = vmul.f32 %v604, %v1050
      %v1063 = vmul.f32 %v606, %v1050
      %v1064 = vmul.f32 %v607, %v1050
      %v1065 = vmul.f32 %v609, %v1050
      %v1066 = vmul.f32 %v610, %v1050
      %v1083 = vrot.slane %v1051, 2
      %v1084 = vrot.slane %v1052, 2
      %v1085 = vsel %vm722, %v1083, %v1084
      %v1086 = vrot.slane %v1053, 2
      %v1087 = vrot.slane %v1054, 2
      %v1088 = vsel %vm722, %v1086, %v1087
      %v1089 = vrot.slane %v1055, 2
      %v1090 = vrot.slane %v1056, 2
      %v1091 = vsel %vm722, %v1089, %v1090
      %v1092 = vrot.slane %v1057, 2
      %v1093 = vrot.slane %v1058, 2
      %v1094 = vsel %vm722, %v1092, %v1093
      %v1095 = vrot.slane %v1059, 2
      %v1096 = vrot.slane %v1060, 2
      %v1097 = vsel %vm722, %v1095, %v1096
      %v1098 = vrot.slane %v1061, 2
      %v1099 = vrot.slane %v1062, 2
      %v1100 = vsel %vm722, %v1098, %v1099
      %v1101 = vrot.slane %v1063, 2
      %v1102 = vrot.slane %v1064, 2
      %v1103 = vsel %vm722, %v1101, %v1102
      %v1104 = vrot.slane %v1065, 2
      %v1105 = vrot.slane %v1066, 2
      %v1106 = vsel %vm722, %v1104, %v1105
      %v1123 = vadd.f32 %v1031, %v1083
      %v1124 = vadd.f32 %v1032, %v1085
      %v1125 = vadd.f32 %v1033, %v1086
      %v1126 = vadd.f32 %v1034, %v1088
      %v1127 = vadd.f32 %v1035, %v1089
      %v1128 = vadd.f32 %v1036, %v1091
      %v1129 = vadd.f32 %v1037, %v1092
      %v1130 = vadd.f32 %v1038, %v1094
      %v1131 = vadd.f32 %v1039, %v1095
      %v1132 = vadd.f32 %v1040, %v1097
      %v1133 = vadd.f32 %v1041, %v1098
      %v1134 = vadd.f32 %v1042, %v1100
      %v1135 = vadd.f32 %v1043, %v1101
      %v1136 = vadd.f32 %v1044, %v1103
      %v1137 = vadd.f32 %v1045, %v1104
      %v1138 = vadd.f32 %v1046, %v1106
      %v1139 = vld [vmem:[%s5] sm:$0x1]
      %v1141 = vlaneseq
      %v1142 = vshrl.u32 %v1141, 7
      %v1143 = vsub.s32 0, %v1142
      %v1144 = vrot.slane %v1139, %v1143
      %v1146 = vadd.f32 %v1123, %v1144
      %v1147 = vadd.f32 %v1124, %v1144
      %v1148 = vadd.f32 %v1125, %v1144
      %v1149 = vadd.f32 %v1126, %v1144
      %v1150 = vadd.f32 %v1127, %v1144
      %v1151 = vadd.f32 %v1128, %v1144
      %v1152 = vadd.f32 %v1129, %v1144
      %v1153 = vadd.f32 %v1130, %v1144
      %v1154 = vadd.f32 %v1131, %v1144
      %v1155 = vadd.f32 %v1132, %v1144
      %v1156 = vadd.f32 %v1133, %v1144
      %v1157 = vadd.f32 %v1134, %v1144
      %v1158 = vadd.f32 %v1135, %v1144
      %v1159 = vadd.f32 %v1136, %v1144
      %v1160 = vadd.f32 %v1137, %v1144
      %v1161 = vadd.f32 %v1138, %v1144
      %v1162 = vmax.f32 %v1146, 0.0
      %v1163 = vmax.f32 %v1147, 0.0
      %v1164 = vmax.f32 %v1148, 0.0
      %v1165 = vmax.f32 %v1149, 0.0
      %v1166 = vmax.f32 %v1150, 0.0
      %v1167 = vmax.f32 %v1151, 0.0
      %v1168 = vmax.f32 %v1152, 0.0
      %v1169 = vmax.f32 %v1153, 0.0
      %v1170 = vmax.f32 %v1154, 0.0
      %v1171 = vmax.f32 %v1155, 0.0
      %v1172 = vmax.f32 %v1156, 0.0
      %v1173 = vmax.f32 %v1157, 0.0
      %v1174 = vmax.f32 %v1158, 0.0
      %v1175 = vmax.f32 %v1159, 0.0
      %v1176 = vmax.f32 %v1160, 0.0
      %v1177 = vmax.f32 %v1161, 0.0
      %1178 = vst [vmem:[%s251 - $0x7] sm:$0x80] %v1162
      %1179 = vst [vmem:[%s251 + $0x1] sm:$0x7f] %v1163
      %1180 = vst [vmem:[%s251 + $0x1] sm:$0x80] %v1164
      %1181 = vst [vmem:[%s251 + $0x9] sm:$0x7f] %v1165
      %1182 = vst [vmem:[%s251 + $0x9] sm:$0x80] %v1166
      %1183 = vst [vmem:[%s251 + $0x11] sm:$0x7f] %v1167
      %1184 = vst [vmem:[%s251 + $0x11] sm:$0x80] %v1168
      %1185 = vst [vmem:[%s251 + $0x19] sm:$0x7f] %v1169
      %1186 = vst [vmem:[%s251 + $0x19] sm:$0x80] %v1170
      %1187 = vst [vmem:[%s251 + $0x21] sm:$0x7f] %v1171
      %1188 = vst [vmem:[%s251 + $0x21] sm:$0x80] %v1172
      %1189 = vst [vmem:[%s251 + $0x29] sm:$0x7f] %v1173
      %1190 = vst [vmem:[%s251 + $0x29] sm:$0x80] %v1174
      %1191 = vst [vmem:[%s251 + $0x31] sm:$0x7f] %v1175
      %1192 = vst [vmem:[%s251 + $0x31] sm:$0x80] %v1176
      %1193 = vst [vmem:[%s251 + $0x39] sm:$0x7f] %v1177
      %p1194 = scmp.lt.s32.totalorder %s17, 1
      %s1195 = scalar_select %p1194, %s17, 1
      %s1196 = smul.addr %s1195, 8
      %s1197 = smul.addr %s1196, 8
      %s1198 = scalar_lea.vmem %s6, %s1197
      // Predicated region
      $region45: #{osblock_forward.5} parent=43 // pred_check
        %p1199 = pneg %p166
      $region46: #{osblock_forward.5} parent=43 // pred_check_branch
        %1201 = sbr.rel (%p1199) target = $region48
      $region47: #{osblock_forward.5} parent=43 // pred_region
        _
      $region48: #{osblock_forward.5} parent=43 // pred_fallthru
        _
    $region44: #{osblock_forward.5} parent=5 // pred_fallthru
      _
    %p1202 = scmp.le.s32.totalorder 2, %s12
    // Predicated region
    $region49: #{osblock_forward.5} parent=5 // pred_check
      %p1203 = pneg %p1202
    $region50: #{osblock_forward.5} parent=5 // pred_check_branch
      %1205 = sbr.rel (%p1203) target = $region52
    $region51: #{osblock_forward.5} parent=5 // pred_region
      %s1206 = ssub.s32 %s12, 2
      // Predicated region
      $region53: #{osblock_forward.5} parent=51 // pred_check
        %p1207 = pneg %p172
      $region54: #{osblock_forward.5} parent=51 // pred_check_branch
        %1209 = sbr.rel (%p1207) target = $region56
      $region55: #{osblock_forward.5} parent=51 // pred_region
        %p1210 = scmp.lt.s32.totalorder %s18, 1
        %s1211 = scalar_select %p1210, %s18, 1
        %s1212 = smul.addr %s1211, 8
        %s1213 = smul.addr %s1212, 8
        %s1214 = scalar_lea.vmem %s6, %s1213
      $region56: #{osblock_forward.5} parent=51 // pred_fallthru
        _
    $region52: #{osblock_forward.5} parent=5 // pred_fallthru
      _
  $region6: #{osblock_forward.5} parent=0 // loop_footer
    %s16 = sadd.s32 1, %s12
  $region7: #{osblock_forward.5} parent=0 // loop_footer_branch
    %11 = sbr.rel target = $region3
  $region8: #{osblock_forward.5} parent=0 // loop_exit
    _

// kernel: osblock_forward.6
$region0: #{osblock_forward.6}
  #allocation0 [shape = 'u32[]', space=smem, size = 0x4, offset = 0x4, fixed_abs, tag = 'smem constant byte address 0x4 - core index']
  #allocation1 [shape = 'u32[144,128]{1,0:T(1,128)}', space=vmem, size = 0x12000, scoped, tag = 'internal scratch']
  #allocation2 [shape = 'f32[10,17,96]{2,1,0:T(8,128)}', space=vmem, size = 0x1e000, scoped, tag = 'scratch operand']
  %s0 = inlined_call_operand.vmem [shape: f32[2,8,8,128], index: 0, kind: input, shape index: {}]
  %s1 = inlined_call_operand.vmem [shape: f32[128,96], index: 1, kind: input, shape index: {}]
  %s2 = inlined_call_operand.vmem [shape: f32[3,3,96], index: 2, kind: input, shape index: {}]
  %s3 = inlined_call_operand.vmem [shape: f32[1,96], index: 3, kind: input, shape index: {}]
  %s4 = inlined_call_operand.vmem [shape: f32[2,8,8,96], index: 4, kind: output, shape index: {}]
  %s5 = sld [smem:[#allocation0]]
  $region49: #{osblock_forward.6} parent=0
    _
  %s7 = ssub.s32 1, %s5
  %s8 = scalar_select 0, %s7, %s5
  loop: start=0, step=1, limit=4
  $region2: #{osblock_forward.6} parent=0 // loop_pre_header
    _
  $region3: #{osblock_forward.6} parent=0 // loop_header
    %s10 = sphi 0, %s14
    %p11 = scmp.ge.s32.totalorder %s10, 4
    %s20 = sphi 0, %s22
    %s23 = sphi 0, %s20
    %s24 = sphi 0, %s23
    %s40 = sphi 0, %s24
    %s44 = sphi 0, %s44
    %s46 = sphi 0, %s44
    %s47 = sphi 0, %s46
    %s61 = sphi 0, %s47
    %s65 = sphi 0, %s65
    %s67 = sphi 0, %s65
    %s68 = sphi 0, %s67
    %s82 = sphi 0, %s68
    %s86 = sphi 0, %s86
    %s88 = sphi 0, %s86
    %s89 = sphi 0, %s88
    %s103 = sphi 0, %s89
    %s109 = sphi 0, %s111
    %s112 = sphi 0, %s109
    %s113 = sphi 0, %s112
    %s129 = sphi 0, %s113
  $region4: #{osblock_forward.6} parent=0 // loop_header_branch
    %13 = sbr.rel (%p11) target = $region8
  $region5: #{osblock_forward.6} parent=0 // loop_body
    %s15 = ssub.s32 %s10, 1
    %s16 = ssub.s32 %s10, 2
    %s17 = sadd.s32 %s10, 1
    %s18 = ssub.s32 %s10, %s17
    %p19 = scmp.eq.s32.totalorder %s18, 0
    %s21 = sadd.s32 %s20, 1
    %s22 = scalar_select %p19, %s20, %s21
    %p25 = pneg %p19
    %p26 = scmp.eq.s32.totalorder %s10, 1
    %p27 = por %p25, %p26
    %p28 = scmp.ne.s32.totalorder %s20, %s23
    %p29 = scmp.eq.s32.totalorder %s10, 0
    %p30 = por %p28, %p29
    %p31 = scmp.ne.s32.totalorder %s20, %s23
    %p32 = scmp.eq.s32.totalorder %s15, 1
    %p33 = por %p31, %p32
    %p34 = scmp.ne.s32.totalorder %s23, %s24
    %p35 = scmp.eq.s32.totalorder %s15, 0
    %p36 = por %p34, %p35
    %p37 = scmp.ne.s32.totalorder %s23, %s24
    %p38 = scmp.eq.s32.totalorder %s16, 1
    %p39 = por %p37, %p38
    %p41 = scmp.ne.s32.totalorder %s24, %s40
    %p42 = scmp.eq.s32.totalorder %s16, 0
    %p43 = por %p41, %p42
    %s45 = sadd.s32 %s44, 1
    %p48 = scmp.eq.s32.totalorder %s10, 1
    %p49 = scmp.ne.s32.totalorder %s44, %s46
    %p50 = scmp.eq.s32.totalorder %s10, 0
    %p51 = por %p49, %p50
    %p52 = scmp.ne.s32.totalorder %s44, %s46
    %p53 = scmp.eq.s32.totalorder %s15, 1
    %p54 = por %p52, %p53
    %p55 = scmp.ne.s32.totalorder %s46, %s47
    %p56 = scmp.eq.s32.totalorder %s15, 0
    %p57 = por %p55, %p56
    %p58 = scmp.ne.s32.totalorder %s46, %s47
    %p59 = scmp.eq.s32.totalorder %s16, 1
    %p60 = por %p58, %p59
    %p62 = scmp.ne.s32.totalorder %s47, %s61
    %p63 = scmp.eq.s32.totalorder %s16, 0
    %p64 = por %p62, %p63
    %s66 = sadd.s32 %s65, 1
    %p69 = scmp.eq.s32.totalorder %s10, 1
    %p70 = scmp.ne.s32.totalorder %s65, %s67
    %p71 = scmp.eq.s32.totalorder %s10, 0
    %p72 = por %p70, %p71
    %p73 = scmp.ne.s32.totalorder %s65, %s67
    %p74 = scmp.eq.s32.totalorder %s15, 1
    %p75 = por %p73, %p74
    %p76 = scmp.ne.s32.totalorder %s67, %s68
    %p77 = scmp.eq.s32.totalorder %s15, 0
    %p78 = por %p76, %p77
    %p79 = scmp.ne.s32.totalorder %s67, %s68
    %p80 = scmp.eq.s32.totalorder %s16, 1
    %p81 = por %p79, %p80
    %p83 = scmp.ne.s32.totalorder %s68, %s82
    %p84 = scmp.eq.s32.totalorder %s16, 0
    %p85 = por %p83, %p84
    %s87 = sadd.s32 %s86, 1
    %p90 = scmp.eq.s32.totalorder %s10, 1
    %p91 = scmp.ne.s32.totalorder %s86, %s88
    %p92 = scmp.eq.s32.totalorder %s10, 0
    %p93 = por %p91, %p92
    %p94 = scmp.ne.s32.totalorder %s86, %s88
    %p95 = scmp.eq.s32.totalorder %s15, 1
    %p96 = por %p94, %p95
    %p97 = scmp.ne.s32.totalorder %s88, %s89
    %p98 = scmp.eq.s32.totalorder %s15, 0
    %p99 = por %p97, %p98
    %p100 = scmp.ne.s32.totalorder %s88, %s89
    %p101 = scmp.eq.s32.totalorder %s16, 1
    %p102 = por %p100, %p101
    %p104 = scmp.ne.s32.totalorder %s89, %s103
    %p105 = scmp.eq.s32.totalorder %s16, 0
    %p106 = por %p104, %p105
    %s107 = ssub.s32 %s10, %s17
    %p108 = scmp.eq.s32.totalorder %s107, 0
    %s110 = sadd.s32 %s109, 1
    %s111 = scalar_select %p108, %s109, %s110
    %p114 = pneg %p108
    %p115 = scmp.eq.s32.totalorder %s10, 1
    %p116 = por %p114, %p115
    %p117 = scmp.ne.s32.totalorder %s109, %s112
    %p118 = scmp.eq.s32.totalorder %s10, 0
    %p119 = por %p117, %p118
    %p120 = scmp.ne.s32.totalorder %s109, %s112
    %p121 = scmp.eq.s32.totalorder %s15, 1
    %p122 = por %p120, %p121
    %p123 = scmp.ne.s32.totalorder %s112, %s113
    %p124 = scmp.eq.s32.totalorder %s15, 0
    %p125 = por %p123, %p124
    %p126 = scmp.ne.s32.totalorder %s112, %s113
    %p127 = scmp.eq.s32.totalorder %s16, 1
    %p128 = por %p126, %p127
    %p130 = scmp.ne.s32.totalorder %s113, %s129
    %p131 = scmp.eq.s32.totalorder %s16, 0
    %p132 = por %p130, %p131
    %p133 = scmp.le.s32.totalorder 1, %s10
    %p134 = scmp.lt.s32.totalorder %s10, 3
    %p135 = pnand %p133, %p134
    %p136 = pneg %p135
    // Predicated region
    $region9: #{osblock_forward.6} parent=5 // pred_check
      _
    $region10: #{osblock_forward.6} parent=5 // pred_check_branch
      %138 = sbr.rel (%p135) target = $region12
    $region11: #{osblock_forward.6} parent=5 // pred_region
      %s139 = ssub.s32 %s10, 1
      // Predicated region
      $region13: #{osblock_forward.6} parent=11 // pred_check
        %p140 = pneg %p57
      $region14: #{osblock_forward.6} parent=11 // pred_check_branch
        %142 = sbr.rel (%p140) target = $region16
      $region15: #{osblock_forward.6} parent=11 // pred_region
        _
      $region16: #{osblock_forward.6} parent=11 // pred_fallthru
        _
      // Predicated region
      $region17: #{osblock_forward.6} parent=11 // pred_check
        %p143 = pneg %p78
      $region18: #{osblock_forward.6} parent=11 // pred_check_branch
        %145 = sbr.rel (%p143) target = $region20
      $region19: #{osblock_forward.6} parent=11 // pred_region
        _
      $region20: #{osblock_forward.6} parent=11 // pred_fallthru
        _
      // Predicated region
      $region21: #{osblock_forward.6} parent=11 // pred_check
        %p146 = pneg %p99
      $region22: #{osblock_forward.6} parent=11 // pred_check_branch
        %148 = sbr.rel (%p146) target = $region24
      $region23: #{osblock_forward.6} parent=11 // pred_region
        _
      $region24: #{osblock_forward.6} parent=11 // pred_fallthru
        _
    $region12: #{osblock_forward.6} parent=5 // pred_fallthru
      _
    %p149 = scmp.lt.s32.totalorder %s10, 2
    // Predicated region
    $region25: #{osblock_forward.6} parent=5 // pred_check
      %p150 = pneg %p149
    $region26: #{osblock_forward.6} parent=5 // pred_check_branch
      %152 = sbr.rel (%p150) target = $region28
    $region27: #{osblock_forward.6} parent=5 // pred_region
      // Predicated region
      $region29: #{osblock_forward.6} parent=27 // pred_check
        %p153 = pneg %p30
      $region30: #{osblock_forward.6} parent=27 // pred_check_branch
        %155 = sbr.rel (%p153) target = $region32
      $region31: #{osblock_forward.6} parent=27 // pred_region
        %p156 = scmp.lt.s32.totalorder %s10, 1
        %s157 = scalar_select %p156, %s10, 1
        %s158 = smul.addr %s157, 8
        %s159 = smul.addr %s158, 8
        %s160 = scalar_lea.vmem %s0, %s159
      $region32: #{osblock_forward.6} parent=27 // pred_fallthru
        _
    $region28: #{osblock_forward.6} parent=5 // pred_fallthru
      _
    %p161 = scmp.le.s32.totalorder 1, %s10
    %p162 = scmp.lt.s32.totalorder %s10, 3
    %p163 = pnand %p161, %p162
    %p164 = pneg %p163
    // Predicated region
    $region33: #{osblock_forward.6} parent=5 // pred_check
      _
    $region34: #{osblock_forward.6} parent=5 // pred_check_branch
      %166 = sbr.rel (%p163) target = $region36
    $region35: #{osblock_forward.6} parent=5 // pred_region
      %s167 = ssub.s32 %s10, 1
      %p168 = scmp.lt.s32.totalorder %s15, 1
      %s169 = scalar_select %p168, %s15, 1
      %s170 = smul.addr %s169, 8
      %s171 = smul.addr %s170, 8
      %s172 = scalar_lea.vmem %s0, %s171
      %p173 = pneg %p36
      %p174 = pneg %p33
      %p175 = pneg %p57
      %p176 = pneg %p54
      %p177 = pneg %p78
      %p178 = pneg %p75
      %p179 = pneg %p99
      %p180 = pneg %p96
      %p181 = pneg %p125
      %p182 = pneg %p122
      %p183 = scmp.lt.s32.totalorder %s15, 1
      %s184 = scalar_select %p183, %s15, 1
      %s185 = smul.addr %s184, 8
      %s186 = smul.addr %s185, 8
      %s187 = scalar_lea.vmem %s4, %s186
      %p188 = scmp.lt.s32.totalorder %s15, 1
      %s189 = scalar_select %p188, %s15, 1
      %s190 = smul.addr %s189, 8
      %s191 = smul.addr %s190, 8
      %s192 = scalar_lea.vmem %s0, %s191
      %p193 = scmp.lt.s32.totalorder %s15, 1
      %s194 = scalar_select %p193, %s15, 1
      %s195 = smul.addr %s194, 8
      %s196 = smul.addr %s195, 8
      %s197 = scalar_lea.vmem %s4, %s196
      %v198 = vld [vmem:[%s192] sm:$0xff]
      %v199 = vld [vmem:[%s192 + $0x8] sm:$0xff]
      %v200 = vld [vmem:[%s192 + $0x10] sm:$0xff]
      %v201 = vld [vmem:[%s192 + $0x18] sm:$0xff]
      %v202 = vld [vmem:[%s192 + $0x20] sm:$0xff]
      %v203 = vld [vmem:[%s192 + $0x28] sm:$0xff]
      %v204 = vld [vmem:[%s192 + $0x30] sm:$0xff]
      %v205 = vld [vmem:[%s192 + $0x38] sm:$0xff]
      %v206 = vld [vmem:[%s1] sm:$0xff]
      %v207 = vld [vmem:[%s1 + $0x8] sm:$0xff]
      %v208 = vld [vmem:[%s1 + $0x10] sm:$0xff]
      %v209 = vld [vmem:[%s1 + $0x18] sm:$0xff]
      %v210 = vld [vmem:[%s1 + $0x20] sm:$0xff]
      %v211 = vld [vmem:[%s1 + $0x28] sm:$0xff]
      %v212 = vld [vmem:[%s1 + $0x30] sm:$0xff]
      %v213 = vld [vmem:[%s1 + $0x38] sm:$0xff]
      %v214 = vld [vmem:[%s1 + $0x40] sm:$0xff]
      %v215 = vld [vmem:[%s1 + $0x48] sm:$0xff]
      %v216 = vld [vmem:[%s1 + $0x50] sm:$0xff]
      %v217 = vld [vmem:[%s1 + $0x58] sm:$0xff]
      %v218 = vld [vmem:[%s1 + $0x60] sm:$0xff]
      %v219 = vld [vmem:[%s1 + $0x68] sm:$0xff]
      %v220 = vld [vmem:[%s1 + $0x70] sm:$0xff]
      %v221 = vld [vmem:[%s1 + $0x78] sm:$0xff]
      %222 = vmatprep.subr.mxu0 0.0
      %223 = vmatpush1.msra.mxu0 %v221
      %224 = vmatprep.subr.mxu0 0.0
      %225 = vmatpush1.msra.mxu0 %v220
      %226 = vmatprep.subr.mxu0 0.0
      %227 = vmatpush1.msra.mxu0 %v219
      %228 = vmatprep.subr.mxu0 0.0
      %229 = vmatpush1.msra.mxu0 %v218
      %230 = vmatprep.subr.mxu0 0.0
      %231 = vmatpush1.msra.mxu0 %v217
      %232 = vmatprep.subr.mxu0 0.0
      %233 = vmatpush1.msra.mxu0 %v216
      %234 = vmatprep.subr.mxu0 0.0
      %235 = vmatpush1.msra.mxu0 %v215
      %236 = vmatprep.subr.mxu0 0.0
      %237 = vmatpush1.msra.mxu0 %v214
      %238 = vmatprep.subr.mxu0 0.0
      %239 = vmatpush1.msra.mxu0 %v213
      %240 = vmatprep.subr.mxu0 0.0
      %241 = vmatpush1.msra.mxu0 %v212
      %242 = vmatprep.subr.mxu0 0.0
      %243 = vmatpush1.msra.mxu0 %v211
      %244 = vmatprep.subr.mxu0 0.0
      %245 = vmatpush1.msra.mxu0 %v210
      %246 = vmatprep.subr.mxu0 0.0
      %247 = vmatpush1.msra.mxu0 %v209
      %248 = vmatprep.subr.mxu0 0.0
      %249 = vmatpush1.msra.mxu0 %v208
      %250 = vmatprep.subr.mxu0 0.0
      %251 = vmatpush1.msra.mxu0 %v207
      %252 = vmatprep.subr.mxu0 0.0
      %253 = vmatpush1.msra.mxu0 %v206
      %254 = vmatprep.subr.mxu0 0.0
      %255 = vmatpush2.msra.mxu0 0.0
      %256 = vmatprep.subr.mxu0 0.0
      %257 = vmatpush2.msra.mxu0 0.0
      %258 = vmatprep.subr.mxu0 0.0
      %259 = vmatpush2.msra.mxu0 0.0
      %260 = vmatprep.subr.mxu0 0.0
      %261 = vmatpush2.msra.mxu0 0.0
      %262 = vmatprep.subr.mxu0 0.0
      %263 = vmatpush2.msra.mxu0 0.0
      %264 = vmatprep.subr.mxu0 0.0
      %265 = vmatpush2.msra.mxu0 0.0
      %266 = vmatprep.subr.mxu0 0.0
      %267 = vmatpush2.msra.mxu0 0.0
      %268 = vmatprep.subr.mxu0 0.0
      %269 = vmatpush2.msra.mxu0 0.0
      %270 = vmatprep.subr.mxu0 0.0
      %271 = vmatpush2.msra.mxu0 0.0
      %272 = vmatprep.subr.mxu0 0.0
      %273 = vmatpush2.msra.mxu0 0.0
      %274 = vmatprep.subr.mxu0 0.0
      %275 = vmatpush2.msra.mxu0 0.0
      %276 = vmatprep.subr.mxu0 0.0
      %277 = vmatpush2.msra.mxu0 0.0
      %278 = vmatprep.subr.mxu0 0.0
      %279 = vmatpush2.msra.mxu0 0.0
      %280 = vmatprep.subr.mxu0 0.0
      %281 = vmatpush2.msra.mxu0 0.0
      %282 = vmatprep.subr.mxu0 0.0
      %283 = vmatpush2.msra.mxu0 0.0
      %284 = vmatprep.subr.mxu0 0.0
      %285 = vmatpush2.msra.mxu0 0.0
      %286 = vmatprep.mubr.f32.mxu0 0.0
      %287 = vmatmul.mubr.f32.gmra.mxu0 %v198
      %v288 = vpop.f32.mrf.mxu0
      %v289 = vadd.f32 0.0, %v288
      %v290 = vpop.f32.mrf.mxu0
      %291 = vmatprep.mubr.f32.mxu0 0.0
      %292 = vmatmul.mubr.f32.gmra.mxu0 %v199
      %v293 = vpop.f32.mrf.mxu0
      %v294 = vadd.f32 0.0, %v293
      %v295 = vpop.f32.mrf.mxu0
      %296 = vmatprep.mubr.f32.mxu0 0.0
      %297 = vmatmul.mubr.f32.gmra.mxu0 %v200
      %v298 = vpop.f32.mrf.mxu0
      %v299 = vadd.f32 0.0, %v298
      %v300 = vpop.f32.mrf.mxu0
      %301 = vmatprep.mubr.f32.mxu0 0.0
      %302 = vmatmul.mubr.f32.gmra.mxu0 %v201
      %v303 = vpop.f32.mrf.mxu0
      %v304 = vadd.f32 0.0, %v303
      %v305 = vpop.f32.mrf.mxu0
      %306 = vmatprep.mubr.f32.mxu0 0.0
      %307 = vmatmul.mubr.f32.gmra.mxu0 %v202
      %v308 = vpop.f32.mrf.mxu0
      %v309 = vadd.f32 0.0, %v308
      %v310 = vpop.f32.mrf.mxu0
      %311 = vmatprep.mubr.f32.mxu0 0.0
      %312 = vmatmul.mubr.f32.gmra.mxu0 %v203
      %v313 = vpop.f32.mrf.mxu0
      %v314 = vadd.f32 0.0, %v313
      %v315 = vpop.f32.mrf.mxu0
      %316 = vmatprep.mubr.f32.mxu0 0.0
      %317 = vmatmul.mubr.f32.gmra.mxu0 %v204
      %v318 = vpop.f32.mrf.mxu0
      %v319 = vadd.f32 0.0, %v318
      %v320 = vpop.f32.mrf.mxu0
      %321 = vmatprep.mubr.f32.mxu0 0.0
      %322 = vmatmul.mubr.f32.gmra.mxu0 %v205
      %v323 = vpop.f32.mrf.mxu0
      %v324 = vadd.f32 0.0, %v323
      %v325 = vpop.f32.mrf.mxu0
      %326 = vdwg.mxu0
      %vm327 = vcmask 785408
      %328 = vst.msk [vmem:[#allocation2] sm:$0xff] %vm327, 0.0
      %329 = vst.msk [vmem:[#allocation2 + $0x8] sm:$0xff] %vm327, 0.0
      %vm330 = vcmask 778240
      %331 = vst.msk [vmem:[#allocation2 + $0x10] sm:$0x1] %vm330, 0.0
      %332 = vst.msk [vmem:[#allocation2 + $0x18] sm:$0xff] %vm327, 0.0
      %333 = vst.msk [vmem:[#allocation2 + $0x20] sm:$0xff] %vm327, 0.0
      %334 = vst.msk [vmem:[#allocation2 + $0x28] sm:$0x1] %vm330, 0.0
      %335 = vst.msk [vmem:[#allocation2 + $0x30] sm:$0xff] %vm327, 0.0
      %336 = vst.msk [vmem:[#allocation2 + $0x38] sm:$0xff] %vm327, 0.0
      %337 = vst.msk [vmem:[#allocation2 + $0x40] sm:$0x1] %vm330, 0.0
      %338 = vst.msk [vmem:[#allocation2 + $0x48] sm:$0xff] %vm327, 0.0
      %339 = vst.msk [vmem:[#allocation2 + $0x50] sm:$0xff] %vm327, 0.0
      %340 = vst.msk [vmem:[#allocation2 + $0x58] sm:$0x1] %vm330, 0.0
      %341 = vst.msk [vmem:[#allocation2 + $0x60] sm:$0xff] %vm327, 0.0
      %342 = vst.msk [vmem:[#allocation2 + $0x68] sm:$0xff] %vm327, 0.0
      %343 = vst.msk [vmem:[#allocation2 + $0x70] sm:$0x1] %vm330, 0.0
      %344 = vst.msk [vmem:[#allocation2 + $0x78] sm:$0xff] %vm327, 0.0
      %345 = vst.msk [vmem:[#allocation2 + $0x80] sm:$0xff] %vm327, 0.0
      %346 = vst.msk [vmem:[#allocation2 + $0x88] sm:$0x1] %vm330, 0.0
      %347 = vst.msk [vmem:[#allocation2 + $0x90] sm:$0xff] %vm327, 0.0
      %348 = vst.msk [vmem:[#allocation2 + $0x98] sm:$0xff] %vm327, 0.0
      %349 = vst.msk [vmem:[#allocation2 + $0xa0] sm:$0x1] %vm330, 0.0
      %350 = vst.msk [vmem:[#allocation2 + $0xa8] sm:$0xff] %vm327, 0.0
      %351 = vst.msk [vmem:[#allocation2 + $0xb0] sm:$0xff] %vm327, 0.0
      %352 = vst.msk [vmem:[#allocation2 + $0xb8] sm:$0x1] %vm330, 0.0
      %353 = vst.msk [vmem:[#allocation2 + $0xc0] sm:$0xff] %vm327, 0.0
      %354 = vst.msk [vmem:[#allocation2 + $0xc8] sm:$0xff] %vm327, 0.0
      %355 = vst.msk [vmem:[#allocation2 + $0xd0] sm:$0x1] %vm330, 0.0
      %356 = vst.msk [vmem:[#allocation2 + $0xd8] sm:$0xff] %vm327, 0.0
      %357 = vst.msk [vmem:[#allocation2 + $0xe0] sm:$0xff] %vm327, 0.0
      %358 = vst.msk [vmem:[#allocation2 + $0xe8] sm:$0x1] %vm330, 0.0
      %s359 = scalar_lea.vmem [#allocation2], 24
      %360 = vst.msk [vmem:[%s359 + $0x8] sm:$0xff] %vm327, %v289
      %361 = vst.msk [vmem:[%s359 + $0x20] sm:$0xff] %vm327, %v294
      %362 = vst.msk [vmem:[%s359 + $0x38] sm:$0xff] %vm327, %v299
      %363 = vst.msk [vmem:[%s359 + $0x50] sm:$0xff] %vm327, %v304
      %364 = vst.msk [vmem:[%s359 + $0x68] sm:$0xff] %vm327, %v309
      %365 = vst.msk [vmem:[%s359 + $0x80] sm:$0xff] %vm327, %v314
      %366 = vst.msk [vmem:[%s359 + $0x98] sm:$0xff] %vm327, %v319
      %367 = vst.msk [vmem:[%s359 + $0xb0] sm:$0xff] %vm327, %v324
      %v368 = vld [vmem:[#allocation2] sm:$0xff]
      %v369 = vld [vmem:[#allocation2 + $0x8] sm:$0xff]
      %v370 = vld [vmem:[#allocation2 + $0x10] sm:$0x1]
      %v371 = vld [vmem:[#allocation2 + $0x18] sm:$0xff]
      %v372 = vld [vmem:[#allocation2 + $0x20] sm:$0xff]
      %v373 = vld [vmem:[#allocation2 + $0x28] sm:$0x1]
      %v374 = vld [vmem:[#allocation2 + $0x30] sm:$0xff]
      %v375 = vld [vmem:[#allocation2 + $0x38] sm:$0xff]
      %v376 = vld [vmem:[#allocation2 + $0x40] sm:$0x1]
      %v377 = vld [vmem:[#allocation2 + $0x48] sm:$0xff]
      %v378 = vld [vmem:[#allocation2 + $0x50] sm:$0xff]
      %v379 = vld [vmem:[#allocation2 + $0x58] sm:$0x1]
      %v380 = vld [vmem:[#allocation2 + $0x60] sm:$0xff]
      %v381 = vld [vmem:[#allocation2 + $0x68] sm:$0xff]
      %v382 = vld [vmem:[#allocation2 + $0x70] sm:$0x1]
      %v383 = vld [vmem:[#allocation2 + $0x78] sm:$0xff]
      %v384 = vld [vmem:[#allocation2 + $0x80] sm:$0xff]
      %v385 = vld [vmem:[#allocation2 + $0x88] sm:$0x1]
      %v386 = vld [vmem:[#allocation2 + $0x90] sm:$0xff]
      %v387 = vld [vmem:[#allocation2 + $0x98] sm:$0xff]
      %v388 = vld [vmem:[#allocation2 + $0xa0] sm:$0x1]
      %v389 = vld [vmem:[#allocation2 + $0xa8] sm:$0xff]
      %v390 = vld [vmem:[#allocation2 + $0xb0] sm:$0xff]
      %v391 = vld [vmem:[#allocation2 + $0xb8] sm:$0x1]
      %v392 = vld [vmem:[#allocation2 + $0xc0] sm:$0xff]
      %v393 = vld [vmem:[#allocation2 + $0xc8] sm:$0xff]
      %v394 = vld [vmem:[#allocation2 + $0xd0] sm:$0x1]
      %v395 = vld [vmem:[#allocation2 + $0xd8] sm:$0xff]
      %v396 = vld [vmem:[#allocation2 + $0xe0] sm:$0xff]
      %v397 = vld [vmem:[#allocation2 + $0xe8] sm:$0x1]
      %v398 = vld [vmem:[%s2] sm:$0x7]
      %v399 = vld [vmem:[%s2 + $0x4] sm:$0x7]
      %v400 = vld [vmem:[%s2 + $0x8] sm:$0x7]
      %v401 = vlaneseq
      %v402 = vshrl.u32 %v401, 7
      %v403 = vsub.s32 0, %v402
      %v404 = vrot.slane %v398, %v403
      %v405 = vmul.f32 %v368, %v404
      %v406 = vmul.f32 %v369, %v404
      %v407 = vmul.f32 %v371, %v404
      %v408 = vmul.f32 %v372, %v404
      %v409 = vmul.f32 %v374, %v404
      %v410 = vmul.f32 %v375, %v404
      %v411 = vmul.f32 %v377, %v404
      %v412 = vmul.f32 %v378, %v404
      %v413 = vmul.f32 %v380, %v404
      %v414 = vmul.f32 %v381, %v404
      %v415 = vmul.f32 %v383, %v404
      %v416 = vmul.f32 %v384, %v404
      %v417 = vmul.f32 %v386, %v404
      %v418 = vmul.f32 %v387, %v404
      %v419 = vmul.f32 %v389, %v404
      %v420 = vmul.f32 %v390, %v404
      %v421 = vlaneseq
      %v422 = vshrl.u32 %v421, 7
      %v423 = vsub.s32 1, %v422
      %v424 = vrot.slane %v398, %v423
      %v425 = vmul.f32 %v369, %v424
      %v426 = vmul.f32 %v372, %v424
      %v427 = vmul.f32 %v375, %v424
      %v428 = vmul.f32 %v378, %v424
      %v429 = vmul.f32 %v381, %v424
      %v430 = vmul.f32 %v384, %v424
      %v431 = vmul.f32 %v387, %v424
      %v432 = vmul.f32 %v390, %v424
      %v441 = vrot.slane %v425, 1
      %v442 = vrot.slane %v426, 1
      %v443 = vrot.slane %v427, 1
      %v444 = vrot.slane %v428, 1
      %v445 = vrot.slane %v429, 1
      %v446 = vrot.slane %v430, 1
      %v447 = vrot.slane %v431, 1
      %v448 = vrot.slane %v432, 1
      %v457 = vadd.f32 %v405, %v441
      %v458 = vadd.f32 %v406, %v441
      %v459 = vadd.f32 %v407, %v442
      %v460 = vadd.f32 %v408, %v442
      %v461 = vadd.f32 %v409, %v443
      %v462 = vadd.f32 %v410, %v443
      %v463 = vadd.f32 %v411, %v444
      %v464 = vadd.f32 %v412, %v444
      %v465 = vadd.f32 %v413, %v445
      %v466 = vadd.f32 %v414, %v445
      %v467 = vadd.f32 %v415, %v446
      %v468 = vadd.f32 %v416, %v446
      %v469 = vadd.f32 %v417, %v447
      %v470 = vadd.f32 %v418, %v447
      %v471 = vadd.f32 %v419, %v448
      %v472 = vadd.f32 %v420, %v448
      %v473 = vlaneseq
      %v474 = vshrl.u32 %v473, 7
      %v475 = vsub.s32 2, %v474
      %v476 = vrot.slane %v398, %v475
      %v477 = vmul.f32 %v369, %v476
      %v478 = vmul.f32 %v370, %v476
      %v479 = vmul.f32 %v372, %v476
      %v480 = vmul.f32 %v373, %v476
      %v481 = vmul.f32 %v375, %v476
      %v482 = vmul.f32 %v376, %v476
      %v483 = vmul.f32 %v378, %v476
      %v484 = vmul.f32 %v379, %v476
      %v485 = vmul.f32 %v381, %v476
      %v486 = vmul.f32 %v382, %v476
      %v487 = vmul.f32 %v384, %v476
      %v488 = vmul.f32 %v385, %v476
      %v489 = vmul.f32 %v387, %v476
      %v490 = vmul.f32 %v388, %v476
      %v491 = vmul.f32 %v390, %v476
      %v492 = vmul.f32 %v391, %v476
      %vm509 = vcmask 1045504
      %v510 = vrot.slane %v477, 2
      %v511 = vrot.slane %v478, 2
      %v512 = vsel %vm509, %v510, %v511
      %v513 = vrot.slane %v479, 2
      %v514 = vrot.slane %v480, 2
      %v515 = vsel %vm509, %v513, %v514
      %v516 = vrot.slane %v481, 2
      %v517 = vrot.slane %v482, 2
      %v518 = vsel %vm509, %v516, %v517
      %v519 = vrot.slane %v483, 2
      %v520 = vrot.slane %v484, 2
      %v521 = vsel %vm509, %v519, %v520
      %v522 = vrot.slane %v485, 2
      %v523 = vrot.slane %v486, 2
      %v524 = vsel %vm509, %v522, %v523
      %v525 = vrot.slane %v487, 2
      %v526 = vrot.slane %v488, 2
      %v527 = vsel %vm509, %v525, %v526
      %v528 = vrot.slane %v489, 2
      %v529 = vrot.slane %v490, 2
      %v530 = vsel %vm509, %v528, %v529
      %v531 = vrot.slane %v491, 2
      %v532 = vrot.slane %v492, 2
      %v533 = vsel %vm509, %v531, %v532
      %v550 = vadd.f32 %v457, %v510
      %v551 = vadd.f32 %v458, %v512
      %v552 = vadd.f32 %v459, %v513
      %v553 = vadd.f32 %v460, %v515
      %v554 = vadd.f32 %v461, %v516
      %v555 = vadd.f32 %v462, %v518
      %v556 = vadd.f32 %v463, %v519
      %v557 = vadd.f32 %v464, %v521
      %v558 = vadd.f32 %v465, %v522
      %v559 = vadd.f32 %v466, %v524
      %v560 = vadd.f32 %v467, %v525
      %v561 = vadd.f32 %v468, %v527
      %v562 = vadd.f32 %v469, %v528
      %v563 = vadd.f32 %v470, %v530
      %v564 = vadd.f32 %v471, %v531
      %v565 = vadd.f32 %v472, %v533
      %v566 = vlaneseq
      %v567 = vshrl.u32 %v566, 7
      %v568 = vsub.s32 0, %v567
      %v569 = vrot.slane %v399, %v568
      %v570 = vmul.f32 %v371, %v569
      %v571 = vmul.f32 %v372, %v569
      %v572 = vmul.f32 %v374, %v569
      %v573 = vmul.f32 %v375, %v569
      %v574 = vmul.f32 %v377, %v569
      %v575 = vmul.f32 %v378, %v569
      %v576 = vmul.f32 %v380, %v569
      %v577 = vmul.f32 %v381, %v569
      %v578 = vmul.f32 %v383, %v569
      %v579 = vmul.f32 %v384, %v569
      %v580 = vmul.f32 %v386, %v569
      %v581 = vmul.f32 %v387, %v569
      %v582 = vmul.f32 %v389, %v569
      %v583 = vmul.f32 %v390, %v569
      %v584 = vmul.f32 %v392, %v569
      %v585 = vmul.f32 %v393, %v569
      %v586 = vadd.f32 %v550, %v570
      %v587 = vadd.f32 %v551, %v571
      %v588 = vadd.f32 %v552, %v572
      %v589 = vadd.f32 %v553, %v573
      %v590 = vadd.f32 %v554, %v574
      %v591 = vadd.f32 %v555, %v575
      %v592 = vadd.f32 %v556, %v576
      %v593 = vadd.f32 %v557, %v577
      %v594 = vadd.f32 %v558, %v578
      %v595 = vadd.f32 %v559, %v579
      %v596 = vadd.f32 %v560, %v580
      %v597 = vadd.f32 %v561, %v581
      %v598 = vadd.f32 %v562, %v582
      %v599 = vadd.f32 %v563, %v583
      %v600 = vadd.f32 %v564, %v584
      %v601 = vadd.f32 %v565, %v585
      %v602 = vlaneseq
      %v603 = vshrl.u32 %v602, 7
      %v604 = vsub.s32 1, %v603
      %v605 = vrot.slane %v399, %v604
      %v606 = vmul.f32 %v372, %v605
      %v607 = vmul.f32 %v375, %v605
      %v608 = vmul.f32 %v378, %v605
      %v609 = vmul.f32 %v381, %v605
      %v610 = vmul.f32 %v384, %v605
      %v611 = vmul.f32 %v387, %v605
      %v612 = vmul.f32 %v390, %v605
      %v613 = vmul.f32 %v393, %v605
      %v622 = vrot.slane %v606, 1
      %v623 = vrot.slane %v607, 1
      %v624 = vrot.slane %v608, 1
      %v625 = vrot.slane %v609, 1
      %v626 = vrot.slane %v610, 1
      %v627 = vrot.slane %v611, 1
      %v628 = vrot.slane %v612, 1
      %v629 = vrot.slane %v613, 1
      %v638 = vadd.f32 %v586, %v622
      %v639 = vadd.f32 %v587, %v622
      %v640 = vadd.f32 %v588, %v623
      %v641 = vadd.f32 %v589, %v623
      %v642 = vadd.f32 %v590, %v624
      %v643 = vadd.f32 %v591, %v624
      %v644 = vadd.f32 %v592, %v625
      %v645 = vadd.f32 %v593, %v625
      %v646 = vadd.f32 %v594, %v626
      %v647 = vadd.f32 %v595, %v626
      %v648 = vadd.f32 %v596, %v627
      %v649 = vadd.f32 %v597, %v627
      %v650 = vadd.f32 %v598, %v628
      %v651 = vadd.f32 %v599, %v628
      %v652 = vadd.f32 %v600, %v629
      %v653 = vadd.f32 %v601, %v629
      %v654 = vlaneseq
      %v655 = vshrl.u32 %v654, 7
      %v656 = vsub.s32 2, %v655
      %v657 = vrot.slane %v399, %v656
      %v658 = vmul.f32 %v372, %v657
      %v659 = vmul.f32 %v373, %v657
      %v660 = vmul.f32 %v375, %v657
      %v661 = vmul.f32 %v376, %v657
      %v662 = vmul.f32 %v378, %v657
      %v663 = vmul.f32 %v379, %v657
      %v664 = vmul.f32 %v381, %v657
      %v665 = vmul.f32 %v382, %v657
      %v666 = vmul.f32 %v384, %v657
      %v667 = vmul.f32 %v385, %v657
      %v668 = vmul.f32 %v387, %v657
      %v669 = vmul.f32 %v388, %v657
      %v670 = vmul.f32 %v390, %v657
      %v671 = vmul.f32 %v391, %v657
      %v672 = vmul.f32 %v393, %v657
      %v673 = vmul.f32 %v394, %v657
      %v690 = vrot.slane %v658, 2
      %v691 = vrot.slane %v659, 2
      %v692 = vsel %vm509, %v690, %v691
      %v693 = vrot.slane %v660, 2
      %v694 = vrot.slane %v661, 2
      %v695 = vsel %vm509, %v693, %v694
      %v696 = vrot.slane %v662, 2
      %v697 = vrot.slane %v663, 2
      %v698 = vsel %vm509, %v696, %v697
      %v699 = vrot.slane %v664, 2
      %v700 = vrot.slane %v665, 2
      %v701 = vsel %vm509, %v699, %v700
      %v702 = vrot.slane %v666, 2
      %v703 = vrot.slane %v667, 2
      %v704 = vsel %vm509, %v702, %v703
      %v705 = vrot.slane %v668, 2
      %v706 = vrot.slane %v669, 2
      %v707 = vsel %vm509, %v705, %v706
      %v708 = vrot.slane %v670, 2
      %v709 = vrot.slane %v671, 2
      %v710 = vsel %vm509, %v708, %v709
      %v711 = vrot.slane %v672, 2
      %v712 = vrot.slane %v673, 2
      %v713 = vsel %vm509, %v711, %v712
      %v730 = vadd.f32 %v638, %v690
      %v731 = vadd.f32 %v639, %v692
      %v732 = vadd.f32 %v640, %v693
      %v733 = vadd.f32 %v641, %v695
      %v734 = vadd.f32 %v642, %v696
      %v735 = vadd.f32 %v643, %v698
      %v736 = vadd.f32 %v644, %v699
      %v737 = vadd.f32 %v645, %v701
      %v738 = vadd.f32 %v646, %v702
      %v739 = vadd.f32 %v647, %v704
      %v740 = vadd.f32 %v648, %v705
      %v741 = vadd.f32 %v649, %v707
      %v742 = vadd.f32 %v650, %v708
      %v743 = vadd.f32 %v651, %v710
      %v744 = vadd.f32 %v652, %v711
      %v745 = vadd.f32 %v653, %v713
      %v746 = vlaneseq
      %v747 = vshrl.u32 %v746, 7
      %v748 = vsub.s32 0, %v747
      %v749 = vrot.slane %v400, %v748
      %v750 = vmul.f32 %v374, %v749
      %v751 = vmul.f32 %v375, %v749
      %v752 = vmul.f32 %v377, %v749
      %v753 = vmul.f32 %v378, %v749
      %v754 = vmul.f32 %v380, %v749
      %v755 = vmul.f32 %v381, %v749
      %v756 = vmul.f32 %v383, %v749
      %v757 = vmul.f32 %v384, %v749
      %v758 = vmul.f32 %v386, %v749
      %v759 = vmul.f32 %v387, %v749
      %v760 = vmul.f32 %v389, %v749
      %v761 = vmul.f32 %v390, %v749
      %v762 = vmul.f32 %v392, %v749
      %v763 = vmul.f32 %v393, %v749
      %v764 = vmul.f32 %v395, %v749
      %v765 = vmul.f32 %v396, %v749
      %v766 = vadd.f32 %v730, %v750
      %v767 = vadd.f32 %v731, %v751
      %v768 = vadd.f32 %v732, %v752
      %v769 = vadd.f32 %v733, %v753
      %v770 = vadd.f32 %v734, %v754
      %v771 = vadd.f32 %v735, %v755
      %v772 = vadd.f32 %v736, %v756
      %v773 = vadd.f32 %v737, %v757
      %v774 = vadd.f32 %v738, %v758
      %v775 = vadd.f32 %v739, %v759
      %v776 = vadd.f32 %v740, %v760
      %v777 = vadd.f32 %v741, %v761
      %v778 = vadd.f32 %v742, %v762
      %v779 = vadd.f32 %v743, %v763
      %v780 = vadd.f32 %v744, %v764
      %v781 = vadd.f32 %v745, %v765
      %v782 = vlaneseq
      %v783 = vshrl.u32 %v782, 7
      %v784 = vsub.s32 1, %v783
      %v785 = vrot.slane %v400, %v784
      %v786 = vmul.f32 %v375, %v785
      %v787 = vmul.f32 %v378, %v785
      %v788 = vmul.f32 %v381, %v785
      %v789 = vmul.f32 %v384, %v785
      %v790 = vmul.f32 %v387, %v785
      %v791 = vmul.f32 %v390, %v785
      %v792 = vmul.f32 %v393, %v785
      %v793 = vmul.f32 %v396, %v785
      %v802 = vrot.slane %v786, 1
      %v803 = vrot.slane %v787, 1
      %v804 = vrot.slane %v788, 1
      %v805 = vrot.slane %v789, 1
      %v806 = vrot.slane %v790, 1
      %v807 = vrot.slane %v791, 1
      %v808 = vrot.slane %v792, 1
      %v809 = vrot.slane %v793, 1
      %v818 = vadd.f32 %v766, %v802
      %v819 = vadd.f32 %v767, %v802
      %v820 = vadd.f32 %v768, %v803
      %v821 = vadd.f32 %v769, %v803
      %v822 = vadd.f32 %v770, %v804
      %v823 = vadd.f32 %v771, %v804
      %v824 = vadd.f32 %v772, %v805
      %v825 = vadd.f32 %v773, %v805
      %v826 = vadd.f32 %v774, %v806
      %v827 = vadd.f32 %v775, %v806
      %v828 = vadd.f32 %v776, %v807
      %v829 = vadd.f32 %v777, %v807
      %v830 = vadd.f32 %v778, %v808
      %v831 = vadd.f32 %v779, %v808
      %v832 = vadd.f32 %v780, %v809
      %v833 = vadd.f32 %v781, %v809
      %v834 = vlaneseq
      %v835 = vshrl.u32 %v834, 7
      %v836 = vsub.s32 2, %v835
      %v837 = vrot.slane %v400, %v836
      %v838 = vmul.f32 %v375, %v837
      %v839 = vmul.f32 %v376, %v837
      %v840 = vmul.f32 %v378, %v837
      %v841 = vmul.f32 %v379, %v837
      %v842 = vmul.f32 %v381, %v837
      %v843 = vmul.f32 %v382, %v837
      %v844 = vmul.f32 %v384, %v837
      %v845 = vmul.f32 %v385, %v837
      %v846 = vmul.f32 %v387, %v837
      %v847 = vmul.f32 %v388, %v837
      %v848 = vmul.f32 %v390, %v837
      %v849 = vmul.f32 %v391, %v837
      %v850 = vmul.f32 %v393, %v837
      %v851 = vmul.f32 %v394, %v837
      %v852 = vmul.f32 %v396, %v837
      %v853 = vmul.f32 %v397, %v837
      %v870 = vrot.slane %v838, 2
      %v871 = vrot.slane %v839, 2
      %v872 = vsel %vm509, %v870, %v871
      %v873 = vrot.slane %v840, 2
      %v874 = vrot.slane %v841, 2
      %v875 = vsel %vm509, %v873, %v874
      %v876 = vrot.slane %v842, 2
      %v877 = vrot.slane %v843, 2
      %v878 = vsel %vm509, %v876, %v877
      %v879 = vrot.slane %v844, 2
      %v880 = vrot.slane %v845, 2
      %v881 = vsel %vm509, %v879, %v880
      %v882 = vrot.slane %v846, 2
      %v883 = vrot.slane %v847, 2
      %v884 = vsel %vm509, %v882, %v883
      %v885 = vrot.slane %v848, 2
      %v886 = vrot.slane %v849, 2
      %v887 = vsel %vm509, %v885, %v886
      %v888 = vrot.slane %v850, 2
      %v889 = vrot.slane %v851, 2
      %v890 = vsel %vm509, %v888, %v889
      %v891 = vrot.slane %v852, 2
      %v892 = vrot.slane %v853, 2
      %v893 = vsel %vm509, %v891, %v892
      %v910 = vadd.f32 %v818, %v870
      %v911 = vadd.f32 %v819, %v872
      %v912 = vadd.f32 %v820, %v873
      %v913 = vadd.f32 %v821, %v875
      %v914 = vadd.f32 %v822, %v876
      %v915 = vadd.f32 %v823, %v878
      %v916 = vadd.f32 %v824, %v879
      %v917 = vadd.f32 %v825, %v881
      %v918 = vadd.f32 %v826, %v882
      %v919 = vadd.f32 %v827, %v884
      %v920 = vadd.f32 %v828, %v885
      %v921 = vadd.f32 %v829, %v887
      %v922 = vadd.f32 %v830, %v888
      %v923 = vadd.f32 %v831, %v890
      %v924 = vadd.f32 %v832, %v891
      %v925 = vadd.f32 %v833, %v893
      %v926 = vld [vmem:[%s3] sm:$0x1]
      %v928 = vlaneseq
      %v929 = vshrl.u32 %v928, 7
      %v930 = vsub.s32 0, %v929
      %v931 = vrot.slane %v926, %v930
      %v933 = vadd.f32 %v910, %v931
      %v934 = vadd.f32 %v911, %v931
      %v935 = vadd.f32 %v912, %v931
      %v936 = vadd.f32 %v913, %v931
      %v937 = vadd.f32 %v914, %v931
      %v938 = vadd.f32 %v915, %v931
      %v939 = vadd.f32 %v916, %v931
      %v940 = vadd.f32 %v917, %v931
      %v941 = vadd.f32 %v918, %v931
      %v942 = vadd.f32 %v919, %v931
      %v943 = vadd.f32 %v920, %v931
      %v944 = vadd.f32 %v921, %v931
      %v945 = vadd.f32 %v922, %v931
      %v946 = vadd.f32 %v923, %v931
      %v947 = vadd.f32 %v924, %v931
      %v948 = vadd.f32 %v925, %v931
      %v949 = vmax.f32 %v933, 0.0
      %v950 = vmax.f32 %v934, 0.0
      %v951 = vmax.f32 %v935, 0.0
      %v952 = vmax.f32 %v936, 0.0
      %v953 = vmax.f32 %v937, 0.0
      %v954 = vmax.f32 %v938, 0.0
      %v955 = vmax.f32 %v939, 0.0
      %v956 = vmax.f32 %v940, 0.0
      %v957 = vmax.f32 %v941, 0.0
      %v958 = vmax.f32 %v942, 0.0
      %v959 = vmax.f32 %v943, 0.0
      %v960 = vmax.f32 %v944, 0.0
      %v961 = vmax.f32 %v945, 0.0
      %v962 = vmax.f32 %v946, 0.0
      %v963 = vmax.f32 %v947, 0.0
      %v964 = vmax.f32 %v948, 0.0
      %vm965 = vcmask 785415
      %966 = vst.msk [vmem:[%s197 - $0x7] sm:$0x80] %vm965, %v949
      %vm967 = vcmask 784384
      %968 = vst.msk [vmem:[%s197 + $0x1] sm:$0x7f] %vm967, %v950
      %969 = vst.msk [vmem:[%s197 + $0x1] sm:$0x80] %vm965, %v951
      %970 = vst.msk [vmem:[%s197 + $0x9] sm:$0x7f] %vm967, %v952
      %971 = vst.msk [vmem:[%s197 + $0x9] sm:$0x80] %vm965, %v953
      %972 = vst.msk [vmem:[%s197 + $0x11] sm:$0x7f] %vm967, %v954
      %973 = vst.msk [vmem:[%s197 + $0x11] sm:$0x80] %vm965, %v955
      %974 = vst.msk [vmem:[%s197 + $0x19] sm:$0x7f] %vm967, %v956
      %975 = vst.msk [vmem:[%s197 + $0x19] sm:$0x80] %vm965, %v957
      %976 = vst.msk [vmem:[%s197 + $0x21] sm:$0x7f] %vm967, %v958
      %977 = vst.msk [vmem:[%s197 + $0x21] sm:$0x80] %vm965, %v959
      %978 = vst.msk [vmem:[%s197 + $0x29] sm:$0x7f] %vm967, %v960
      %979 = vst.msk [vmem:[%s197 + $0x29] sm:$0x80] %vm965, %v961
      %980 = vst.msk [vmem:[%s197 + $0x31] sm:$0x7f] %vm967, %v962
      %981 = vst.msk [vmem:[%s197 + $0x31] sm:$0x80] %vm965, %v963
      %982 = vst.msk [vmem:[%s197 + $0x39] sm:$0x7f] %vm967, %v964
      %p983 = scmp.lt.s32.totalorder %s15, 1
      %s984 = scalar_select %p983, %s15, 1
      %s985 = smul.addr %s984, 8
      %s986 = smul.addr %s985, 8
      %s987 = scalar_lea.vmem %s4, %s986
      // Predicated region
      $region37: #{osblock_forward.6} parent=35 // pred_check
        %p988 = pneg %p122
      $region38: #{osblock_forward.6} parent=35 // pred_check_branch
        %990 = sbr.rel (%p988) target = $region40
      $region39: #{osblock_forward.6} parent=35 // pred_region
        _
      $region40: #{osblock_forward.6} parent=35 // pred_fallthru
        _
    $region36: #{osblock_forward.6} parent=5 // pred_fallthru
      _
    %p991 = scmp.le.s32.totalorder 2, %s10
    // Predicated region
    $region41: #{osblock_forward.6} parent=5 // pred_check
      %p992 = pneg %p991
    $region42: #{osblock_forward.6} parent=5 // pred_check_branch
      %994 = sbr.rel (%p992) target = $region44
    $region43: #{osblock_forward.6} parent=5 // pred_region
      %s995 = ssub.s32 %s10, 2
      // Predicated region
      $region45: #{osblock_forward.6} parent=43 // pred_check
        %p996 = pneg %p128
      $region46: #{osblock_forward.6} parent=43 // pred_check_branch
        %998 = sbr.rel (%p996) target = $region48
      $region47: #{osblock_forward.6} parent=43 // pred_region
        %p999 = scmp.lt.s32.totalorder %s16, 1
        %s1000 = scalar_select %p999, %s16, 1
        %s1001 = smul.addr %s1000, 8
        %s1002 = smul.addr %s1001, 8
        %s1003 = scalar_lea.vmem %s4, %s1002
      $region48: #{osblock_forward.6} parent=43 // pred_fallthru
        _
    $region44: #{osblock_forward.6} parent=5 // pred_fallthru
      _
  $region6: #{osblock_forward.6} parent=0 // loop_footer
    %s14 = sadd.s32 1, %s10
  $region7: #{osblock_forward.6} parent=0 // loop_footer_branch
    %9 = sbr.rel target = $region3
  $region8: #{osblock_forward.6} parent=0 // loop_exit
    _

// kernel: osblock_forward.8
$region0: #{osblock_forward.8}
  #allocation0 [shape = 'u32[]', space=smem, size = 0x4, offset = 0x4, fixed_abs, tag = 'smem constant byte address 0x4 - core index']
  #allocation1 [shape = 'u32[144,128]{1,0:T(1,128)}', space=vmem, size = 0x12000, scoped, tag = 'internal scratch']
  #allocation2 [shape = 'f32[10,17,32]{2,1,0:T(8,128)}', space=vmem, size = 0x1e000, scoped, tag = 'scratch operand']
  %s0 = inlined_call_operand.vmem [shape: f32[2,8,8,64], index: 0, kind: input, shape index: {}]
  %s1 = inlined_call_operand.vmem [shape: f32[64,32], index: 1, kind: input, shape index: {}]
  %s2 = inlined_call_operand.vmem [shape: f32[3,3,32], index: 2, kind: input, shape index: {}]
  %s3 = inlined_call_operand.vmem [shape: f32[1,32], index: 3, kind: input, shape index: {}]
  %s4 = inlined_call_operand.vmem [shape: f32[2,8,8,32], index: 4, kind: output, shape index: {}]
  %s5 = sld [smem:[#allocation0]]
  $region49: #{osblock_forward.8} parent=0
    _
  %s7 = ssub.s32 1, %s5
  %s8 = scalar_select 0, %s7, %s5
  loop: start=0, step=1, limit=4
  $region2: #{osblock_forward.8} parent=0 // loop_pre_header
    _
  $region3: #{osblock_forward.8} parent=0 // loop_header
    %s10 = sphi 0, %s14
    %p11 = scmp.ge.s32.totalorder %s10, 4
    %s20 = sphi 0, %s22
    %s23 = sphi 0, %s20
    %s24 = sphi 0, %s23
    %s40 = sphi 0, %s24
    %s44 = sphi 0, %s44
    %s46 = sphi 0, %s44
    %s47 = sphi 0, %s46
    %s61 = sphi 0, %s47
    %s65 = sphi 0, %s65
    %s67 = sphi 0, %s65
    %s68 = sphi 0, %s67
    %s82 = sphi 0, %s68
    %s86 = sphi 0, %s86
    %s88 = sphi 0, %s86
    %s89 = sphi 0, %s88
    %s103 = sphi 0, %s89
    %s109 = sphi 0, %s111
    %s112 = sphi 0, %s109
    %s113 = sphi 0, %s112
    %s129 = sphi 0, %s113
  $region4: #{osblock_forward.8} parent=0 // loop_header_branch
    %13 = sbr.rel (%p11) target = $region8
  $region5: #{osblock_forward.8} parent=0 // loop_body
    %s15 = ssub.s32 %s10, 1
    %s16 = ssub.s32 %s10, 2
    %s17 = sadd.s32 %s10, 1
    %s18 = ssub.s32 %s10, %s17
    %p19 = scmp.eq.s32.totalorder %s18, 0
    %s21 = sadd.s32 %s20, 1
    %s22 = scalar_select %p19, %s20, %s21
    %p25 = pneg %p19
    %p26 = scmp.eq.s32.totalorder %s10, 1
    %p27 = por %p25, %p26
    %p28 = scmp.ne.s32.totalorder %s20, %s23
    %p29 = scmp.eq.s32.totalorder %s10, 0
    %p30 = por %p28, %p29
    %p31 = scmp.ne.s32.totalorder %s20, %s23
    %p32 = scmp.eq.s32.totalorder %s15, 1
    %p33 = por %p31, %p32
    %p34 = scmp.ne.s32.totalorder %s23, %s24
    %p35 = scmp.eq.s32.totalorder %s15, 0
    %p36 = por %p34, %p35
    %p37 = scmp.ne.s32.totalorder %s23, %s24
    %p38 = scmp.eq.s32.totalorder %s16, 1
    %p39 = por %p37, %p38
    %p41 = scmp.ne.s32.totalorder %s24, %s40
    %p42 = scmp.eq.s32.totalorder %s16, 0
    %p43 = por %p41, %p42
    %s45 = sadd.s32 %s44, 1
    %p48 = scmp.eq.s32.totalorder %s10, 1
    %p49 = scmp.ne.s32.totalorder %s44, %s46
    %p50 = scmp.eq.s32.totalorder %s10, 0
    %p51 = por %p49, %p50
    %p52 = scmp.ne.s32.totalorder %s44, %s46
    %p53 = scmp.eq.s32.totalorder %s15, 1
    %p54 = por %p52, %p53
    %p55 = scmp.ne.s32.totalorder %s46, %s47
    %p56 = scmp.eq.s32.totalorder %s15, 0
    %p57 = por %p55, %p56
    %p58 = scmp.ne.s32.totalorder %s46, %s47
    %p59 = scmp.eq.s32.totalorder %s16, 1
    %p60 = por %p58, %p59
    %p62 = scmp.ne.s32.totalorder %s47, %s61
    %p63 = scmp.eq.s32.totalorder %s16, 0
    %p64 = por %p62, %p63
    %s66 = sadd.s32 %s65, 1
    %p69 = scmp.eq.s32.totalorder %s10, 1
    %p70 = scmp.ne.s32.totalorder %s65, %s67
    %p71 = scmp.eq.s32.totalorder %s10, 0
    %p72 = por %p70, %p71
    %p73 = scmp.ne.s32.totalorder %s65, %s67
    %p74 = scmp.eq.s32.totalorder %s15, 1
    %p75 = por %p73, %p74
    %p76 = scmp.ne.s32.totalorder %s67, %s68
    %p77 = scmp.eq.s32.totalorder %s15, 0
    %p78 = por %p76, %p77
    %p79 = scmp.ne.s32.totalorder %s67, %s68
    %p80 = scmp.eq.s32.totalorder %s16, 1
    %p81 = por %p79, %p80
    %p83 = scmp.ne.s32.totalorder %s68, %s82
    %p84 = scmp.eq.s32.totalorder %s16, 0
    %p85 = por %p83, %p84
    %s87 = sadd.s32 %s86, 1
    %p90 = scmp.eq.s32.totalorder %s10, 1
    %p91 = scmp.ne.s32.totalorder %s86, %s88
    %p92 = scmp.eq.s32.totalorder %s10, 0
    %p93 = por %p91, %p92
    %p94 = scmp.ne.s32.totalorder %s86, %s88
    %p95 = scmp.eq.s32.totalorder %s15, 1
    %p96 = por %p94, %p95
    %p97 = scmp.ne.s32.totalorder %s88, %s89
    %p98 = scmp.eq.s32.totalorder %s15, 0
    %p99 = por %p97, %p98
    %p100 = scmp.ne.s32.totalorder %s88, %s89
    %p101 = scmp.eq.s32.totalorder %s16, 1
    %p102 = por %p100, %p101
    %p104 = scmp.ne.s32.totalorder %s89, %s103
    %p105 = scmp.eq.s32.totalorder %s16, 0
    %p106 = por %p104, %p105
    %s107 = ssub.s32 %s10, %s17
    %p108 = scmp.eq.s32.totalorder %s107, 0
    %s110 = sadd.s32 %s109, 1
    %s111 = scalar_select %p108, %s109, %s110
    %p114 = pneg %p108
    %p115 = scmp.eq.s32.totalorder %s10, 1
    %p116 = por %p114, %p115
    %p117 = scmp.ne.s32.totalorder %s109, %s112
    %p118 = scmp.eq.s32.totalorder %s10, 0
    %p119 = por %p117, %p118
    %p120 = scmp.ne.s32.totalorder %s109, %s112
    %p121 = scmp.eq.s32.totalorder %s15, 1
    %p122 = por %p120, %p121
    %p123 = scmp.ne.s32.totalorder %s112, %s113
    %p124 = scmp.eq.s32.totalorder %s15, 0
    %p125 = por %p123, %p124
    %p126 = scmp.ne.s32.totalorder %s112, %s113
    %p127 = scmp.eq.s32.totalorder %s16, 1
    %p128 = por %p126, %p127
    %p130 = scmp.ne.s32.totalorder %s113, %s129
    %p131 = scmp.eq.s32.totalorder %s16, 0
    %p132 = por %p130, %p131
    %p133 = scmp.le.s32.totalorder 1, %s10
    %p134 = scmp.lt.s32.totalorder %s10, 3
    %p135 = pnand %p133, %p134
    %p136 = pneg %p135
    // Predicated region
    $region9: #{osblock_forward.8} parent=5 // pred_check
      _
    $region10: #{osblock_forward.8} parent=5 // pred_check_branch
      %138 = sbr.rel (%p135) target = $region12
    $region11: #{osblock_forward.8} parent=5 // pred_region
      %s139 = ssub.s32 %s10, 1
      // Predicated region
      $region13: #{osblock_forward.8} parent=11 // pred_check
        %p140 = pneg %p57
      $region14: #{osblock_forward.8} parent=11 // pred_check_branch
        %142 = sbr.rel (%p140) target = $region16
      $region15: #{osblock_forward.8} parent=11 // pred_region
        _
      $region16: #{osblock_forward.8} parent=11 // pred_fallthru
        _
      // Predicated region
      $region17: #{osblock_forward.8} parent=11 // pred_check
        %p143 = pneg %p78
      $region18: #{osblock_forward.8} parent=11 // pred_check_branch
        %145 = sbr.rel (%p143) target = $region20
      $region19: #{osblock_forward.8} parent=11 // pred_region
        _
      $region20: #{osblock_forward.8} parent=11 // pred_fallthru
        _
      // Predicated region
      $region21: #{osblock_forward.8} parent=11 // pred_check
        %p146 = pneg %p99
      $region22: #{osblock_forward.8} parent=11 // pred_check_branch
        %148 = sbr.rel (%p146) target = $region24
      $region23: #{osblock_forward.8} parent=11 // pred_region
        _
      $region24: #{osblock_forward.8} parent=11 // pred_fallthru
        _
    $region12: #{osblock_forward.8} parent=5 // pred_fallthru
      _
    %p149 = scmp.lt.s32.totalorder %s10, 2
    // Predicated region
    $region25: #{osblock_forward.8} parent=5 // pred_check
      %p150 = pneg %p149
    $region26: #{osblock_forward.8} parent=5 // pred_check_branch
      %152 = sbr.rel (%p150) target = $region28
    $region27: #{osblock_forward.8} parent=5 // pred_region
      // Predicated region
      $region29: #{osblock_forward.8} parent=27 // pred_check
        %p153 = pneg %p30
      $region30: #{osblock_forward.8} parent=27 // pred_check_branch
        %155 = sbr.rel (%p153) target = $region32
      $region31: #{osblock_forward.8} parent=27 // pred_region
        %p156 = scmp.lt.s32.totalorder %s10, 1
        %s157 = scalar_select %p156, %s10, 1
        %s158 = smul.addr %s157, 8
        %s159 = smul.addr %s158, 8
        %s160 = scalar_lea.vmem %s0, %s159
      $region32: #{osblock_forward.8} parent=27 // pred_fallthru
        _
    $region28: #{osblock_forward.8} parent=5 // pred_fallthru
      _
    %p161 = scmp.le.s32.totalorder 1, %s10
    %p162 = scmp.lt.s32.totalorder %s10, 3
    %p163 = pnand %p161, %p162
    %p164 = pneg %p163
    // Predicated region
    $region33: #{osblock_forward.8} parent=5 // pred_check
      _
    $region34: #{osblock_forward.8} parent=5 // pred_check_branch
      %166 = sbr.rel (%p163) target = $region36
    $region35: #{osblock_forward.8} parent=5 // pred_region
      %s167 = ssub.s32 %s10, 1
      %p168 = scmp.lt.s32.totalorder %s15, 1
      %s169 = scalar_select %p168, %s15, 1
      %s170 = smul.addr %s169, 8
      %s171 = smul.addr %s170, 8
      %s172 = scalar_lea.vmem %s0, %s171
      %p173 = pneg %p36
      %p174 = pneg %p33
      %p175 = pneg %p57
      %p176 = pneg %p54
      %p177 = pneg %p78
      %p178 = pneg %p75
      %p179 = pneg %p99
      %p180 = pneg %p96
      %p181 = pneg %p125
      %p182 = pneg %p122
      %p183 = scmp.lt.s32.totalorder %s15, 1
      %s184 = scalar_select %p183, %s15, 1
      %s185 = smul.addr %s184, 8
      %s186 = smul.addr %s185, 8
      %s187 = scalar_lea.vmem %s4, %s186
      %p188 = scmp.lt.s32.totalorder %s15, 1
      %s189 = scalar_select %p188, %s15, 1
      %s190 = smul.addr %s189, 8
      %s191 = smul.addr %s190, 8
      %s192 = scalar_lea.vmem %s0, %s191
      %p193 = scmp.lt.s32.totalorder %s15, 1
      %s194 = scalar_select %p193, %s15, 1
      %s195 = smul.addr %s194, 8
      %s196 = smul.addr %s195, 8
      %s197 = scalar_lea.vmem %s4, %s196
      %v198 = vld [vmem:[%s192] sm:$0xff]
      %v199 = vld [vmem:[%s192 + $0x8] sm:$0xff]
      %v200 = vld [vmem:[%s192 + $0x10] sm:$0xff]
      %v201 = vld [vmem:[%s192 + $0x18] sm:$0xff]
      %v202 = vld [vmem:[%s192 + $0x20] sm:$0xff]
      %v203 = vld [vmem:[%s192 + $0x28] sm:$0xff]
      %v204 = vld [vmem:[%s192 + $0x30] sm:$0xff]
      %v205 = vld [vmem:[%s192 + $0x38] sm:$0xff]
      %v206 = vld [vmem:[%s1] sm:$0xff]
      %v207 = vld [vmem:[%s1 + $0x8] sm:$0xff]
      %v208 = vld [vmem:[%s1 + $0x10] sm:$0xff]
      %v209 = vld [vmem:[%s1 + $0x18] sm:$0xff]
      %v210 = vld [vmem:[%s1 + $0x20] sm:$0xff]
      %v211 = vld [vmem:[%s1 + $0x28] sm:$0xff]
      %v212 = vld [vmem:[%s1 + $0x30] sm:$0xff]
      %v213 = vld [vmem:[%s1 + $0x38] sm:$0xff]
      %vm214 = vcmask 523264
      %v216 = vsel %vm214, %v198, 0
      %v219 = vsel %vm214, %v199, 0
      %v222 = vsel %vm214, %v200, 0
      %v225 = vsel %vm214, %v201, 0
      %v228 = vsel %vm214, %v202, 0
      %v231 = vsel %vm214, %v203, 0
      %v234 = vsel %vm214, %v204, 0
      %v237 = vsel %vm214, %v205, 0
      %239 = vmatprep.subr.mxu0 0.0
      %240 = vmatpush1.msra.mxu0 0.0
      %241 = vmatprep.subr.mxu0 0.0
      %242 = vmatpush1.msra.mxu0 0.0
      %243 = vmatprep.subr.mxu0 0.0
      %244 = vmatpush1.msra.mxu0 0.0
      %245 = vmatprep.subr.mxu0 0.0
      %246 = vmatpush1.msra.mxu0 0.0
      %247 = vmatprep.subr.mxu0 0.0
      %248 = vmatpush1.msra.mxu0 0.0
      %249 = vmatprep.subr.mxu0 0.0
      %250 = vmatpush1.msra.mxu0 0.0
      %251 = vmatprep.subr.mxu0 0.0
      %252 = vmatpush1.msra.mxu0 0.0
      %253 = vmatprep.subr.mxu0 0.0
      %254 = vmatpush1.msra.mxu0 0.0
      %255 = vmatprep.subr.mxu0 0.0
      %256 = vmatpush1.msra.mxu0 %v213
      %257 = vmatprep.subr.mxu0 0.0
      %258 = vmatpush1.msra.mxu0 %v212
      %259 = vmatprep.subr.mxu0 0.0
      %260 = vmatpush1.msra.mxu0 %v211
      %261 = vmatprep.subr.mxu0 0.0
      %262 = vmatpush1.msra.mxu0 %v210
      %263 = vmatprep.subr.mxu0 0.0
      %264 = vmatpush1.msra.mxu0 %v209
      %265 = vmatprep.subr.mxu0 0.0
      %266 = vmatpush1.msra.mxu0 %v208
      %267 = vmatprep.subr.mxu0 0.0
      %268 = vmatpush1.msra.mxu0 %v207
      %269 = vmatprep.subr.mxu0 0.0
      %270 = vmatpush1.msra.mxu0 %v206
      %271 = vmatprep.subr.mxu0 0.0
      %272 = vmatpush2.msra.mxu0 0.0
      %273 = vmatprep.subr.mxu0 0.0
      %274 = vmatpush2.msra.mxu0 0.0
      %275 = vmatprep.subr.mxu0 0.0
      %276 = vmatpush2.msra.mxu0 0.0
      %277 = vmatprep.subr.mxu0 0.0
      %278 = vmatpush2.msra.mxu0 0.0
      %279 = vmatprep.subr.mxu0 0.0
      %280 = vmatpush2.msra.mxu0 0.0
      %281 = vmatprep.subr.mxu0 0.0
      %282 = vmatpush2.msra.mxu0 0.0
      %283 = vmatprep.subr.mxu0 0.0
      %284 = vmatpush2.msra.mxu0 0.0
      %285 = vmatprep.subr.mxu0 0.0
      %286 = vmatpush2.msra.mxu0 0.0
      %287 = vmatprep.subr.mxu0 0.0
      %288 = vmatpush2.msra.mxu0 0.0
      %289 = vmatprep.subr.mxu0 0.0
      %290 = vmatpush2.msra.mxu0 0.0
      %291 = vmatprep.subr.mxu0 0.0
      %292 = vmatpush2.msra.mxu0 0.0
      %293 = vmatprep.subr.mxu0 0.0
      %294 = vmatpush2.msra.mxu0 0.0
      %295 = vmatprep.subr.mxu0 0.0
      %296 = vmatpush2.msra.mxu0 0.0
      %297 = vmatprep.subr.mxu0 0.0
      %298 = vmatpush2.msra.mxu0 0.0
      %299 = vmatprep.subr.mxu0 0.0
      %300 = vmatpush2.msra.mxu0 0.0
      %301 = vmatprep.subr.mxu0 0.0
      %302 = vmatpush2.msra.mxu0 0.0
      %303 = vmatprep.mubr.f32.mxu0 0.0
      %304 = vmatmul.mubr.f32.gmra.mxu0 %v216
      %v305 = vpop.f32.mrf.mxu0
      %v306 = vadd.f32 0.0, %v305
      %v307 = vpop.f32.mrf.mxu0
      %308 = vmatprep.mubr.f32.mxu0 0.0
      %309 = vmatmul.mubr.f32.gmra.mxu0 %v219
      %v310 = vpop.f32.mrf.mxu0
      %v311 = vadd.f32 0.0, %v310
      %v312 = vpop.f32.mrf.mxu0
      %313 = vmatprep.mubr.f32.mxu0 0.0
      %314 = vmatmul.mubr.f32.gmra.mxu0 %v222
      %v315 = vpop.f32.mrf.mxu0
      %v316 = vadd.f32 0.0, %v315
      %v317 = vpop.f32.mrf.mxu0
      %318 = vmatprep.mubr.f32.mxu0 0.0
      %319 = vmatmul.mubr.f32.gmra.mxu0 %v225
      %v320 = vpop.f32.mrf.mxu0
      %v321 = vadd.f32 0.0, %v320
      %v322 = vpop.f32.mrf.mxu0
      %323 = vmatprep.mubr.f32.mxu0 0.0
      %324 = vmatmul.mubr.f32.gmra.mxu0 %v228
      %v325 = vpop.f32.mrf.mxu0
      %v326 = vadd.f32 0.0, %v325
      %v327 = vpop.f32.mrf.mxu0
      %328 = vmatprep.mubr.f32.mxu0 0.0
      %329 = vmatmul.mubr.f32.gmra.mxu0 %v231
      %v330 = vpop.f32.mrf.mxu0
      %v331 = vadd.f32 0.0, %v330
      %v332 = vpop.f32.mrf.mxu0
      %333 = vmatprep.mubr.f32.mxu0 0.0
      %334 = vmatmul.mubr.f32.gmra.mxu0 %v234
      %v335 = vpop.f32.mrf.mxu0
      %v336 = vadd.f32 0.0, %v335
      %v337 = vpop.f32.mrf.mxu0
      %338 = vmatprep.mubr.f32.mxu0 0.0
      %339 = vmatmul.mubr.f32.gmra.mxu0 %v237
      %v340 = vpop.f32.mrf.mxu0
      %v341 = vadd.f32 0.0, %v340
      %v342 = vpop.f32.mrf.mxu0
      %343 = vdwg.mxu0
      %vm344 = vcmask 261120
      %345 = vst.msk [vmem:[#allocation2] sm:$0xff] %vm344, 0.0
      %346 = vst.msk [vmem:[#allocation2 + $0x8] sm:$0xff] %vm344, 0.0
      %vm347 = vcmask 253952
      %348 = vst.msk [vmem:[#allocation2 + $0x10] sm:$0x1] %vm347, 0.0
      %349 = vst.msk [vmem:[#allocation2 + $0x18] sm:$0xff] %vm344, 0.0
      %350 = vst.msk [vmem:[#allocation2 + $0x20] sm:$0xff] %vm344, 0.0
      %351 = vst.msk [vmem:[#allocation2 + $0x28] sm:$0x1] %vm347, 0.0
      %352 = vst.msk [vmem:[#allocation2 + $0x30] sm:$0xff] %vm344, 0.0
      %353 = vst.msk [vmem:[#allocation2 + $0x38] sm:$0xff] %vm344, 0.0
      %354 = vst.msk [vmem:[#allocation2 + $0x40] sm:$0x1] %vm347, 0.0
      %355 = vst.msk [vmem:[#allocation2 + $0x48] sm:$0xff] %vm344, 0.0
      %356 = vst.msk [vmem:[#allocation2 + $0x50] sm:$0xff] %vm344, 0.0
      %357 = vst.msk [vmem:[#allocation2 + $0x58] sm:$0x1] %vm347, 0.0
      %358 = vst.msk [vmem:[#allocation2 + $0x60] sm:$0xff] %vm344, 0.0
      %359 = vst.msk [vmem:[#allocation2 + $0x68] sm:$0xff] %vm344, 0.0
      %360 = vst.msk [vmem:[#allocation2 + $0x70] sm:$0x1] %vm347, 0.0
      %361 = vst.msk [vmem:[#allocation2 + $0x78] sm:$0xff] %vm344, 0.0
      %362 = vst.msk [vmem:[#allocation2 + $0x80] sm:$0xff] %vm344, 0.0
      %363 = vst.msk [vmem:[#allocation2 + $0x88] sm:$0x1] %vm347, 0.0
      %364 = vst.msk [vmem:[#allocation2 + $0x90] sm:$0xff] %vm344, 0.0
      %365 = vst.msk [vmem:[#allocation2 + $0x98] sm:$0xff] %vm344, 0.0
      %366 = vst.msk [vmem:[#allocation2 + $0xa0] sm:$0x1] %vm347, 0.0
      %367 = vst.msk [vmem:[#allocation2 + $0xa8] sm:$0xff] %vm344, 0.0
      %368 = vst.msk [vmem:[#allocation2 + $0xb0] sm:$0xff] %vm344, 0.0
      %369 = vst.msk [vmem:[#allocation2 + $0xb8] sm:$0x1] %vm347, 0.0
      %370 = vst.msk [vmem:[#allocation2 + $0xc0] sm:$0xff] %vm344, 0.0
      %371 = vst.msk [vmem:[#allocation2 + $0xc8] sm:$0xff] %vm344, 0.0
      %372 = vst.msk [vmem:[#allocation2 + $0xd0] sm:$0x1] %vm347, 0.0
      %373 = vst.msk [vmem:[#allocation2 + $0xd8] sm:$0xff] %vm344, 0.0
      %374 = vst.msk [vmem:[#allocation2 + $0xe0] sm:$0xff] %vm344, 0.0
      %375 = vst.msk [vmem:[#allocation2 + $0xe8] sm:$0x1] %vm347, 0.0
      %s376 = scalar_lea.vmem [#allocation2], 24
      %377 = vst.msk [vmem:[%s376 + $0x8] sm:$0xff] %vm344, %v306
      %378 = vst.msk [vmem:[%s376 + $0x20] sm:$0xff] %vm344, %v311
      %379 = vst.msk [vmem:[%s376 + $0x38] sm:$0xff] %vm344, %v316
      %380 = vst.msk [vmem:[%s376 + $0x50] sm:$0xff] %vm344, %v321
      %381 = vst.msk [vmem:[%s376 + $0x68] sm:$0xff] %vm344, %v326
      %382 = vst.msk [vmem:[%s376 + $0x80] sm:$0xff] %vm344, %v331
      %383 = vst.msk [vmem:[%s376 + $0x98] sm:$0xff] %vm344, %v336
      %384 = vst.msk [vmem:[%s376 + $0xb0] sm:$0xff] %vm344, %v341
      %v385 = vld [vmem:[#allocation2] sm:$0xff]
      %v386 = vld [vmem:[#allocation2 + $0x8] sm:$0xff]
      %v387 = vld [vmem:[#allocation2 + $0x10] sm:$0x1]
      %v388 = vld [vmem:[#allocation2 + $0x18] sm:$0xff]
      %v389 = vld [vmem:[#allocation2 + $0x20] sm:$0xff]
      %v390 = vld [vmem:[#allocation2 + $0x28] sm:$0x1]
      %v391 = vld [vmem:[#allocation2 + $0x30] sm:$0xff]
      %v392 = vld [vmem:[#allocation2 + $0x38] sm:$0xff]
      %v393 = vld [vmem:[#allocation2 + $0x40] sm:$0x1]
      %v394 = vld [vmem:[#allocation2 + $0x48] sm:$0xff]
      %v395 = vld [vmem:[#allocation2 + $0x50] sm:$0xff]
      %v396 = vld [vmem:[#allocation2 + $0x58] sm:$0x1]
      %v397 = vld [vmem:[#allocation2 + $0x60] sm:$0xff]
      %v398 = vld [vmem:[#allocation2 + $0x68] sm:$0xff]
      %v399 = vld [vmem:[#allocation2 + $0x70] sm:$0x1]
      %v400 = vld [vmem:[#allocation2 + $0x78] sm:$0xff]
      %v401 = vld [vmem:[#allocation2 + $0x80] sm:$0xff]
      %v402 = vld [vmem:[#allocation2 + $0x88] sm:$0x1]
      %v403 = vld [vmem:[#allocation2 + $0x90] sm:$0xff]
      %v404 = vld [vmem:[#allocation2 + $0x98] sm:$0xff]
      %v405 = vld [vmem:[#allocation2 + $0xa0] sm:$0x1]
      %v406 = vld [vmem:[#allocation2 + $0xa8] sm:$0xff]
      %v407 = vld [vmem:[#allocation2 + $0xb0] sm:$0xff]
      %v408 = vld [vmem:[#allocation2 + $0xb8] sm:$0x1]
      %v409 = vld [vmem:[#allocation2 + $0xc0] sm:$0xff]
      %v410 = vld [vmem:[#allocation2 + $0xc8] sm:$0xff]
      %v411 = vld [vmem:[#allocation2 + $0xd0] sm:$0x1]
      %v412 = vld [vmem:[#allocation2 + $0xd8] sm:$0xff]
      %v413 = vld [vmem:[#allocation2 + $0xe0] sm:$0xff]
      %v414 = vld [vmem:[#allocation2 + $0xe8] sm:$0x1]
      %v415 = vld [vmem:[%s2] sm:$0x7]
      %v416 = vld [vmem:[%s2 + $0x4] sm:$0x7]
      %v417 = vld [vmem:[%s2 + $0x8] sm:$0x7]
      %v418 = vlaneseq
      %v419 = vshrl.u32 %v418, 7
      %v420 = vsub.s32 0, %v419
      %v421 = vrot.slane %v415, %v420
      %v422 = vmul.f32 %v385, %v421
      %v423 = vmul.f32 %v386, %v421
      %v424 = vmul.f32 %v388, %v421
      %v425 = vmul.f32 %v389, %v421
      %v426 = vmul.f32 %v391, %v421
      %v427 = vmul.f32 %v392, %v421
      %v428 = vmul.f32 %v394, %v421
      %v429 = vmul.f32 %v395, %v421
      %v430 = vmul.f32 %v397, %v421
      %v431 = vmul.f32 %v398, %v421
      %v432 = vmul.f32 %v400, %v421
      %v433 = vmul.f32 %v401, %v421
      %v434 = vmul.f32 %v403, %v421
      %v435 = vmul.f32 %v404, %v421
      %v436 = vmul.f32 %v406, %v421
      %v437 = vmul.f32 %v407, %v421
      %v438 = vlaneseq
      %v439 = vshrl.u32 %v438, 7
      %v440 = vsub.s32 1, %v439
      %v441 = vrot.slane %v415, %v440
      %v442 = vmul.f32 %v386, %v441
      %v443 = vmul.f32 %v389, %v441
      %v444 = vmul.f32 %v392, %v441
      %v445 = vmul.f32 %v395, %v441
      %v446 = vmul.f32 %v398, %v441
      %v447 = vmul.f32 %v401, %v441
      %v448 = vmul.f32 %v404, %v441
      %v449 = vmul.f32 %v407, %v441
      %v458 = vrot.slane %v442, 1
      %v459 = vrot.slane %v443, 1
      %v460 = vrot.slane %v444, 1
      %v461 = vrot.slane %v445, 1
      %v462 = vrot.slane %v446, 1
      %v463 = vrot.slane %v447, 1
      %v464 = vrot.slane %v448, 1
      %v465 = vrot.slane %v449, 1
      %v474 = vadd.f32 %v422, %v458
      %v475 = vadd.f32 %v423, %v458
      %v476 = vadd.f32 %v424, %v459
      %v477 = vadd.f32 %v425, %v459
      %v478 = vadd.f32 %v426, %v460
      %v479 = vadd.f32 %v427, %v460
      %v480 = vadd.f32 %v428, %v461
      %v481 = vadd.f32 %v429, %v461
      %v482 = vadd.f32 %v430, %v462
      %v483 = vadd.f32 %v431, %v462
      %v484 = vadd.f32 %v432, %v463
      %v485 = vadd.f32 %v433, %v463
      %v486 = vadd.f32 %v434, %v464
      %v487 = vadd.f32 %v435, %v464
      %v488 = vadd.f32 %v436, %v465
      %v489 = vadd.f32 %v437, %v465
      %v490 = vlaneseq
      %v491 = vshrl.u32 %v490, 7
      %v492 = vsub.s32 2, %v491
      %v493 = vrot.slane %v415, %v492
      %v494 = vmul.f32 %v386, %v493
      %v495 = vmul.f32 %v387, %v493
      %v496 = vmul.f32 %v389, %v493
      %v497 = vmul.f32 %v390, %v493
      %v498 = vmul.f32 %v392, %v493
      %v499 = vmul.f32 %v393, %v493
      %v500 = vmul.f32 %v395, %v493
      %v501 = vmul.f32 %v396, %v493
      %v502 = vmul.f32 %v398, %v493
      %v503 = vmul.f32 %v399, %v493
      %v504 = vmul.f32 %v401, %v493
      %v505 = vmul.f32 %v402, %v493
      %v506 = vmul.f32 %v404, %v493
      %v507 = vmul.f32 %v405, %v493
      %v508 = vmul.f32 %v407, %v493
      %v509 = vmul.f32 %v408, %v493
      %vm526 = vcmask 1045504
      %v527 = vrot.slane %v494, 2
      %v528 = vrot.slane %v495, 2
      %v529 = vsel %vm526, %v527, %v528
      %v530 = vrot.slane %v496, 2
      %v531 = vrot.slane %v497, 2
      %v532 = vsel %vm526, %v530, %v531
      %v533 = vrot.slane %v498, 2
      %v534 = vrot.slane %v499, 2
      %v535 = vsel %vm526, %v533, %v534
      %v536 = vrot.slane %v500, 2
      %v537 = vrot.slane %v501, 2
      %v538 = vsel %vm526, %v536, %v537
      %v539 = vrot.slane %v502, 2
      %v540 = vrot.slane %v503, 2
      %v541 = vsel %vm526, %v539, %v540
      %v542 = vrot.slane %v504, 2
      %v543 = vrot.slane %v505, 2
      %v544 = vsel %vm526, %v542, %v543
      %v545 = vrot.slane %v506, 2
      %v546 = vrot.slane %v507, 2
      %v547 = vsel %vm526, %v545, %v546
      %v548 = vrot.slane %v508, 2
      %v549 = vrot.slane %v509, 2
      %v550 = vsel %vm526, %v548, %v549
      %v567 = vadd.f32 %v474, %v527
      %v568 = vadd.f32 %v475, %v529
      %v569 = vadd.f32 %v476, %v530
      %v570 = vadd.f32 %v477, %v532
      %v571 = vadd.f32 %v478, %v533
      %v572 = vadd.f32 %v479, %v535
      %v573 = vadd.f32 %v480, %v536
      %v574 = vadd.f32 %v481, %v538
      %v575 = vadd.f32 %v482, %v539
      %v576 = vadd.f32 %v483, %v541
      %v577 = vadd.f32 %v484, %v542
      %v578 = vadd.f32 %v485, %v544
      %v579 = vadd.f32 %v486, %v545
      %v580 = vadd.f32 %v487, %v547
      %v581 = vadd.f32 %v488, %v548
      %v582 = vadd.f32 %v489, %v550
      %v583 = vlaneseq
      %v584 = vshrl.u32 %v583, 7
      %v585 = vsub.s32 0, %v584
      %v586 = vrot.slane %v416, %v585
      %v587 = vmul.f32 %v388, %v586
      %v588 = vmul.f32 %v389, %v586
      %v589 = vmul.f32 %v391, %v586
      %v590 = vmul.f32 %v392, %v586
      %v591 = vmul.f32 %v394, %v586
      %v592 = vmul.f32 %v395, %v586
      %v593 = vmul.f32 %v397, %v586
      %v594 = vmul.f32 %v398, %v586
      %v595 = vmul.f32 %v400, %v586
      %v596 = vmul.f32 %v401, %v586
      %v597 = vmul.f32 %v403, %v586
      %v598 = vmul.f32 %v404, %v586
      %v599 = vmul.f32 %v406, %v586
      %v600 = vmul.f32 %v407, %v586
      %v601 = vmul.f32 %v409, %v586
      %v602 = vmul.f32 %v410, %v586
      %v603 = vadd.f32 %v567, %v587
      %v604 = vadd.f32 %v568, %v588
      %v605 = vadd.f32 %v569, %v589
      %v606 = vadd.f32 %v570, %v590
      %v607 = vadd.f32 %v571, %v591
      %v608 = vadd.f32 %v572, %v592
      %v609 = vadd.f32 %v573, %v593
      %v610 = vadd.f32 %v574, %v594
      %v611 = vadd.f32 %v575, %v595
      %v612 = vadd.f32 %v576, %v596
      %v613 = vadd.f32 %v577, %v597
      %v614 = vadd.f32 %v578, %v598
      %v615 = vadd.f32 %v579, %v599
      %v616 = vadd.f32 %v580, %v600
      %v617 = vadd.f32 %v581, %v601
      %v618 = vadd.f32 %v582, %v602
      %v619 = vlaneseq
      %v620 = vshrl.u32 %v619, 7
      %v621 = vsub.s32 1, %v620
      %v622 = vrot.slane %v416, %v621
      %v623 = vmul.f32 %v389, %v622
      %v624 = vmul.f32 %v392, %v622
      %v625 = vmul.f32 %v395, %v622
      %v626 = vmul.f32 %v398, %v622
      %v627 = vmul.f32 %v401, %v622
      %v628 = vmul.f32 %v404, %v622
      %v629 = vmul.f32 %v407, %v622
      %v630 = vmul.f32 %v410, %v622
      %v639 = vrot.slane %v623, 1
      %v640 = vrot.slane %v624, 1
      %v641 = vrot.slane %v625, 1
      %v642 = vrot.slane %v626, 1
      %v643 = vrot.slane %v627, 1
      %v644 = vrot.slane %v628, 1
      %v645 = vrot.slane %v629, 1
      %v646 = vrot.slane %v630, 1
      %v655 = vadd.f32 %v603, %v639
      %v656 = vadd.f32 %v604, %v639
      %v657 = vadd.f32 %v605, %v640
      %v658 = vadd.f32 %v606, %v640
      %v659 = vadd.f32 %v607, %v641
      %v660 = vadd.f32 %v608, %v641
      %v661 = vadd.f32 %v609, %v642
      %v662 = vadd.f32 %v610, %v642
      %v663 = vadd.f32 %v611, %v643
      %v664 = vadd.f32 %v612, %v643
      %v665 = vadd.f32 %v613, %v644
      %v666 = vadd.f32 %v614, %v644
      %v667 = vadd.f32 %v615, %v645
      %v668 = vadd.f32 %v616, %v645
      %v669 = vadd.f32 %v617, %v646
      %v670 = vadd.f32 %v618, %v646
      %v671 = vlaneseq
      %v672 = vshrl.u32 %v671, 7
      %v673 = vsub.s32 2, %v672
      %v674 = vrot.slane %v416, %v673
      %v675 = vmul.f32 %v389, %v674
      %v676 = vmul.f32 %v390, %v674
      %v677 = vmul.f32 %v392, %v674
      %v678 = vmul.f32 %v393, %v674
      %v679 = vmul.f32 %v395, %v674
      %v680 = vmul.f32 %v396, %v674
      %v681 = vmul.f32 %v398, %v674
      %v682 = vmul.f32 %v399, %v674
      %v683 = vmul.f32 %v401, %v674
      %v684 = vmul.f32 %v402, %v674
      %v685 = vmul.f32 %v404, %v674
      %v686 = vmul.f32 %v405, %v674
      %v687 = vmul.f32 %v407, %v674
      %v688 = vmul.f32 %v408, %v674
      %v689 = vmul.f32 %v410, %v674
      %v690 = vmul.f32 %v411, %v674
      %v707 = vrot.slane %v675, 2
      %v708 = vrot.slane %v676, 2
      %v709 = vsel %vm526, %v707, %v708
      %v710 = vrot.slane %v677, 2
      %v711 = vrot.slane %v678, 2
      %v712 = vsel %vm526, %v710, %v711
      %v713 = vrot.slane %v679, 2
      %v714 = vrot.slane %v680, 2
      %v715 = vsel %vm526, %v713, %v714
      %v716 = vrot.slane %v681, 2
      %v717 = vrot.slane %v682, 2
      %v718 = vsel %vm526, %v716, %v717
      %v719 = vrot.slane %v683, 2
      %v720 = vrot.slane %v684, 2
      %v721 = vsel %vm526, %v719, %v720
      %v722 = vrot.slane %v685, 2
      %v723 = vrot.slane %v686, 2
      %v724 = vsel %vm526, %v722, %v723
      %v725 = vrot.slane %v687, 2
      %v726 = vrot.slane %v688, 2
      %v727 = vsel %vm526, %v725, %v726
      %v728 = vrot.slane %v689, 2
      %v729 = vrot.slane %v690, 2
      %v730 = vsel %vm526, %v728, %v729
      %v747 = vadd.f32 %v655, %v707
      %v748 = vadd.f32 %v656, %v709
      %v749 = vadd.f32 %v657, %v710
      %v750 = vadd.f32 %v658, %v712
      %v751 = vadd.f32 %v659, %v713
      %v752 = vadd.f32 %v660, %v715
      %v753 = vadd.f32 %v661, %v716
      %v754 = vadd.f32 %v662, %v718
      %v755 = vadd.f32 %v663, %v719
      %v756 = vadd.f32 %v664, %v721
      %v757 = vadd.f32 %v665, %v722
      %v758 = vadd.f32 %v666, %v724
      %v759 = vadd.f32 %v667, %v725
      %v760 = vadd.f32 %v668, %v727
      %v761 = vadd.f32 %v669, %v728
      %v762 = vadd.f32 %v670, %v730
      %v763 = vlaneseq
      %v764 = vshrl.u32 %v763, 7
      %v765 = vsub.s32 0, %v764
      %v766 = vrot.slane %v417, %v765
      %v767 = vmul.f32 %v391, %v766
      %v768 = vmul.f32 %v392, %v766
      %v769 = vmul.f32 %v394, %v766
      %v770 = vmul.f32 %v395, %v766
      %v771 = vmul.f32 %v397, %v766
      %v772 = vmul.f32 %v398, %v766
      %v773 = vmul.f32 %v400, %v766
      %v774 = vmul.f32 %v401, %v766
      %v775 = vmul.f32 %v403, %v766
      %v776 = vmul.f32 %v404, %v766
      %v777 = vmul.f32 %v406, %v766
      %v778 = vmul.f32 %v407, %v766
      %v779 = vmul.f32 %v409, %v766
      %v780 = vmul.f32 %v410, %v766
      %v781 = vmul.f32 %v412, %v766
      %v782 = vmul.f32 %v413, %v766
      %v783 = vadd.f32 %v747, %v767
      %v784 = vadd.f32 %v748, %v768
      %v785 = vadd.f32 %v749, %v769
      %v786 = vadd.f32 %v750, %v770
      %v787 = vadd.f32 %v751, %v771
      %v788 = vadd.f32 %v752, %v772
      %v789 = vadd.f32 %v753, %v773
      %v790 = vadd.f32 %v754, %v774
      %v791 = vadd.f32 %v755, %v775
      %v792 = vadd.f32 %v756, %v776
      %v793 = vadd.f32 %v757, %v777
      %v794 = vadd.f32 %v758, %v778
      %v795 = vadd.f32 %v759, %v779
      %v796 = vadd.f32 %v760, %v780
      %v797 = vadd.f32 %v761, %v781
      %v798 = vadd.f32 %v762, %v782
      %v799 = vlaneseq
      %v800 = vshrl.u32 %v799, 7
      %v801 = vsub.s32 1, %v800
      %v802 = vrot.slane %v417, %v801
      %v803 = vmul.f32 %v392, %v802
      %v804 = vmul.f32 %v395, %v802
      %v805 = vmul.f32 %v398, %v802
      %v806 = vmul.f32 %v401, %v802
      %v807 = vmul.f32 %v404, %v802
      %v808 = vmul.f32 %v407, %v802
      %v809 = vmul.f32 %v410, %v802
      %v810 = vmul.f32 %v413, %v802
      %v819 = vrot.slane %v803, 1
      %v820 = vrot.slane %v804, 1
      %v821 = vrot.slane %v805, 1
      %v822 = vrot.slane %v806, 1
      %v823 = vrot.slane %v807, 1
      %v824 = vrot.slane %v808, 1
      %v825 = vrot.slane %v809, 1
      %v826 = vrot.slane %v810, 1
      %v835 = vadd.f32 %v783, %v819
      %v836 = vadd.f32 %v784, %v819
      %v837 = vadd.f32 %v785, %v820
      %v838 = vadd.f32 %v786, %v820
      %v839 = vadd.f32 %v787, %v821
      %v840 = vadd.f32 %v788, %v821
      %v841 = vadd.f32 %v789, %v822
      %v842 = vadd.f32 %v790, %v822
      %v843 = vadd.f32 %v791, %v823
      %v844 = vadd.f32 %v792, %v823
      %v845 = vadd.f32 %v793, %v824
      %v846 = vadd.f32 %v794, %v824
      %v847 = vadd.f32 %v795, %v825
      %v848 = vadd.f32 %v796, %v825
      %v849 = vadd.f32 %v797, %v826
      %v850 = vadd.f32 %v798, %v826
      %v851 = vlaneseq
      %v852 = vshrl.u32 %v851, 7
      %v853 = vsub.s32 2, %v852
      %v854 = vrot.slane %v417, %v853
      %v855 = vmul.f32 %v392, %v854
      %v856 = vmul.f32 %v393, %v854
      %v857 = vmul.f32 %v395, %v854
      %v858 = vmul.f32 %v396, %v854
      %v859 = vmul.f32 %v398, %v854
      %v860 = vmul.f32 %v399, %v854
      %v861 = vmul.f32 %v401, %v854
      %v862 = vmul.f32 %v402, %v854
      %v863 = vmul.f32 %v404, %v854
      %v864 = vmul.f32 %v405, %v854
      %v865 = vmul.f32 %v407, %v854
      %v866 = vmul.f32 %v408, %v854
      %v867 = vmul.f32 %v410, %v854
      %v868 = vmul.f32 %v411, %v854
      %v869 = vmul.f32 %v413, %v854
      %v870 = vmul.f32 %v414, %v854
      %v887 = vrot.slane %v855, 2
      %v888 = vrot.slane %v856, 2
      %v889 = vsel %vm526, %v887, %v888
      %v890 = vrot.slane %v857, 2
      %v891 = vrot.slane %v858, 2
      %v892 = vsel %vm526, %v890, %v891
      %v893 = vrot.slane %v859, 2
      %v894 = vrot.slane %v860, 2
      %v895 = vsel %vm526, %v893, %v894
      %v896 = vrot.slane %v861, 2
      %v897 = vrot.slane %v862, 2
      %v898 = vsel %vm526, %v896, %v897
      %v899 = vrot.slane %v863, 2
      %v900 = vrot.slane %v864, 2
      %v901 = vsel %vm526, %v899, %v900
      %v902 = vrot.slane %v865, 2
      %v903 = vrot.slane %v866, 2
      %v904 = vsel %vm526, %v902, %v903
      %v905 = vrot.slane %v867, 2
      %v906 = vrot.slane %v868, 2
      %v907 = vsel %vm526, %v905, %v906
      %v908 = vrot.slane %v869, 2
      %v909 = vrot.slane %v870, 2
      %v910 = vsel %vm526, %v908, %v909
      %v927 = vadd.f32 %v835, %v887
      %v928 = vadd.f32 %v836, %v889
      %v929 = vadd.f32 %v837, %v890
      %v930 = vadd.f32 %v838, %v892
      %v931 = vadd.f32 %v839, %v893
      %v932 = vadd.f32 %v840, %v895
      %v933 = vadd.f32 %v841, %v896
      %v934 = vadd.f32 %v842, %v898
      %v935 = vadd.f32 %v843, %v899
      %v936 = vadd.f32 %v844, %v901
      %v937 = vadd.f32 %v845, %v902
      %v938 = vadd.f32 %v846, %v904
      %v939 = vadd.f32 %v847, %v905
      %v940 = vadd.f32 %v848, %v907
      %v941 = vadd.f32 %v849, %v908
      %v942 = vadd.f32 %v850, %v910
      %v943 = vld [vmem:[%s3] sm:$0x1]
      %v945 = vlaneseq
      %v946 = vshrl.u32 %v945, 7
      %v947 = vsub.s32 0, %v946
      %v948 = vrot.slane %v943, %v947
      %v950 = vadd.f32 %v927, %v948
      %v951 = vadd.f32 %v928, %v948
      %v952 = vadd.f32 %v929, %v948
      %v953 = vadd.f32 %v930, %v948
      %v954 = vadd.f32 %v931, %v948
      %v955 = vadd.f32 %v932, %v948
      %v956 = vadd.f32 %v933, %v948
      %v957 = vadd.f32 %v934, %v948
      %v958 = vadd.f32 %v935, %v948
      %v959 = vadd.f32 %v936, %v948
      %v960 = vadd.f32 %v937, %v948
      %v961 = vadd.f32 %v938, %v948
      %v962 = vadd.f32 %v939, %v948
      %v963 = vadd.f32 %v940, %v948
      %v964 = vadd.f32 %v941, %v948
      %v965 = vadd.f32 %v942, %v948
      %v966 = vmax.f32 %v950, 0.0
      %v967 = vmax.f32 %v951, 0.0
      %v968 = vmax.f32 %v952, 0.0
      %v969 = vmax.f32 %v953, 0.0
      %v970 = vmax.f32 %v954, 0.0
      %v971 = vmax.f32 %v955, 0.0
      %v972 = vmax.f32 %v956, 0.0
      %v973 = vmax.f32 %v957, 0.0
      %v974 = vmax.f32 %v958, 0.0
      %v975 = vmax.f32 %v959, 0.0
      %v976 = vmax.f32 %v960, 0.0
      %v977 = vmax.f32 %v961, 0.0
      %v978 = vmax.f32 %v962, 0.0
      %v979 = vmax.f32 %v963, 0.0
      %v980 = vmax.f32 %v964, 0.0
      %v981 = vmax.f32 %v965, 0.0
      %vm982 = vcmask 261127
      %983 = vst.msk [vmem:[%s197 - $0x7] sm:$0x80] %vm982, %v966
      %vm984 = vcmask 260096
      %985 = vst.msk [vmem:[%s197 + $0x1] sm:$0x7f] %vm984, %v967
      %986 = vst.msk [vmem:[%s197 + $0x1] sm:$0x80] %vm982, %v968
      %987 = vst.msk [vmem:[%s197 + $0x9] sm:$0x7f] %vm984, %v969
      %988 = vst.msk [vmem:[%s197 + $0x9] sm:$0x80] %vm982, %v970
      %989 = vst.msk [vmem:[%s197 + $0x11] sm:$0x7f] %vm984, %v971
      %990 = vst.msk [vmem:[%s197 + $0x11] sm:$0x80] %vm982, %v972
      %991 = vst.msk [vmem:[%s197 + $0x19] sm:$0x7f] %vm984, %v973
      %992 = vst.msk [vmem:[%s197 + $0x19] sm:$0x80] %vm982, %v974
      %993 = vst.msk [vmem:[%s197 + $0x21] sm:$0x7f] %vm984, %v975
      %994 = vst.msk [vmem:[%s197 + $0x21] sm:$0x80] %vm982, %v976
      %995 = vst.msk [vmem:[%s197 + $0x29] sm:$0x7f] %vm984, %v977
      %996 = vst.msk [vmem:[%s197 + $0x29] sm:$0x80] %vm982, %v978
      %997 = vst.msk [vmem:[%s197 + $0x31] sm:$0x7f] %vm984, %v979
      %998 = vst.msk [vmem:[%s197 + $0x31] sm:$0x80] %vm982, %v980
      %999 = vst.msk [vmem:[%s197 + $0x39] sm:$0x7f] %vm984, %v981
      %p1000 = scmp.lt.s32.totalorder %s15, 1
      %s1001 = scalar_select %p1000, %s15, 1
      %s1002 = smul.addr %s1001, 8
      %s1003 = smul.addr %s1002, 8
      %s1004 = scalar_lea.vmem %s4, %s1003
      // Predicated region
      $region37: #{osblock_forward.8} parent=35 // pred_check
        %p1005 = pneg %p122
      $region38: #{osblock_forward.8} parent=35 // pred_check_branch
        %1007 = sbr.rel (%p1005) target = $region40
      $region39: #{osblock_forward.8} parent=35 // pred_region
        _
      $region40: #{osblock_forward.8} parent=35 // pred_fallthru
        _
    $region36: #{osblock_forward.8} parent=5 // pred_fallthru
      _
    %p1008 = scmp.le.s32.totalorder 2, %s10
    // Predicated region
    $region41: #{osblock_forward.8} parent=5 // pred_check
      %p1009 = pneg %p1008
    $region42: #{osblock_forward.8} parent=5 // pred_check_branch
      %1011 = sbr.rel (%p1009) target = $region44
    $region43: #{osblock_forward.8} parent=5 // pred_region
      %s1012 = ssub.s32 %s10, 2
      // Predicated region
      $region45: #{osblock_forward.8} parent=43 // pred_check
        %p1013 = pneg %p128
      $region46: #{osblock_forward.8} parent=43 // pred_check_branch
        %1015 = sbr.rel (%p1013) target = $region48
      $region47: #{osblock_forward.8} parent=43 // pred_region
        %p1016 = scmp.lt.s32.totalorder %s16, 1
        %s1017 = scalar_select %p1016, %s16, 1
        %s1018 = smul.addr %s1017, 8
        %s1019 = smul.addr %s1018, 8
        %s1020 = scalar_lea.vmem %s4, %s1019
      $region48: #{osblock_forward.8} parent=43 // pred_fallthru
        _
    $region44: #{osblock_forward.8} parent=5 // pred_fallthru
      _
  $region6: #{osblock_forward.8} parent=0 // loop_footer
    %s14 = sadd.s32 1, %s10
  $region7: #{osblock_forward.8} parent=0 // loop_footer_branch
    %9 = sbr.rel target = $region3
  $region8: #{osblock_forward.8} parent=0 // loop_exit
    _

// kernel: osblock_forward.9
$region0: #{osblock_forward.9}
  #allocation0 [shape = 'u32[]', space=smem, size = 0x4, offset = 0x4, fixed_abs, tag = 'smem constant byte address 0x4 - core index']
  #allocation1 [shape = 'u32[144,128]{1,0:T(1,128)}', space=vmem, size = 0x12000, scoped, tag = 'internal scratch']
  %s0 = inlined_call_operand.vmem [shape: f32[2,8,8,32], index: 0, kind: input, shape index: {}]
  %s1 = inlined_call_operand.vmem [shape: f32[2,8,8,128], index: 1, kind: input, shape index: {}]
  %s2 = inlined_call_operand.vmem [shape: f32[2,8,8,96], index: 2, kind: input, shape index: {}]
  %s3 = inlined_call_operand.vmem [shape: f32[2,8,8,64], index: 3, kind: input, shape index: {}]
  %s4 = inlined_call_operand.vmem [shape: f32[2,8,8,32], index: 4, kind: input, shape index: {}]
  %s5 = inlined_call_operand.vmem [shape: f32[32,8], index: 5, kind: input, shape index: {}]
  %s6 = inlined_call_operand.vmem [shape: f32[1,8], index: 6, kind: input, shape index: {}]
  %s7 = inlined_call_operand.vmem [shape: f32[8,32], index: 7, kind: input, shape index: {}]
  %s8 = inlined_call_operand.vmem [shape: f32[1,32], index: 8, kind: input, shape index: {}]
  %s9 = inlined_call_operand.vmem [shape: f32[32,128], index: 9, kind: input, shape index: {}]
  %s10 = inlined_call_operand.vmem [shape: f32[1,128], index: 10, kind: input, shape index: {}]
  %s11 = inlined_call_operand.vmem [shape: f32[32,128], index: 11, kind: input, shape index: {}]
  %s12 = inlined_call_operand.vmem [shape: f32[1,128], index: 12, kind: input, shape index: {}]
  %s13 = inlined_call_operand.hbm [shape: f32[2,8,8,128], index: 13, kind: output, shape index: {}]
  %s14 = sld [smem:[#allocation0]]
  $region85: #{osblock_forward.9} parent=0
    _
  %s16 = ssub.s32 1, %s14
  %s17 = scalar_select 0, %s16, %s14
  $region1: #{osblock_forward.9} parent=0
    #allocation2 [shape = 'u8[65536]{0}', space=vmem, size = 0x10000, scoped, tag = 'output window, operand 0']
    #allocation3 [shape = 's32[2]{0}', space=sflag, size = 0x8, scoped, tag = 'scoped memory for osblock_forward.9']
    %18 = vsyncpa [#allocation3], 0
    %s19 = scalar_lea.sflag [#allocation3], 1
    %20 = vsyncpa %s19, 0
    loop: start=0, step=1, limit=4
    $region2: #{osblock_forward.9} parent=1 // loop_pre_header
      _
    $region3: #{osblock_forward.9} parent=1 // loop_header
      %s22 = sphi 0, %s26
      %p23 = scmp.ge.s32.totalorder %s22, 4
      %s32 = sphi 0, %s34
      %s35 = sphi 0, %s32
      %s36 = sphi 0, %s35
      %s52 = sphi 0, %s36
      %s58 = sphi 0, %s60
      %s61 = sphi 0, %s58
      %s62 = sphi 0, %s61
      %s78 = sphi 0, %s62
      %s84 = sphi 0, %s86
      %s87 = sphi 0, %s84
      %s88 = sphi 0, %s87
      %s104 = sphi 0, %s88
      %s110 = sphi 0, %s112
      %s113 = sphi 0, %s110
      %s114 = sphi 0, %s113
      %s130 = sphi 0, %s114
      %s136 = sphi 0, %s138
      %s139 = sphi 0, %s136
      %s140 = sphi 0, %s139
      %s156 = sphi 0, %s140
      %s160 = sphi 0, %s160
      %s162 = sphi 0, %s160
      %s163 = sphi 0, %s162
      %s177 = sphi 0, %s163
      %s181 = sphi 0, %s181
      %s183 = sphi 0, %s181
      %s184 = sphi 0, %s183
      %s198 = sphi 0, %s184
      %s202 = sphi 0, %s202
      %s204 = sphi 0, %s202
      %s205 = sphi 0, %s204
      %s219 = sphi 0, %s205
      %s223 = sphi 0, %s223
      %s225 = sphi 0, %s223
      %s226 = sphi 0, %s225
      %s240 = sphi 0, %s226
      %s244 = sphi 0, %s244
      %s246 = sphi 0, %s244
      %s247 = sphi 0, %s246
      %s261 = sphi 0, %s247
      %s265 = sphi 0, %s265
      %s267 = sphi 0, %s265
      %s268 = sphi 0, %s267
      %s282 = sphi 0, %s268
      %s286 = sphi 0, %s286
      %s288 = sphi 0, %s286
      %s289 = sphi 0, %s288
      %s303 = sphi 0, %s289
      %s307 = sphi 0, %s307
      %s309 = sphi 0, %s307
      %s310 = sphi 0, %s309
      %s324 = sphi 0, %s310
      %s330 = sphi 0, %s332
      %s333 = sphi 0, %s330
      %s334 = sphi 0, %s333
      %s350 = sphi 0, %s334
    $region4: #{osblock_forward.9} parent=1 // loop_header_branch
      %25 = sbr.rel (%p23) target = $region8
    $region5: #{osblock_forward.9} parent=1 // loop_body
      %s27 = ssub.s32 %s22, 1
      %s28 = ssub.s32 %s22, 2
      %s29 = sadd.s32 %s22, 1
      %s30 = ssub.s32 %s22, %s29
      %p31 = scmp.eq.s32.totalorder %s30, 0
      %s33 = sadd.s32 %s32, 1
      %s34 = scalar_select %p31, %s32, %s33
      %p37 = pneg %p31
      %p38 = scmp.eq.s32.totalorder %s22, 1
      %p39 = por %p37, %p38
      %p40 = scmp.ne.s32.totalorder %s32, %s35
      %p41 = scmp.eq.s32.totalorder %s22, 0
      %p42 = por %p40, %p41
      %p43 = scmp.ne.s32.totalorder %s32, %s35
      %p44 = scmp.eq.s32.totalorder %s27, 1
      %p45 = por %p43, %p44
      %p46 = scmp.ne.s32.totalorder %s35, %s36
      %p47 = scmp.eq.s32.totalorder %s27, 0
      %p48 = por %p46, %p47
      %p49 = scmp.ne.s32.totalorder %s35, %s36
      %p50 = scmp.eq.s32.totalorder %s28, 1
      %p51 = por %p49, %p50
      %p53 = scmp.ne.s32.totalorder %s36, %s52
      %p54 = scmp.eq.s32.totalorder %s28, 0
      %p55 = por %p53, %p54
      %s56 = ssub.s32 %s22, %s29
      %p57 = scmp.eq.s32.totalorder %s56, 0
      %s59 = sadd.s32 %s58, 1
      %s60 = scalar_select %p57, %s58, %s59
      %p63 = pneg %p57
      %p64 = scmp.eq.s32.totalorder %s22, 1
      %p65 = por %p63, %p64
      %p66 = scmp.ne.s32.totalorder %s58, %s61
      %p67 = scmp.eq.s32.totalorder %s22, 0
      %p68 = por %p66, %p67
      %p69 = scmp.ne.s32.totalorder %s58, %s61
      %p70 = scmp.eq.s32.totalorder %s27, 1
      %p71 = por %p69, %p70
      %p72 = scmp.ne.s32.totalorder %s61, %s62
      %p73 = scmp.eq.s32.totalorder %s27, 0
      %p74 = por %p72, %p73
      %p75 = scmp.ne.s32.totalorder %s61, %s62
      %p76 = scmp.eq.s32.totalorder %s28, 1
      %p77 = por %p75, %p76
      %p79 = scmp.ne.s32.totalorder %s62, %s78
      %p80 = scmp.eq.s32.totalorder %s28, 0
      %p81 = por %p79, %p80
      %s82 = ssub.s32 %s22, %s29
      %p83 = scmp.eq.s32.totalorder %s82, 0
      %s85 = sadd.s32 %s84, 1
      %s86 = scalar_select %p83, %s84, %s85
      %p89 = pneg %p83
      %p90 = scmp.eq.s32.totalorder %s22, 1
      %p91 = por %p89, %p90
      %p92 = scmp.ne.s32.totalorder %s84, %s87
      %p93 = scmp.eq.s32.totalorder %s22, 0
      %p94 = por %p92, %p93
      %p95 = scmp.ne.s32.totalorder %s84, %s87
      %p96 = scmp.eq.s32.totalorder %s27, 1
      %p97 = por %p95, %p96
      %p98 = scmp.ne.s32.totalorder %s87, %s88
      %p99 = scmp.eq.s32.totalorder %s27, 0
      %p100 = por %p98, %p99
      %p101 = scmp.ne.s32.totalorder %s87, %s88
      %p102 = scmp.eq.s32.totalorder %s28, 1
      %p103 = por %p101, %p102
      %p105 = scmp.ne.s32.totalorder %s88, %s104
      %p106 = scmp.eq.s32.totalorder %s28, 0
      %p107 = por %p105, %p106
      %s108 = ssub.s32 %s22, %s29
      %p109 = scmp.eq.s32.totalorder %s108, 0
      %s111 = sadd.s32 %s110, 1
      %s112 = scalar_select %p109, %s110, %s111
      %p115 = pneg %p109
      %p116 = scmp.eq.s32.totalorder %s22, 1
      %p117 = por %p115, %p116
      %p118 = scmp.ne.s32.totalorder %s110, %s113
      %p119 = scmp.eq.s32.totalorder %s22, 0
      %p120 = por %p118, %p119
      %p121 = scmp.ne.s32.totalorder %s110, %s113
      %p122 = scmp.eq.s32.totalorder %s27, 1
      %p123 = por %p121, %p122
      %p124 = scmp.ne.s32.totalorder %s113, %s114
      %p125 = scmp.eq.s32.totalorder %s27, 0
      %p126 = por %p124, %p125
      %p127 = scmp.ne.s32.totalorder %s113, %s114
      %p128 = scmp.eq.s32.totalorder %s28, 1
      %p129 = por %p127, %p128
      %p131 = scmp.ne.s32.totalorder %s114, %s130
      %p132 = scmp.eq.s32.totalorder %s28, 0
      %p133 = por %p131, %p132
      %s134 = ssub.s32 %s22, %s29
      %p135 = scmp.eq.s32.totalorder %s134, 0
      %s137 = sadd.s32 %s136, 1
      %s138 = scalar_select %p135, %s136, %s137
      %p141 = pneg %p135
      %p142 = scmp.eq.s32.totalorder %s22, 1
      %p143 = por %p141, %p142
      %p144 = scmp.ne.s32.totalorder %s136, %s139
      %p145 = scmp.eq.s32.totalorder %s22, 0
      %p146 = por %p144, %p145
      %p147 = scmp.ne.s32.totalorder %s136, %s139
      %p148 = scmp.eq.s32.totalorder %s27, 1
      %p149 = por %p147, %p148
      %p150 = scmp.ne.s32.totalorder %s139, %s140
      %p151 = scmp.eq.s32.totalorder %s27, 0
      %p152 = por %p150, %p151
      %p153 = scmp.ne.s32.totalorder %s139, %s140
      %p154 = scmp.eq.s32.totalorder %s28, 1
      %p155 = por %p153, %p154
      %p157 = scmp.ne.s32.totalorder %s140, %s156
      %p158 = scmp.eq.s32.totalorder %s28, 0
      %p159 = por %p157, %p158
      %s161 = sadd.s32 %s160, 1
      %p164 = scmp.eq.s32.totalorder %s22, 1
      %p165 = scmp.ne.s32.totalorder %s160, %s162
      %p166 = scmp.eq.s32.totalorder %s22, 0
      %p167 = por %p165, %p166
      %p168 = scmp.ne.s32.totalorder %s160, %s162
      %p169 = scmp.eq.s32.totalorder %s27, 1
      %p170 = por %p168, %p169
      %p171 = scmp.ne.s32.totalorder %s162, %s163
      %p172 = scmp.eq.s32.totalorder %s27, 0
      %p173 = por %p171, %p172
      %p174 = scmp.ne.s32.totalorder %s162, %s163
      %p175 = scmp.eq.s32.totalorder %s28, 1
      %p176 = por %p174, %p175
      %p178 = scmp.ne.s32.totalorder %s163, %s177
      %p179 = scmp.eq.s32.totalorder %s28, 0
      %p180 = por %p178, %p179
      %s182 = sadd.s32 %s181, 1
      %p185 = scmp.eq.s32.totalorder %s22, 1
      %p186 = scmp.ne.s32.totalorder %s181, %s183
      %p187 = scmp.eq.s32.totalorder %s22, 0
      %p188 = por %p186, %p187
      %p189 = scmp.ne.s32.totalorder %s181, %s183
      %p190 = scmp.eq.s32.totalorder %s27, 1
      %p191 = por %p189, %p190
      %p192 = scmp.ne.s32.totalorder %s183, %s184
      %p193 = scmp.eq.s32.totalorder %s27, 0
      %p194 = por %p192, %p193
      %p195 = scmp.ne.s32.totalorder %s183, %s184
      %p196 = scmp.eq.s32.totalorder %s28, 1
      %p197 = por %p195, %p196
      %p199 = scmp.ne.s32.totalorder %s184, %s198
      %p200 = scmp.eq.s32.totalorder %s28, 0
      %p201 = por %p199, %p200
      %s203 = sadd.s32 %s202, 1
      %p206 = scmp.eq.s32.totalorder %s22, 1
      %p207 = scmp.ne.s32.totalorder %s202, %s204
      %p208 = scmp.eq.s32.totalorder %s22, 0
      %p209 = por %p207, %p208
      %p210 = scmp.ne.s32.totalorder %s202, %s204
      %p211 = scmp.eq.s32.totalorder %s27, 1
      %p212 = por %p210, %p211
      %p213 = scmp.ne.s32.totalorder %s204, %s205
      %p214 = scmp.eq.s32.totalorder %s27, 0
      %p215 = por %p213, %p214
      %p216 = scmp.ne.s32.totalorder %s204, %s205
      %p217 = scmp.eq.s32.totalorder %s28, 1
      %p218 = por %p216, %p217
      %p220 = scmp.ne.s32.totalorder %s205, %s219
      %p221 = scmp.eq.s32.totalorder %s28, 0
      %p222 = por %p220, %p221
      %s224 = sadd.s32 %s223, 1
      %p227 = scmp.eq.s32.totalorder %s22, 1
      %p228 = scmp.ne.s32.totalorder %s223, %s225
      %p229 = scmp.eq.s32.totalorder %s22, 0
      %p230 = por %p228, %p229
      %p231 = scmp.ne.s32.totalorder %s223, %s225
      %p232 = scmp.eq.s32.totalorder %s27, 1
      %p233 = por %p231, %p232
      %p234 = scmp.ne.s32.totalorder %s225, %s226
      %p235 = scmp.eq.s32.totalorder %s27, 0
      %p236 = por %p234, %p235
      %p237 = scmp.ne.s32.totalorder %s225, %s226
      %p238 = scmp.eq.s32.totalorder %s28, 1
      %p239 = por %p237, %p238
      %p241 = scmp.ne.s32.totalorder %s226, %s240
      %p242 = scmp.eq.s32.totalorder %s28, 0
      %p243 = por %p241, %p242
      %s245 = sadd.s32 %s244, 1
      %p248 = scmp.eq.s32.totalorder %s22, 1
      %p249 = scmp.ne.s32.totalorder %s244, %s246
      %p250 = scmp.eq.s32.totalorder %s22, 0
      %p251 = por %p249, %p250
      %p252 = scmp.ne.s32.totalorder %s244, %s246
      %p253 = scmp.eq.s32.totalorder %s27, 1
      %p254 = por %p252, %p253
      %p255 = scmp.ne.s32.totalorder %s246, %s247
      %p256 = scmp.eq.s32.totalorder %s27, 0
      %p257 = por %p255, %p256
      %p258 = scmp.ne.s32.totalorder %s246, %s247
      %p259 = scmp.eq.s32.totalorder %s28, 1
      %p260 = por %p258, %p259
      %p262 = scmp.ne.s32.totalorder %s247, %s261
      %p263 = scmp.eq.s32.totalorder %s28, 0
      %p264 = por %p262, %p263
      %s266 = sadd.s32 %s265, 1
      %p269 = scmp.eq.s32.totalorder %s22, 1
      %p270 = scmp.ne.s32.totalorder %s265, %s267
      %p271 = scmp.eq.s32.totalorder %s22, 0
      %p272 = por %p270, %p271
      %p273 = scmp.ne.s32.totalorder %s265, %s267
      %p274 = scmp.eq.s32.totalorder %s27, 1
      %p275 = por %p273, %p274
      %p276 = scmp.ne.s32.totalorder %s267, %s268
      %p277 = scmp.eq.s32.totalorder %s27, 0
      %p278 = por %p276, %p277
      %p279 = scmp.ne.s32.totalorder %s267, %s268
      %p280 = scmp.eq.s32.totalorder %s28, 1
      %p281 = por %p279, %p280
      %p283 = scmp.ne.s32.totalorder %s268, %s282
      %p284 = scmp.eq.s32.totalorder %s28, 0
      %p285 = por %p283, %p284
      %s287 = sadd.s32 %s286, 1
      %p290 = scmp.eq.s32.totalorder %s22, 1
      %p291 = scmp.ne.s32.totalorder %s286, %s288
      %p292 = scmp.eq.s32.totalorder %s22, 0
      %p293 = por %p291, %p292
      %p294 = scmp.ne.s32.totalorder %s286, %s288
      %p295 = scmp.eq.s32.totalorder %s27, 1
      %p296 = por %p294, %p295
      %p297 = scmp.ne.s32.totalorder %s288, %s289
      %p298 = scmp.eq.s32.totalorder %s27, 0
      %p299 = por %p297, %p298
      %p300 = scmp.ne.s32.totalorder %s288, %s289
      %p301 = scmp.eq.s32.totalorder %s28, 1
      %p302 = por %p300, %p301
      %p304 = scmp.ne.s32.totalorder %s289, %s303
      %p305 = scmp.eq.s32.totalorder %s28, 0
      %p306 = por %p304, %p305
      %s308 = sadd.s32 %s307, 1
      %p311 = scmp.eq.s32.totalorder %s22, 1
      %p312 = scmp.ne.s32.totalorder %s307, %s309
      %p313 = scmp.eq.s32.totalorder %s22, 0
      %p314 = por %p312, %p313
      %p315 = scmp.ne.s32.totalorder %s307, %s309
      %p316 = scmp.eq.s32.totalorder %s27, 1
      %p317 = por %p315, %p316
      %p318 = scmp.ne.s32.totalorder %s309, %s310
      %p319 = scmp.eq.s32.totalorder %s27, 0
      %p320 = por %p318, %p319
      %p321 = scmp.ne.s32.totalorder %s309, %s310
      %p322 = scmp.eq.s32.totalorder %s28, 1
      %p323 = por %p321, %p322
      %p325 = scmp.ne.s32.totalorder %s310, %s324
      %p326 = scmp.eq.s32.totalorder %s28, 0
      %p327 = por %p325, %p326
      %s328 = ssub.s32 %s22, %s29
      %p329 = scmp.eq.s32.totalorder %s328, 0
      %s331 = sadd.s32 %s330, 1
      %s332 = scalar_select %p329, %s330, %s331
      %p335 = pneg %p329
      %p336 = scmp.eq.s32.totalorder %s22, 1
      %p337 = por %p335, %p336
      %p338 = scmp.ne.s32.totalorder %s330, %s333
      %p339 = scmp.eq.s32.totalorder %s22, 0
      %p340 = por %p338, %p339
      %p341 = scmp.ne.s32.totalorder %s330, %s333
      %p342 = scmp.eq.s32.totalorder %s27, 1
      %p343 = por %p341, %p342
      %p344 = scmp.ne.s32.totalorder %s333, %s334
      %p345 = scmp.eq.s32.totalorder %s27, 0
      %p346 = por %p344, %p345
      %p347 = scmp.ne.s32.totalorder %s333, %s334
      %p348 = scmp.eq.s32.totalorder %s28, 1
      %p349 = por %p347, %p348
      %p351 = scmp.ne.s32.totalorder %s334, %s350
      %p352 = scmp.eq.s32.totalorder %s28, 0
      %p353 = por %p351, %p352
      %p354 = scmp.le.s32.totalorder 1, %s22
      %p355 = scmp.lt.s32.totalorder %s22, 3
      %p356 = pnand %p354, %p355
      %p357 = pneg %p356
      // Predicated region
      $region9: #{osblock_forward.9} parent=5 // pred_check
        _
      $region10: #{osblock_forward.9} parent=5 // pred_check_branch
        %359 = sbr.rel (%p356) target = $region12
      $region11: #{osblock_forward.9} parent=5 // pred_region
        %s360 = ssub.s32 %s22, 1
        // Predicated region
        $region13: #{osblock_forward.9} parent=11 // pred_check
          %p361 = pneg %p173
        $region14: #{osblock_forward.9} parent=11 // pred_check_branch
          %363 = sbr.rel (%p361) target = $region16
        $region15: #{osblock_forward.9} parent=11 // pred_region
          _
        $region16: #{osblock_forward.9} parent=11 // pred_fallthru
          _
        // Predicated region
        $region17: #{osblock_forward.9} parent=11 // pred_check
          %p364 = pneg %p194
        $region18: #{osblock_forward.9} parent=11 // pred_check_branch
          %366 = sbr.rel (%p364) target = $region20
        $region19: #{osblock_forward.9} parent=11 // pred_region
          _
        $region20: #{osblock_forward.9} parent=11 // pred_fallthru
          _
        // Predicated region
        $region21: #{osblock_forward.9} parent=11 // pred_check
          %p367 = pneg %p215
        $region22: #{osblock_forward.9} parent=11 // pred_check_branch
          %369 = sbr.rel (%p367) target = $region24
        $region23: #{osblock_forward.9} parent=11 // pred_region
          _
        $region24: #{osblock_forward.9} parent=11 // pred_fallthru
          _
        // Predicated region
        $region25: #{osblock_forward.9} parent=11 // pred_check
          %p370 = pneg %p236
        $region26: #{osblock_forward.9} parent=11 // pred_check_branch
          %372 = sbr.rel (%p370) target = $region28
        $region27: #{osblock_forward.9} parent=11 // pred_region
          _
        $region28: #{osblock_forward.9} parent=11 // pred_fallthru
          _
        // Predicated region
        $region29: #{osblock_forward.9} parent=11 // pred_check
          %p373 = pneg %p257
        $region30: #{osblock_forward.9} parent=11 // pred_check_branch
          %375 = sbr.rel (%p373) target = $region32
        $region31: #{osblock_forward.9} parent=11 // pred_region
          _
        $region32: #{osblock_forward.9} parent=11 // pred_fallthru
          _
        // Predicated region
        $region33: #{osblock_forward.9} parent=11 // pred_check
          %p376 = pneg %p278
        $region34: #{osblock_forward.9} parent=11 // pred_check_branch
          %378 = sbr.rel (%p376) target = $region36
        $region35: #{osblock_forward.9} parent=11 // pred_region
          _
        $region36: #{osblock_forward.9} parent=11 // pred_fallthru
          _
        // Predicated region
        $region37: #{osblock_forward.9} parent=11 // pred_check
          %p379 = pneg %p299
        $region38: #{osblock_forward.9} parent=11 // pred_check_branch
          %381 = sbr.rel (%p379) target = $region40
        $region39: #{osblock_forward.9} parent=11 // pred_region
          _
        $region40: #{osblock_forward.9} parent=11 // pred_fallthru
          _
        // Predicated region
        $region41: #{osblock_forward.9} parent=11 // pred_check
          %p382 = pneg %p320
        $region42: #{osblock_forward.9} parent=11 // pred_check_branch
          %384 = sbr.rel (%p382) target = $region44
        $region43: #{osblock_forward.9} parent=11 // pred_region
          _
        $region44: #{osblock_forward.9} parent=11 // pred_fallthru
          _
      $region12: #{osblock_forward.9} parent=5 // pred_fallthru
        _
      %p385 = scmp.lt.s32.totalorder %s22, 2
      // Predicated region
      $region45: #{osblock_forward.9} parent=5 // pred_check
        %p386 = pneg %p385
      $region46: #{osblock_forward.9} parent=5 // pred_check_branch
        %388 = sbr.rel (%p386) target = $region48
      $region47: #{osblock_forward.9} parent=5 // pred_region
        // Predicated region
        $region49: #{osblock_forward.9} parent=47 // pred_check
          %p389 = pneg %p42
        $region50: #{osblock_forward.9} parent=47 // pred_check_branch
          %391 = sbr.rel (%p389) target = $region52
        $region51: #{osblock_forward.9} parent=47 // pred_region
          %p392 = scmp.lt.s32.totalorder %s22, 1
          %s393 = scalar_select %p392, %s22, 1
          %s394 = smul.addr %s393, 8
          %s395 = smul.addr %s394, 8
          %s396 = scalar_lea.vmem %s0, %s395
        $region52: #{osblock_forward.9} parent=47 // pred_fallthru
          _
        // Predicated region
        $region53: #{osblock_forward.9} parent=47 // pred_check
          %p397 = pneg %p68
        $region54: #{osblock_forward.9} parent=47 // pred_check_branch
          %399 = sbr.rel (%p397) target = $region56
        $region55: #{osblock_forward.9} parent=47 // pred_region
          %p400 = scmp.lt.s32.totalorder %s22, 1
          %s401 = scalar_select %p400, %s22, 1
          %s402 = smul.addr %s401, 8
          %s403 = smul.addr %s402, 8
          %s404 = scalar_lea.vmem %s1, %s403
        $region56: #{osblock_forward.9} parent=47 // pred_fallthru
          _
        // Predicated region
        $region57: #{osblock_forward.9} parent=47 // pred_check
          %p405 = pneg %p94
        $region58: #{osblock_forward.9} parent=47 // pred_check_branch
          %407 = sbr.rel (%p405) target = $region60
        $region59: #{osblock_forward.9} parent=47 // pred_region
          %p408 = scmp.lt.s32.totalorder %s22, 1
          %s409 = scalar_select %p408, %s22, 1
          %s410 = smul.addr %s409, 8
          %s411 = smul.addr %s410, 8
          %s412 = scalar_lea.vmem %s2, %s411
        $region60: #{osblock_forward.9} parent=47 // pred_fallthru
          _
        // Predicated region
        $region61: #{osblock_forward.9} parent=47 // pred_check
          %p413 = pneg %p120
        $region62: #{osblock_forward.9} parent=47 // pred_check_branch
          %415 = sbr.rel (%p413) target = $region64
        $region63: #{osblock_forward.9} parent=47 // pred_region
          %p416 = scmp.lt.s32.totalorder %s22, 1
          %s417 = scalar_select %p416, %s22, 1
          %s418 = smul.addr %s417, 8
          %s419 = smul.addr %s418, 8
          %s420 = scalar_lea.vmem %s3, %s419
        $region64: #{osblock_forward.9} parent=47 // pred_fallthru
          _
        // Predicated region
        $region65: #{osblock_forward.9} parent=47 // pred_check
          %p421 = pneg %p146
        $region66: #{osblock_forward.9} parent=47 // pred_check_branch
          %423 = sbr.rel (%p421) target = $region68
        $region67: #{osblock_forward.9} parent=47 // pred_region
          %p424 = scmp.lt.s32.totalorder %s22, 1
          %s425 = scalar_select %p424, %s22, 1
          %s426 = smul.addr %s425, 8
          %s427 = smul.addr %s426, 8
          %s428 = scalar_lea.vmem %s4, %s427
        $region68: #{osblock_forward.9} parent=47 // pred_fallthru
          _
      $region48: #{osblock_forward.9} parent=5 // pred_fallthru
        _
      %p429 = scmp.le.s32.totalorder 1, %s22
      %p430 = scmp.lt.s32.totalorder %s22, 3
      %p431 = pnand %p429, %p430
      %p432 = pneg %p431
      // Predicated region
      $region69: #{osblock_forward.9} parent=5 // pred_check
        _
      $region70: #{osblock_forward.9} parent=5 // pred_check_branch
        %434 = sbr.rel (%p431) target = $region72
      $region71: #{osblock_forward.9} parent=5 // pred_region
        %s435 = ssub.s32 %s22, 1
        %p436 = scmp.lt.s32.totalorder %s27, 1
        %s437 = scalar_select %p436, %s27, 1
        %s438 = smul.addr %s437, 8
        %s439 = smul.addr %s438, 8
        %s440 = scalar_lea.vmem %s0, %s439
        %p441 = pneg %p48
        %p442 = pneg %p45
        %p443 = scmp.lt.s32.totalorder %s27, 1
        %s444 = scalar_select %p443, %s27, 1
        %s445 = smul.addr %s444, 8
        %s446 = smul.addr %s445, 8
        %s447 = scalar_lea.vmem %s1, %s446
        %p448 = pneg %p74
        %p449 = pneg %p71
        %p450 = scmp.lt.s32.totalorder %s27, 1
        %s451 = scalar_select %p450, %s27, 1
        %s452 = smul.addr %s451, 8
        %s453 = smul.addr %s452, 8
        %s454 = scalar_lea.vmem %s2, %s453
        %p455 = pneg %p100
        %p456 = pneg %p97
        %p457 = scmp.lt.s32.totalorder %s27, 1
        %s458 = scalar_select %p457, %s27, 1
        %s459 = smul.addr %s458, 8
        %s460 = smul.addr %s459, 8
        %s461 = scalar_lea.vmem %s3, %s460
        %p462 = pneg %p126
        %p463 = pneg %p123
        %p464 = scmp.lt.s32.totalorder %s27, 1
        %s465 = scalar_select %p464, %s27, 1
        %s466 = smul.addr %s465, 8
        %s467 = smul.addr %s466, 8
        %s468 = scalar_lea.vmem %s4, %s467
        %p469 = pneg %p152
        %p470 = pneg %p149
        %p471 = pneg %p173
        %p472 = pneg %p170
        %p473 = pneg %p194
        %p474 = pneg %p191
        %p475 = pneg %p215
        %p476 = pneg %p212
        %p477 = pneg %p236
        %p478 = pneg %p233
        %p479 = pneg %p257
        %p480 = pneg %p254
        %p481 = pneg %p278
        %p482 = pneg %p275
        %p483 = pneg %p299
        %p484 = pneg %p296
        %p485 = pneg %p320
        %p486 = pneg %p317
        %p487 = pneg %p346
        %p488 = pneg %p343
        %s489 = sand.u32 %s333, 1
        %s490 = scalar_lea.sflag [#allocation3], %s489
        %s491 = sand.u32 %s333, 1
        %s492 = smul.addr %s491, 64
        %s493 = scalar_lea.vmem [#allocation2], %s492
        %p494 = scmp.lt.s32.totalorder %s27, 1
        %s495 = scalar_select %p494, %s27, 1
        %s496 = smul.addr %s495, 8
        %s497 = smul.addr %s496, 8
        %s498 = scalar_lea.vmem %s0, %s497
        %p499 = scmp.lt.s32.totalorder %s27, 1
        %s500 = scalar_select %p499, %s27, 1
        %s501 = smul.addr %s500, 8
        %s502 = smul.addr %s501, 8
        %s503 = scalar_lea.vmem %s1, %s502
        %p504 = scmp.lt.s32.totalorder %s27, 1
        %s505 = scalar_select %p504, %s27, 1
        %s506 = smul.addr %s505, 8
        %s507 = smul.addr %s506, 8
        %s508 = scalar_lea.vmem %s2, %s507
        %p509 = scmp.lt.s32.totalorder %s27, 1
        %s510 = scalar_select %p509, %s27, 1
        %s511 = smul.addr %s510, 8
        %s512 = smul.addr %s511, 8
        %s513 = scalar_lea.vmem %s3, %s512
        %p514 = scmp.lt.s32.totalorder %s27, 1
        %s515 = scalar_select %p514, %s27, 1
        %s516 = smul.addr %s515, 8
        %s517 = smul.addr %s516, 8
        %s518 = scalar_lea.vmem %s4, %s517
        %v519 = vld [vmem:[%s5] sm:$0xff]
        %v520 = vld [vmem:[%s5 + $0x8] sm:$0xff]
        %v521 = vld [vmem:[%s5 + $0x10] sm:$0xff]
        %v522 = vld [vmem:[%s5 + $0x18] sm:$0xff]
        %v523 = vld [vmem:[%s6] sm:$0x1]
        %v524 = vld [vmem:[%s7] sm:$0xff]
        %v525 = vld [vmem:[%s8] sm:$0x1]
        %v526 = vld [vmem:[%s503] sm:$0xff]
        %v527 = vld [vmem:[%s503 + $0x8] sm:$0xff]
        %v528 = vld [vmem:[%s503 + $0x10] sm:$0xff]
        %v529 = vld [vmem:[%s503 + $0x18] sm:$0xff]
        %v530 = vld [vmem:[%s503 + $0x20] sm:$0xff]
        %v531 = vld [vmem:[%s503 + $0x28] sm:$0xff]
        %v532 = vld [vmem:[%s503 + $0x30] sm:$0xff]
        %v533 = vld [vmem:[%s503 + $0x38] sm:$0xff]
        %vm534 = vcmask 261120
        %v535 = vsel %vm534, %v526, 0.0
        %v536 = vsel %vm534, %v527, 0.0
        %v537 = vadd.f32 %v535, %v536
        %v538 = vsel %vm534, %v528, 0.0
        %v539 = vadd.f32 %v537, %v538
        %v540 = vsel %vm534, %v529, 0.0
        %v541 = vadd.f32 %v539, %v540
        %v542 = vsel %vm534, %v530, 0.0
        %v543 = vadd.f32 %v541, %v542
        %v544 = vsel %vm534, %v531, 0.0
        %v545 = vadd.f32 %v543, %v544
        %v546 = vsel %vm534, %v532, 0.0
        %v547 = vadd.f32 %v545, %v546
        %v548 = vsel %vm534, %v533, 0.0
        %v549 = vadd.f32 %v547, %v548
        %v550 = vsel %vm534, %v549, 0.0
        %v551 = vrot.slane %v550, 4
        %v552 = vadd.f32 %v550, %v551
        %v553 = vrot.slane %v552, 2
        %v554 = vadd.f32 %v552, %v553
        %v555 = vrot.slane %v554, 1
        %v556 = vadd.f32 %v554, %v555
        %v557 = vmul.f32 %v556, 0.015625
        %v559 = vsel %vm534, %v557, 0
        %561 = vmatprep.subr.mxu0 0.0
        %562 = vmatpush1.msra.mxu0 0.0
        %563 = vmatprep.subr.mxu0 0.0
        %564 = vmatpush1.msra.mxu0 0.0
        %565 = vmatprep.subr.mxu0 0.0
        %566 = vmatpush1.msra.mxu0 0.0
        %567 = vmatprep.subr.mxu0 0.0
        %568 = vmatpush1.msra.mxu0 0.0
        %569 = vmatprep.subr.mxu0 0.0
        %570 = vmatpush1.msra.mxu0 0.0
        %571 = vmatprep.subr.mxu0 0.0
        %572 = vmatpush1.msra.mxu0 0.0
        %573 = vmatprep.subr.mxu0 0.0
        %574 = vmatpush1.msra.mxu0 0.0
        %575 = vmatprep.subr.mxu0 0.0
        %576 = vmatpush1.msra.mxu0 0.0
        %577 = vmatprep.subr.mxu0 0.0
        %578 = vmatpush1.msra.mxu0 0.0
        %579 = vmatprep.subr.mxu0 0.0
        %580 = vmatpush1.msra.mxu0 0.0
        %581 = vmatprep.subr.mxu0 0.0
        %582 = vmatpush1.msra.mxu0 0.0
        %583 = vmatprep.subr.mxu0 0.0
        %584 = vmatpush1.msra.mxu0 0.0
        %585 = vmatprep.subr.mxu0 0.0
        %586 = vmatpush1.msra.mxu0 %v522
        %587 = vmatprep.subr.mxu0 0.0
        %588 = vmatpush1.msra.mxu0 %v521
        %589 = vmatprep.subr.mxu0 0.0
        %590 = vmatpush1.msra.mxu0 %v520
        %591 = vmatprep.subr.mxu0 0.0
        %592 = vmatpush1.msra.mxu0 %v519
        %593 = vmatprep.subr.mxu0 0.0
        %594 = vmatpush2.msra.mxu0 0.0
        %595 = vmatprep.subr.mxu0 0.0
        %596 = vmatpush2.msra.mxu0 0.0
        %597 = vmatprep.subr.mxu0 0.0
        %598 = vmatpush2.msra.mxu0 0.0
        %599 = vmatprep.subr.mxu0 0.0
        %600 = vmatpush2.msra.mxu0 0.0
        %601 = vmatprep.subr.mxu0 0.0
        %602 = vmatpush2.msra.mxu0 0.0
        %603 = vmatprep.subr.mxu0 0.0
        %604 = vmatpush2.msra.mxu0 0.0
        %605 = vmatprep.subr.mxu0 0.0
        %606 = vmatpush2.msra.mxu0 0.0
        %607 = vmatprep.subr.mxu0 0.0
        %608 = vmatpush2.msra.mxu0 0.0
        %609 = vmatprep.subr.mxu0 0.0
        %610 = vmatpush2.msra.mxu0 0.0
        %611 = vmatprep.subr.mxu0 0.0
        %612 = vmatpush2.msra.mxu0 0.0
        %613 = vmatprep.subr.mxu0 0.0
        %614 = vmatpush2.msra.mxu0 0.0
        %615 = vmatprep.subr.mxu0 0.0
        %616 = vmatpush2.msra.mxu0 0.0
        %617 = vmatprep.subr.mxu0 0.0
        %618 = vmatpush2.msra.mxu0 0.0
        %619 = vmatprep.subr.mxu0 0.0
        %620 = vmatpush2.msra.mxu0 0.0
        %621 = vmatprep.subr.mxu0 0.0
        %622 = vmatpush2.msra.mxu0 0.0
        %623 = vmatprep.subr.mxu0 0.0
        %624 = vmatpush2.msra.mxu0 0.0
        %625 = vmatprep.mubr.f32.mxu0 0.0
        %626 = vmatmul.mubr.f32.gmra.mxu0 %v559
        %v627 = vpop.f32.mrf.mxu0
        %v628 = vadd.f32 %v523, %v627
        %v629 = vpop.f32.mrf.mxu0
        %630 = vdwg.mxu0
        %v631 = vmax.f32 %v628, 0.0
        %vm632 = vcmask 64512
        %v634 = vsel %vm632, %v631, 0
        %636 = vmatprep.subr.mxu0 0.0
        %637 = vmatpush1.msra.mxu0 0.0
        %638 = vmatprep.subr.mxu0 0.0
        %639 = vmatpush1.msra.mxu0 0.0
        %640 = vmatprep.subr.mxu0 0.0
        %641 = vmatpush1.msra.mxu0 0.0
        %642 = vmatprep.subr.mxu0 0.0
        %643 = vmatpush1.msra.mxu0 0.0
        %644 = vmatprep.subr.mxu0 0.0
        %645 = vmatpush1.msra.mxu0 0.0
        %646 = vmatprep.subr.mxu0 0.0
        %647 = vmatpush1.msra.mxu0 0.0
        %648 = vmatprep.subr.mxu0 0.0
        %649 = vmatpush1.msra.mxu0 0.0
        %650 = vmatprep.subr.mxu0 0.0
        %651 = vmatpush1.msra.mxu0 0.0
        %652 = vmatprep.subr.mxu0 0.0
        %653 = vmatpush1.msra.mxu0 0.0
        %654 = vmatprep.subr.mxu0 0.0
        %655 = vmatpush1.msra.mxu0 0.0
        %656 = vmatprep.subr.mxu0 0.0
        %657 = vmatpush1.msra.mxu0 0.0
        %658 = vmatprep.subr.mxu0 0.0
        %659 = vmatpush1.msra.mxu0 0.0
        %660 = vmatprep.subr.mxu0 0.0
        %661 = vmatpush1.msra.mxu0 0.0
        %662 = vmatprep.subr.mxu0 0.0
        %663 = vmatpush1.msra.mxu0 0.0
        %664 = vmatprep.subr.mxu0 0.0
        %665 = vmatpush1.msra.mxu0 0.0
        %666 = vmatprep.subr.mxu0 0.0
        %667 = vmatpush1.msra.mxu0 %v524
        %668 = vmatprep.subr.mxu0 0.0
        %669 = vmatpush2.msra.mxu0 0.0
        %670 = vmatprep.subr.mxu0 0.0
        %671 = vmatpush2.msra.mxu0 0.0
        %672 = vmatprep.subr.mxu0 0.0
        %673 = vmatpush2.msra.mxu0 0.0
        %674 = vmatprep.subr.mxu0 0.0
        %675 = vmatpush2.msra.mxu0 0.0
        %676 = vmatprep.subr.mxu0 0.0
        %677 = vmatpush2.msra.mxu0 0.0
        %678 = vmatprep.subr.mxu0 0.0
        %679 = vmatpush2.msra.mxu0 0.0
        %680 = vmatprep.subr.mxu0 0.0
        %681 = vmatpush2.msra.mxu0 0.0
        %682 = vmatprep.subr.mxu0 0.0
        %683 = vmatpush2.msra.mxu0 0.0
        %684 = vmatprep.subr.mxu0 0.0
        %685 = vmatpush2.msra.mxu0 0.0
        %686 = vmatprep.subr.mxu0 0.0
        %687 = vmatpush2.msra.mxu0 0.0
        %688 = vmatprep.subr.mxu0 0.0
        %689 = vmatpush2.msra.mxu0 0.0
        %690 = vmatprep.subr.mxu0 0.0
        %691 = vmatpush2.msra.mxu0 0.0
        %692 = vmatprep.subr.mxu0 0.0
        %693 = vmatpush2.msra.mxu0 0.0
        %694 = vmatprep.subr.mxu0 0.0
        %695 = vmatpush2.msra.mxu0 0.0
        %696 = vmatprep.subr.mxu0 0.0
        %697 = vmatpush2.msra.mxu0 0.0
        %698 = vmatprep.subr.mxu0 0.0
        %699 = vmatpush2.msra.mxu0 0.0
        %700 = vmatprep.mubr.f32.mxu0 0.0
        %701 = vmatmul.mubr.f32.gmra.mxu0 %v634
        %v702 = vpop.f32.mrf.mxu0
        %v703 = vadd.f32 %v525, %v702
        %v704 = vpop.f32.mrf.mxu0
        %705 = vdwg.mxu0
        %v706 = vxor.u32 %v703, 2147483648
        %v707 = vmul.f32 %v706, 1.442695
        %v708 = vpow.pop %v707
        %v709 = vadd.f32 %v708, 1.0
        %v710 = vrcp.pop %v709
        %v711 = vmul.f32 1.0, %v710
        %v712 = vlaneseq
        %v713 = vshrl.u32 %v712, 7
        %v714 = vsub.s32 0, %v713
        %v715 = vrot.slane %v711, %v714
        %v716 = vmul.f32 %v526, %v715
        %v717 = vmul.f32 %v527, %v715
        %v718 = vmul.f32 %v528, %v715
        %v719 = vmul.f32 %v529, %v715
        %v720 = vmul.f32 %v530, %v715
        %v721 = vmul.f32 %v531, %v715
        %v722 = vmul.f32 %v532, %v715
        %v723 = vmul.f32 %v533, %v715
        %v724 = vld [vmem:[%s508] sm:$0xff]
        %v725 = vld [vmem:[%s508 + $0x8] sm:$0xff]
        %v726 = vld [vmem:[%s508 + $0x10] sm:$0xff]
        %v727 = vld [vmem:[%s508 + $0x18] sm:$0xff]
        %v728 = vld [vmem:[%s508 + $0x20] sm:$0xff]
        %v729 = vld [vmem:[%s508 + $0x28] sm:$0xff]
        %v730 = vld [vmem:[%s508 + $0x30] sm:$0xff]
        %v731 = vld [vmem:[%s508 + $0x38] sm:$0xff]
        %v732 = vsel %vm534, %v724, 0.0
        %v733 = vsel %vm534, %v725, 0.0
        %v734 = vadd.f32 %v732, %v733
        %v735 = vsel %vm534, %v726, 0.0
        %v736 = vadd.f32 %v734, %v735
        %v737 = vsel %vm534, %v727, 0.0
        %v738 = vadd.f32 %v736, %v737
        %v739 = vsel %vm534, %v728, 0.0
        %v740 = vadd.f32 %v738, %v739
        %v741 = vsel %vm534, %v729, 0.0
        %v742 = vadd.f32 %v740, %v741
        %v743 = vsel %vm534, %v730, 0.0
        %v744 = vadd.f32 %v742, %v743
        %v745 = vsel %vm534, %v731, 0.0
        %v746 = vadd.f32 %v744, %v745
        %v747 = vsel %vm534, %v746, 0.0
        %v748 = vrot.slane %v747, 4
        %v749 = vadd.f32 %v747, %v748
        %v750 = vrot.slane %v749, 2
        %v751 = vadd.f32 %v749, %v750
        %v752 = vrot.slane %v751, 1
        %v753 = vadd.f32 %v751, %v752
        %v754 = vmul.f32 %v753, 0.015625
        %v756 = vsel %vm534, %v754, 0
        %758 = vmatprep.subr.mxu0 0.0
        %759 = vmatpush1.msra.mxu0 0.0
        %760 = vmatprep.subr.mxu0 0.0
        %761 = vmatpush1.msra.mxu0 0.0
        %762 = vmatprep.subr.mxu0 0.0
        %763 = vmatpush1.msra.mxu0 0.0
        %764 = vmatprep.subr.mxu0 0.0
        %765 = vmatpush1.msra.mxu0 0.0
        %766 = vmatprep.subr.mxu0 0.0
        %767 = vmatpush1.msra.mxu0 0.0
        %768 = vmatprep.subr.mxu0 0.0
        %769 = vmatpush1.msra.mxu0 0.0
        %770 = vmatprep.subr.mxu0 0.0
        %771 = vmatpush1.msra.mxu0 0.0
        %772 = vmatprep.subr.mxu0 0.0
        %773 = vmatpush1.msra.mxu0 0.0
        %774 = vmatprep.subr.mxu0 0.0
        %775 = vmatpush1.msra.mxu0 0.0
        %776 = vmatprep.subr.mxu0 0.0
        %777 = vmatpush1.msra.mxu0 0.0
        %778 = vmatprep.subr.mxu0 0.0
        %779 = vmatpush1.msra.mxu0 0.0
        %780 = vmatprep.subr.mxu0 0.0
        %781 = vmatpush1.msra.mxu0 0.0
        %782 = vmatprep.subr.mxu0 0.0
        %783 = vmatpush1.msra.mxu0 %v522
        %784 = vmatprep.subr.mxu0 0.0
        %785 = vmatpush1.msra.mxu0 %v521
        %786 = vmatprep.subr.mxu0 0.0
        %787 = vmatpush1.msra.mxu0 %v520
        %788 = vmatprep.subr.mxu0 0.0
        %789 = vmatpush1.msra.mxu0 %v519
        %790 = vmatprep.subr.mxu0 0.0
        %791 = vmatpush2.msra.mxu0 0.0
        %792 = vmatprep.subr.mxu0 0.0
        %793 = vmatpush2.msra.mxu0 0.0
        %794 = vmatprep.subr.mxu0 0.0
        %795 = vmatpush2.msra.mxu0 0.0
        %796 = vmatprep.subr.mxu0 0.0
        %797 = vmatpush2.msra.mxu0 0.0
        %798 = vmatprep.subr.mxu0 0.0
        %799 = vmatpush2.msra.mxu0 0.0
        %800 = vmatprep.subr.mxu0 0.0
        %801 = vmatpush2.msra.mxu0 0.0
        %802 = vmatprep.subr.mxu0 0.0
        %803 = vmatpush2.msra.mxu0 0.0
        %804 = vmatprep.subr.mxu0 0.0
        %805 = vmatpush2.msra.mxu0 0.0
        %806 = vmatprep.subr.mxu0 0.0
        %807 = vmatpush2.msra.mxu0 0.0
        %808 = vmatprep.subr.mxu0 0.0
        %809 = vmatpush2.msra.mxu0 0.0
        %810 = vmatprep.subr.mxu0 0.0
        %811 = vmatpush2.msra.mxu0 0.0
        %812 = vmatprep.subr.mxu0 0.0
        %813 = vmatpush2.msra.mxu0 0.0
        %814 = vmatprep.subr.mxu0 0.0
        %815 = vmatpush2.msra.mxu0 0.0
        %816 = vmatprep.subr.mxu0 0.0
        %817 = vmatpush2.msra.mxu0 0.0
        %818 = vmatprep.subr.mxu0 0.0
        %819 = vmatpush2.msra.mxu0 0.0
        %820 = vmatprep.subr.mxu0 0.0
        %821 = vmatpush2.msra.mxu0 0.0
        %822 = vmatprep.mubr.f32.mxu0 0.0
        %823 = vmatmul.mubr.f32.gmra.mxu0 %v756
        %v824 = vpop.f32.mrf.mxu0
        %v825 = vadd.f32 %v523, %v824
        %v826 = vpop.f32.mrf.mxu0
        %827 = vdwg.mxu0
        %v828 = vmax.f32 %v825, 0.0
        %v830 = vsel %vm632, %v828, 0
        %832 = vmatprep.subr.mxu0 0.0
        %833 = vmatpush1.msra.mxu0 0.0
        %834 = vmatprep.subr.mxu0 0.0
        %835 = vmatpush1.msra.mxu0 0.0
        %836 = vmatprep.subr.mxu0 0.0
        %837 = vmatpush1.msra.mxu0 0.0
        %838 = vmatprep.subr.mxu0 0.0
        %839 = vmatpush1.msra.mxu0 0.0
        %840 = vmatprep.subr.mxu0 0.0
        %841 = vmatpush1.msra.mxu0 0.0
        %842 = vmatprep.subr.mxu0 0.0
        %843 = vmatpush1.msra.mxu0 0.0
        %844 = vmatprep.subr.mxu0 0.0
        %845 = vmatpush1.msra.mxu0 0.0
        %846 = vmatprep.subr.mxu0 0.0
        %847 = vmatpush1.msra.mxu0 0.0
        %848 = vmatprep.subr.mxu0 0.0
        %849 = vmatpush1.msra.mxu0 0.0
        %850 = vmatprep.subr.mxu0 0.0
        %851 = vmatpush1.msra.mxu0 0.0
        %852 = vmatprep.subr.mxu0 0.0
        %853 = vmatpush1.msra.mxu0 0.0
        %854 = vmatprep.subr.mxu0 0.0
        %855 = vmatpush1.msra.mxu0 0.0
        %856 = vmatprep.subr.mxu0 0.0
        %857 = vmatpush1.msra.mxu0 0.0
        %858 = vmatprep.subr.mxu0 0.0
        %859 = vmatpush1.msra.mxu0 0.0
        %860 = vmatprep.subr.mxu0 0.0
        %861 = vmatpush1.msra.mxu0 0.0
        %862 = vmatprep.subr.mxu0 0.0
        %863 = vmatpush1.msra.mxu0 %v524
        %864 = vmatprep.subr.mxu0 0.0
        %865 = vmatpush2.msra.mxu0 0.0
        %866 = vmatprep.subr.mxu0 0.0
        %867 = vmatpush2.msra.mxu0 0.0
        %868 = vmatprep.subr.mxu0 0.0
        %869 = vmatpush2.msra.mxu0 0.0
        %870 = vmatprep.subr.mxu0 0.0
        %871 = vmatpush2.msra.mxu0 0.0
        %872 = vmatprep.subr.mxu0 0.0
        %873 = vmatpush2.msra.mxu0 0.0
        %874 = vmatprep.subr.mxu0 0.0
        %875 = vmatpush2.msra.mxu0 0.0
        %876 = vmatprep.subr.mxu0 0.0
        %877 = vmatpush2.msra.mxu0 0.0
        %878 = vmatprep.subr.mxu0 0.0
        %879 = vmatpush2.msra.mxu0 0.0
        %880 = vmatprep.subr.mxu0 0.0
        %881 = vmatpush2.msra.mxu0 0.0
        %882 = vmatprep.subr.mxu0 0.0
        %883 = vmatpush2.msra.mxu0 0.0
        %884 = vmatprep.subr.mxu0 0.0
        %885 = vmatpush2.msra.mxu0 0.0
        %886 = vmatprep.subr.mxu0 0.0
        %887 = vmatpush2.msra.mxu0 0.0
        %888 = vmatprep.subr.mxu0 0.0
        %889 = vmatpush2.msra.mxu0 0.0
        %890 = vmatprep.subr.mxu0 0.0
        %891 = vmatpush2.msra.mxu0 0.0
        %892 = vmatprep.subr.mxu0 0.0
        %893 = vmatpush2.msra.mxu0 0.0
        %894 = vmatprep.subr.mxu0 0.0
        %895 = vmatpush2.msra.mxu0 0.0
        %896 = vmatprep.mubr.f32.mxu0 0.0
        %897 = vmatmul.mubr.f32.gmra.mxu0 %v830
        %v898 = vpop.f32.mrf.mxu0
        %v899 = vadd.f32 %v525, %v898
        %v900 = vpop.f32.mrf.mxu0
        %901 = vdwg.mxu0
        %v902 = vxor.u32 %v899, 2147483648
        %v903 = vmul.f32 %v902, 1.442695
        %v904 = vpow.pop %v903
        %v905 = vadd.f32 %v904, 1.0
        %v906 = vrcp.pop %v905
        %v907 = vmul.f32 1.0, %v906
        %v908 = vlaneseq
        %v909 = vshrl.u32 %v908, 7
        %v910 = vsub.s32 0, %v909
        %v911 = vrot.slane %v907, %v910
        %v912 = vmul.f32 %v724, %v911
        %v913 = vmul.f32 %v725, %v911
        %v914 = vmul.f32 %v726, %v911
        %v915 = vmul.f32 %v727, %v911
        %v916 = vmul.f32 %v728, %v911
        %v917 = vmul.f32 %v729, %v911
        %v918 = vmul.f32 %v730, %v911
        %v919 = vmul.f32 %v731, %v911
        %v920 = vadd.f32 %v716, %v912
        %v921 = vadd.f32 %v717, %v913
        %v922 = vadd.f32 %v718, %v914
        %v923 = vadd.f32 %v719, %v915
        %v924 = vadd.f32 %v720, %v916
        %v925 = vadd.f32 %v721, %v917
        %v926 = vadd.f32 %v722, %v918
        %v927 = vadd.f32 %v723, %v919
        %v928 = vld [vmem:[%s513] sm:$0xff]
        %v929 = vld [vmem:[%s513 + $0x8] sm:$0xff]
        %v930 = vld [vmem:[%s513 + $0x10] sm:$0xff]
        %v931 = vld [vmem:[%s513 + $0x18] sm:$0xff]
        %v932 = vld [vmem:[%s513 + $0x20] sm:$0xff]
        %v933 = vld [vmem:[%s513 + $0x28] sm:$0xff]
        %v934 = vld [vmem:[%s513 + $0x30] sm:$0xff]
        %v935 = vld [vmem:[%s513 + $0x38] sm:$0xff]
        %v936 = vsel %vm534, %v928, 0.0
        %v937 = vsel %vm534, %v929, 0.0
        %v938 = vadd.f32 %v936, %v937
        %v939 = vsel %vm534, %v930, 0.0
        %v940 = vadd.f32 %v938, %v939
        %v941 = vsel %vm534, %v931, 0.0
        %v942 = vadd.f32 %v940, %v941
        %v943 = vsel %vm534, %v932, 0.0
        %v944 = vadd.f32 %v942, %v943
        %v945 = vsel %vm534, %v933, 0.0
        %v946 = vadd.f32 %v944, %v945
        %v947 = vsel %vm534, %v934, 0.0
        %v948 = vadd.f32 %v946, %v947
        %v949 = vsel %vm534, %v935, 0.0
        %v950 = vadd.f32 %v948, %v949
        %v951 = vsel %vm534, %v950, 0.0
        %v952 = vrot.slane %v951, 4
        %v953 = vadd.f32 %v951, %v952
        %v954 = vrot.slane %v953, 2
        %v955 = vadd.f32 %v953, %v954
        %v956 = vrot.slane %v955, 1
        %v957 = vadd.f32 %v955, %v956
        %v958 = vmul.f32 %v957, 0.015625
        %v960 = vsel %vm534, %v958, 0
        %962 = vmatprep.subr.mxu0 0.0
        %963 = vmatpush1.msra.mxu0 0.0
        %964 = vmatprep.subr.mxu0 0.0
        %965 = vmatpush1.msra.mxu0 0.0
        %966 = vmatprep.subr.mxu0 0.0
        %967 = vmatpush1.msra.mxu0 0.0
        %968 = vmatprep.subr.mxu0 0.0
        %969 = vmatpush1.msra.mxu0 0.0
        %970 = vmatprep.subr.mxu0 0.0
        %971 = vmatpush1.msra.mxu0 0.0
        %972 = vmatprep.subr.mxu0 0.0
        %973 = vmatpush1.msra.mxu0 0.0
        %974 = vmatprep.subr.mxu0 0.0
        %975 = vmatpush1.msra.mxu0 0.0
        %976 = vmatprep.subr.mxu0 0.0
        %977 = vmatpush1.msra.mxu0 0.0
        %978 = vmatprep.subr.mxu0 0.0
        %979 = vmatpush1.msra.mxu0 0.0
        %980 = vmatprep.subr.mxu0 0.0
        %981 = vmatpush1.msra.mxu0 0.0
        %982 = vmatprep.subr.mxu0 0.0
        %983 = vmatpush1.msra.mxu0 0.0
        %984 = vmatprep.subr.mxu0 0.0
        %985 = vmatpush1.msra.mxu0 0.0
        %986 = vmatprep.subr.mxu0 0.0
        %987 = vmatpush1.msra.mxu0 %v522
        %988 = vmatprep.subr.mxu0 0.0
        %989 = vmatpush1.msra.mxu0 %v521
        %990 = vmatprep.subr.mxu0 0.0
        %991 = vmatpush1.msra.mxu0 %v520
        %992 = vmatprep.subr.mxu0 0.0
        %993 = vmatpush1.msra.mxu0 %v519
        %994 = vmatprep.subr.mxu0 0.0
        %995 = vmatpush2.msra.mxu0 0.0
        %996 = vmatprep.subr.mxu0 0.0
        %997 = vmatpush2.msra.mxu0 0.0
        %998 = vmatprep.subr.mxu0 0.0
        %999 = vmatpush2.msra.mxu0 0.0
        %1000 = vmatprep.subr.mxu0 0.0
        %1001 = vmatpush2.msra.mxu0 0.0
        %1002 = vmatprep.subr.mxu0 0.0
        %1003 = vmatpush2.msra.mxu0 0.0
        %1004 = vmatprep.subr.mxu0 0.0
        %1005 = vmatpush2.msra.mxu0 0.0
        %1006 = vmatprep.subr.mxu0 0.0
        %1007 = vmatpush2.msra.mxu0 0.0
        %1008 = vmatprep.subr.mxu0 0.0
        %1009 = vmatpush2.msra.mxu0 0.0
        %1010 = vmatprep.subr.mxu0 0.0
        %1011 = vmatpush2.msra.mxu0 0.0
        %1012 = vmatprep.subr.mxu0 0.0
        %1013 = vmatpush2.msra.mxu0 0.0
        %1014 = vmatprep.subr.mxu0 0.0
        %1015 = vmatpush2.msra.mxu0 0.0
        %1016 = vmatprep.subr.mxu0 0.0
        %1017 = vmatpush2.msra.mxu0 0.0
        %1018 = vmatprep.subr.mxu0 0.0
        %1019 = vmatpush2.msra.mxu0 0.0
        %1020 = vmatprep.subr.mxu0 0.0
        %1021 = vmatpush2.msra.mxu0 0.0
        %1022 = vmatprep.subr.mxu0 0.0
        %1023 = vmatpush2.msra.mxu0 0.0
        %1024 = vmatprep.subr.mxu0 0.0
        %1025 = vmatpush2.msra.mxu0 0.0
        %1026 = vmatprep.mubr.f32.mxu0 0.0
        %1027 = vmatmul.mubr.f32.gmra.mxu0 %v960
        %v1028 = vpop.f32.mrf.mxu0
        %v1029 = vadd.f32 %v523, %v1028
        %v1030 = vpop.f32.mrf.mxu0
        %1031 = vdwg.mxu0
        %v1032 = vmax.f32 %v1029, 0.0
        %v1034 = vsel %vm632, %v1032, 0
        %1036 = vmatprep.subr.mxu0 0.0
        %1037 = vmatpush1.msra.mxu0 0.0
        %1038 = vmatprep.subr.mxu0 0.0
        %1039 = vmatpush1.msra.mxu0 0.0
        %1040 = vmatprep.subr.mxu0 0.0
        %1041 = vmatpush1.msra.mxu0 0.0
        %1042 = vmatprep.subr.mxu0 0.0
        %1043 = vmatpush1.msra.mxu0 0.0
        %1044 = vmatprep.subr.mxu0 0.0
        %1045 = vmatpush1.msra.mxu0 0.0
        %1046 = vmatprep.subr.mxu0 0.0
        %1047 = vmatpush1.msra.mxu0 0.0
        %1048 = vmatprep.subr.mxu0 0.0
        %1049 = vmatpush1.msra.mxu0 0.0
        %1050 = vmatprep.subr.mxu0 0.0
        %1051 = vmatpush1.msra.mxu0 0.0
        %1052 = vmatprep.subr.mxu0 0.0
        %1053 = vmatpush1.msra.mxu0 0.0
        %1054 = vmatprep.subr.mxu0 0.0
        %1055 = vmatpush1.msra.mxu0 0.0
        %1056 = vmatprep.subr.mxu0 0.0
        %1057 = vmatpush1.msra.mxu0 0.0
        %1058 = vmatprep.subr.mxu0 0.0
        %1059 = vmatpush1.msra.mxu0 0.0
        %1060 = vmatprep.subr.mxu0 0.0
        %1061 = vmatpush1.msra.mxu0 0.0
        %1062 = vmatprep.subr.mxu0 0.0
        %1063 = vmatpush1.msra.mxu0 0.0
        %1064 = vmatprep.subr.mxu0 0.0
        %1065 = vmatpush1.msra.mxu0 0.0
        %1066 = vmatprep.subr.mxu0 0.0
        %1067 = vmatpush1.msra.mxu0 %v524
        %1068 = vmatprep.subr.mxu0 0.0
        %1069 = vmatpush2.msra.mxu0 0.0
        %1070 = vmatprep.subr.mxu0 0.0
        %1071 = vmatpush2.msra.mxu0 0.0
        %1072 = vmatprep.subr.mxu0 0.0
        %1073 = vmatpush2.msra.mxu0 0.0
        %1074 = vmatprep.subr.mxu0 0.0
        %1075 = vmatpush2.msra.mxu0 0.0
        %1076 = vmatprep.subr.mxu0 0.0
        %1077 = vmatpush2.msra.mxu0 0.0
        %1078 = vmatprep.subr.mxu0 0.0
        %1079 = vmatpush2.msra.mxu0 0.0
        %1080 = vmatprep.subr.mxu0 0.0
        %1081 = vmatpush2.msra.mxu0 0.0
        %1082 = vmatprep.subr.mxu0 0.0
        %1083 = vmatpush2.msra.mxu0 0.0
        %1084 = vmatprep.subr.mxu0 0.0
        %1085 = vmatpush2.msra.mxu0 0.0
        %1086 = vmatprep.subr.mxu0 0.0
        %1087 = vmatpush2.msra.mxu0 0.0
        %1088 = vmatprep.subr.mxu0 0.0
        %1089 = vmatpush2.msra.mxu0 0.0
        %1090 = vmatprep.subr.mxu0 0.0
        %1091 = vmatpush2.msra.mxu0 0.0
        %1092 = vmatprep.subr.mxu0 0.0
        %1093 = vmatpush2.msra.mxu0 0.0
        %1094 = vmatprep.subr.mxu0 0.0
        %1095 = vmatpush2.msra.mxu0 0.0
        %1096 = vmatprep.subr.mxu0 0.0
        %1097 = vmatpush2.msra.mxu0 0.0
        %1098 = vmatprep.subr.mxu0 0.0
        %1099 = vmatpush2.msra.mxu0 0.0
        %1100 = vmatprep.mubr.f32.mxu0 0.0
        %1101 = vmatmul.mubr.f32.gmra.mxu0 %v1034
        %v1102 = vpop.f32.mrf.mxu0
        %v1103 = vadd.f32 %v525, %v1102
        %v1104 = vpop.f32.mrf.mxu0
        %1105 = vdwg.mxu0
        %v1106 = vxor.u32 %v1103, 2147483648
        %v1107 = vmul.f32 %v1106, 1.442695
        %v1108 = vpow.pop %v1107
        %v1109 = vadd.f32 %v1108, 1.0
        %v1110 = vrcp.pop %v1109
        %v1111 = vmul.f32 1.0, %v1110
        %v1112 = vlaneseq
        %v1113 = vshrl.u32 %v1112, 7
        %v1114 = vsub.s32 0, %v1113
        %v1115 = vrot.slane %v1111, %v1114
        %v1116 = vmul.f32 %v928, %v1115
        %v1117 = vmul.f32 %v929, %v1115
        %v1118 = vmul.f32 %v930, %v1115
        %v1119 = vmul.f32 %v931, %v1115
        %v1120 = vmul.f32 %v932, %v1115
        %v1121 = vmul.f32 %v933, %v1115
        %v1122 = vmul.f32 %v934, %v1115
        %v1123 = vmul.f32 %v935, %v1115
        %v1124 = vadd.f32 %v920, %v1116
        %v1125 = vadd.f32 %v921, %v1117
        %v1126 = vadd.f32 %v922, %v1118
        %v1127 = vadd.f32 %v923, %v1119
        %v1128 = vadd.f32 %v924, %v1120
        %v1129 = vadd.f32 %v925, %v1121
        %v1130 = vadd.f32 %v926, %v1122
        %v1131 = vadd.f32 %v927, %v1123
        %v1132 = vld [vmem:[%s518] sm:$0xff]
        %v1133 = vld [vmem:[%s518 + $0x8] sm:$0xff]
        %v1134 = vld [vmem:[%s518 + $0x10] sm:$0xff]
        %v1135 = vld [vmem:[%s518 + $0x18] sm:$0xff]
        %v1136 = vld [vmem:[%s518 + $0x20] sm:$0xff]
        %v1137 = vld [vmem:[%s518 + $0x28] sm:$0xff]
        %v1138 = vld [vmem:[%s518 + $0x30] sm:$0xff]
        %v1139 = vld [vmem:[%s518 + $0x38] sm:$0xff]
        %v1140 = vsel %vm534, %v1132, 0.0
        %v1141 = vsel %vm534, %v1133, 0.0
        %v1142 = vadd.f32 %v1140, %v1141
        %v1143 = vsel %vm534, %v1134, 0.0
        %v1144 = vadd.f32 %v1142, %v1143
        %v1145 = vsel %vm534, %v1135, 0.0
        %v1146 = vadd.f32 %v1144, %v1145
        %v1147 = vsel %vm534, %v1136, 0.0
        %v1148 = vadd.f32 %v1146, %v1147
        %v1149 = vsel %vm534, %v1137, 0.0
        %v1150 = vadd.f32 %v1148, %v1149
        %v1151 = vsel %vm534, %v1138, 0.0
        %v1152 = vadd.f32 %v1150, %v1151
        %v1153 = vsel %vm534, %v1139, 0.0
        %v1154 = vadd.f32 %v1152, %v1153
        %v1155 = vsel %vm534, %v1154, 0.0
        %v1156 = vrot.slane %v1155, 4
        %v1157 = vadd.f32 %v1155, %v1156
        %v1158 = vrot.slane %v1157, 2
        %v1159 = vadd.f32 %v1157, %v1158
        %v1160 = vrot.slane %v1159, 1
        %v1161 = vadd.f32 %v1159, %v1160
        %v1162 = vmul.f32 %v1161, 0.015625
        %v1164 = vsel %vm534, %v1162, 0
        %1166 = vmatprep.subr.mxu0 0.0
        %1167 = vmatpush1.msra.mxu0 0.0
        %1168 = vmatprep.subr.mxu0 0.0
        %1169 = vmatpush1.msra.mxu0 0.0
        %1170 = vmatprep.subr.mxu0 0.0
        %1171 = vmatpush1.msra.mxu0 0.0
        %1172 = vmatprep.subr.mxu0 0.0
        %1173 = vmatpush1.msra.mxu0 0.0
        %1174 = vmatprep.subr.mxu0 0.0
        %1175 = vmatpush1.msra.mxu0 0.0
        %1176 = vmatprep.subr.mxu0 0.0
        %1177 = vmatpush1.msra.mxu0 0.0
        %1178 = vmatprep.subr.mxu0 0.0
        %1179 = vmatpush1.msra.mxu0 0.0
        %1180 = vmatprep.subr.mxu0 0.0
        %1181 = vmatpush1.msra.mxu0 0.0
        %1182 = vmatprep.subr.mxu0 0.0
        %1183 = vmatpush1.msra.mxu0 0.0
        %1184 = vmatprep.subr.mxu0 0.0
        %1185 = vmatpush1.msra.mxu0 0.0
        %1186 = vmatprep.subr.mxu0 0.0
        %1187 = vmatpush1.msra.mxu0 0.0
        %1188 = vmatprep.subr.mxu0 0.0
        %1189 = vmatpush1.msra.mxu0 0.0
        %1190 = vmatprep.subr.mxu0 0.0
        %1191 = vmatpush1.msra.mxu0 %v522
        %1192 = vmatprep.subr.mxu0 0.0
        %1193 = vmatpush1.msra.mxu0 %v521
        %1194 = vmatprep.subr.mxu0 0.0
        %1195 = vmatpush1.msra.mxu0 %v520
        %1196 = vmatprep.subr.mxu0 0.0
        %1197 = vmatpush1.msra.mxu0 %v519
        %1198 = vmatprep.subr.mxu0 0.0
        %1199 = vmatpush2.msra.mxu0 0.0
        %1200 = vmatprep.subr.mxu0 0.0
        %1201 = vmatpush2.msra.mxu0 0.0
        %1202 = vmatprep.subr.mxu0 0.0
        %1203 = vmatpush2.msra.mxu0 0.0
        %1204 = vmatprep.subr.mxu0 0.0
        %1205 = vmatpush2.msra.mxu0 0.0
        %1206 = vmatprep.subr.mxu0 0.0
        %1207 = vmatpush2.msra.mxu0 0.0
        %1208 = vmatprep.subr.mxu0 0.0
        %1209 = vmatpush2.msra.mxu0 0.0
        %1210 = vmatprep.subr.mxu0 0.0
        %1211 = vmatpush2.msra.mxu0 0.0
        %1212 = vmatprep.subr.mxu0 0.0
        %1213 = vmatpush2.msra.mxu0 0.0
        %1214 = vmatprep.subr.mxu0 0.0
        %1215 = vmatpush2.msra.mxu0 0.0
        %1216 = vmatprep.subr.mxu0 0.0
        %1217 = vmatpush2.msra.mxu0 0.0
        %1218 = vmatprep.subr.mxu0 0.0
        %1219 = vmatpush2.msra.mxu0 0.0
        %1220 = vmatprep.subr.mxu0 0.0
        %1221 = vmatpush2.msra.mxu0 0.0
        %1222 = vmatprep.subr.mxu0 0.0
        %1223 = vmatpush2.msra.mxu0 0.0
        %1224 = vmatprep.subr.mxu0 0.0
        %1225 = vmatpush2.msra.mxu0 0.0
        %1226 = vmatprep.subr.mxu0 0.0
        %1227 = vmatpush2.msra.mxu0 0.0
        %1228 = vmatprep.subr.mxu0 0.0
        %1229 = vmatpush2.msra.mxu0 0.0
        %1230 = vmatprep.mubr.f32.mxu0 0.0
        %1231 = vmatmul.mubr.f32.gmra.mxu0 %v1164
        %v1232 = vpop.f32.mrf.mxu0
        %v1233 = vadd.f32 %v523, %v1232
        %v1234 = vpop.f32.mrf.mxu0
        %1235 = vdwg.mxu0
        %v1236 = vmax.f32 %v1233, 0.0
        %v1238 = vsel %vm632, %v1236, 0
        %1240 = vmatprep.subr.mxu0 0.0
        %1241 = vmatpush1.msra.mxu0 0.0
        %1242 = vmatprep.subr.mxu0 0.0
        %1243 = vmatpush1.msra.mxu0 0.0
        %1244 = vmatprep.subr.mxu0 0.0
        %1245 = vmatpush1.msra.mxu0 0.0
        %1246 = vmatprep.subr.mxu0 0.0
        %1247 = vmatpush1.msra.mxu0 0.0
        %1248 = vmatprep.subr.mxu0 0.0
        %1249 = vmatpush1.msra.mxu0 0.0
        %1250 = vmatprep.subr.mxu0 0.0
        %1251 = vmatpush1.msra.mxu0 0.0
        %1252 = vmatprep.subr.mxu0 0.0
        %1253 = vmatpush1.msra.mxu0 0.0
        %1254 = vmatprep.subr.mxu0 0.0
        %1255 = vmatpush1.msra.mxu0 0.0
        %1256 = vmatprep.subr.mxu0 0.0
        %1257 = vmatpush1.msra.mxu0 0.0
        %1258 = vmatprep.subr.mxu0 0.0
        %1259 = vmatpush1.msra.mxu0 0.0
        %1260 = vmatprep.subr.mxu0 0.0
        %1261 = vmatpush1.msra.mxu0 0.0
        %1262 = vmatprep.subr.mxu0 0.0
        %1263 = vmatpush1.msra.mxu0 0.0
        %1264 = vmatprep.subr.mxu0 0.0
        %1265 = vmatpush1.msra.mxu0 0.0
        %1266 = vmatprep.subr.mxu0 0.0
        %1267 = vmatpush1.msra.mxu0 0.0
        %1268 = vmatprep.subr.mxu0 0.0
        %1269 = vmatpush1.msra.mxu0 0.0
        %1270 = vmatprep.subr.mxu0 0.0
        %1271 = vmatpush1.msra.mxu0 %v524
        %1272 = vmatprep.subr.mxu0 0.0
        %1273 = vmatpush2.msra.mxu0 0.0
        %1274 = vmatprep.subr.mxu0 0.0
        %1275 = vmatpush2.msra.mxu0 0.0
        %1276 = vmatprep.subr.mxu0 0.0
        %1277 = vmatpush2.msra.mxu0 0.0
        %1278 = vmatprep.subr.mxu0 0.0
        %1279 = vmatpush2.msra.mxu0 0.0
        %1280 = vmatprep.subr.mxu0 0.0
        %1281 = vmatpush2.msra.mxu0 0.0
        %1282 = vmatprep.subr.mxu0 0.0
        %1283 = vmatpush2.msra.mxu0 0.0
        %1284 = vmatprep.subr.mxu0 0.0
        %1285 = vmatpush2.msra.mxu0 0.0
        %1286 = vmatprep.subr.mxu0 0.0
        %1287 = vmatpush2.msra.mxu0 0.0
        %1288 = vmatprep.subr.mxu0 0.0
        %1289 = vmatpush2.msra.mxu0 0.0
        %1290 = vmatprep.subr.mxu0 0.0
        %1291 = vmatpush2.msra.mxu0 0.0
        %1292 = vmatprep.subr.mxu0 0.0
        %1293 = vmatpush2.msra.mxu0 0.0
        %1294 = vmatprep.subr.mxu0 0.0
        %1295 = vmatpush2.msra.mxu0 0.0
        %1296 = vmatprep.subr.mxu0 0.0
        %1297 = vmatpush2.msra.mxu0 0.0
        %1298 = vmatprep.subr.mxu0 0.0
        %1299 = vmatpush2.msra.mxu0 0.0
        %1300 = vmatprep.subr.mxu0 0.0
        %1301 = vmatpush2.msra.mxu0 0.0
        %1302 = vmatprep.subr.mxu0 0.0
        %1303 = vmatpush2.msra.mxu0 0.0
        %1304 = vmatprep.mubr.f32.mxu0 0.0
        %1305 = vmatmul.mubr.f32.gmra.mxu0 %v1238
        %v1306 = vpop.f32.mrf.mxu0
        %v1307 = vadd.f32 %v525, %v1306
        %v1308 = vpop.f32.mrf.mxu0
        %1309 = vdwg.mxu0
        %v1310 = vxor.u32 %v1307, 2147483648
        %v1311 = vmul.f32 %v1310, 1.442695
        %v1312 = vpow.pop %v1311
        %v1313 = vadd.f32 %v1312, 1.0
        %v1314 = vrcp.pop %v1313
        %v1315 = vmul.f32 1.0, %v1314
        %v1316 = vlaneseq
        %v1317 = vshrl.u32 %v1316, 7
        %v1318 = vsub.s32 0, %v1317
        %v1319 = vrot.slane %v1315, %v1318
        %v1320 = vmul.f32 %v1132, %v1319
        %v1321 = vmul.f32 %v1133, %v1319
        %v1322 = vmul.f32 %v1134, %v1319
        %v1323 = vmul.f32 %v1135, %v1319
        %v1324 = vmul.f32 %v1136, %v1319
        %v1325 = vmul.f32 %v1137, %v1319
        %v1326 = vmul.f32 %v1138, %v1319
        %v1327 = vmul.f32 %v1139, %v1319
        %v1328 = vadd.f32 %v1124, %v1320
        %v1329 = vadd.f32 %v1125, %v1321
        %v1330 = vadd.f32 %v1126, %v1322
        %v1331 = vadd.f32 %v1127, %v1323
        %v1332 = vadd.f32 %v1128, %v1324
        %v1333 = vadd.f32 %v1129, %v1325
        %v1334 = vadd.f32 %v1130, %v1326
        %v1335 = vadd.f32 %v1131, %v1327
        %v1336 = vld [vmem:[%s9] sm:$0xff]
        %v1337 = vld [vmem:[%s9 + $0x8] sm:$0xff]
        %v1338 = vld [vmem:[%s9 + $0x10] sm:$0xff]
        %v1339 = vld [vmem:[%s9 + $0x18] sm:$0xff]
        %v1340 = vld [vmem:[%s10] sm:$0x1]
        %v1342 = vlaneseq
        %v1343 = vshrl.u32 %v1342, 7
        %v1344 = vsub.s32 0, %v1343
        %v1345 = vrot.slane %v1340, %v1344
        %v1348 = vsel %vm534, %v1328, 0
        %v1351 = vsel %vm534, %v1329, 0
        %v1354 = vsel %vm534, %v1330, 0
        %v1357 = vsel %vm534, %v1331, 0
        %v1360 = vsel %vm534, %v1332, 0
        %v1363 = vsel %vm534, %v1333, 0
        %v1366 = vsel %vm534, %v1334, 0
        %v1369 = vsel %vm534, %v1335, 0
        %1371 = vmatprep.subr.mxu0 0.0
        %1372 = vmatpush1.msra.mxu0 0.0
        %1373 = vmatprep.subr.mxu0 0.0
        %1374 = vmatpush1.msra.mxu0 0.0
        %1375 = vmatprep.subr.mxu0 0.0
        %1376 = vmatpush1.msra.mxu0 0.0
        %1377 = vmatprep.subr.mxu0 0.0
        %1378 = vmatpush1.msra.mxu0 0.0
        %1379 = vmatprep.subr.mxu0 0.0
        %1380 = vmatpush1.msra.mxu0 0.0
        %1381 = vmatprep.subr.mxu0 0.0
        %1382 = vmatpush1.msra.mxu0 0.0
        %1383 = vmatprep.subr.mxu0 0.0
        %1384 = vmatpush1.msra.mxu0 0.0
        %1385 = vmatprep.subr.mxu0 0.0
        %1386 = vmatpush1.msra.mxu0 0.0
        %1387 = vmatprep.subr.mxu0 0.0
        %1388 = vmatpush1.msra.mxu0 0.0
        %1389 = vmatprep.subr.mxu0 0.0
        %1390 = vmatpush1.msra.mxu0 0.0
        %1391 = vmatprep.subr.mxu0 0.0
        %1392 = vmatpush1.msra.mxu0 0.0
        %1393 = vmatprep.subr.mxu0 0.0
        %1394 = vmatpush1.msra.mxu0 0.0
        %1395 = vmatprep.subr.mxu0 0.0
        %1396 = vmatpush1.msra.mxu0 %v1339
        %1397 = vmatprep.subr.mxu0 0.0
        %1398 = vmatpush1.msra.mxu0 %v1338
        %1399 = vmatprep.subr.mxu0 0.0
        %1400 = vmatpush1.msra.mxu0 %v1337
        %1401 = vmatprep.subr.mxu0 0.0
        %1402 = vmatpush1.msra.mxu0 %v1336
        %1403 = vmatprep.subr.mxu0 0.0
        %1404 = vmatpush2.msra.mxu0 0.0
        %1405 = vmatprep.subr.mxu0 0.0
        %1406 = vmatpush2.msra.mxu0 0.0
        %1407 = vmatprep.subr.mxu0 0.0
        %1408 = vmatpush2.msra.mxu0 0.0
        %1409 = vmatprep.subr.mxu0 0.0
        %1410 = vmatpush2.msra.mxu0 0.0
        %1411 = vmatprep.subr.mxu0 0.0
        %1412 = vmatpush2.msra.mxu0 0.0
        %1413 = vmatprep.subr.mxu0 0.0
        %1414 = vmatpush2.msra.mxu0 0.0
        %1415 = vmatprep.subr.mxu0 0.0
        %1416 = vmatpush2.msra.mxu0 0.0
        %1417 = vmatprep.subr.mxu0 0.0
        %1418 = vmatpush2.msra.mxu0 0.0
        %1419 = vmatprep.subr.mxu0 0.0
        %1420 = vmatpush2.msra.mxu0 0.0
        %1421 = vmatprep.subr.mxu0 0.0
        %1422 = vmatpush2.msra.mxu0 0.0
        %1423 = vmatprep.subr.mxu0 0.0
        %1424 = vmatpush2.msra.mxu0 0.0
        %1425 = vmatprep.subr.mxu0 0.0
        %1426 = vmatpush2.msra.mxu0 0.0
        %1427 = vmatprep.subr.mxu0 0.0
        %1428 = vmatpush2.msra.mxu0 0.0
        %1429 = vmatprep.subr.mxu0 0.0
        %1430 = vmatpush2.msra.mxu0 0.0
        %1431 = vmatprep.subr.mxu0 0.0
        %1432 = vmatpush2.msra.mxu0 0.0
        %1433 = vmatprep.subr.mxu0 0.0
        %1434 = vmatpush2.msra.mxu0 0.0
        %1435 = vmatprep.mubr.f32.mxu0 0.0
        %1436 = vmatmul.mubr.f32.gmra.mxu0 %v1348
        %v1437 = vpop.f32.mrf.mxu0
        %v1438 = vadd.f32 %v1345, %v1437
        %v1439 = vpop.f32.mrf.mxu0
        %1440 = vmatprep.mubr.f32.mxu0 0.0
        %1441 = vmatmul.mubr.f32.gmra.mxu0 %v1351
        %v1442 = vpop.f32.mrf.mxu0
        %v1443 = vadd.f32 %v1345, %v1442
        %v1444 = vpop.f32.mrf.mxu0
        %1445 = vmatprep.mubr.f32.mxu0 0.0
        %1446 = vmatmul.mubr.f32.gmra.mxu0 %v1354
        %v1447 = vpop.f32.mrf.mxu0
        %v1448 = vadd.f32 %v1345, %v1447
        %v1449 = vpop.f32.mrf.mxu0
        %1450 = vmatprep.mubr.f32.mxu0 0.0
        %1451 = vmatmul.mubr.f32.gmra.mxu0 %v1357
        %v1452 = vpop.f32.mrf.mxu0
        %v1453 = vadd.f32 %v1345, %v1452
        %v1454 = vpop.f32.mrf.mxu0
        %1455 = vmatprep.mubr.f32.mxu0 0.0
        %1456 = vmatmul.mubr.f32.gmra.mxu0 %v1360
        %v1457 = vpop.f32.mrf.mxu0
        %v1458 = vadd.f32 %v1345, %v1457
        %v1459 = vpop.f32.mrf.mxu0
        %1460 = vmatprep.mubr.f32.mxu0 0.0
        %1461 = vmatmul.mubr.f32.gmra.mxu0 %v1363
        %v1462 = vpop.f32.mrf.mxu0
        %v1463 = vadd.f32 %v1345, %v1462
        %v1464 = vpop.f32.mrf.mxu0
        %1465 = vmatprep.mubr.f32.mxu0 0.0
        %1466 = vmatmul.mubr.f32.gmra.mxu0 %v1366
        %v1467 = vpop.f32.mrf.mxu0
        %v1468 = vadd.f32 %v1345, %v1467
        %v1469 = vpop.f32.mrf.mxu0
        %1470 = vmatprep.mubr.f32.mxu0 0.0
        %1471 = vmatmul.mubr.f32.gmra.mxu0 %v1369
        %v1472 = vpop.f32.mrf.mxu0
        %v1473 = vadd.f32 %v1345, %v1472
        %v1474 = vpop.f32.mrf.mxu0
        %1475 = vdwg.mxu0
        %v1476 = vld [vmem:[%s498] sm:$0xff]
        %v1477 = vld [vmem:[%s498 + $0x8] sm:$0xff]
        %v1478 = vld [vmem:[%s498 + $0x10] sm:$0xff]
        %v1479 = vld [vmem:[%s498 + $0x18] sm:$0xff]
        %v1480 = vld [vmem:[%s498 + $0x20] sm:$0xff]
        %v1481 = vld [vmem:[%s498 + $0x28] sm:$0xff]
        %v1482 = vld [vmem:[%s498 + $0x30] sm:$0xff]
        %v1483 = vld [vmem:[%s498 + $0x38] sm:$0xff]
        %v1484 = vld [vmem:[%s11] sm:$0xff]
        %v1485 = vld [vmem:[%s11 + $0x8] sm:$0xff]
        %v1486 = vld [vmem:[%s11 + $0x10] sm:$0xff]
        %v1487 = vld [vmem:[%s11 + $0x18] sm:$0xff]
        %v1488 = vld [vmem:[%s12] sm:$0x1]
        %v1490 = vlaneseq
        %v1491 = vshrl.u32 %v1490, 7
        %v1492 = vsub.s32 0, %v1491
        %v1493 = vrot.slane %v1488, %v1492
        %v1496 = vsel %vm534, %v1476, 0
        %v1499 = vsel %vm534, %v1477, 0
        %v1502 = vsel %vm534, %v1478, 0
        %v1505 = vsel %vm534, %v1479, 0
        %v1508 = vsel %vm534, %v1480, 0
        %v1511 = vsel %vm534, %v1481, 0
        %v1514 = vsel %vm534, %v1482, 0
        %v1517 = vsel %vm534, %v1483, 0
        %1519 = vmatprep.subr.mxu0 0.0
        %1520 = vmatpush1.msra.mxu0 0.0
        %1521 = vmatprep.subr.mxu0 0.0
        %1522 = vmatpush1.msra.mxu0 0.0
        %1523 = vmatprep.subr.mxu0 0.0
        %1524 = vmatpush1.msra.mxu0 0.0
        %1525 = vmatprep.subr.mxu0 0.0
        %1526 = vmatpush1.msra.mxu0 0.0
        %1527 = vmatprep.subr.mxu0 0.0
        %1528 = vmatpush1.msra.mxu0 0.0
        %1529 = vmatprep.subr.mxu0 0.0
        %1530 = vmatpush1.msra.mxu0 0.0
        %1531 = vmatprep.subr.mxu0 0.0
        %1532 = vmatpush1.msra.mxu0 0.0
        %1533 = vmatprep.subr.mxu0 0.0
        %1534 = vmatpush1.msra.mxu0 0.0
        %1535 = vmatprep.subr.mxu0 0.0
        %1536 = vmatpush1.msra.mxu0 0.0
        %1537 = vmatprep.subr.mxu0 0.0
        %1538 = vmatpush1.msra.mxu0 0.0
        %1539 = vmatprep.subr.mxu0 0.0
        %1540 = vmatpush1.msra.mxu0 0.0
        %1541 = vmatprep.subr.mxu0 0.0
        %1542 = vmatpush1.msra.mxu0 0.0
        %1543 = vmatprep.subr.mxu0 0.0
        %1544 = vmatpush1.msra.mxu0 %v1487
        %1545 = vmatprep.subr.mxu0 0.0
        %1546 = vmatpush1.msra.mxu0 %v1486
        %1547 = vmatprep.subr.mxu0 0.0
        %1548 = vmatpush1.msra.mxu0 %v1485
        %1549 = vmatprep.subr.mxu0 0.0
        %1550 = vmatpush1.msra.mxu0 %v1484
        %1551 = vmatprep.subr.mxu0 0.0
        %1552 = vmatpush2.msra.mxu0 0.0
        %1553 = vmatprep.subr.mxu0 0.0
        %1554 = vmatpush2.msra.mxu0 0.0
        %1555 = vmatprep.subr.mxu0 0.0
        %1556 = vmatpush2.msra.mxu0 0.0
        %1557 = vmatprep.subr.mxu0 0.0
        %1558 = vmatpush2.msra.mxu0 0.0
        %1559 = vmatprep.subr.mxu0 0.0
        %1560 = vmatpush2.msra.mxu0 0.0
        %1561 = vmatprep.subr.mxu0 0.0
        %1562 = vmatpush2.msra.mxu0 0.0
        %1563 = vmatprep.subr.mxu0 0.0
        %1564 = vmatpush2.msra.mxu0 0.0
        %1565 = vmatprep.subr.mxu0 0.0
        %1566 = vmatpush2.msra.mxu0 0.0
        %1567 = vmatprep.subr.mxu0 0.0
        %1568 = vmatpush2.msra.mxu0 0.0
        %1569 = vmatprep.subr.mxu0 0.0
        %1570 = vmatpush2.msra.mxu0 0.0
        %1571 = vmatprep.subr.mxu0 0.0
        %1572 = vmatpush2.msra.mxu0 0.0
        %1573 = vmatprep.subr.mxu0 0.0
        %1574 = vmatpush2.msra.mxu0 0.0
        %1575 = vmatprep.subr.mxu0 0.0
        %1576 = vmatpush2.msra.mxu0 0.0
        %1577 = vmatprep.subr.mxu0 0.0
        %1578 = vmatpush2.msra.mxu0 0.0
        %1579 = vmatprep.subr.mxu0 0.0
        %1580 = vmatpush2.msra.mxu0 0.0
        %1581 = vmatprep.subr.mxu0 0.0
        %1582 = vmatpush2.msra.mxu0 0.0
        %1583 = vmatprep.mubr.f32.mxu0 0.0
        %1584 = vmatmul.mubr.f32.gmra.mxu0 %v1496
        %v1585 = vpop.f32.mrf.mxu0
        %v1586 = vadd.f32 %v1493, %v1585
        %v1587 = vpop.f32.mrf.mxu0
        %1588 = vmatprep.mubr.f32.mxu0 0.0
        %1589 = vmatmul.mubr.f32.gmra.mxu0 %v1499
        %v1590 = vpop.f32.mrf.mxu0
        %v1591 = vadd.f32 %v1493, %v1590
        %v1592 = vpop.f32.mrf.mxu0
        %1593 = vmatprep.mubr.f32.mxu0 0.0
        %1594 = vmatmul.mubr.f32.gmra.mxu0 %v1502
        %v1595 = vpop.f32.mrf.mxu0
        %v1596 = vadd.f32 %v1493, %v1595
        %v1597 = vpop.f32.mrf.mxu0
        %1598 = vmatprep.mubr.f32.mxu0 0.0
        %1599 = vmatmul.mubr.f32.gmra.mxu0 %v1505
        %v1600 = vpop.f32.mrf.mxu0
        %v1601 = vadd.f32 %v1493, %v1600
        %v1602 = vpop.f32.mrf.mxu0
        %1603 = vmatprep.mubr.f32.mxu0 0.0
        %1604 = vmatmul.mubr.f32.gmra.mxu0 %v1508
        %v1605 = vpop.f32.mrf.mxu0
        %v1606 = vadd.f32 %v1493, %v1605
        %v1607 = vpop.f32.mrf.mxu0
        %1608 = vmatprep.mubr.f32.mxu0 0.0
        %1609 = vmatmul.mubr.f32.gmra.mxu0 %v1511
        %v1610 = vpop.f32.mrf.mxu0
        %v1611 = vadd.f32 %v1493, %v1610
        %v1612 = vpop.f32.mrf.mxu0
        %1613 = vmatprep.mubr.f32.mxu0 0.0
        %1614 = vmatmul.mubr.f32.gmra.mxu0 %v1514
        %v1615 = vpop.f32.mrf.mxu0
        %v1616 = vadd.f32 %v1493, %v1615
        %v1617 = vpop.f32.mrf.mxu0
        %1618 = vmatprep.mubr.f32.mxu0 0.0
        %1619 = vmatmul.mubr.f32.gmra.mxu0 %v1517
        %v1620 = vpop.f32.mrf.mxu0
        %v1621 = vadd.f32 %v1493, %v1620
        %v1622 = vpop.f32.mrf.mxu0
        %1623 = vdwg.mxu0
        %v1624 = vadd.f32 %v1438, %v1586
        %v1625 = vadd.f32 %v1443, %v1591
        %v1626 = vadd.f32 %v1448, %v1596
        %v1627 = vadd.f32 %v1453, %v1601
        %v1628 = vadd.f32 %v1458, %v1606
        %v1629 = vadd.f32 %v1463, %v1611
        %v1630 = vadd.f32 %v1468, %v1616
        %v1631 = vadd.f32 %v1473, %v1621
        %v1632 = vmax.f32 %v1624, 0.0
        %v1633 = vmax.f32 %v1625, 0.0
        %v1634 = vmax.f32 %v1626, 0.0
        %v1635 = vmax.f32 %v1627, 0.0
        %v1636 = vmax.f32 %v1628, 0.0
        %v1637 = vmax.f32 %v1629, 0.0
        %v1638 = vmax.f32 %v1630, 0.0
        %v1639 = vmax.f32 %v1631, 0.0
        %1640 = vst [vmem:[%s493] sm:$0xff] %v1632
        %1641 = vst [vmem:[%s493 + $0x8] sm:$0xff] %v1633
        %1642 = vst [vmem:[%s493 + $0x10] sm:$0xff] %v1634
        %1643 = vst [vmem:[%s493 + $0x18] sm:$0xff] %v1635
        %1644 = vst [vmem:[%s493 + $0x20] sm:$0xff] %v1636
        %1645 = vst [vmem:[%s493 + $0x28] sm:$0xff] %v1637
        %1646 = vst [vmem:[%s493 + $0x30] sm:$0xff] %v1638
        %1647 = vst [vmem:[%s493 + $0x38] sm:$0xff] %v1639
        %s1648 = sand.u32 %s333, 1
        %s1649 = scalar_lea.sflag [#allocation3], %s1648
        %s1650 = sand.u32 %s333, 1
        %s1651 = smul.addr %s1650, 64
        %s1652 = scalar_lea.vmem [#allocation2], %s1651
        // Predicated region
        $region73: #{osblock_forward.9} parent=71 // pred_check
          %p1653 = pneg %p343
        $region74: #{osblock_forward.9} parent=71 // pred_check_branch
          %1655 = sbr.rel (%p1653) target = $region76
        $region75: #{osblock_forward.9} parent=71 // pred_region
          %s1657 = ssub.s32 1024, 1024
          %1658 = vsyncadd %s1649, %s1657
          %s1659 = smul.addr %s27, 8
          %s1660 = smul.addr %s1659, 128
          %s1661 = scalar_lea.hbm %s13, %s1660
          %s1662 = sshll.u32 %s1652, 4
          %s1663 = int_to_ptr.vmem [resolvable:$true] %s1662
          %1668 = dma.vmem_to_hbm [thread:$0]  %s1663, 1024, %s1661, %s1649, 128, 128, 8
        $region76: #{osblock_forward.9} parent=71 // pred_fallthru
          _
      $region72: #{osblock_forward.9} parent=5 // pred_fallthru
        _
      %p1669 = scmp.le.s32.totalorder 2, %s22
      // Predicated region
      $region77: #{osblock_forward.9} parent=5 // pred_check
        %p1670 = pneg %p1669
      $region78: #{osblock_forward.9} parent=5 // pred_check_branch
        %1672 = sbr.rel (%p1670) target = $region80
      $region79: #{osblock_forward.9} parent=5 // pred_region
        %s1673 = ssub.s32 %s22, 2
        // Predicated region
        $region81: #{osblock_forward.9} parent=79 // pred_check
          %p1674 = pneg %p349
        $region82: #{osblock_forward.9} parent=79 // pred_check_branch
          %1676 = sbr.rel (%p1674) target = $region84
        $region83: #{osblock_forward.9} parent=79 // pred_region
          %s1677 = sand.u32 %s334, 1
          %s1678 = scalar_lea.sflag [#allocation3], %s1677
          %s1679 = sand.u32 %s334, 1
          %s1680 = smul.addr %s1679, 64
          %s1681 = scalar_lea.vmem [#allocation2], %s1680
          %1682 = dma.done %s1678, 1024
        $region84: #{osblock_forward.9} parent=79 // pred_fallthru
          _
      $region80: #{osblock_forward.9} parent=5 // pred_fallthru
        _
    $region6: #{osblock_forward.9} parent=1 // loop_footer
      %s26 = sadd.s32 1, %s22
    $region7: #{osblock_forward.9} parent=1 // loop_footer_branch
      %21 = sbr.rel target = $region3
    $region8: #{osblock_forward.9} parent=1 // loop_exit
      _
    %1683 = vsyncpa [#allocation3], 1
    %s1684 = scalar_lea.sflag [#allocation3], 1
    %1685 = vsyncpa %s1684, 1

</llo_original>
